<compile_context>
chip_gen: v7x
topology: tpu7x:2x2x1
jax: 0.10.0
libtpu: 0.0.40
codegen_flags: <defaults>
</compile_context>

<pallas_src>
import functools

import jax
import jax.numpy as jnp
from jax import lax
from jax.experimental import pallas as pl
from jax.experimental.pallas import tpu as pltpu


_PARITY = ((0, 0), (0, 1), (1, 0), (1, 1))   # (row, col) sub-pixel parities


def _regressor_kernel(x_ref, w1_ref, b1_ref, w2_ref, b2_ref, w3_ref, w4_ref,
                      o_ref, pad_ref, par_ref, *, H, W, alpha):
    """Fused Regressor forward for ONE batch element (one grid step).

    x_ref  : (1, H, W, 128)     f32  input features (NHWC)
    w1_ref : (1152, 128)        bf16 deconv1 weight, 3x3 taps folded into K
    b1_ref : (1, 128)           f32  deconv1 bias
    w2_ref, b2_ref                   deconv2 weight / bias (same layouts)
    w3_ref : (4, 512, 64)       bf16 deconv3 polyphase weights
                                      [parity, 4 taps x Cin, Cout]
    w4_ref : (576, 128)         bf16 est_normal weight, taps folded into K,
                                      Cout zero-padded 3 -> 128
    o_ref  : (1, 4, H*W, 128)   f32  L2-normalized output per sub-pixel parity
    pad_ref: (H+2, W+2, 128)    f32  zero-padded activation scratch (pad=1)
    par_ref: (4, H+2, W+2, 64)  f32  zero-padded deconv3 parity planes
    """
    # TODO(synk): switch pad_ref/par_ref to bf16 (halves scratch VMEM and the
    # shifted-window re-read traffic) once packed-dtype sub-window stores at
    # odd sublane offsets are verified to lower on the target Mosaic version.
    HW = H * W
    bf16 = jnp.bfloat16
    f32 = jnp.float32

    # ---- zero ONLY the halo borders (interiors are fully rewritten below);
    #      done every step so it stays correct under megacore grid sharding.
    pad_ref[0:1, :, :] = jnp.zeros((1, W + 2, 128), f32)
    pad_ref[H + 1:H + 2, :, :] = jnp.zeros((1, W + 2, 128), f32)
    pad_ref[:, 0:1, :] = jnp.zeros((H + 2, 1, 128), f32)
    pad_ref[:, W + 1:W + 2, :] = jnp.zeros((H + 2, 1, 128), f32)
    par_ref[:, 0:1, :, :] = jnp.zeros((4, 1, W + 2, 64), f32)
    par_ref[:, H + 1:H + 2, :, :] = jnp.zeros((4, 1, W + 2, 64), f32)
    par_ref[:, :, 0:1, :] = jnp.zeros((4, H + 2, 1, 64), f32)
    par_ref[:, :, W + 1:W + 2, :] = jnp.zeros((4, H + 2, 1, 64), f32)

    def leaky(a):                                    # LeakyReLU(alpha)
        return jnp.where(a >= 0, a, alpha * a)

    def im2col3x3():
        # Lane-concatenate the 9 shifted windows: (HW, 9*128), (kh,kw) major.
        cols = [pad_ref[kh:kh + H, kw:kw + W, :].reshape(HW, 128)
                for kh in range(3) for kw in range(3)]
        return jnp.concatenate(cols, axis=-1).astype(bf16)

    # ---- write the input into the padded scratch interior ------------------
    pad_ref[1:1 + H, 1:1 + W, :] = x_ref[0]

    # ---- deconv1: Conv2d(128,128,3,1,1)+LeakyReLU = ONE (HW,1152)@(1152,128)
    a1 = jnp.dot(im2col3x3(), w1_ref[...], preferred_element_type=f32)
    a1 = leaky(a1 + b1_ref[...])
    pad_ref[1:1 + H, 1:1 + W, :] = a1.reshape(H, W, 128)

    # ---- deconv2 ------------------------------------------------------------
    a2 = jnp.dot(im2col3x3(), w2_ref[...], preferred_element_type=f32)
    a2 = leaky(a2 + b2_ref[...])
    pad_ref[1:1 + H, 1:1 + W, :] = a2.reshape(H, W, 128)

    # ---- deconv3: ConvTranspose2d(128,64,4,2,1)+LeakyReLU (polyphase) -------
    # Output parity (rh, rw) at low-res pixel (a, b):
    #   sum_{dh,dw in {0,1}} xpad1[a+rh+dh, b+rw+dw] @ Wflip[rh+2dh, rw+2dw]
    # -> one (HW, 4*128) @ (512, 64) dot per parity.
    for p, (rh, rw) in enumerate(_PARITY):
        cols = [pad_ref[rh + dh:rh + dh + H,
                        rw + dw:rw + dw + W, :].reshape(HW, 128)
                for (dh, dw) in _PARITY]
        acc = jnp.dot(jnp.concatenate(cols, axis=-1).astype(bf16), w3_ref[p],
                      preferred_element_type=f32)
        par_ref[p, 1:1 + H, 1:1 + W, :] = leaky(acc).reshape(H, W, 64)

    # ---- est_normal: Conv2d(64,3,3,1,1) + L2 normalize ----------------------
    # Evaluated directly on the parity (space-to-depth) planes; the 4 output
    # parities are stacked along M and the 9 taps folded into K ->
    # ONE (4*HW, 576) @ (576, 128) dot.  Full-res pixel (2a+rh+dy, 2b+rw+dx)
    # lives in plane ((rh+dy)%2, (rw+dx)%2) at low-res offset (a+sr, b+sc);
    # out-of-image taps hit the zero halo of par_ref (== pad=1 at full res).
    rows = []
    for (rh, rw) in _PARITY:                          # output parity -> M block
        cols = []
        for dy in (-1, 0, 1):
            sh = (rh + dy) % 2
            sr = (rh + dy - sh) // 2
            for dx in (-1, 0, 1):
                sw = (rw + dx) % 2
                sc = (rw + dx - sw) // 2
                p_in = 2 * sh + sw
                cols.append(par_ref[p_in, 1 + sr:1 + sr + H,
                                    1 + sc:1 + sc + W, :].reshape(HW, 64))
        rows.append(jnp.concatenate(cols, axis=-1))           # (HW, 576)
    acc = jnp.dot(jnp.concatenate(rows, axis=0).astype(bf16), w4_ref[...],
                  preferred_element_type=f32)                  # (4*HW, 128)
    # Channels 3..127 are exactly zero (zero-padded weights), so the full-lane
    # sum of squares equals the 3-channel squared norm.
    ssq = jnp.sum(acc * acc, axis=-1, keepdims=True)
    inv = lax.rsqrt(jnp.maximum(ssq, 1e-24))       # == 1 / max(||x||_2, 1e-12)
    o_ref[0] = (acc * inv).reshape(4, HW, 128)


def regressor_pallas(x_nhwc, w1, b1, w2, b2, w3, w4, *, alpha=0.1):
    """Run the fused Regressor kernel. x_nhwc: (N, H, W, 128) f32."""
    N, H, W, C = x_nhwc.shape
    assert C == 128
    HW = H * W
    kernel = functools.partial(_regressor_kernel, H=H, W=W, alpha=alpha)

    # Explicit VMEM budget: double-buffered in/out blocks, (pipeline-buffered)
    # weights, padded scratch, im2col / dot temporaries, plus headroom.
    in_blk = HW * 128 * 4
    out_blk = 4 * HW * 128 * 4
    w_bytes = (w1.size + w2.size + w3.size + w4.size) * 2 + (b1.size + b2.size) * 4
    pad_b = (H + 2) * (W + 2) * 128 * 4
    par_b = 4 * (H + 2) * (W + 2) * 64 * 4
    tmp_b = (HW * 9 * 128 + 4 * HW * 9 * 64) * (4 + 2) + 4 * HW * 128 * 4
    vmem_bytes = 2 * (in_blk + out_blk) + 2 * w_bytes + pad_b + par_b + 2 * tmp_b
    vmem_bytes = int(min(max(vmem_bytes + (8 << 20), 32 << 20), 100 << 20))
    # TODO(synk): at large H,W (v7x: 64 MiB VMEM) tile the grid over row bands
    # with a 1-row halo and store only the 3 real output channels.

    return pl.pallas_call(
        kernel,
        out_shape=jax.ShapeDtypeStruct((N, 4, HW, 128), jnp.float32),
        grid_spec=pltpu.PrefetchScalarGridSpec(
            num_scalar_prefetch=0,
            grid=(N,),
            in_specs=[
                pl.BlockSpec((1, H, W, 128), lambda n: (n, 0, 0, 0)),
                pl.BlockSpec((9 * 128, 128), lambda n: (0, 0)),
                pl.BlockSpec((1, 128), lambda n: (0, 0)),
                pl.BlockSpec((9 * 128, 128), lambda n: (0, 0)),
                pl.BlockSpec((1, 128), lambda n: (0, 0)),
                pl.BlockSpec((4, 4 * 128, 64), lambda n: (0, 0, 0)),
                pl.BlockSpec((9 * 64, 128), lambda n: (0, 0)),
            ],
            out_specs=pl.BlockSpec((1, 4, HW, 128), lambda n: (n, 0, 0, 0)),
            scratch_shapes=[
                pltpu.VMEM((H + 2, W + 2, 128), jnp.float32),
                pltpu.VMEM((4, H + 2, W + 2, 64), jnp.float32),
            ],
        ),
        compiler_params=pltpu.CompilerParams(
            dimension_semantics=("parallel",),
            vmem_limit_bytes=vmem_bytes),
    )(x_nhwc, w1, b1, w2, b2, w3, w4)


def make_params(key):
    """Deterministic synthetic parameters (kaiming-style normal init)."""
    ks = jax.random.split(key, 6)

    def kaiming(k, shape, fan_in):
        return jax.random.normal(k, shape, jnp.float32) * jnp.sqrt(2.0 / fan_in)

    # deconv1 / deconv2: Conv2d(128,128,3,1,1,bias=True), stored (K,K,Cin,Cout)
    w1 = kaiming(ks[0], (3, 3, 128, 128), 3 * 3 * 128)
    b1 = 0.01 * jax.random.normal(ks[1], (128,), jnp.float32)
    w2 = kaiming(ks[2], (3, 3, 128, 128), 3 * 3 * 128)
    b2 = 0.01 * jax.random.normal(ks[3], (128,), jnp.float32)
    # deconv3: ConvTranspose2d(128,64,4,2,1,bias=False); torch layout (Cin,Cout,K,K)
    wt = kaiming(ks[4], (128, 64, 4, 4), 128 * 4 * 4)
    # est_normal: Conv2d(64,3,3,1,1,bias=False), stored (K,K,Cin,Cout)
    w4 = kaiming(ks[5], (3, 3, 64, 3), 3 * 3 * 64)
    return dict(w1=w1, b1=b1, w2=w2, b2=b2, wt=wt, w4=w4)


def prepare_params(params):
    """Torch-style params -> kernel layouts (run ONCE, outside the jitted path)."""
    bf16 = jnp.bfloat16
    # deconv1/2: fold (kh, kw, cin) into the contraction dim K = 9*128.
    w1 = params['w1'].astype(bf16).reshape(9 * 128, 128)
    w2 = params['w2'].astype(bf16).reshape(9 * 128, 128)
    b1 = params['b1'].reshape(1, 128).astype(jnp.float32)
    b2 = params['b2'].reshape(1, 128).astype(jnp.float32)
    # deconv3: equivalent regular-conv weight of the transposed conv =
    # transpose torch (Cin,Cout,K,K) -> (K,K,Cin,Cout) and flip spatial taps;
    # then fold the 4 taps of each output parity into K = 4*128.
    w3f = jnp.transpose(params['wt'], (2, 3, 0, 1))[::-1, ::-1, :, :]
    w3 = jnp.stack([
        jnp.concatenate([w3f[rh + 2 * dh, rw + 2 * dw] for (dh, dw) in _PARITY],
                        axis=0)
        for (rh, rw) in _PARITY], axis=0).astype(bf16)        # (4, 512, 64)
    # est_normal: Cout zero-padded 3 -> 128 (lane-dense store; pad lanes stay
    # exactly 0 so the in-kernel full-lane norm == 3-channel norm), taps folded.
    w4 = jnp.zeros((3, 3, 64, 128), jnp.float32).at[..., :3].set(params['w4'])
    w4 = w4.astype(bf16).reshape(9 * 64, 128)                 # (576, 128)
    return dict(w1=w1, b1=b1, w2=w2, b2=b2, w3=w3, w4=w4)


@functools.partial(jax.jit, static_argnums=(2,))
def regressor_forward(prepped, x, shape):
    """x: (possibly flattened) features; shape = (N, 128, H, W) as in torch."""
    N, C, H, W = shape
    x = x.reshape(shape)                          # NCHW (torch .view semantics)
    x = jnp.transpose(x, (0, 2, 3, 1))            # -> NHWC for the TPU kernel
    out = regressor_pallas(x, prepped['w1'], prepped['b1'], prepped['w2'],
                           prepped['b2'], prepped['w3'], prepped['w4'])
    # sub-pixel (parity) planes -> full-resolution NCHW image with 3 channels
    o = out[..., :3].reshape(N, 2, 2, H, W, 3)                # (N,rh,rw,a,b,c)
    o = jnp.transpose(o, (0, 5, 3, 1, 4, 2))                  # (N,c,a,rh,b,rw)
    return o.reshape(N, 3, 2 * H, 2 * W)


if __name__ == "__main__":
    key = jax.random.PRNGKey(0)
    pkey, xkey = jax.random.split(key)

    params = make_params(pkey)
    prepped = prepare_params(params)              # weight prep hoisted out of jit

    # Small shapes consistent with the module (channels fixed at 128 by arch).
    N, C, H, W = 2, 128, 8, 8
    shape = (N, C, H, W)
    x = jax.random.normal(xkey, (N * C * H * W,), jnp.float32)  # flat, like torch .view input

    normal = regressor_forward(prepped, x, shape)
    normal = jax.block_until_ready(normal)

    assert normal.shape == (N, 3, 2 * H, 2 * W), normal.shape
    # sanity: unit L2 norm along the channel axis (F.normalize semantics)
    norms = jnp.sqrt(jnp.sum(normal.astype(jnp.float32) ** 2, axis=1))
    assert bool(jnp.all(jnp.abs(norms - 1.0) < 1e-3)), "channel L2 norm != 1"

    print("KERNEL_OK")
</pallas_src>

<mosaic_0001>
module attributes {stable_mosaic.version = 11 : i64} {
  func.func @_regressor_kernel(%arg0: i32, %arg1: memref<1x8x8x128xf32, #tpu.memory_space<vmem>>, %arg2: memref<1152x128xbf16, #tpu.memory_space<vmem>>, %arg3: memref<1x128xf32, #tpu.memory_space<vmem>>, %arg4: memref<1152x128xbf16, #tpu.memory_space<vmem>>, %arg5: memref<1x128xf32, #tpu.memory_space<vmem>>, %arg6: memref<4x512x64xbf16, #tpu.memory_space<vmem>>, %arg7: memref<576x128xbf16, #tpu.memory_space<vmem>>, %arg8: memref<1x4x64x128xf32, #tpu.memory_space<vmem>>, %arg9: memref<10x10x128xf32, #tpu.memory_space<vmem>>, %arg10: memref<4x10x10x64xf32, #tpu.memory_space<vmem>>) attributes {dimension_semantics = [#tpu.dimension_semantics<parallel>], iteration_bounds = array<i64: 2>, scalar_prefetch = 0 : i64, scratch_operands = 2 : i64, tpu.core_type = #tpu.core_type<tc>, window_params = [{transform_indices = @transform_0, window_bounds = array<i64: 1, 8, 8, 128>}, {pipeline_mode = #tpu.pipeline_mode<synchronous>, transform_indices = @transform_1, window_bounds = array<i64: 1152, 128>}, {pipeline_mode = #tpu.pipeline_mode<synchronous>, transform_indices = @transform_2, window_bounds = array<i64: 1, 128>}, {pipeline_mode = #tpu.pipeline_mode<synchronous>, transform_indices = @transform_3, window_bounds = array<i64: 1152, 128>}, {pipeline_mode = #tpu.pipeline_mode<synchronous>, transform_indices = @transform_4, window_bounds = array<i64: 1, 128>}, {pipeline_mode = #tpu.pipeline_mode<synchronous>, transform_indices = @transform_5, window_bounds = array<i64: 4, 512, 64>}, {pipeline_mode = #tpu.pipeline_mode<synchronous>, transform_indices = @transform_6, window_bounds = array<i64: 576, 128>}, {transform_indices = @transform_7, window_bounds = array<i64: 1, 4, 64, 128>}]} {
    %cst = arith.constant 0.000000e+00 : f32
    %0 = vector.broadcast %cst : f32 to vector<1x10x128xf32>
    %c0 = arith.constant 0 : index
    %c0_0 = arith.constant 0 : index
    %c0_1 = arith.constant 0 : index
    %1 = vector.load %arg9[%c0, %c0_0, %c0_1] : memref<10x10x128xf32, #tpu.memory_space<vmem>>, vector<1x10x128xf32>
    tpu.vector_store %arg9[%c0, %c0_0, %c0_1], %0 {strides = array<i32>} : memref<10x10x128xf32, #tpu.memory_space<vmem>>, vector<1x10x128xf32>,
    %cst_2 = arith.constant 0.000000e+00 : f32
    %2 = vector.broadcast %cst_2 : f32 to vector<1x10x128xf32>
    %c9 = arith.constant 9 : index
    %c0_3 = arith.constant 0 : index
    %c0_4 = arith.constant 0 : index
    %3 = vector.load %arg9[%c9, %c0_3, %c0_4] : memref<10x10x128xf32, #tpu.memory_space<vmem>>, vector<1x10x128xf32>
    tpu.vector_store %arg9[%c9, %c0_3, %c0_4], %2 {strides = array<i32>} : memref<10x10x128xf32, #tpu.memory_space<vmem>>, vector<1x10x128xf32>,
    %cst_5 = arith.constant 0.000000e+00 : f32
    %4 = vector.broadcast %cst_5 : f32 to vector<10x1x128xf32>
    %c0_6 = arith.constant 0 : index
    %c0_7 = arith.constant 0 : index
    %c0_8 = arith.constant 0 : index
    %5 = vector.load %arg9[%c0_6, %c0_7, %c0_8] : memref<10x10x128xf32, #tpu.memory_space<vmem>>, vector<10x1x128xf32>
    tpu.vector_store %arg9[%c0_6, %c0_7, %c0_8], %4 {strides = array<i32>} : memref<10x10x128xf32, #tpu.memory_space<vmem>>, vector<10x1x128xf32>,
    %cst_9 = arith.constant 0.000000e+00 : f32
    %6 = vector.broadcast %cst_9 : f32 to vector<10x1x128xf32>
    %c0_10 = arith.constant 0 : index
    %c9_11 = arith.constant 9 : index
    %c0_12 = arith.constant 0 : index
    %7 = vector.load %arg9[%c0_10, %c9_11, %c0_12] : memref<10x10x128xf32, #tpu.memory_space<vmem>>, vector<10x1x128xf32>
    tpu.vector_store %arg9[%c0_10, %c9_11, %c0_12], %6 {strides = array<i32>} : memref<10x10x128xf32, #tpu.memory_space<vmem>>, vector<10x1x128xf32>,
    %cst_13 = arith.constant 0.000000e+00 : f32
    %8 = vector.broadcast %cst_13 : f32 to vector<4x1x10x64xf32>
    %c0_14 = arith.constant 0 : index
    %c0_15 = arith.constant 0 : index
    %c0_16 = arith.constant 0 : index
    %c0_17 = arith.constant 0 : index
    %9 = vector.load %arg10[%c0_14, %c0_15, %c0_16, %c0_17] : memref<4x10x10x64xf32, #tpu.memory_space<vmem>>, vector<4x1x10x64xf32>
    tpu.vector_store %arg10[%c0_14, %c0_15, %c0_16, %c0_17], %8 {strides = array<i32>} : memref<4x10x10x64xf32, #tpu.memory_space<vmem>>, vector<4x1x10x64xf32>,
    %cst_18 = arith.constant 0.000000e+00 : f32
    %10 = vector.broadcast %cst_18 : f32 to vector<4x1x10x64xf32>
    %c0_19 = arith.constant 0 : index
    %c9_20 = arith.constant 9 : index
    %c0_21 = arith.constant 0 : index
    %c0_22 = arith.constant 0 : index
    %11 = vector.load %arg10[%c0_19, %c9_20, %c0_21, %c0_22] : memref<4x10x10x64xf32, #tpu.memory_space<vmem>>, vector<4x1x10x64xf32>
    tpu.vector_store %arg10[%c0_19, %c9_20, %c0_21, %c0_22], %10 {strides = array<i32>} : memref<4x10x10x64xf32, #tpu.memory_space<vmem>>, vector<4x1x10x64xf32>,
    %cst_23 = arith.constant 0.000000e+00 : f32
    %12 = vector.broadcast %cst_23 : f32 to vector<4x10x1x64xf32>
    %c0_24 = arith.constant 0 : index
    %c0_25 = arith.constant 0 : index
    %c0_26 = arith.constant 0 : index
    %c0_27 = arith.constant 0 : index
    %13 = vector.load %arg10[%c0_24, %c0_25, %c0_26, %c0_27] : memref<4x10x10x64xf32, #tpu.memory_space<vmem>>, vector<4x10x1x64xf32>
    tpu.vector_store %arg10[%c0_24, %c0_25, %c0_26, %c0_27], %12 {strides = array<i32>} : memref<4x10x10x64xf32, #tpu.memory_space<vmem>>, vector<4x10x1x64xf32>,
    %cst_28 = arith.constant 0.000000e+00 : f32
    %14 = vector.broadcast %cst_28 : f32 to vector<4x10x1x64xf32>
    %c0_29 = arith.constant 0 : index
    %c0_30 = arith.constant 0 : index
    %c9_31 = arith.constant 9 : index
    %c0_32 = arith.constant 0 : index
    %15 = vector.load %arg10[%c0_29, %c0_30, %c9_31, %c0_32] : memref<4x10x10x64xf32, #tpu.memory_space<vmem>>, vector<4x10x1x64xf32>
    tpu.vector_store %arg10[%c0_29, %c0_30, %c9_31, %c0_32], %14 {strides = array<i32>} : memref<4x10x10x64xf32, #tpu.memory_space<vmem>>, vector<4x10x1x64xf32>,
    %c0_33 = arith.constant 0 : index
    %c0_34 = arith.constant 0 : index
    %c0_35 = arith.constant 0 : index
    %c0_36 = arith.constant 0 : index
    %16 = vector.load %arg1[%c0_33, %c0_34, %c0_35, %c0_36] : memref<1x8x8x128xf32, #tpu.memory_space<vmem>>, vector<1x8x8x128xf32>
    %17 = vector.shape_cast %16 : vector<1x8x8x128xf32> to vector<8x8x128xf32>
    %c1 = arith.constant 1 : index
    %c1_37 = arith.constant 1 : index
    %c0_38 = arith.constant 0 : index
    %18 = vector.load %arg9[%c1, %c1_37, %c0_38] : memref<10x10x128xf32, #tpu.memory_space<vmem>>, vector<8x8x128xf32>
    tpu.vector_store %arg9[%c1, %c1_37, %c0_38], %17 {strides = array<i32>} : memref<10x10x128xf32, #tpu.memory_space<vmem>>, vector<8x8x128xf32>,
    %c0_39 = arith.constant 0 : index
    %c0_40 = arith.constant 0 : index
    %c0_41 = arith.constant 0 : index
    %19 = vector.load %arg9[%c0_39, %c0_40, %c0_41] : memref<10x10x128xf32, #tpu.memory_space<vmem>>, vector<8x8x128xf32>
    %20 = vector.shape_cast %19 : vector<8x8x128xf32> to vector<64x128xf32>
    %c0_42 = arith.constant 0 : index
    %c1_43 = arith.constant 1 : index
    %c0_44 = arith.constant 0 : index
    %21 = vector.load %arg9[%c0_42, %c1_43, %c0_44] : memref<10x10x128xf32, #tpu.memory_space<vmem>>, vector<8x8x128xf32>
    %22 = vector.shape_cast %21 : vector<8x8x128xf32> to vector<64x128xf32>
    %c0_45 = arith.constant 0 : index
    %c2 = arith.constant 2 : index
    %c0_46 = arith.constant 0 : index
    %23 = vector.load %arg9[%c0_45, %c2, %c0_46] : memref<10x10x128xf32, #tpu.memory_space<vmem>>, vector<8x8x128xf32>
    %24 = vector.shape_cast %23 : vector<8x8x128xf32> to vector<64x128xf32>
    %c1_47 = arith.constant 1 : index
    %c0_48 = arith.constant 0 : index
    %c0_49 = arith.constant 0 : index
    %25 = vector.load %arg9[%c1_47, %c0_48, %c0_49] : memref<10x10x128xf32, #tpu.memory_space<vmem>>, vector<8x8x128xf32>
    %26 = vector.shape_cast %25 : vector<8x8x128xf32> to vector<64x128xf32>
    %c1_50 = arith.constant 1 : index
    %c1_51 = arith.constant 1 : index
    %c0_52 = arith.constant 0 : index
    %27 = vector.load %arg9[%c1_50, %c1_51, %c0_52] : memref<10x10x128xf32, #tpu.memory_space<vmem>>, vector<8x8x128xf32>
    %28 = vector.shape_cast %27 : vector<8x8x128xf32> to vector<64x128xf32>
    %c1_53 = arith.constant 1 : index
    %c2_54 = arith.constant 2 : index
    %c0_55 = arith.constant 0 : index
    %29 = vector.load %arg9[%c1_53, %c2_54, %c0_55] : memref<10x10x128xf32, #tpu.memory_space<vmem>>, vector<8x8x128xf32>
    %30 = vector.shape_cast %29 : vector<8x8x128xf32> to vector<64x128xf32>
    %c2_56 = arith.constant 2 : index
    %c0_57 = arith.constant 0 : index
    %c0_58 = arith.constant 0 : index
    %31 = vector.load %arg9[%c2_56, %c0_57, %c0_58] : memref<10x10x128xf32, #tpu.memory_space<vmem>>, vector<8x8x128xf32>
    %32 = vector.shape_cast %31 : vector<8x8x128xf32> to vector<64x128xf32>
    %c2_59 = arith.constant 2 : index
    %c1_60 = arith.constant 1 : index
    %c0_61 = arith.constant 0 : index
    %33 = vector.load %arg9[%c2_59, %c1_60, %c0_61] : memref<10x10x128xf32, #tpu.memory_space<vmem>>, vector<8x8x128xf32>
    %34 = vector.shape_cast %33 : vector<8x8x128xf32> to vector<64x128xf32>
    %c2_62 = arith.constant 2 : index
    %c2_63 = arith.constant 2 : index
    %c0_64 = arith.constant 0 : index
    %35 = vector.load %arg9[%c2_62, %c2_63, %c0_64] : memref<10x10x128xf32, #tpu.memory_space<vmem>>, vector<8x8x128xf32>
    %36 = vector.shape_cast %35 : vector<8x8x128xf32> to vector<64x128xf32>
    %37 = tpu.concatenate %20, %22, %24, %26, %28, %30, %32, %34, %36 in 1 : vector<64x128xf32>, vector<64x128xf32>, vector<64x128xf32>, vector<64x128xf32>, vector<64x128xf32>, vector<64x128xf32>, vector<64x128xf32>, vector<64x128xf32>, vector<64x128xf32> -> vector<64x1152xf32>
    %38 = arith.truncf %37 : vector<64x1152xf32> to vector<64x1152xbf16>
    %c0_65 = arith.constant 0 : index
    %c0_66 = arith.constant 0 : index
    %39 = vector.load %arg2[%c0_65, %c0_66] : memref<1152x128xbf16, #tpu.memory_space<vmem>>, vector<1152x128xbf16>
    %cst_67 = arith.constant dense<0.000000e+00> : vector<64x128xf32>
    %40 = tpu.matmul %38, %39, %cst_67 {dimension_numbers = #tpu.dot_dimension_numbers<[1], [0], [0], [1], [0, 0, 1, 1], [], []>} : vector<64x1152xbf16>, vector<1152x128xbf16>, vector<64x128xf32> -> vector<64x128xf32>
    %c0_68 = arith.constant 0 : index
    %c0_69 = arith.constant 0 : index
    %41 = vector.load %arg3[%c0_68, %c0_69] : memref<1x128xf32, #tpu.memory_space<vmem>>, vector<1x128xf32>
    %42 = vector.broadcast %41 : vector<1x128xf32> to vector<64x128xf32>
    %43 = arith.addf %40, %42 : vector<64x128xf32>
    %cst_70 = arith.constant 0.000000e+00 : f32
    %44 = vector.broadcast %cst_70 : f32 to vector<64x128xf32>
    %45 = arith.cmpf oge, %43, %44 : vector<64x128xf32>
    %cst_71 = arith.constant 1.000000e-01 : f32
    %46 = vector.broadcast %cst_71 : f32 to vector<64x128xf32>
    %47 = arith.mulf %46, %43 : vector<64x128xf32>
    %48 = arith.select %45, %43, %47 : vector<64x128xi1>, vector<64x128xf32>
    %49 = vector.shape_cast %48 : vector<64x128xf32> to vector<8x8x128xf32>
    %c1_72 = arith.constant 1 : index
    %c1_73 = arith.constant 1 : index
    %c0_74 = arith.constant 0 : index
    %50 = vector.load %arg9[%c1_72, %c1_73, %c0_74] : memref<10x10x128xf32, #tpu.memory_space<vmem>>, vector<8x8x128xf32>
    tpu.vector_store %arg9[%c1_72, %c1_73, %c0_74], %49 {strides = array<i32>} : memref<10x10x128xf32, #tpu.memory_space<vmem>>, vector<8x8x128xf32>,
    %c0_75 = arith.constant 0 : index
    %c0_76 = arith.constant 0 : index
    %c0_77 = arith.constant 0 : index
    %51 = vector.load %arg9[%c0_75, %c0_76, %c0_77] : memref<10x10x128xf32, #tpu.memory_space<vmem>>, vector<8x8x128xf32>
    %52 = vector.shape_cast %51 : vector<8x8x128xf32> to vector<64x128xf32>
    %c0_78 = arith.constant 0 : index
    %c1_79 = arith.constant 1 : index
    %c0_80 = arith.constant 0 : index
    %53 = vector.load %arg9[%c0_78, %c1_79, %c0_80] : memref<10x10x128xf32, #tpu.memory_space<vmem>>, vector<8x8x128xf32>
    %54 = vector.shape_cast %53 : vector<8x8x128xf32> to vector<64x128xf32>
    %c0_81 = arith.constant 0 : index
    %c2_82 = arith.constant 2 : index
    %c0_83 = arith.constant 0 : index
    %55 = vector.load %arg9[%c0_81, %c2_82, %c0_83] : memref<10x10x128xf32, #tpu.memory_space<vmem>>, vector<8x8x128xf32>
    %56 = vector.shape_cast %55 : vector<8x8x128xf32> to vector<64x128xf32>
    %c1_84 = arith.constant 1 : index
    %c0_85 = arith.constant 0 : index
    %c0_86 = arith.constant 0 : index
    %57 = vector.load %arg9[%c1_84, %c0_85, %c0_86] : memref<10x10x128xf32, #tpu.memory_space<vmem>>, vector<8x8x128xf32>
    %58 = vector.shape_cast %57 : vector<8x8x128xf32> to vector<64x128xf32>
    %c1_87 = arith.constant 1 : index
    %c1_88 = arith.constant 1 : index
    %c0_89 = arith.constant 0 : index
    %59 = vector.load %arg9[%c1_87, %c1_88, %c0_89] : memref<10x10x128xf32, #tpu.memory_space<vmem>>, vector<8x8x128xf32>
    %60 = vector.shape_cast %59 : vector<8x8x128xf32> to vector<64x128xf32>
    %c1_90 = arith.constant 1 : index
    %c2_91 = arith.constant 2 : index
    %c0_92 = arith.constant 0 : index
    %61 = vector.load %arg9[%c1_90, %c2_91, %c0_92] : memref<10x10x128xf32, #tpu.memory_space<vmem>>, vector<8x8x128xf32>
    %62 = vector.shape_cast %61 : vector<8x8x128xf32> to vector<64x128xf32>
    %c2_93 = arith.constant 2 : index
    %c0_94 = arith.constant 0 : index
    %c0_95 = arith.constant 0 : index
    %63 = vector.load %arg9[%c2_93, %c0_94, %c0_95] : memref<10x10x128xf32, #tpu.memory_space<vmem>>, vector<8x8x128xf32>
    %64 = vector.shape_cast %63 : vector<8x8x128xf32> to vector<64x128xf32>
    %c2_96 = arith.constant 2 : index
    %c1_97 = arith.constant 1 : index
    %c0_98 = arith.constant 0 : index
    %65 = vector.load %arg9[%c2_96, %c1_97, %c0_98] : memref<10x10x128xf32, #tpu.memory_space<vmem>>, vector<8x8x128xf32>
    %66 = vector.shape_cast %65 : vector<8x8x128xf32> to vector<64x128xf32>
    %c2_99 = arith.constant 2 : index
    %c2_100 = arith.constant 2 : index
    %c0_101 = arith.constant 0 : index
    %67 = vector.load %arg9[%c2_99, %c2_100, %c0_101] : memref<10x10x128xf32, #tpu.memory_space<vmem>>, vector<8x8x128xf32>
    %68 = vector.shape_cast %67 : vector<8x8x128xf32> to vector<64x128xf32>
    %69 = tpu.concatenate %52, %54, %56, %58, %60, %62, %64, %66, %68 in 1 : vector<64x128xf32>, vector<64x128xf32>, vector<64x128xf32>, vector<64x128xf32>, vector<64x128xf32>, vector<64x128xf32>, vector<64x128xf32>, vector<64x128xf32>, vector<64x128xf32> -> vector<64x1152xf32>
    %70 = arith.truncf %69 : vector<64x1152xf32> to vector<64x1152xbf16>
    %c0_102 = arith.constant 0 : index
    %c0_103 = arith.constant 0 : index
    %71 = vector.load %arg4[%c0_102, %c0_103] : memref<1152x128xbf16, #tpu.memory_space<vmem>>, vector<1152x128xbf16>
    %cst_104 = arith.constant dense<0.000000e+00> : vector<64x128xf32>
    %72 = tpu.matmul %70, %71, %cst_104 {dimension_numbers = #tpu.dot_dimension_numbers<[1], [0], [0], [1], [0, 0, 1, 1], [], []>} : vector<64x1152xbf16>, vector<1152x128xbf16>, vector<64x128xf32> -> vector<64x128xf32>
    %c0_105 = arith.constant 0 : index
    %c0_106 = arith.constant 0 : index
    %73 = vector.load %arg5[%c0_105, %c0_106] : memref<1x128xf32, #tpu.memory_space<vmem>>, vector<1x128xf32>
    %74 = vector.broadcast %73 : vector<1x128xf32> to vector<64x128xf32>
    %75 = arith.addf %72, %74 : vector<64x128xf32>
    %cst_107 = arith.constant 0.000000e+00 : f32
    %76 = vector.broadcast %cst_107 : f32 to vector<64x128xf32>
    %77 = arith.cmpf oge, %75, %76 : vector<64x128xf32>
    %cst_108 = arith.constant 1.000000e-01 : f32
    %78 = vector.broadcast %cst_108 : f32 to vector<64x128xf32>
    %79 = arith.mulf %78, %75 : vector<64x128xf32>
    %80 = arith.select %77, %75, %79 : vector<64x128xi1>, vector<64x128xf32>
    %81 = vector.shape_cast %80 : vector<64x128xf32> to vector<8x8x128xf32>
    %c1_109 = arith.constant 1 : index
    %c1_110 = arith.constant 1 : index
    %c0_111 = arith.constant 0 : index
    %82 = vector.load %arg9[%c1_109, %c1_110, %c0_111] : memref<10x10x128xf32, #tpu.memory_space<vmem>>, vector<8x8x128xf32>
    tpu.vector_store %arg9[%c1_109, %c1_110, %c0_111], %81 {strides = array<i32>} : memref<10x10x128xf32, #tpu.memory_space<vmem>>, vector<8x8x128xf32>,
    %c0_112 = arith.constant 0 : index
    %c0_113 = arith.constant 0 : index
    %c0_114 = arith.constant 0 : index
    %83 = vector.load %arg9[%c0_112, %c0_113, %c0_114] : memref<10x10x128xf32, #tpu.memory_space<vmem>>, vector<8x8x128xf32>
    %84 = vector.shape_cast %83 : vector<8x8x128xf32> to vector<64x128xf32>
    %c0_115 = arith.constant 0 : index
    %c1_116 = arith.constant 1 : index
    %c0_117 = arith.constant 0 : index
    %85 = vector.load %arg9[%c0_115, %c1_116, %c0_117] : memref<10x10x128xf32, #tpu.memory_space<vmem>>, vector<8x8x128xf32>
    %86 = vector.shape_cast %85 : vector<8x8x128xf32> to vector<64x128xf32>
    %c1_118 = arith.constant 1 : index
    %c0_119 = arith.constant 0 : index
    %c0_120 = arith.constant 0 : index
    %87 = vector.load %arg9[%c1_118, %c0_119, %c0_120] : memref<10x10x128xf32, #tpu.memory_space<vmem>>, vector<8x8x128xf32>
    %88 = vector.shape_cast %87 : vector<8x8x128xf32> to vector<64x128xf32>
    %c1_121 = arith.constant 1 : index
    %c1_122 = arith.constant 1 : index
    %c0_123 = arith.constant 0 : index
    %89 = vector.load %arg9[%c1_121, %c1_122, %c0_123] : memref<10x10x128xf32, #tpu.memory_space<vmem>>, vector<8x8x128xf32>
    %90 = vector.shape_cast %89 : vector<8x8x128xf32> to vector<64x128xf32>
    %91 = tpu.concatenate %84, %86, %88, %90 in 1 : vector<64x128xf32>, vector<64x128xf32>, vector<64x128xf32>, vector<64x128xf32> -> vector<64x512xf32>
    %92 = arith.truncf %91 : vector<64x512xf32> to vector<64x512xbf16>
    %c0_124 = arith.constant 0 : index
    %c0_125 = arith.constant 0 : index
    %c0_126 = arith.constant 0 : index
    %93 = vector.load %arg6[%c0_124, %c0_125, %c0_126] : memref<4x512x64xbf16, #tpu.memory_space<vmem>>, vector<1x512x64xbf16>
    %94 = vector.shape_cast %93 : vector<1x512x64xbf16> to vector<512x64xbf16>
    %cst_127 = arith.constant dense<0.000000e+00> : vector<64x64xf32>
    %95 = tpu.matmul %92, %94, %cst_127 {dimension_numbers = #tpu.dot_dimension_numbers<[1], [0], [0], [1], [0, 0, 1, 1], [], []>} : vector<64x512xbf16>, vector<512x64xbf16>, vector<64x64xf32> -> vector<64x64xf32>
    %cst_128 = arith.constant 0.000000e+00 : f32
    %96 = vector.broadcast %cst_128 : f32 to vector<64x64xf32>
    %97 = arith.cmpf oge, %95, %96 : vector<64x64xf32>
    %cst_129 = arith.constant 1.000000e-01 : f32
    %98 = vector.broadcast %cst_129 : f32 to vector<64x64xf32>
    %99 = arith.mulf %98, %95 : vector<64x64xf32>
    %100 = arith.select %97, %95, %99 : vector<64x64xi1>, vector<64x64xf32>
    %101 = vector.shape_cast %100 : vector<64x64xf32> to vector<8x8x64xf32>
    %c0_130 = arith.constant 0 : index
    %c1_131 = arith.constant 1 : index
    %c1_132 = arith.constant 1 : index
    %c0_133 = arith.constant 0 : index
    %102 = vector.load %arg10[%c0_130, %c1_131, %c1_132, %c0_133] : memref<4x10x10x64xf32, #tpu.memory_space<vmem>>, vector<1x8x8x64xf32>
    %103 = vector.shape_cast %102 : vector<1x8x8x64xf32> to vector<8x8x64xf32>
    %104 = vector.shape_cast %101 : vector<8x8x64xf32> to vector<1x8x8x64xf32>
    tpu.vector_store %arg10[%c0_130, %c1_131, %c1_132, %c0_133], %104 {strides = array<i32>} : memref<4x10x10x64xf32, #tpu.memory_space<vmem>>, vector<1x8x8x64xf32>,
    %c0_134 = arith.constant 0 : index
    %c1_135 = arith.constant 1 : index
    %c0_136 = arith.constant 0 : index
    %105 = vector.load %arg9[%c0_134, %c1_135, %c0_136] : memref<10x10x128xf32, #tpu.memory_space<vmem>>, vector<8x8x128xf32>
    %106 = vector.shape_cast %105 : vector<8x8x128xf32> to vector<64x128xf32>
    %c0_137 = arith.constant 0 : index
    %c2_138 = arith.constant 2 : index
    %c0_139 = arith.constant 0 : index
    %107 = vector.load %arg9[%c0_137, %c2_138, %c0_139] : memref<10x10x128xf32, #tpu.memory_space<vmem>>, vector<8x8x128xf32>
    %108 = vector.shape_cast %107 : vector<8x8x128xf32> to vector<64x128xf32>
    %c1_140 = arith.constant 1 : index
    %c1_141 = arith.constant 1 : index
    %c0_142 = arith.constant 0 : index
    %109 = vector.load %arg9[%c1_140, %c1_141, %c0_142] : memref<10x10x128xf32, #tpu.memory_space<vmem>>, vector<8x8x128xf32>
    %110 = vector.shape_cast %109 : vector<8x8x128xf32> to vector<64x128xf32>
    %c1_143 = arith.constant 1 : index
    %c2_144 = arith.constant 2 : index
    %c0_145 = arith.constant 0 : index
    %111 = vector.load %arg9[%c1_143, %c2_144, %c0_145] : memref<10x10x128xf32, #tpu.memory_space<vmem>>, vector<8x8x128xf32>
    %112 = vector.shape_cast %111 : vector<8x8x128xf32> to vector<64x128xf32>
    %113 = tpu.concatenate %106, %108, %110, %112 in 1 : vector<64x128xf32>, vector<64x128xf32>, vector<64x128xf32>, vector<64x128xf32> -> vector<64x512xf32>
    %114 = arith.truncf %113 : vector<64x512xf32> to vector<64x512xbf16>
    %c1_146 = arith.constant 1 : index
    %c0_147 = arith.constant 0 : index
    %c0_148 = arith.constant 0 : index
    %115 = vector.load %arg6[%c1_146, %c0_147, %c0_148] : memref<4x512x64xbf16, #tpu.memory_space<vmem>>, vector<1x512x64xbf16>
    %116 = vector.shape_cast %115 : vector<1x512x64xbf16> to vector<512x64xbf16>
    %cst_149 = arith.constant dense<0.000000e+00> : vector<64x64xf32>
    %117 = tpu.matmul %114, %116, %cst_149 {dimension_numbers = #tpu.dot_dimension_numbers<[1], [0], [0], [1], [0, 0, 1, 1], [], []>} : vector<64x512xbf16>, vector<512x64xbf16>, vector<64x64xf32> -> vector<64x64xf32>
    %cst_150 = arith.constant 0.000000e+00 : f32
    %118 = vector.broadcast %cst_150 : f32 to vector<64x64xf32>
    %119 = arith.cmpf oge, %117, %118 : vector<64x64xf32>
    %cst_151 = arith.constant 1.000000e-01 : f32
    %120 = vector.broadcast %cst_151 : f32 to vector<64x64xf32>
    %121 = arith.mulf %120, %117 : vector<64x64xf32>
    %122 = arith.select %119, %117, %121 : vector<64x64xi1>, vector<64x64xf32>
    %123 = vector.shape_cast %122 : vector<64x64xf32> to vector<8x8x64xf32>
    %c1_152 = arith.constant 1 : index
    %c1_153 = arith.constant 1 : index
    %c1_154 = arith.constant 1 : index
    %c0_155 = arith.constant 0 : index
    %124 = vector.load %arg10[%c1_152, %c1_153, %c1_154, %c0_155] : memref<4x10x10x64xf32, #tpu.memory_space<vmem>>, vector<1x8x8x64xf32>
    %125 = vector.shape_cast %124 : vector<1x8x8x64xf32> to vector<8x8x64xf32>
    %126 = vector.shape_cast %123 : vector<8x8x64xf32> to vector<1x8x8x64xf32>
    tpu.vector_store %arg10[%c1_152, %c1_153, %c1_154, %c0_155], %126 {strides = array<i32>} : memref<4x10x10x64xf32, #tpu.memory_space<vmem>>, vector<1x8x8x64xf32>,
    %c1_156 = arith.constant 1 : index
    %c0_157 = arith.constant 0 : index
    %c0_158 = arith.constant 0 : index
    %127 = vector.load %arg9[%c1_156, %c0_157, %c0_158] : memref<10x10x128xf32, #tpu.memory_space<vmem>>, vector<8x8x128xf32>
    %128 = vector.shape_cast %127 : vector<8x8x128xf32> to vector<64x128xf32>
    %c1_159 = arith.constant 1 : index
    %c1_160 = arith.constant 1 : index
    %c0_161 = arith.constant 0 : index
    %129 = vector.load %arg9[%c1_159, %c1_160, %c0_161] : memref<10x10x128xf32, #tpu.memory_space<vmem>>, vector<8x8x128xf32>
    %130 = vector.shape_cast %129 : vector<8x8x128xf32> to vector<64x128xf32>
    %c2_162 = arith.constant 2 : index
    %c0_163 = arith.constant 0 : index
    %c0_164 = arith.constant 0 : index
    %131 = vector.load %arg9[%c2_162, %c0_163, %c0_164] : memref<10x10x128xf32, #tpu.memory_space<vmem>>, vector<8x8x128xf32>
    %132 = vector.shape_cast %131 : vector<8x8x128xf32> to vector<64x128xf32>
    %c2_165 = arith.constant 2 : index
    %c1_166 = arith.constant 1 : index
    %c0_167 = arith.constant 0 : index
    %133 = vector.load %arg9[%c2_165, %c1_166, %c0_167] : memref<10x10x128xf32, #tpu.memory_space<vmem>>, vector<8x8x128xf32>
    %134 = vector.shape_cast %133 : vector<8x8x128xf32> to vector<64x128xf32>
    %135 = tpu.concatenate %128, %130, %132, %134 in 1 : vector<64x128xf32>, vector<64x128xf32>, vector<64x128xf32>, vector<64x128xf32> -> vector<64x512xf32>
    %136 = arith.truncf %135 : vector<64x512xf32> to vector<64x512xbf16>
    %c2_168 = arith.constant 2 : index
    %c0_169 = arith.constant 0 : index
    %c0_170 = arith.constant 0 : index
    %137 = vector.load %arg6[%c2_168, %c0_169, %c0_170] : memref<4x512x64xbf16, #tpu.memory_space<vmem>>, vector<1x512x64xbf16>
    %138 = vector.shape_cast %137 : vector<1x512x64xbf16> to vector<512x64xbf16>
    %cst_171 = arith.constant dense<0.000000e+00> : vector<64x64xf32>
    %139 = tpu.matmul %136, %138, %cst_171 {dimension_numbers = #tpu.dot_dimension_numbers<[1], [0], [0], [1], [0, 0, 1, 1], [], []>} : vector<64x512xbf16>, vector<512x64xbf16>, vector<64x64xf32> -> vector<64x64xf32>
    %cst_172 = arith.constant 0.000000e+00 : f32
    %140 = vector.broadcast %cst_172 : f32 to vector<64x64xf32>
    %141 = arith.cmpf oge, %139, %140 : vector<64x64xf32>
    %cst_173 = arith.constant 1.000000e-01 : f32
    %142 = vector.broadcast %cst_173 : f32 to vector<64x64xf32>
    %143 = arith.mulf %142, %139 : vector<64x64xf32>
    %144 = arith.select %141, %139, %143 : vector<64x64xi1>, vector<64x64xf32>
    %145 = vector.shape_cast %144 : vector<64x64xf32> to vector<8x8x64xf32>
    %c2_174 = arith.constant 2 : index
    %c1_175 = arith.constant 1 : index
    %c1_176 = arith.constant 1 : index
    %c0_177 = arith.constant 0 : index
    %146 = vector.load %arg10[%c2_174, %c1_175, %c1_176, %c0_177] : memref<4x10x10x64xf32, #tpu.memory_space<vmem>>, vector<1x8x8x64xf32>
    %147 = vector.shape_cast %146 : vector<1x8x8x64xf32> to vector<8x8x64xf32>
    %148 = vector.shape_cast %145 : vector<8x8x64xf32> to vector<1x8x8x64xf32>
    tpu.vector_store %arg10[%c2_174, %c1_175, %c1_176, %c0_177], %148 {strides = array<i32>} : memref<4x10x10x64xf32, #tpu.memory_space<vmem>>, vector<1x8x8x64xf32>,
    %c1_178 = arith.constant 1 : index
    %c1_179 = arith.constant 1 : index
    %c0_180 = arith.constant 0 : index
    %149 = vector.load %arg9[%c1_178, %c1_179, %c0_180] : memref<10x10x128xf32, #tpu.memory_space<vmem>>, vector<8x8x128xf32>
    %150 = vector.shape_cast %149 : vector<8x8x128xf32> to vector<64x128xf32>
    %c1_181 = arith.constant 1 : index
    %c2_182 = arith.constant 2 : index
    %c0_183 = arith.constant 0 : index
    %151 = vector.load %arg9[%c1_181, %c2_182, %c0_183] : memref<10x10x128xf32, #tpu.memory_space<vmem>>, vector<8x8x128xf32>
    %152 = vector.shape_cast %151 : vector<8x8x128xf32> to vector<64x128xf32>
    %c2_184 = arith.constant 2 : index
    %c1_185 = arith.constant 1 : index
    %c0_186 = arith.constant 0 : index
    %153 = vector.load %arg9[%c2_184, %c1_185, %c0_186] : memref<10x10x128xf32, #tpu.memory_space<vmem>>, vector<8x8x128xf32>
    %154 = vector.shape_cast %153 : vector<8x8x128xf32> to vector<64x128xf32>
    %c2_187 = arith.constant 2 : index
    %c2_188 = arith.constant 2 : index
    %c0_189 = arith.constant 0 : index
    %155 = vector.load %arg9[%c2_187, %c2_188, %c0_189] : memref<10x10x128xf32, #tpu.memory_space<vmem>>, vector<8x8x128xf32>
    %156 = vector.shape_cast %155 : vector<8x8x128xf32> to vector<64x128xf32>
    %157 = tpu.concatenate %150, %152, %154, %156 in 1 : vector<64x128xf32>, vector<64x128xf32>, vector<64x128xf32>, vector<64x128xf32> -> vector<64x512xf32>
    %158 = arith.truncf %157 : vector<64x512xf32> to vector<64x512xbf16>
    %c3 = arith.constant 3 : index
    %c0_190 = arith.constant 0 : index
    %c0_191 = arith.constant 0 : index
    %159 = vector.load %arg6[%c3, %c0_190, %c0_191] : memref<4x512x64xbf16, #tpu.memory_space<vmem>>, vector<1x512x64xbf16>
    %160 = vector.shape_cast %159 : vector<1x512x64xbf16> to vector<512x64xbf16>
    %cst_192 = arith.constant dense<0.000000e+00> : vector<64x64xf32>
    %161 = tpu.matmul %158, %160, %cst_192 {dimension_numbers = #tpu.dot_dimension_numbers<[1], [0], [0], [1], [0, 0, 1, 1], [], []>} : vector<64x512xbf16>, vector<512x64xbf16>, vector<64x64xf32> -> vector<64x64xf32>
    %cst_193 = arith.constant 0.000000e+00 : f32
    %162 = vector.broadcast %cst_193 : f32 to vector<64x64xf32>
    %163 = arith.cmpf oge, %161, %162 : vector<64x64xf32>
    %cst_194 = arith.constant 1.000000e-01 : f32
    %164 = vector.broadcast %cst_194 : f32 to vector<64x64xf32>
    %165 = arith.mulf %164, %161 : vector<64x64xf32>
    %166 = arith.select %163, %161, %165 : vector<64x64xi1>, vector<64x64xf32>
    %167 = vector.shape_cast %166 : vector<64x64xf32> to vector<8x8x64xf32>
    %c3_195 = arith.constant 3 : index
    %c1_196 = arith.constant 1 : index
    %c1_197 = arith.constant 1 : index
    %c0_198 = arith.constant 0 : index
    %168 = vector.load %arg10[%c3_195, %c1_196, %c1_197, %c0_198] : memref<4x10x10x64xf32, #tpu.memory_space<vmem>>, vector<1x8x8x64xf32>
    %169 = vector.shape_cast %168 : vector<1x8x8x64xf32> to vector<8x8x64xf32>
    %170 = vector.shape_cast %167 : vector<8x8x64xf32> to vector<1x8x8x64xf32>
    tpu.vector_store %arg10[%c3_195, %c1_196, %c1_197, %c0_198], %170 {strides = array<i32>} : memref<4x10x10x64xf32, #tpu.memory_space<vmem>>, vector<1x8x8x64xf32>,
    %c3_199 = arith.constant 3 : index
    %c0_200 = arith.constant 0 : index
    %c0_201 = arith.constant 0 : index
    %c0_202 = arith.constant 0 : index
    %171 = vector.load %arg10[%c3_199, %c0_200, %c0_201, %c0_202] : memref<4x10x10x64xf32, #tpu.memory_space<vmem>>, vector<1x8x8x64xf32>
    %172 = vector.shape_cast %171 : vector<1x8x8x64xf32> to vector<8x8x64xf32>
    %173 = vector.shape_cast %172 : vector<8x8x64xf32> to vector<64x64xf32>
    %c2_203 = arith.constant 2 : index
    %c0_204 = arith.constant 0 : index
    %c1_205 = arith.constant 1 : index
    %c0_206 = arith.constant 0 : index
    %174 = vector.load %arg10[%c2_203, %c0_204, %c1_205, %c0_206] : memref<4x10x10x64xf32, #tpu.memory_space<vmem>>, vector<1x8x8x64xf32>
    %175 = vector.shape_cast %174 : vector<1x8x8x64xf32> to vector<8x8x64xf32>
    %176 = vector.shape_cast %175 : vector<8x8x64xf32> to vector<64x64xf32>
    %c3_207 = arith.constant 3 : index
    %c0_208 = arith.constant 0 : index
    %c1_209 = arith.constant 1 : index
    %c0_210 = arith.constant 0 : index
    %177 = vector.load %arg10[%c3_207, %c0_208, %c1_209, %c0_210] : memref<4x10x10x64xf32, #tpu.memory_space<vmem>>, vector<1x8x8x64xf32>
    %178 = vector.shape_cast %177 : vector<1x8x8x64xf32> to vector<8x8x64xf32>
    %179 = vector.shape_cast %178 : vector<8x8x64xf32> to vector<64x64xf32>
    %c1_211 = arith.constant 1 : index
    %c1_212 = arith.constant 1 : index
    %c0_213 = arith.constant 0 : index
    %c0_214 = arith.constant 0 : index
    %180 = vector.load %arg10[%c1_211, %c1_212, %c0_213, %c0_214] : memref<4x10x10x64xf32, #tpu.memory_space<vmem>>, vector<1x8x8x64xf32>
    %181 = vector.shape_cast %180 : vector<1x8x8x64xf32> to vector<8x8x64xf32>
    %182 = vector.shape_cast %181 : vector<8x8x64xf32> to vector<64x64xf32>
    %c0_215 = arith.constant 0 : index
    %c1_216 = arith.constant 1 : index
    %c1_217 = arith.constant 1 : index
    %c0_218 = arith.constant 0 : index
    %183 = vector.load %arg10[%c0_215, %c1_216, %c1_217, %c0_218] : memref<4x10x10x64xf32, #tpu.memory_space<vmem>>, vector<1x8x8x64xf32>
    %184 = vector.shape_cast %183 : vector<1x8x8x64xf32> to vector<8x8x64xf32>
    %185 = vector.shape_cast %184 : vector<8x8x64xf32> to vector<64x64xf32>
    %c1_219 = arith.constant 1 : index
    %c1_220 = arith.constant 1 : index
    %c1_221 = arith.constant 1 : index
    %c0_222 = arith.constant 0 : index
    %186 = vector.load %arg10[%c1_219, %c1_220, %c1_221, %c0_222] : memref<4x10x10x64xf32, #tpu.memory_space<vmem>>, vector<1x8x8x64xf32>
    %187 = vector.shape_cast %186 : vector<1x8x8x64xf32> to vector<8x8x64xf32>
    %188 = vector.shape_cast %187 : vector<8x8x64xf32> to vector<64x64xf32>
    %c3_223 = arith.constant 3 : index
    %c1_224 = arith.constant 1 : index
    %c0_225 = arith.constant 0 : index
    %c0_226 = arith.constant 0 : index
    %189 = vector.load %arg10[%c3_223, %c1_224, %c0_225, %c0_226] : memref<4x10x10x64xf32, #tpu.memory_space<vmem>>, vector<1x8x8x64xf32>
    %190 = vector.shape_cast %189 : vector<1x8x8x64xf32> to vector<8x8x64xf32>
    %191 = vector.shape_cast %190 : vector<8x8x64xf32> to vector<64x64xf32>
    %c2_227 = arith.constant 2 : index
    %c1_228 = arith.constant 1 : index
    %c1_229 = arith.constant 1 : index
    %c0_230 = arith.constant 0 : index
    %192 = vector.load %arg10[%c2_227, %c1_228, %c1_229, %c0_230] : memref<4x10x10x64xf32, #tpu.memory_space<vmem>>, vector<1x8x8x64xf32>
    %193 = vector.shape_cast %192 : vector<1x8x8x64xf32> to vector<8x8x64xf32>
    %194 = vector.shape_cast %193 : vector<8x8x64xf32> to vector<64x64xf32>
    %c3_231 = arith.constant 3 : index
    %c1_232 = arith.constant 1 : index
    %c1_233 = arith.constant 1 : index
    %c0_234 = arith.constant 0 : index
    %195 = vector.load %arg10[%c3_231, %c1_232, %c1_233, %c0_234] : memref<4x10x10x64xf32, #tpu.memory_space<vmem>>, vector<1x8x8x64xf32>
    %196 = vector.shape_cast %195 : vector<1x8x8x64xf32> to vector<8x8x64xf32>
    %197 = vector.shape_cast %196 : vector<8x8x64xf32> to vector<64x64xf32>
    %198 = tpu.concatenate %173, %176, %179, %182, %185, %188, %191, %194, %197 in 1 : vector<64x64xf32>, vector<64x64xf32>, vector<64x64xf32>, vector<64x64xf32>, vector<64x64xf32>, vector<64x64xf32>, vector<64x64xf32>, vector<64x64xf32>, vector<64x64xf32> -> vector<64x576xf32>
    %c2_235 = arith.constant 2 : index
    %c0_236 = arith.constant 0 : index
    %c1_237 = arith.constant 1 : index
    %c0_238 = arith.constant 0 : index
    %199 = vector.load %arg10[%c2_235, %c0_236, %c1_237, %c0_238] : memref<4x10x10x64xf32, #tpu.memory_space<vmem>>, vector<1x8x8x64xf32>
    %200 = vector.shape_cast %199 : vector<1x8x8x64xf32> to vector<8x8x64xf32>
    %201 = vector.shape_cast %200 : vector<8x8x64xf32> to vector<64x64xf32>
    %c3_239 = arith.constant 3 : index
    %c0_240 = arith.constant 0 : index
    %c1_241 = arith.constant 1 : index
    %c0_242 = arith.constant 0 : index
    %202 = vector.load %arg10[%c3_239, %c0_240, %c1_241, %c0_242] : memref<4x10x10x64xf32, #tpu.memory_space<vmem>>, vector<1x8x8x64xf32>
    %203 = vector.shape_cast %202 : vector<1x8x8x64xf32> to vector<8x8x64xf32>
    %204 = vector.shape_cast %203 : vector<8x8x64xf32> to vector<64x64xf32>
    %c2_243 = arith.constant 2 : index
    %c0_244 = arith.constant 0 : index
    %c2_245 = arith.constant 2 : index
    %c0_246 = arith.constant 0 : index
    %205 = vector.load %arg10[%c2_243, %c0_244, %c2_245, %c0_246] : memref<4x10x10x64xf32, #tpu.memory_space<vmem>>, vector<1x8x8x64xf32>
    %206 = vector.shape_cast %205 : vector<1x8x8x64xf32> to vector<8x8x64xf32>
    %207 = vector.shape_cast %206 : vector<8x8x64xf32> to vector<64x64xf32>
    %c0_247 = arith.constant 0 : index
    %c1_248 = arith.constant 1 : index
    %c1_249 = arith.constant 1 : index
    %c0_250 = arith.constant 0 : index
    %208 = vector.load %arg10[%c0_247, %c1_248, %c1_249, %c0_250] : memref<4x10x10x64xf32, #tpu.memory_space<vmem>>, vector<1x8x8x64xf32>
    %209 = vector.shape_cast %208 : vector<1x8x8x64xf32> to vector<8x8x64xf32>
    %210 = vector.shape_cast %209 : vector<8x8x64xf32> to vector<64x64xf32>
    %c1_251 = arith.constant 1 : index
    %c1_252 = arith.constant 1 : index
    %c1_253 = arith.constant 1 : index
    %c0_254 = arith.constant 0 : index
    %211 = vector.load %arg10[%c1_251, %c1_252, %c1_253, %c0_254] : memref<4x10x10x64xf32, #tpu.memory_space<vmem>>, vector<1x8x8x64xf32>
    %212 = vector.shape_cast %211 : vector<1x8x8x64xf32> to vector<8x8x64xf32>
    %213 = vector.shape_cast %212 : vector<8x8x64xf32> to vector<64x64xf32>
    %c0_255 = arith.constant 0 : index
    %c1_256 = arith.constant 1 : index
    %c2_257 = arith.constant 2 : index
    %c0_258 = arith.constant 0 : index
    %214 = vector.load %arg10[%c0_255, %c1_256, %c2_257, %c0_258] : memref<4x10x10x64xf32, #tpu.memory_space<vmem>>, vector<1x8x8x64xf32>
    %215 = vector.shape_cast %214 : vector<1x8x8x64xf32> to vector<8x8x64xf32>
    %216 = vector.shape_cast %215 : vector<8x8x64xf32> to vector<64x64xf32>
    %c2_259 = arith.constant 2 : index
    %c1_260 = arith.constant 1 : index
    %c1_261 = arith.constant 1 : index
    %c0_262 = arith.constant 0 : index
    %217 = vector.load %arg10[%c2_259, %c1_260, %c1_261, %c0_262] : memref<4x10x10x64xf32, #tpu.memory_space<vmem>>, vector<1x8x8x64xf32>
    %218 = vector.shape_cast %217 : vector<1x8x8x64xf32> to vector<8x8x64xf32>
    %219 = vector.shape_cast %218 : vector<8x8x64xf32> to vector<64x64xf32>
    %c3_263 = arith.constant 3 : index
    %c1_264 = arith.constant 1 : index
    %c1_265 = arith.constant 1 : index
    %c0_266 = arith.constant 0 : index
    %220 = vector.load %arg10[%c3_263, %c1_264, %c1_265, %c0_266] : memref<4x10x10x64xf32, #tpu.memory_space<vmem>>, vector<1x8x8x64xf32>
    %221 = vector.shape_cast %220 : vector<1x8x8x64xf32> to vector<8x8x64xf32>
    %222 = vector.shape_cast %221 : vector<8x8x64xf32> to vector<64x64xf32>
    %c2_267 = arith.constant 2 : index
    %c1_268 = arith.constant 1 : index
    %c2_269 = arith.constant 2 : index
    %c0_270 = arith.constant 0 : index
    %223 = vector.load %arg10[%c2_267, %c1_268, %c2_269, %c0_270] : memref<4x10x10x64xf32, #tpu.memory_space<vmem>>, vector<1x8x8x64xf32>
    %224 = vector.shape_cast %223 : vector<1x8x8x64xf32> to vector<8x8x64xf32>
    %225 = vector.shape_cast %224 : vector<8x8x64xf32> to vector<64x64xf32>
    %226 = tpu.concatenate %201, %204, %207, %210, %213, %216, %219, %222, %225 in 1 : vector<64x64xf32>, vector<64x64xf32>, vector<64x64xf32>, vector<64x64xf32>, vector<64x64xf32>, vector<64x64xf32>, vector<64x64xf32>, vector<64x64xf32>, vector<64x64xf32> -> vector<64x576xf32>
    %c1_271 = arith.constant 1 : index
    %c1_272 = arith.constant 1 : index
    %c0_273 = arith.constant 0 : index
    %c0_274 = arith.constant 0 : index
    %227 = vector.load %arg10[%c1_271, %c1_272, %c0_273, %c0_274] : memref<4x10x10x64xf32, #tpu.memory_space<vmem>>, vector<1x8x8x64xf32>
    %228 = vector.shape_cast %227 : vector<1x8x8x64xf32> to vector<8x8x64xf32>
    %229 = vector.shape_cast %228 : vector<8x8x64xf32> to vector<64x64xf32>
    %c0_275 = arith.constant 0 : index
    %c1_276 = arith.constant 1 : index
    %c1_277 = arith.constant 1 : index
    %c0_278 = arith.constant 0 : index
    %230 = vector.load %arg10[%c0_275, %c1_276, %c1_277, %c0_278] : memref<4x10x10x64xf32, #tpu.memory_space<vmem>>, vector<1x8x8x64xf32>
    %231 = vector.shape_cast %230 : vector<1x8x8x64xf32> to vector<8x8x64xf32>
    %232 = vector.shape_cast %231 : vector<8x8x64xf32> to vector<64x64xf32>
    %c1_279 = arith.constant 1 : index
    %c1_280 = arith.constant 1 : index
    %c1_281 = arith.constant 1 : index
    %c0_282 = arith.constant 0 : index
    %233 = vector.load %arg10[%c1_279, %c1_280, %c1_281, %c0_282] : memref<4x10x10x64xf32, #tpu.memory_space<vmem>>, vector<1x8x8x64xf32>
    %234 = vector.shape_cast %233 : vector<1x8x8x64xf32> to vector<8x8x64xf32>
    %235 = vector.shape_cast %234 : vector<8x8x64xf32> to vector<64x64xf32>
    %c3_283 = arith.constant 3 : index
    %c1_284 = arith.constant 1 : index
    %c0_285 = arith.constant 0 : index
    %c0_286 = arith.constant 0 : index
    %236 = vector.load %arg10[%c3_283, %c1_284, %c0_285, %c0_286] : memref<4x10x10x64xf32, #tpu.memory_space<vmem>>, vector<1x8x8x64xf32>
    %237 = vector.shape_cast %236 : vector<1x8x8x64xf32> to vector<8x8x64xf32>
    %238 = vector.shape_cast %237 : vector<8x8x64xf32> to vector<64x64xf32>
    %c2_287 = arith.constant 2 : index
    %c1_288 = arith.constant 1 : index
    %c1_289 = arith.constant 1 : index
    %c0_290 = arith.constant 0 : index
    %239 = vector.load %arg10[%c2_287, %c1_288, %c1_289, %c0_290] : memref<4x10x10x64xf32, #tpu.memory_space<vmem>>, vector<1x8x8x64xf32>
    %240 = vector.shape_cast %239 : vector<1x8x8x64xf32> to vector<8x8x64xf32>
    %241 = vector.shape_cast %240 : vector<8x8x64xf32> to vector<64x64xf32>
    %c3_291 = arith.constant 3 : index
    %c1_292 = arith.constant 1 : index
    %c1_293 = arith.constant 1 : index
    %c0_294 = arith.constant 0 : index
    %242 = vector.load %arg10[%c3_291, %c1_292, %c1_293, %c0_294] : memref<4x10x10x64xf32, #tpu.memory_space<vmem>>, vector<1x8x8x64xf32>
    %243 = vector.shape_cast %242 : vector<1x8x8x64xf32> to vector<8x8x64xf32>
    %244 = vector.shape_cast %243 : vector<8x8x64xf32> to vector<64x64xf32>
    %c1_295 = arith.constant 1 : index
    %c2_296 = arith.constant 2 : index
    %c0_297 = arith.constant 0 : index
    %c0_298 = arith.constant 0 : index
    %245 = vector.load %arg10[%c1_295, %c2_296, %c0_297, %c0_298] : memref<4x10x10x64xf32, #tpu.memory_space<vmem>>, vector<1x8x8x64xf32>
    %246 = vector.shape_cast %245 : vector<1x8x8x64xf32> to vector<8x8x64xf32>
    %247 = vector.shape_cast %246 : vector<8x8x64xf32> to vector<64x64xf32>
    %c0_299 = arith.constant 0 : index
    %c2_300 = arith.constant 2 : index
    %c1_301 = arith.constant 1 : index
    %c0_302 = arith.constant 0 : index
    %248 = vector.load %arg10[%c0_299, %c2_300, %c1_301, %c0_302] : memref<4x10x10x64xf32, #tpu.memory_space<vmem>>, vector<1x8x8x64xf32>
    %249 = vector.shape_cast %248 : vector<1x8x8x64xf32> to vector<8x8x64xf32>
    %250 = vector.shape_cast %249 : vector<8x8x64xf32> to vector<64x64xf32>
    %c1_303 = arith.constant 1 : index
    %c2_304 = arith.constant 2 : index
    %c1_305 = arith.constant 1 : index
    %c0_306 = arith.constant 0 : index
    %251 = vector.load %arg10[%c1_303, %c2_304, %c1_305, %c0_306] : memref<4x10x10x64xf32, #tpu.memory_space<vmem>>, vector<1x8x8x64xf32>
    %252 = vector.shape_cast %251 : vector<1x8x8x64xf32> to vector<8x8x64xf32>
    %253 = vector.shape_cast %252 : vector<8x8x64xf32> to vector<64x64xf32>
    %254 = tpu.concatenate %229, %232, %235, %238, %241, %244, %247, %250, %253 in 1 : vector<64x64xf32>, vector<64x64xf32>, vector<64x64xf32>, vector<64x64xf32>, vector<64x64xf32>, vector<64x64xf32>, vector<64x64xf32>, vector<64x64xf32>, vector<64x64xf32> -> vector<64x576xf32>
    %c0_307 = arith.constant 0 : index
    %c1_308 = arith.constant 1 : index
    %c1_309 = arith.constant 1 : index
    %c0_310 = arith.constant 0 : index
    %255 = vector.load %arg10[%c0_307, %c1_308, %c1_309, %c0_310] : memref<4x10x10x64xf32, #tpu.memory_space<vmem>>, vector<1x8x8x64xf32>
    %256 = vector.shape_cast %255 : vector<1x8x8x64xf32> to vector<8x8x64xf32>
    %257 = vector.shape_cast %256 : vector<8x8x64xf32> to vector<64x64xf32>
    %c1_311 = arith.constant 1 : index
    %c1_312 = arith.constant 1 : index
    %c1_313 = arith.constant 1 : index
    %c0_314 = arith.constant 0 : index
    %258 = vector.load %arg10[%c1_311, %c1_312, %c1_313, %c0_314] : memref<4x10x10x64xf32, #tpu.memory_space<vmem>>, vector<1x8x8x64xf32>
    %259 = vector.shape_cast %258 : vector<1x8x8x64xf32> to vector<8x8x64xf32>
    %260 = vector.shape_cast %259 : vector<8x8x64xf32> to vector<64x64xf32>
    %c0_315 = arith.constant 0 : index
    %c1_316 = arith.constant 1 : index
    %c2_317 = arith.constant 2 : index
    %c0_318 = arith.constant 0 : index
    %261 = vector.load %arg10[%c0_315, %c1_316, %c2_317, %c0_318] : memref<4x10x10x64xf32, #tpu.memory_space<vmem>>, vector<1x8x8x64xf32>
    %262 = vector.shape_cast %261 : vector<1x8x8x64xf32> to vector<8x8x64xf32>
    %263 = vector.shape_cast %262 : vector<8x8x64xf32> to vector<64x64xf32>
    %c2_319 = arith.constant 2 : index
    %c1_320 = arith.constant 1 : index
    %c1_321 = arith.constant 1 : index
    %c0_322 = arith.constant 0 : index
    %264 = vector.load %arg10[%c2_319, %c1_320, %c1_321, %c0_322] : memref<4x10x10x64xf32, #tpu.memory_space<vmem>>, vector<1x8x8x64xf32>
    %265 = vector.shape_cast %264 : vector<1x8x8x64xf32> to vector<8x8x64xf32>
    %266 = vector.shape_cast %265 : vector<8x8x64xf32> to vector<64x64xf32>
    %c3_323 = arith.constant 3 : index
    %c1_324 = arith.constant 1 : index
    %c1_325 = arith.constant 1 : index
    %c0_326 = arith.constant 0 : index
    %267 = vector.load %arg10[%c3_323, %c1_324, %c1_325, %c0_326] : memref<4x10x10x64xf32, #tpu.memory_space<vmem>>, vector<1x8x8x64xf32>
    %268 = vector.shape_cast %267 : vector<1x8x8x64xf32> to vector<8x8x64xf32>
    %269 = vector.shape_cast %268 : vector<8x8x64xf32> to vector<64x64xf32>
    %c2_327 = arith.constant 2 : index
    %c1_328 = arith.constant 1 : index
    %c2_329 = arith.constant 2 : index
    %c0_330 = arith.constant 0 : index
    %270 = vector.load %arg10[%c2_327, %c1_328, %c2_329, %c0_330] : memref<4x10x10x64xf32, #tpu.memory_space<vmem>>, vector<1x8x8x64xf32>
    %271 = vector.shape_cast %270 : vector<1x8x8x64xf32> to vector<8x8x64xf32>
    %272 = vector.shape_cast %271 : vector<8x8x64xf32> to vector<64x64xf32>
    %c0_331 = arith.constant 0 : index
    %c2_332 = arith.constant 2 : index
    %c1_333 = arith.constant 1 : index
    %c0_334 = arith.constant 0 : index
    %273 = vector.load %arg10[%c0_331, %c2_332, %c1_333, %c0_334] : memref<4x10x10x64xf32, #tpu.memory_space<vmem>>, vector<1x8x8x64xf32>
    %274 = vector.shape_cast %273 : vector<1x8x8x64xf32> to vector<8x8x64xf32>
    %275 = vector.shape_cast %274 : vector<8x8x64xf32> to vector<64x64xf32>
    %c1_335 = arith.constant 1 : index
    %c2_336 = arith.constant 2 : index
    %c1_337 = arith.constant 1 : index
    %c0_338 = arith.constant 0 : index
    %276 = vector.load %arg10[%c1_335, %c2_336, %c1_337, %c0_338] : memref<4x10x10x64xf32, #tpu.memory_space<vmem>>, vector<1x8x8x64xf32>
    %277 = vector.shape_cast %276 : vector<1x8x8x64xf32> to vector<8x8x64xf32>
    %278 = vector.shape_cast %277 : vector<8x8x64xf32> to vector<64x64xf32>
    %c0_339 = arith.constant 0 : index
    %c2_340 = arith.constant 2 : index
    %c2_341 = arith.constant 2 : index
    %c0_342 = arith.constant 0 : index
    %279 = vector.load %arg10[%c0_339, %c2_340, %c2_341, %c0_342] : memref<4x10x10x64xf32, #tpu.memory_space<vmem>>, vector<1x8x8x64xf32>
    %280 = vector.shape_cast %279 : vector<1x8x8x64xf32> to vector<8x8x64xf32>
    %281 = vector.shape_cast %280 : vector<8x8x64xf32> to vector<64x64xf32>
    %282 = tpu.concatenate %257, %260, %263, %266, %269, %272, %275, %278, %281 in 1 : vector<64x64xf32>, vector<64x64xf32>, vector<64x64xf32>, vector<64x64xf32>, vector<64x64xf32>, vector<64x64xf32>, vector<64x64xf32>, vector<64x64xf32>, vector<64x64xf32> -> vector<64x576xf32>
    %283 = tpu.concatenate %198, %226, %254, %282 in 0 : vector<64x576xf32>, vector<64x576xf32>, vector<64x576xf32>, vector<64x576xf32> -> vector<256x576xf32>
    %284 = arith.truncf %283 : vector<256x576xf32> to vector<256x576xbf16>
    %c0_343 = arith.constant 0 : index
    %c0_344 = arith.constant 0 : index
    %285 = vector.load %arg7[%c0_343, %c0_344] : memref<576x128xbf16, #tpu.memory_space<vmem>>, vector<576x128xbf16>
    %cst_345 = arith.constant dense<0.000000e+00> : vector<256x128xf32>
    %286 = tpu.matmul %284, %285, %cst_345 {dimension_numbers = #tpu.dot_dimension_numbers<[1], [0], [0], [1], [0, 0, 1, 1], [], []>} : vector<256x576xbf16>, vector<576x128xbf16>, vector<256x128xf32> -> vector<256x128xf32>
    %287 = arith.mulf %286, %286 : vector<256x128xf32>
    %cst_346 = arith.constant dense<0.000000e+00> : vector<256xf32>
    %288 = vector.multi_reduction <add>, %287, %cst_346 [1] : vector<256x128xf32> to vector<256xf32>
    %289 = vector.shape_cast %288 : vector<256xf32> to vector<256x1xf32>
    %cst_347 = arith.constant 1.000000e-24 : f32
    %290 = vector.broadcast %cst_347 : f32 to vector<256x1xf32>
    %291 = arith.maximumf %289, %290 : vector<256x1xf32>
    %292 = math.rsqrt %291 : vector<256x1xf32>
    %293 = vector.broadcast %292 : vector<256x1xf32> to vector<256x128xf32>
    %294 = arith.mulf %286, %293 : vector<256x128xf32>
    %295 = vector.shape_cast %294 : vector<256x128xf32> to vector<4x64x128xf32>
    %c0_348 = arith.constant 0 : index
    %c0_349 = arith.constant 0 : index
    %c0_350 = arith.constant 0 : index
    %c0_351 = arith.constant 0 : index
    %296 = vector.load %arg8[%c0_348, %c0_349, %c0_350, %c0_351] : memref<1x4x64x128xf32, #tpu.memory_space<vmem>>, vector<1x4x64x128xf32>
    %297 = vector.shape_cast %296 : vector<1x4x64x128xf32> to vector<4x64x128xf32>
    %298 = vector.shape_cast %295 : vector<4x64x128xf32> to vector<1x4x64x128xf32>
    tpu.vector_store %arg8[%c0_348, %c0_349, %c0_350, %c0_351], %298 {strides = array<i32>} : memref<1x4x64x128xf32, #tpu.memory_space<vmem>>, vector<1x4x64x128xf32>,
    return
  }
  func.func @transform_0(%arg0: i32) -> (i32, i32, i32, i32) {
    %c0_i32 = arith.constant 0 : i32
    %c0_i32_0 = arith.constant 0 : i32
    %c0_i32_1 = arith.constant 0 : i32
    %c0_i32_2 = arith.constant 0 : i32
    return %arg0, %c0_i32, %c0_i32_0, %c0_i32_1 : i32, i32, i32, i32
  }
  func.func @transform_1(%arg0: i32) -> (i32, i32) {
    %c0_i32 = arith.constant 0 : i32
    %c0_i32_0 = arith.constant 0 : i32
    %c0_i32_1 = arith.constant 0 : i32
    return %c0_i32, %c0_i32_0 : i32, i32
  }
  func.func @transform_2(%arg0: i32) -> (i32, i32) {
    %c0_i32 = arith.constant 0 : i32
    %c0_i32_0 = arith.constant 0 : i32
    %c0_i32_1 = arith.constant 0 : i32
    return %c0_i32, %c0_i32_0 : i32, i32
  }
  func.func @transform_3(%arg0: i32) -> (i32, i32) {
    %c0_i32 = arith.constant 0 : i32
    %c0_i32_0 = arith.constant 0 : i32
    %c0_i32_1 = arith.constant 0 : i32
    return %c0_i32, %c0_i32_0 : i32, i32
  }
  func.func @transform_4(%arg0: i32) -> (i32, i32) {
    %c0_i32 = arith.constant 0 : i32
    %c0_i32_0 = arith.constant 0 : i32
    %c0_i32_1 = arith.constant 0 : i32
    return %c0_i32, %c0_i32_0 : i32, i32
  }
  func.func @transform_5(%arg0: i32) -> (i32, i32, i32) {
    %c0_i32 = arith.constant 0 : i32
    %c0_i32_0 = arith.constant 0 : i32
    %c0_i32_1 = arith.constant 0 : i32
    %c0_i32_2 = arith.constant 0 : i32
    return %c0_i32, %c0_i32_0, %c0_i32_1 : i32, i32, i32
  }
  func.func @transform_6(%arg0: i32) -> (i32, i32) {
    %c0_i32 = arith.constant 0 : i32
    %c0_i32_0 = arith.constant 0 : i32
    %c0_i32_1 = arith.constant 0 : i32
    return %c0_i32, %c0_i32_0 : i32, i32
  }
  func.func @transform_7(%arg0: i32) -> (i32, i32, i32, i32) {
    %c0_i32 = arith.constant 0 : i32
    %c0_i32_0 = arith.constant 0 : i32
    %c0_i32_1 = arith.constant 0 : i32
    %c0_i32_2 = arith.constant 0 : i32
    return %arg0, %c0_i32, %c0_i32_0, %c0_i32_1 : i32, i32, i32, i32
  }
}

</mosaic_0001>

<llo_original>
// kernel: regressor_forward.1
$region0: #{regressor_forward.1}
  #allocation0 [shape = 'u32[]', space=smem, size = 0x4, offset = 0x4, fixed_abs, tag = 'smem constant byte address 0x4 - core index']
  #allocation1 [shape = 'u32[144,128]{1,0:T(1,128)}', space=vmem, size = 0x12000, scoped, tag = 'internal scratch']
  #allocation2 [shape = 'f32[10,10,128]{2,1,0:T(8,128)}', space=vmem, size = 0x14000, scoped, tag = 'scratch operand']
  #allocation3 [shape = 'f32[4,10,10,64]{3,2,1,0:T(8,128)}', space=vmem, size = 0x50000, scoped, tag = 'scratch operand']
  %s0 = inlined_call_operand.vmem [shape: f32[2,8,8,128], index: 0, kind: input, shape index: {}]
  %s1 = inlined_call_operand.vmem [shape: bf16[1152,128], index: 1, kind: input, shape index: {}]
  %s2 = inlined_call_operand.vmem [shape: f32[1,128], index: 2, kind: input, shape index: {}]
  %s3 = inlined_call_operand.vmem [shape: bf16[1152,128], index: 3, kind: input, shape index: {}]
  %s4 = inlined_call_operand.vmem [shape: f32[1,128], index: 4, kind: input, shape index: {}]
  %s5 = inlined_call_operand.vmem [shape: bf16[4,512,64], index: 5, kind: input, shape index: {}]
  %s6 = inlined_call_operand.vmem [shape: bf16[576,128], index: 6, kind: input, shape index: {}]
  %s7 = inlined_call_operand.vmem [shape: f32[2,4,64,128], index: 7, kind: output, shape index: {}]
  %s8 = sld [smem:[#allocation0]]
  $region61: #{regressor_forward.1} parent=0
    _
  %s10 = ssub.s32 1, %s8
  %s11 = scalar_select 0, %s10, %s8
  loop: start=0, step=1, limit=4
  $region2: #{regressor_forward.1} parent=0 // loop_pre_header
    _
  $region3: #{regressor_forward.1} parent=0 // loop_header
    %s13 = sphi 0, %s17
    %p14 = scmp.ge.s32.totalorder %s13, 4
    %s23 = sphi 0, %s25
    %s26 = sphi 0, %s23
    %s27 = sphi 0, %s26
    %s43 = sphi 0, %s27
    %s47 = sphi 0, %s47
    %s49 = sphi 0, %s47
    %s50 = sphi 0, %s49
    %s64 = sphi 0, %s50
    %s68 = sphi 0, %s68
    %s70 = sphi 0, %s68
    %s71 = sphi 0, %s70
    %s85 = sphi 0, %s71
    %s89 = sphi 0, %s89
    %s91 = sphi 0, %s89
    %s92 = sphi 0, %s91
    %s106 = sphi 0, %s92
    %s110 = sphi 0, %s110
    %s112 = sphi 0, %s110
    %s113 = sphi 0, %s112
    %s127 = sphi 0, %s113
    %s131 = sphi 0, %s131
    %s133 = sphi 0, %s131
    %s134 = sphi 0, %s133
    %s148 = sphi 0, %s134
    %s152 = sphi 0, %s152
    %s154 = sphi 0, %s152
    %s155 = sphi 0, %s154
    %s169 = sphi 0, %s155
    %s175 = sphi 0, %s177
    %s178 = sphi 0, %s175
    %s179 = sphi 0, %s178
    %s195 = sphi 0, %s179
  $region4: #{regressor_forward.1} parent=0 // loop_header_branch
    %16 = sbr.rel (%p14) target = $region8
  $region5: #{regressor_forward.1} parent=0 // loop_body
    %s18 = ssub.s32 %s13, 1
    %s19 = ssub.s32 %s13, 2
    %s20 = sadd.s32 %s13, 1
    %s21 = ssub.s32 %s13, %s20
    %p22 = scmp.eq.s32.totalorder %s21, 0
    %s24 = sadd.s32 %s23, 1
    %s25 = scalar_select %p22, %s23, %s24
    %p28 = pneg %p22
    %p29 = scmp.eq.s32.totalorder %s13, 1
    %p30 = por %p28, %p29
    %p31 = scmp.ne.s32.totalorder %s23, %s26
    %p32 = scmp.eq.s32.totalorder %s13, 0
    %p33 = por %p31, %p32
    %p34 = scmp.ne.s32.totalorder %s23, %s26
    %p35 = scmp.eq.s32.totalorder %s18, 1
    %p36 = por %p34, %p35
    %p37 = scmp.ne.s32.totalorder %s26, %s27
    %p38 = scmp.eq.s32.totalorder %s18, 0
    %p39 = por %p37, %p38
    %p40 = scmp.ne.s32.totalorder %s26, %s27
    %p41 = scmp.eq.s32.totalorder %s19, 1
    %p42 = por %p40, %p41
    %p44 = scmp.ne.s32.totalorder %s27, %s43
    %p45 = scmp.eq.s32.totalorder %s19, 0
    %p46 = por %p44, %p45
    %s48 = sadd.s32 %s47, 1
    %p51 = scmp.eq.s32.totalorder %s13, 1
    %p52 = scmp.ne.s32.totalorder %s47, %s49
    %p53 = scmp.eq.s32.totalorder %s13, 0
    %p54 = por %p52, %p53
    %p55 = scmp.ne.s32.totalorder %s47, %s49
    %p56 = scmp.eq.s32.totalorder %s18, 1
    %p57 = por %p55, %p56
    %p58 = scmp.ne.s32.totalorder %s49, %s50
    %p59 = scmp.eq.s32.totalorder %s18, 0
    %p60 = por %p58, %p59
    %p61 = scmp.ne.s32.totalorder %s49, %s50
    %p62 = scmp.eq.s32.totalorder %s19, 1
    %p63 = por %p61, %p62
    %p65 = scmp.ne.s32.totalorder %s50, %s64
    %p66 = scmp.eq.s32.totalorder %s19, 0
    %p67 = por %p65, %p66
    %s69 = sadd.s32 %s68, 1
    %p72 = scmp.eq.s32.totalorder %s13, 1
    %p73 = scmp.ne.s32.totalorder %s68, %s70
    %p74 = scmp.eq.s32.totalorder %s13, 0
    %p75 = por %p73, %p74
    %p76 = scmp.ne.s32.totalorder %s68, %s70
    %p77 = scmp.eq.s32.totalorder %s18, 1
    %p78 = por %p76, %p77
    %p79 = scmp.ne.s32.totalorder %s70, %s71
    %p80 = scmp.eq.s32.totalorder %s18, 0
    %p81 = por %p79, %p80
    %p82 = scmp.ne.s32.totalorder %s70, %s71
    %p83 = scmp.eq.s32.totalorder %s19, 1
    %p84 = por %p82, %p83
    %p86 = scmp.ne.s32.totalorder %s71, %s85
    %p87 = scmp.eq.s32.totalorder %s19, 0
    %p88 = por %p86, %p87
    %s90 = sadd.s32 %s89, 1
    %p93 = scmp.eq.s32.totalorder %s13, 1
    %p94 = scmp.ne.s32.totalorder %s89, %s91
    %p95 = scmp.eq.s32.totalorder %s13, 0
    %p96 = por %p94, %p95
    %p97 = scmp.ne.s32.totalorder %s89, %s91
    %p98 = scmp.eq.s32.totalorder %s18, 1
    %p99 = por %p97, %p98
    %p100 = scmp.ne.s32.totalorder %s91, %s92
    %p101 = scmp.eq.s32.totalorder %s18, 0
    %p102 = por %p100, %p101
    %p103 = scmp.ne.s32.totalorder %s91, %s92
    %p104 = scmp.eq.s32.totalorder %s19, 1
    %p105 = por %p103, %p104
    %p107 = scmp.ne.s32.totalorder %s92, %s106
    %p108 = scmp.eq.s32.totalorder %s19, 0
    %p109 = por %p107, %p108
    %s111 = sadd.s32 %s110, 1
    %p114 = scmp.eq.s32.totalorder %s13, 1
    %p115 = scmp.ne.s32.totalorder %s110, %s112
    %p116 = scmp.eq.s32.totalorder %s13, 0
    %p117 = por %p115, %p116
    %p118 = scmp.ne.s32.totalorder %s110, %s112
    %p119 = scmp.eq.s32.totalorder %s18, 1
    %p120 = por %p118, %p119
    %p121 = scmp.ne.s32.totalorder %s112, %s113
    %p122 = scmp.eq.s32.totalorder %s18, 0
    %p123 = por %p121, %p122
    %p124 = scmp.ne.s32.totalorder %s112, %s113
    %p125 = scmp.eq.s32.totalorder %s19, 1
    %p126 = por %p124, %p125
    %p128 = scmp.ne.s32.totalorder %s113, %s127
    %p129 = scmp.eq.s32.totalorder %s19, 0
    %p130 = por %p128, %p129
    %s132 = sadd.s32 %s131, 1
    %p135 = scmp.eq.s32.totalorder %s13, 1
    %p136 = scmp.ne.s32.totalorder %s131, %s133
    %p137 = scmp.eq.s32.totalorder %s13, 0
    %p138 = por %p136, %p137
    %p139 = scmp.ne.s32.totalorder %s131, %s133
    %p140 = scmp.eq.s32.totalorder %s18, 1
    %p141 = por %p139, %p140
    %p142 = scmp.ne.s32.totalorder %s133, %s134
    %p143 = scmp.eq.s32.totalorder %s18, 0
    %p144 = por %p142, %p143
    %p145 = scmp.ne.s32.totalorder %s133, %s134
    %p146 = scmp.eq.s32.totalorder %s19, 1
    %p147 = por %p145, %p146
    %p149 = scmp.ne.s32.totalorder %s134, %s148
    %p150 = scmp.eq.s32.totalorder %s19, 0
    %p151 = por %p149, %p150
    %s153 = sadd.s32 %s152, 1
    %p156 = scmp.eq.s32.totalorder %s13, 1
    %p157 = scmp.ne.s32.totalorder %s152, %s154
    %p158 = scmp.eq.s32.totalorder %s13, 0
    %p159 = por %p157, %p158
    %p160 = scmp.ne.s32.totalorder %s152, %s154
    %p161 = scmp.eq.s32.totalorder %s18, 1
    %p162 = por %p160, %p161
    %p163 = scmp.ne.s32.totalorder %s154, %s155
    %p164 = scmp.eq.s32.totalorder %s18, 0
    %p165 = por %p163, %p164
    %p166 = scmp.ne.s32.totalorder %s154, %s155
    %p167 = scmp.eq.s32.totalorder %s19, 1
    %p168 = por %p166, %p167
    %p170 = scmp.ne.s32.totalorder %s155, %s169
    %p171 = scmp.eq.s32.totalorder %s19, 0
    %p172 = por %p170, %p171
    %s173 = ssub.s32 %s13, %s20
    %p174 = scmp.eq.s32.totalorder %s173, 0
    %s176 = sadd.s32 %s175, 1
    %s177 = scalar_select %p174, %s175, %s176
    %p180 = pneg %p174
    %p181 = scmp.eq.s32.totalorder %s13, 1
    %p182 = por %p180, %p181
    %p183 = scmp.ne.s32.totalorder %s175, %s178
    %p184 = scmp.eq.s32.totalorder %s13, 0
    %p185 = por %p183, %p184
    %p186 = scmp.ne.s32.totalorder %s175, %s178
    %p187 = scmp.eq.s32.totalorder %s18, 1
    %p188 = por %p186, %p187
    %p189 = scmp.ne.s32.totalorder %s178, %s179
    %p190 = scmp.eq.s32.totalorder %s18, 0
    %p191 = por %p189, %p190
    %p192 = scmp.ne.s32.totalorder %s178, %s179
    %p193 = scmp.eq.s32.totalorder %s19, 1
    %p194 = por %p192, %p193
    %p196 = scmp.ne.s32.totalorder %s179, %s195
    %p197 = scmp.eq.s32.totalorder %s19, 0
    %p198 = por %p196, %p197
    %p199 = scmp.le.s32.totalorder 1, %s13
    %p200 = scmp.lt.s32.totalorder %s13, 3
    %p201 = pnand %p199, %p200
    %p202 = pneg %p201
    // Predicated region
    $region9: #{regressor_forward.1} parent=5 // pred_check
      _
    $region10: #{regressor_forward.1} parent=5 // pred_check_branch
      %204 = sbr.rel (%p201) target = $region12
    $region11: #{regressor_forward.1} parent=5 // pred_region
      %s205 = ssub.s32 %s13, 1
      // Predicated region
      $region13: #{regressor_forward.1} parent=11 // pred_check
        %p206 = pneg %p60
      $region14: #{regressor_forward.1} parent=11 // pred_check_branch
        %208 = sbr.rel (%p206) target = $region16
      $region15: #{regressor_forward.1} parent=11 // pred_region
        _
      $region16: #{regressor_forward.1} parent=11 // pred_fallthru
        _
      // Predicated region
      $region17: #{regressor_forward.1} parent=11 // pred_check
        %p209 = pneg %p81
      $region18: #{regressor_forward.1} parent=11 // pred_check_branch
        %211 = sbr.rel (%p209) target = $region20
      $region19: #{regressor_forward.1} parent=11 // pred_region
        _
      $region20: #{regressor_forward.1} parent=11 // pred_fallthru
        _
      // Predicated region
      $region21: #{regressor_forward.1} parent=11 // pred_check
        %p212 = pneg %p102
      $region22: #{regressor_forward.1} parent=11 // pred_check_branch
        %214 = sbr.rel (%p212) target = $region24
      $region23: #{regressor_forward.1} parent=11 // pred_region
        _
      $region24: #{regressor_forward.1} parent=11 // pred_fallthru
        _
      // Predicated region
      $region25: #{regressor_forward.1} parent=11 // pred_check
        %p215 = pneg %p123
      $region26: #{regressor_forward.1} parent=11 // pred_check_branch
        %217 = sbr.rel (%p215) target = $region28
      $region27: #{regressor_forward.1} parent=11 // pred_region
        _
      $region28: #{regressor_forward.1} parent=11 // pred_fallthru
        _
      // Predicated region
      $region29: #{regressor_forward.1} parent=11 // pred_check
        %p218 = pneg %p144
      $region30: #{regressor_forward.1} parent=11 // pred_check_branch
        %220 = sbr.rel (%p218) target = $region32
      $region31: #{regressor_forward.1} parent=11 // pred_region
        _
      $region32: #{regressor_forward.1} parent=11 // pred_fallthru
        _
      // Predicated region
      $region33: #{regressor_forward.1} parent=11 // pred_check
        %p221 = pneg %p165
      $region34: #{regressor_forward.1} parent=11 // pred_check_branch
        %223 = sbr.rel (%p221) target = $region36
      $region35: #{regressor_forward.1} parent=11 // pred_region
        _
      $region36: #{regressor_forward.1} parent=11 // pred_fallthru
        _
    $region12: #{regressor_forward.1} parent=5 // pred_fallthru
      _
    %p224 = scmp.lt.s32.totalorder %s13, 2
    // Predicated region
    $region37: #{regressor_forward.1} parent=5 // pred_check
      %p225 = pneg %p224
    $region38: #{regressor_forward.1} parent=5 // pred_check_branch
      %227 = sbr.rel (%p225) target = $region40
    $region39: #{regressor_forward.1} parent=5 // pred_region
      // Predicated region
      $region41: #{regressor_forward.1} parent=39 // pred_check
        %p228 = pneg %p33
      $region42: #{regressor_forward.1} parent=39 // pred_check_branch
        %230 = sbr.rel (%p228) target = $region44
      $region43: #{regressor_forward.1} parent=39 // pred_region
        %p231 = scmp.lt.s32.totalorder %s13, 1
        %s232 = scalar_select %p231, %s13, 1
        %s233 = smul.addr %s232, 8
        %s234 = smul.addr %s233, 8
        %s235 = scalar_lea.vmem %s0, %s234
      $region44: #{regressor_forward.1} parent=39 // pred_fallthru
        _
    $region40: #{regressor_forward.1} parent=5 // pred_fallthru
      _
    %p236 = scmp.le.s32.totalorder 1, %s13
    %p237 = scmp.lt.s32.totalorder %s13, 3
    %p238 = pnand %p236, %p237
    %p239 = pneg %p238
    // Predicated region
    $region45: #{regressor_forward.1} parent=5 // pred_check
      _
    $region46: #{regressor_forward.1} parent=5 // pred_check_branch
      %241 = sbr.rel (%p238) target = $region48
    $region47: #{regressor_forward.1} parent=5 // pred_region
      %s242 = ssub.s32 %s13, 1
      %p243 = scmp.lt.s32.totalorder %s18, 1
      %s244 = scalar_select %p243, %s18, 1
      %s245 = smul.addr %s244, 8
      %s246 = smul.addr %s245, 8
      %s247 = scalar_lea.vmem %s0, %s246
      %p248 = pneg %p39
      %p249 = pneg %p36
      %p250 = pneg %p60
      %p251 = pneg %p57
      %p252 = pneg %p81
      %p253 = pneg %p78
      %p254 = pneg %p102
      %p255 = pneg %p99
      %p256 = pneg %p123
      %p257 = pneg %p120
      %p258 = pneg %p144
      %p259 = pneg %p141
      %p260 = pneg %p165
      %p261 = pneg %p162
      %p262 = pneg %p191
      %p263 = pneg %p188
      %p264 = scmp.lt.s32.totalorder %s18, 1
      %s265 = scalar_select %p264, %s18, 1
      %s266 = smul.addr %s265, 32
      %s267 = smul.addr %s266, 8
      %s268 = scalar_lea.vmem %s7, %s267
      %p269 = scmp.lt.s32.totalorder %s18, 1
      %s270 = scalar_select %p269, %s18, 1
      %s271 = smul.addr %s270, 8
      %s272 = smul.addr %s271, 8
      %s273 = scalar_lea.vmem %s0, %s272
      %p274 = scmp.lt.s32.totalorder %s18, 1
      %s275 = scalar_select %p274, %s18, 1
      %s276 = smul.addr %s275, 32
      %s277 = smul.addr %s276, 8
      %s278 = scalar_lea.vmem %s7, %s277
      %280 = vst [vmem:[#allocation2] sm:$0xff] 0.0
      %281 = vst [vmem:[#allocation2 + $0x8] sm:$0x3] 0.0
      %s282 = scalar_lea.vmem [#allocation2], 144
      %283 = vst [vmem:[%s282] sm:$0xff] 0.0
      %284 = vst [vmem:[%s282 + $0x8] sm:$0x3] 0.0
      %285 = vst [vmem:[#allocation2] sm:$0x1] 0.0
      %286 = vst [vmem:[#allocation2 + $0x10] sm:$0x1] 0.0
      %287 = vst [vmem:[#allocation2 + $0x20] sm:$0x1] 0.0
      %288 = vst [vmem:[#allocation2 + $0x30] sm:$0x1] 0.0
      %289 = vst [vmem:[#allocation2 + $0x40] sm:$0x1] 0.0
      %290 = vst [vmem:[#allocation2 + $0x50] sm:$0x1] 0.0
      %291 = vst [vmem:[#allocation2 + $0x60] sm:$0x1] 0.0
      %292 = vst [vmem:[#allocation2 + $0x70] sm:$0x1] 0.0
      %293 = vst [vmem:[#allocation2 + $0x80] sm:$0x1] 0.0
      %294 = vst [vmem:[#allocation2 + $0x90] sm:$0x1] 0.0
      %295 = vst [vmem:[#allocation2 + $0x9] sm:$0x1] 0.0
      %296 = vst [vmem:[#allocation2 + $0x19] sm:$0x1] 0.0
      %297 = vst [vmem:[#allocation2 + $0x29] sm:$0x1] 0.0
      %298 = vst [vmem:[#allocation2 + $0x39] sm:$0x1] 0.0
      %299 = vst [vmem:[#allocation2 + $0x49] sm:$0x1] 0.0
      %300 = vst [vmem:[#allocation2 + $0x59] sm:$0x1] 0.0
      %301 = vst [vmem:[#allocation2 + $0x69] sm:$0x1] 0.0
      %302 = vst [vmem:[#allocation2 + $0x79] sm:$0x1] 0.0
      %303 = vst [vmem:[#allocation2 + $0x89] sm:$0x1] 0.0
      %304 = vst [vmem:[#allocation2 + $0x99] sm:$0x1] 0.0
      %vm305 = vcmask 523264
      %306 = vst.msk [vmem:[#allocation3] sm:$0xff] %vm305, 0.0
      %vm307 = vcmask 517120
      %308 = vst.msk [vmem:[#allocation3 + $0x8] sm:$0x3] %vm307, 0.0
      %309 = vst.msk [vmem:[#allocation3 + $0xa0] sm:$0xff] %vm305, 0.0
      %310 = vst.msk [vmem:[#allocation3 + $0xa8] sm:$0x3] %vm307, 0.0
      %311 = vst.msk [vmem:[#allocation3 + $0x140] sm:$0xff] %vm305, 0.0
      %312 = vst.msk [vmem:[#allocation3 + $0x148] sm:$0x3] %vm307, 0.0
      %313 = vst.msk [vmem:[#allocation3 + $0x1e0] sm:$0xff] %vm305, 0.0
      %314 = vst.msk [vmem:[#allocation3 + $0x1e8] sm:$0x3] %vm307, 0.0
      %s315 = scalar_lea.vmem [#allocation3], 144
      %316 = vst.msk [vmem:[%s315] sm:$0xff] %vm305, 0.0
      %317 = vst.msk [vmem:[%s315 + $0x8] sm:$0x3] %vm307, 0.0
      %318 = vst.msk [vmem:[%s315 + $0xa0] sm:$0xff] %vm305, 0.0
      %319 = vst.msk [vmem:[%s315 + $0xa8] sm:$0x3] %vm307, 0.0
      %320 = vst.msk [vmem:[%s315 + $0x140] sm:$0xff] %vm305, 0.0
      %321 = vst.msk [vmem:[%s315 + $0x148] sm:$0x3] %vm307, 0.0
      %322 = vst.msk [vmem:[%s315 + $0x1e0] sm:$0xff] %vm305, 0.0
      %323 = vst.msk [vmem:[%s315 + $0x1e8] sm:$0x3] %vm307, 0.0
      %vm324 = vcmask 516096
      %325 = vst.msk [vmem:[#allocation3] sm:$0x1] %vm324, 0.0
      %326 = vst.msk [vmem:[#allocation3 + $0x10] sm:$0x1] %vm324, 0.0
      %327 = vst.msk [vmem:[#allocation3 + $0x20] sm:$0x1] %vm324, 0.0
      %328 = vst.msk [vmem:[#allocation3 + $0x30] sm:$0x1] %vm324, 0.0
      %329 = vst.msk [vmem:[#allocation3 + $0x40] sm:$0x1] %vm324, 0.0
      %330 = vst.msk [vmem:[#allocation3 + $0x50] sm:$0x1] %vm324, 0.0
      %331 = vst.msk [vmem:[#allocation3 + $0x60] sm:$0x1] %vm324, 0.0
      %332 = vst.msk [vmem:[#allocation3 + $0x70] sm:$0x1] %vm324, 0.0
      %333 = vst.msk [vmem:[#allocation3 + $0x80] sm:$0x1] %vm324, 0.0
      %334 = vst.msk [vmem:[#allocation3 + $0x90] sm:$0x1] %vm324, 0.0
      %335 = vst.msk [vmem:[#allocation3 + $0xa0] sm:$0x1] %vm324, 0.0
      %336 = vst.msk [vmem:[#allocation3 + $0xb0] sm:$0x1] %vm324, 0.0
      %337 = vst.msk [vmem:[#allocation3 + $0xc0] sm:$0x1] %vm324, 0.0
      %338 = vst.msk [vmem:[#allocation3 + $0xd0] sm:$0x1] %vm324, 0.0
      %339 = vst.msk [vmem:[#allocation3 + $0xe0] sm:$0x1] %vm324, 0.0
      %340 = vst.msk [vmem:[#allocation3 + $0xf0] sm:$0x1] %vm324, 0.0
      %341 = vst.msk [vmem:[#allocation3 + $0x100] sm:$0x1] %vm324, 0.0
      %342 = vst.msk [vmem:[#allocation3 + $0x110] sm:$0x1] %vm324, 0.0
      %343 = vst.msk [vmem:[#allocation3 + $0x120] sm:$0x1] %vm324, 0.0
      %344 = vst.msk [vmem:[#allocation3 + $0x130] sm:$0x1] %vm324, 0.0
      %345 = vst.msk [vmem:[#allocation3 + $0x140] sm:$0x1] %vm324, 0.0
      %346 = vst.msk [vmem:[#allocation3 + $0x150] sm:$0x1] %vm324, 0.0
      %347 = vst.msk [vmem:[#allocation3 + $0x160] sm:$0x1] %vm324, 0.0
      %348 = vst.msk [vmem:[#allocation3 + $0x170] sm:$0x1] %vm324, 0.0
      %349 = vst.msk [vmem:[#allocation3 + $0x180] sm:$0x1] %vm324, 0.0
      %350 = vst.msk [vmem:[#allocation3 + $0x190] sm:$0x1] %vm324, 0.0
      %351 = vst.msk [vmem:[#allocation3 + $0x1a0] sm:$0x1] %vm324, 0.0
      %352 = vst.msk [vmem:[#allocation3 + $0x1b0] sm:$0x1] %vm324, 0.0
      %353 = vst.msk [vmem:[#allocation3 + $0x1c0] sm:$0x1] %vm324, 0.0
      %354 = vst.msk [vmem:[#allocation3 + $0x1d0] sm:$0x1] %vm324, 0.0
      %355 = vst.msk [vmem:[#allocation3 + $0x1e0] sm:$0x1] %vm324, 0.0
      %356 = vst.msk [vmem:[#allocation3 + $0x1f0] sm:$0x1] %vm324, 0.0
      %357 = vst.msk [vmem:[#allocation3 + $0x200] sm:$0x1] %vm324, 0.0
      %358 = vst.msk [vmem:[#allocation3 + $0x210] sm:$0x1] %vm324, 0.0
      %359 = vst.msk [vmem:[#allocation3 + $0x220] sm:$0x1] %vm324, 0.0
      %360 = vst.msk [vmem:[#allocation3 + $0x230] sm:$0x1] %vm324, 0.0
      %361 = vst.msk [vmem:[#allocation3 + $0x240] sm:$0x1] %vm324, 0.0
      %362 = vst.msk [vmem:[#allocation3 + $0x250] sm:$0x1] %vm324, 0.0
      %363 = vst.msk [vmem:[#allocation3 + $0x260] sm:$0x1] %vm324, 0.0
      %364 = vst.msk [vmem:[#allocation3 + $0x270] sm:$0x1] %vm324, 0.0
      %365 = vst.msk [vmem:[#allocation3 + $0x9] sm:$0x1] %vm324, 0.0
      %366 = vst.msk [vmem:[#allocation3 + $0x19] sm:$0x1] %vm324, 0.0
      %367 = vst.msk [vmem:[#allocation3 + $0x29] sm:$0x1] %vm324, 0.0
      %368 = vst.msk [vmem:[#allocation3 + $0x39] sm:$0x1] %vm324, 0.0
      %369 = vst.msk [vmem:[#allocation3 + $0x49] sm:$0x1] %vm324, 0.0
      %370 = vst.msk [vmem:[#allocation3 + $0x59] sm:$0x1] %vm324, 0.0
      %371 = vst.msk [vmem:[#allocation3 + $0x69] sm:$0x1] %vm324, 0.0
      %372 = vst.msk [vmem:[#allocation3 + $0x79] sm:$0x1] %vm324, 0.0
      %373 = vst.msk [vmem:[#allocation3 + $0x89] sm:$0x1] %vm324, 0.0
      %374 = vst.msk [vmem:[#allocation3 + $0x99] sm:$0x1] %vm324, 0.0
      %375 = vst.msk [vmem:[#allocation3 + $0xa9] sm:$0x1] %vm324, 0.0
      %376 = vst.msk [vmem:[#allocation3 + $0xb9] sm:$0x1] %vm324, 0.0
      %377 = vst.msk [vmem:[#allocation3 + $0xc9] sm:$0x1] %vm324, 0.0
      %378 = vst.msk [vmem:[#allocation3 + $0xd9] sm:$0x1] %vm324, 0.0
      %379 = vst.msk [vmem:[#allocation3 + $0xe9] sm:$0x1] %vm324, 0.0
      %380 = vst.msk [vmem:[#allocation3 + $0xf9] sm:$0x1] %vm324, 0.0
      %381 = vst.msk [vmem:[#allocation3 + $0x109] sm:$0x1] %vm324, 0.0
      %382 = vst.msk [vmem:[#allocation3 + $0x119] sm:$0x1] %vm324, 0.0
      %383 = vst.msk [vmem:[#allocation3 + $0x129] sm:$0x1] %vm324, 0.0
      %384 = vst.msk [vmem:[#allocation3 + $0x139] sm:$0x1] %vm324, 0.0
      %385 = vst.msk [vmem:[#allocation3 + $0x149] sm:$0x1] %vm324, 0.0
      %386 = vst.msk [vmem:[#allocation3 + $0x159] sm:$0x1] %vm324, 0.0
      %387 = vst.msk [vmem:[#allocation3 + $0x169] sm:$0x1] %vm324, 0.0
      %388 = vst.msk [vmem:[#allocation3 + $0x179] sm:$0x1] %vm324, 0.0
      %389 = vst.msk [vmem:[#allocation3 + $0x189] sm:$0x1] %vm324, 0.0
      %390 = vst.msk [vmem:[#allocation3 + $0x199] sm:$0x1] %vm324, 0.0
      %391 = vst.msk [vmem:[#allocation3 + $0x1a9] sm:$0x1] %vm324, 0.0
      %392 = vst.msk [vmem:[#allocation3 + $0x1b9] sm:$0x1] %vm324, 0.0
      %393 = vst.msk [vmem:[#allocation3 + $0x1c9] sm:$0x1] %vm324, 0.0
      %394 = vst.msk [vmem:[#allocation3 + $0x1d9] sm:$0x1] %vm324, 0.0
      %395 = vst.msk [vmem:[#allocation3 + $0x1e9] sm:$0x1] %vm324, 0.0
      %396 = vst.msk [vmem:[#allocation3 + $0x1f9] sm:$0x1] %vm324, 0.0
      %397 = vst.msk [vmem:[#allocation3 + $0x209] sm:$0x1] %vm324, 0.0
      %398 = vst.msk [vmem:[#allocation3 + $0x219] sm:$0x1] %vm324, 0.0
      %399 = vst.msk [vmem:[#allocation3 + $0x229] sm:$0x1] %vm324, 0.0
      %400 = vst.msk [vmem:[#allocation3 + $0x239] sm:$0x1] %vm324, 0.0
      %401 = vst.msk [vmem:[#allocation3 + $0x249] sm:$0x1] %vm324, 0.0
      %402 = vst.msk [vmem:[#allocation3 + $0x259] sm:$0x1] %vm324, 0.0
      %403 = vst.msk [vmem:[#allocation3 + $0x269] sm:$0x1] %vm324, 0.0
      %404 = vst.msk [vmem:[#allocation3 + $0x279] sm:$0x1] %vm324, 0.0
      %v405 = vld [vmem:[%s273] sm:$0xff]
      %v406 = vld [vmem:[%s273 + $0x8] sm:$0xff]
      %v407 = vld [vmem:[%s273 + $0x10] sm:$0xff]
      %v408 = vld [vmem:[%s273 + $0x18] sm:$0xff]
      %v409 = vld [vmem:[%s273 + $0x20] sm:$0xff]
      %v410 = vld [vmem:[%s273 + $0x28] sm:$0xff]
      %v411 = vld [vmem:[%s273 + $0x30] sm:$0xff]
      %v412 = vld [vmem:[%s273 + $0x38] sm:$0xff]
      %s413 = scalar_lea.vmem [#allocation2], 16
      %414 = vst [vmem:[%s413 + $0x1] sm:$0xff] %v405
      %415 = vst [vmem:[%s413 + $0x11] sm:$0xff] %v406
      %416 = vst [vmem:[%s413 + $0x21] sm:$0xff] %v407
      %417 = vst [vmem:[%s413 + $0x31] sm:$0xff] %v408
      %418 = vst [vmem:[%s413 + $0x41] sm:$0xff] %v409
      %419 = vst [vmem:[%s413 + $0x51] sm:$0xff] %v410
      %420 = vst [vmem:[%s413 + $0x61] sm:$0xff] %v411
      %421 = vst [vmem:[%s413 + $0x71] sm:$0xff] %v412
      %v422 = vld [vmem:[#allocation2] sm:$0xff]
      %v423 = vld [vmem:[#allocation2 + $0x10] sm:$0xff]
      %v424 = vld [vmem:[#allocation2 + $0x20] sm:$0xff]
      %v425 = vld [vmem:[#allocation2 + $0x30] sm:$0xff]
      %v426 = vld [vmem:[#allocation2 + $0x40] sm:$0xff]
      %v427 = vld [vmem:[#allocation2 + $0x50] sm:$0xff]
      %v428 = vld [vmem:[#allocation2 + $0x60] sm:$0xff]
      %v429 = vld [vmem:[#allocation2 + $0x70] sm:$0xff]
      %v430 = vld [vmem:[#allocation2 + $0x1] sm:$0xff]
      %v431 = vld [vmem:[#allocation2 + $0x11] sm:$0xff]
      %v432 = vld [vmem:[#allocation2 + $0x21] sm:$0xff]
      %v433 = vld [vmem:[#allocation2 + $0x31] sm:$0xff]
      %v434 = vld [vmem:[#allocation2 + $0x41] sm:$0xff]
      %v435 = vld [vmem:[#allocation2 + $0x51] sm:$0xff]
      %v436 = vld [vmem:[#allocation2 + $0x61] sm:$0xff]
      %v437 = vld [vmem:[#allocation2 + $0x71] sm:$0xff]
      %v438 = vld [vmem:[#allocation2 + $0x2] sm:$0xff]
      %v439 = vld [vmem:[#allocation2 + $0x12] sm:$0xff]
      %v440 = vld [vmem:[#allocation2 + $0x22] sm:$0xff]
      %v441 = vld [vmem:[#allocation2 + $0x32] sm:$0xff]
      %v442 = vld [vmem:[#allocation2 + $0x42] sm:$0xff]
      %v443 = vld [vmem:[#allocation2 + $0x52] sm:$0xff]
      %v444 = vld [vmem:[#allocation2 + $0x62] sm:$0xff]
      %v445 = vld [vmem:[#allocation2 + $0x72] sm:$0xff]
      %v446 = vld [vmem:[%s413] sm:$0xff]
      %v447 = vld [vmem:[%s413 + $0x10] sm:$0xff]
      %v448 = vld [vmem:[%s413 + $0x20] sm:$0xff]
      %v449 = vld [vmem:[%s413 + $0x30] sm:$0xff]
      %v450 = vld [vmem:[%s413 + $0x40] sm:$0xff]
      %v451 = vld [vmem:[%s413 + $0x50] sm:$0xff]
      %v452 = vld [vmem:[%s413 + $0x60] sm:$0xff]
      %v453 = vld [vmem:[%s413 + $0x70] sm:$0xff]
      %v454 = vld [vmem:[%s413 + $0x1] sm:$0xff]
      %v455 = vld [vmem:[%s413 + $0x11] sm:$0xff]
      %v456 = vld [vmem:[%s413 + $0x21] sm:$0xff]
      %v457 = vld [vmem:[%s413 + $0x31] sm:$0xff]
      %v458 = vld [vmem:[%s413 + $0x41] sm:$0xff]
      %v459 = vld [vmem:[%s413 + $0x51] sm:$0xff]
      %v460 = vld [vmem:[%s413 + $0x61] sm:$0xff]
      %v461 = vld [vmem:[%s413 + $0x71] sm:$0xff]
      %v462 = vld [vmem:[%s413 + $0x2] sm:$0xff]
      %v463 = vld [vmem:[%s413 + $0x12] sm:$0xff]
      %v464 = vld [vmem:[%s413 + $0x22] sm:$0xff]
      %v465 = vld [vmem:[%s413 + $0x32] sm:$0xff]
      %v466 = vld [vmem:[%s413 + $0x42] sm:$0xff]
      %v467 = vld [vmem:[%s413 + $0x52] sm:$0xff]
      %v468 = vld [vmem:[%s413 + $0x62] sm:$0xff]
      %v469 = vld [vmem:[%s413 + $0x72] sm:$0xff]
      %s470 = scalar_lea.vmem [#allocation2], 32
      %v471 = vld [vmem:[%s470] sm:$0xff]
      %v472 = vld [vmem:[%s470 + $0x10] sm:$0xff]
      %v473 = vld [vmem:[%s470 + $0x20] sm:$0xff]
      %v474 = vld [vmem:[%s470 + $0x30] sm:$0xff]
      %v475 = vld [vmem:[%s470 + $0x40] sm:$0xff]
      %v476 = vld [vmem:[%s470 + $0x50] sm:$0xff]
      %v477 = vld [vmem:[%s470 + $0x60] sm:$0xff]
      %v478 = vld [vmem:[%s470 + $0x70] sm:$0xff]
      %v479 = vld [vmem:[%s470 + $0x1] sm:$0xff]
      %v480 = vld [vmem:[%s470 + $0x11] sm:$0xff]
      %v481 = vld [vmem:[%s470 + $0x21] sm:$0xff]
      %v482 = vld [vmem:[%s470 + $0x31] sm:$0xff]
      %v483 = vld [vmem:[%s470 + $0x41] sm:$0xff]
      %v484 = vld [vmem:[%s470 + $0x51] sm:$0xff]
      %v485 = vld [vmem:[%s470 + $0x61] sm:$0xff]
      %v486 = vld [vmem:[%s470 + $0x71] sm:$0xff]
      %v487 = vld [vmem:[%s470 + $0x2] sm:$0xff]
      %v488 = vld [vmem:[%s470 + $0x12] sm:$0xff]
      %v489 = vld [vmem:[%s470 + $0x22] sm:$0xff]
      %v490 = vld [vmem:[%s470 + $0x32] sm:$0xff]
      %v491 = vld [vmem:[%s470 + $0x42] sm:$0xff]
      %v492 = vld [vmem:[%s470 + $0x52] sm:$0xff]
      %v493 = vld [vmem:[%s470 + $0x62] sm:$0xff]
      %v494 = vld [vmem:[%s470 + $0x72] sm:$0xff]
      %v495 = vpack.c.bf16 %v423, %v422
      %v496 = vpack.c.bf16 %v431, %v430
      %v497 = vpack.c.bf16 %v439, %v438
      %v498 = vpack.c.bf16 %v447, %v446
      %v499 = vpack.c.bf16 %v455, %v454
      %v500 = vpack.c.bf16 %v463, %v462
      %v501 = vpack.c.bf16 %v472, %v471
      %v502 = vpack.c.bf16 %v480, %v479
      %v503 = vpack.c.bf16 %v488, %v487
      %v504 = vpack.c.bf16 %v425, %v424
      %v505 = vpack.c.bf16 %v433, %v432
      %v506 = vpack.c.bf16 %v441, %v440
      %v507 = vpack.c.bf16 %v449, %v448
      %v508 = vpack.c.bf16 %v457, %v456
      %v509 = vpack.c.bf16 %v465, %v464
      %v510 = vpack.c.bf16 %v474, %v473
      %v511 = vpack.c.bf16 %v482, %v481
      %v512 = vpack.c.bf16 %v490, %v489
      %v513 = vpack.c.bf16 %v427, %v426
      %v514 = vpack.c.bf16 %v435, %v434
      %v515 = vpack.c.bf16 %v443, %v442
      %v516 = vpack.c.bf16 %v451, %v450
      %v517 = vpack.c.bf16 %v459, %v458
      %v518 = vpack.c.bf16 %v467, %v466
      %v519 = vpack.c.bf16 %v476, %v475
      %v520 = vpack.c.bf16 %v484, %v483
      %v521 = vpack.c.bf16 %v492, %v491
      %v522 = vpack.c.bf16 %v429, %v428
      %v523 = vpack.c.bf16 %v437, %v436
      %v524 = vpack.c.bf16 %v445, %v444
      %v525 = vpack.c.bf16 %v453, %v452
      %v526 = vpack.c.bf16 %v461, %v460
      %v527 = vpack.c.bf16 %v469, %v468
      %v528 = vpack.c.bf16 %v478, %v477
      %v529 = vpack.c.bf16 %v486, %v485
      %v530 = vpack.c.bf16 %v494, %v493
      %v531 = vld [vmem:[%s1] sm:$0xf]
      %v532 = vld [vmem:[%s1 + $0x4] sm:$0xf]
      %v533 = vld [vmem:[%s1 + $0x8] sm:$0xf]
      %v534 = vld [vmem:[%s1 + $0xc] sm:$0xf]
      %v535 = vld [vmem:[%s1 + $0x10] sm:$0xf]
      %v536 = vld [vmem:[%s1 + $0x14] sm:$0xf]
      %v537 = vld [vmem:[%s1 + $0x18] sm:$0xf]
      %v538 = vld [vmem:[%s1 + $0x1c] sm:$0xf]
      %v539 = vld [vmem:[%s1 + $0x20] sm:$0xf]
      %v540 = vld [vmem:[%s1 + $0x24] sm:$0xf]
      %v541 = vld [vmem:[%s1 + $0x28] sm:$0xf]
      %v542 = vld [vmem:[%s1 + $0x2c] sm:$0xf]
      %v543 = vld [vmem:[%s1 + $0x30] sm:$0xf]
      %v544 = vld [vmem:[%s1 + $0x34] sm:$0xf]
      %v545 = vld [vmem:[%s1 + $0x38] sm:$0xf]
      %v546 = vld [vmem:[%s1 + $0x3c] sm:$0xf]
      %v547 = vld [vmem:[%s1 + $0x40] sm:$0xf]
      %v548 = vld [vmem:[%s1 + $0x44] sm:$0xf]
      %v549 = vld [vmem:[%s1 + $0x48] sm:$0xf]
      %v550 = vld [vmem:[%s1 + $0x4c] sm:$0xf]
      %v551 = vld [vmem:[%s1 + $0x50] sm:$0xf]
      %v552 = vld [vmem:[%s1 + $0x54] sm:$0xf]
      %v553 = vld [vmem:[%s1 + $0x58] sm:$0xf]
      %v554 = vld [vmem:[%s1 + $0x5c] sm:$0xf]
      %v555 = vld [vmem:[%s1 + $0x60] sm:$0xf]
      %v556 = vld [vmem:[%s1 + $0x64] sm:$0xf]
      %v557 = vld [vmem:[%s1 + $0x68] sm:$0xf]
      %v558 = vld [vmem:[%s1 + $0x6c] sm:$0xf]
      %v559 = vld [vmem:[%s1 + $0x70] sm:$0xf]
      %v560 = vld [vmem:[%s1 + $0x74] sm:$0xf]
      %v561 = vld [vmem:[%s1 + $0x78] sm:$0xf]
      %v562 = vld [vmem:[%s1 + $0x7c] sm:$0xf]
      %v563 = vld [vmem:[%s1 + $0x80] sm:$0xf]
      %v564 = vld [vmem:[%s1 + $0x84] sm:$0xf]
      %v565 = vld [vmem:[%s1 + $0x88] sm:$0xf]
      %v566 = vld [vmem:[%s1 + $0x8c] sm:$0xf]
      %v567 = vld [vmem:[%s1 + $0x90] sm:$0xf]
      %v568 = vld [vmem:[%s1 + $0x94] sm:$0xf]
      %v569 = vld [vmem:[%s1 + $0x98] sm:$0xf]
      %v570 = vld [vmem:[%s1 + $0x9c] sm:$0xf]
      %v571 = vld [vmem:[%s1 + $0xa0] sm:$0xf]
      %v572 = vld [vmem:[%s1 + $0xa4] sm:$0xf]
      %v573 = vld [vmem:[%s1 + $0xa8] sm:$0xf]
      %v574 = vld [vmem:[%s1 + $0xac] sm:$0xf]
      %v575 = vld [vmem:[%s1 + $0xb0] sm:$0xf]
      %v576 = vld [vmem:[%s1 + $0xb4] sm:$0xf]
      %v577 = vld [vmem:[%s1 + $0xb8] sm:$0xf]
      %v578 = vld [vmem:[%s1 + $0xbc] sm:$0xf]
      %v579 = vld [vmem:[%s1 + $0xc0] sm:$0xf]
      %v580 = vld [vmem:[%s1 + $0xc4] sm:$0xf]
      %v581 = vld [vmem:[%s1 + $0xc8] sm:$0xf]
      %v582 = vld [vmem:[%s1 + $0xcc] sm:$0xf]
      %v583 = vld [vmem:[%s1 + $0xd0] sm:$0xf]
      %v584 = vld [vmem:[%s1 + $0xd4] sm:$0xf]
      %v585 = vld [vmem:[%s1 + $0xd8] sm:$0xf]
      %v586 = vld [vmem:[%s1 + $0xdc] sm:$0xf]
      %v587 = vld [vmem:[%s1 + $0xe0] sm:$0xf]
      %v588 = vld [vmem:[%s1 + $0xe4] sm:$0xf]
      %v589 = vld [vmem:[%s1 + $0xe8] sm:$0xf]
      %v590 = vld [vmem:[%s1 + $0xec] sm:$0xf]
      %v591 = vld [vmem:[%s1 + $0xf0] sm:$0xf]
      %v592 = vld [vmem:[%s1 + $0xf4] sm:$0xf]
      %v593 = vld [vmem:[%s1 + $0xf8] sm:$0xf]
      %v594 = vld [vmem:[%s1 + $0xfc] sm:$0xf]
      %v595 = vld [vmem:[%s1 + $0x100] sm:$0xf]
      %v596 = vld [vmem:[%s1 + $0x104] sm:$0xf]
      %v597 = vld [vmem:[%s1 + $0x108] sm:$0xf]
      %v598 = vld [vmem:[%s1 + $0x10c] sm:$0xf]
      %v599 = vld [vmem:[%s1 + $0x110] sm:$0xf]
      %v600 = vld [vmem:[%s1 + $0x114] sm:$0xf]
      %v601 = vld [vmem:[%s1 + $0x118] sm:$0xf]
      %v602 = vld [vmem:[%s1 + $0x11c] sm:$0xf]
      %v603 = vld [vmem:[%s1 + $0x120] sm:$0xf]
      %v604 = vld [vmem:[%s1 + $0x124] sm:$0xf]
      %v605 = vld [vmem:[%s1 + $0x128] sm:$0xf]
      %v606 = vld [vmem:[%s1 + $0x12c] sm:$0xf]
      %v607 = vld [vmem:[%s1 + $0x130] sm:$0xf]
      %v608 = vld [vmem:[%s1 + $0x134] sm:$0xf]
      %v609 = vld [vmem:[%s1 + $0x138] sm:$0xf]
      %v610 = vld [vmem:[%s1 + $0x13c] sm:$0xf]
      %v611 = vld [vmem:[%s1 + $0x140] sm:$0xf]
      %v612 = vld [vmem:[%s1 + $0x144] sm:$0xf]
      %v613 = vld [vmem:[%s1 + $0x148] sm:$0xf]
      %v614 = vld [vmem:[%s1 + $0x14c] sm:$0xf]
      %v615 = vld [vmem:[%s1 + $0x150] sm:$0xf]
      %v616 = vld [vmem:[%s1 + $0x154] sm:$0xf]
      %v617 = vld [vmem:[%s1 + $0x158] sm:$0xf]
      %v618 = vld [vmem:[%s1 + $0x15c] sm:$0xf]
      %v619 = vld [vmem:[%s1 + $0x160] sm:$0xf]
      %v620 = vld [vmem:[%s1 + $0x164] sm:$0xf]
      %v621 = vld [vmem:[%s1 + $0x168] sm:$0xf]
      %v622 = vld [vmem:[%s1 + $0x16c] sm:$0xf]
      %v623 = vld [vmem:[%s1 + $0x170] sm:$0xf]
      %v624 = vld [vmem:[%s1 + $0x174] sm:$0xf]
      %v625 = vld [vmem:[%s1 + $0x178] sm:$0xf]
      %v626 = vld [vmem:[%s1 + $0x17c] sm:$0xf]
      %v627 = vld [vmem:[%s1 + $0x180] sm:$0xf]
      %v628 = vld [vmem:[%s1 + $0x184] sm:$0xf]
      %v629 = vld [vmem:[%s1 + $0x188] sm:$0xf]
      %v630 = vld [vmem:[%s1 + $0x18c] sm:$0xf]
      %v631 = vld [vmem:[%s1 + $0x190] sm:$0xf]
      %v632 = vld [vmem:[%s1 + $0x194] sm:$0xf]
      %v633 = vld [vmem:[%s1 + $0x198] sm:$0xf]
      %v634 = vld [vmem:[%s1 + $0x19c] sm:$0xf]
      %v635 = vld [vmem:[%s1 + $0x1a0] sm:$0xf]
      %v636 = vld [vmem:[%s1 + $0x1a4] sm:$0xf]
      %v637 = vld [vmem:[%s1 + $0x1a8] sm:$0xf]
      %v638 = vld [vmem:[%s1 + $0x1ac] sm:$0xf]
      %v639 = vld [vmem:[%s1 + $0x1b0] sm:$0xf]
      %v640 = vld [vmem:[%s1 + $0x1b4] sm:$0xf]
      %v641 = vld [vmem:[%s1 + $0x1b8] sm:$0xf]
      %v642 = vld [vmem:[%s1 + $0x1bc] sm:$0xf]
      %v643 = vld [vmem:[%s1 + $0x1c0] sm:$0xf]
      %v644 = vld [vmem:[%s1 + $0x1c4] sm:$0xf]
      %v645 = vld [vmem:[%s1 + $0x1c8] sm:$0xf]
      %v646 = vld [vmem:[%s1 + $0x1cc] sm:$0xf]
      %v647 = vld [vmem:[%s1 + $0x1d0] sm:$0xf]
      %v648 = vld [vmem:[%s1 + $0x1d4] sm:$0xf]
      %v649 = vld [vmem:[%s1 + $0x1d8] sm:$0xf]
      %v650 = vld [vmem:[%s1 + $0x1dc] sm:$0xf]
      %v651 = vld [vmem:[%s1 + $0x1e0] sm:$0xf]
      %v652 = vld [vmem:[%s1 + $0x1e4] sm:$0xf]
      %v653 = vld [vmem:[%s1 + $0x1e8] sm:$0xf]
      %v654 = vld [vmem:[%s1 + $0x1ec] sm:$0xf]
      %v655 = vld [vmem:[%s1 + $0x1f0] sm:$0xf]
      %v656 = vld [vmem:[%s1 + $0x1f4] sm:$0xf]
      %v657 = vld [vmem:[%s1 + $0x1f8] sm:$0xf]
      %v658 = vld [vmem:[%s1 + $0x1fc] sm:$0xf]
      %v659 = vld [vmem:[%s1 + $0x200] sm:$0xf]
      %v660 = vld [vmem:[%s1 + $0x204] sm:$0xf]
      %v661 = vld [vmem:[%s1 + $0x208] sm:$0xf]
      %v662 = vld [vmem:[%s1 + $0x20c] sm:$0xf]
      %v663 = vld [vmem:[%s1 + $0x210] sm:$0xf]
      %v664 = vld [vmem:[%s1 + $0x214] sm:$0xf]
      %v665 = vld [vmem:[%s1 + $0x218] sm:$0xf]
      %v666 = vld [vmem:[%s1 + $0x21c] sm:$0xf]
      %v667 = vld [vmem:[%s1 + $0x220] sm:$0xf]
      %v668 = vld [vmem:[%s1 + $0x224] sm:$0xf]
      %v669 = vld [vmem:[%s1 + $0x228] sm:$0xf]
      %v670 = vld [vmem:[%s1 + $0x22c] sm:$0xf]
      %v671 = vld [vmem:[%s1 + $0x230] sm:$0xf]
      %v672 = vld [vmem:[%s1 + $0x234] sm:$0xf]
      %v673 = vld [vmem:[%s1 + $0x238] sm:$0xf]
      %v674 = vld [vmem:[%s1 + $0x23c] sm:$0xf]
      %v675 = vld [vmem:[%s2] sm:$0x1]
      %v677 = vlaneseq
      %v678 = vshrl.u32 %v677, 7
      %v679 = vsub.s32 0, %v678
      %v680 = vrot.slane %v675, %v679
      %v826 = vunpack.c.l.b16 %v531
      %v827 = vunpack.c.l.b16 %v532
      %v828 = vunpack.c.l.b16 %v533
      %v829 = vunpack.c.l.b16 %v534
      %v830 = vunpack.c.l.b16 %v535
      %v831 = vunpack.c.l.b16 %v536
      %v832 = vunpack.c.l.b16 %v537
      %v833 = vunpack.c.l.b16 %v538
      %v834 = vunpack.c.l.b16 %v539
      %v835 = vunpack.c.l.b16 %v540
      %v836 = vunpack.c.l.b16 %v541
      %v837 = vunpack.c.l.b16 %v542
      %v838 = vunpack.c.l.b16 %v543
      %v839 = vunpack.c.l.b16 %v544
      %v840 = vunpack.c.l.b16 %v545
      %v841 = vunpack.c.l.b16 %v546
      %v842 = vunpack.c.l.b16 %v547
      %v843 = vunpack.c.l.b16 %v548
      %v844 = vunpack.c.l.b16 %v549
      %v845 = vunpack.c.l.b16 %v550
      %v846 = vunpack.c.l.b16 %v551
      %v847 = vunpack.c.l.b16 %v552
      %v848 = vunpack.c.l.b16 %v553
      %v849 = vunpack.c.l.b16 %v554
      %v850 = vunpack.c.l.b16 %v555
      %v851 = vunpack.c.l.b16 %v556
      %v852 = vunpack.c.l.b16 %v557
      %v853 = vunpack.c.l.b16 %v558
      %v854 = vunpack.c.l.b16 %v559
      %v855 = vunpack.c.l.b16 %v560
      %v856 = vunpack.c.l.b16 %v561
      %v857 = vunpack.c.l.b16 %v562
      %v858 = vunpack.c.l.b16 %v563
      %v859 = vunpack.c.l.b16 %v564
      %v860 = vunpack.c.l.b16 %v565
      %v861 = vunpack.c.l.b16 %v566
      %v862 = vunpack.c.l.b16 %v567
      %v863 = vunpack.c.l.b16 %v568
      %v864 = vunpack.c.l.b16 %v569
      %v865 = vunpack.c.l.b16 %v570
      %v866 = vunpack.c.l.b16 %v571
      %v867 = vunpack.c.l.b16 %v572
      %v868 = vunpack.c.l.b16 %v573
      %v869 = vunpack.c.l.b16 %v574
      %v870 = vunpack.c.l.b16 %v575
      %v871 = vunpack.c.l.b16 %v576
      %v872 = vunpack.c.l.b16 %v577
      %v873 = vunpack.c.l.b16 %v578
      %v874 = vunpack.c.l.b16 %v579
      %v875 = vunpack.c.l.b16 %v580
      %v876 = vunpack.c.l.b16 %v581
      %v877 = vunpack.c.l.b16 %v582
      %v878 = vunpack.c.l.b16 %v583
      %v879 = vunpack.c.l.b16 %v584
      %v880 = vunpack.c.l.b16 %v585
      %v881 = vunpack.c.l.b16 %v586
      %v882 = vunpack.c.l.b16 %v587
      %v883 = vunpack.c.l.b16 %v588
      %v884 = vunpack.c.l.b16 %v589
      %v885 = vunpack.c.l.b16 %v590
      %v886 = vunpack.c.l.b16 %v591
      %v887 = vunpack.c.l.b16 %v592
      %v888 = vunpack.c.l.b16 %v593
      %v889 = vunpack.c.l.b16 %v594
      %v890 = vunpack.c.l.b16 %v595
      %v891 = vunpack.c.l.b16 %v596
      %v892 = vunpack.c.l.b16 %v597
      %v893 = vunpack.c.l.b16 %v598
      %v894 = vunpack.c.l.b16 %v599
      %v895 = vunpack.c.l.b16 %v600
      %v896 = vunpack.c.l.b16 %v601
      %v897 = vunpack.c.l.b16 %v602
      %v898 = vunpack.c.l.b16 %v603
      %v899 = vunpack.c.l.b16 %v604
      %v900 = vunpack.c.l.b16 %v605
      %v901 = vunpack.c.l.b16 %v606
      %v902 = vunpack.c.l.b16 %v607
      %v903 = vunpack.c.l.b16 %v608
      %v904 = vunpack.c.l.b16 %v609
      %v905 = vunpack.c.l.b16 %v610
      %v906 = vunpack.c.l.b16 %v611
      %v907 = vunpack.c.l.b16 %v612
      %v908 = vunpack.c.l.b16 %v613
      %v909 = vunpack.c.l.b16 %v614
      %v910 = vunpack.c.l.b16 %v615
      %v911 = vunpack.c.l.b16 %v616
      %v912 = vunpack.c.l.b16 %v617
      %v913 = vunpack.c.l.b16 %v618
      %v914 = vunpack.c.l.b16 %v619
      %v915 = vunpack.c.l.b16 %v620
      %v916 = vunpack.c.l.b16 %v621
      %v917 = vunpack.c.l.b16 %v622
      %v918 = vunpack.c.l.b16 %v623
      %v919 = vunpack.c.l.b16 %v624
      %v920 = vunpack.c.l.b16 %v625
      %v921 = vunpack.c.l.b16 %v626
      %v922 = vunpack.c.l.b16 %v627
      %v923 = vunpack.c.l.b16 %v628
      %v924 = vunpack.c.l.b16 %v629
      %v925 = vunpack.c.l.b16 %v630
      %v926 = vunpack.c.l.b16 %v631
      %v927 = vunpack.c.l.b16 %v632
      %v928 = vunpack.c.l.b16 %v633
      %v929 = vunpack.c.l.b16 %v634
      %v930 = vunpack.c.l.b16 %v635
      %v931 = vunpack.c.l.b16 %v636
      %v932 = vunpack.c.l.b16 %v637
      %v933 = vunpack.c.l.b16 %v638
      %v934 = vunpack.c.l.b16 %v639
      %v935 = vunpack.c.l.b16 %v640
      %v936 = vunpack.c.l.b16 %v641
      %v937 = vunpack.c.l.b16 %v642
      %v938 = vunpack.c.l.b16 %v643
      %v939 = vunpack.c.l.b16 %v644
      %v940 = vunpack.c.l.b16 %v645
      %v941 = vunpack.c.l.b16 %v646
      %v942 = vunpack.c.l.b16 %v647
      %v943 = vunpack.c.l.b16 %v648
      %v944 = vunpack.c.l.b16 %v649
      %v945 = vunpack.c.l.b16 %v650
      %v946 = vunpack.c.l.b16 %v651
      %v947 = vunpack.c.l.b16 %v652
      %v948 = vunpack.c.l.b16 %v653
      %v949 = vunpack.c.l.b16 %v654
      %v950 = vunpack.c.l.b16 %v655
      %v951 = vunpack.c.l.b16 %v656
      %v952 = vunpack.c.l.b16 %v657
      %v953 = vunpack.c.l.b16 %v658
      %v954 = vunpack.c.l.b16 %v659
      %v955 = vunpack.c.l.b16 %v660
      %v956 = vunpack.c.l.b16 %v661
      %v957 = vunpack.c.l.b16 %v662
      %v958 = vunpack.c.l.b16 %v663
      %v959 = vunpack.c.l.b16 %v664
      %v960 = vunpack.c.l.b16 %v665
      %v961 = vunpack.c.l.b16 %v666
      %v962 = vunpack.c.l.b16 %v667
      %v963 = vunpack.c.l.b16 %v668
      %v964 = vunpack.c.l.b16 %v669
      %v965 = vunpack.c.l.b16 %v670
      %v966 = vunpack.c.l.b16 %v671
      %v967 = vunpack.c.l.b16 %v672
      %v968 = vunpack.c.l.b16 %v673
      %v969 = vunpack.c.l.b16 %v674
      %v970 = vpack.c.b16 %v827, %v826
      %v971 = vpack.c.b16 %v829, %v828
      %v972 = vpack.c.b16 %v831, %v830
      %v973 = vpack.c.b16 %v833, %v832
      %v974 = vpack.c.b16 %v835, %v834
      %v975 = vpack.c.b16 %v837, %v836
      %v976 = vpack.c.b16 %v839, %v838
      %v977 = vpack.c.b16 %v841, %v840
      %v978 = vpack.c.b16 %v843, %v842
      %v979 = vpack.c.b16 %v845, %v844
      %v980 = vpack.c.b16 %v847, %v846
      %v981 = vpack.c.b16 %v849, %v848
      %v982 = vpack.c.b16 %v851, %v850
      %v983 = vpack.c.b16 %v853, %v852
      %v984 = vpack.c.b16 %v855, %v854
      %v985 = vpack.c.b16 %v857, %v856
      %v986 = vpack.c.b16 %v859, %v858
      %v987 = vpack.c.b16 %v861, %v860
      %v988 = vpack.c.b16 %v863, %v862
      %v989 = vpack.c.b16 %v865, %v864
      %v990 = vpack.c.b16 %v867, %v866
      %v991 = vpack.c.b16 %v869, %v868
      %v992 = vpack.c.b16 %v871, %v870
      %v993 = vpack.c.b16 %v873, %v872
      %v994 = vpack.c.b16 %v875, %v874
      %v995 = vpack.c.b16 %v877, %v876
      %v996 = vpack.c.b16 %v879, %v878
      %v997 = vpack.c.b16 %v881, %v880
      %v998 = vpack.c.b16 %v883, %v882
      %v999 = vpack.c.b16 %v885, %v884
      %v1000 = vpack.c.b16 %v887, %v886
      %v1001 = vpack.c.b16 %v889, %v888
      %v1002 = vpack.c.b16 %v891, %v890
      %v1003 = vpack.c.b16 %v893, %v892
      %v1004 = vpack.c.b16 %v895, %v894
      %v1005 = vpack.c.b16 %v897, %v896
      %v1006 = vpack.c.b16 %v899, %v898
      %v1007 = vpack.c.b16 %v901, %v900
      %v1008 = vpack.c.b16 %v903, %v902
      %v1009 = vpack.c.b16 %v905, %v904
      %v1010 = vpack.c.b16 %v907, %v906
      %v1011 = vpack.c.b16 %v909, %v908
      %v1012 = vpack.c.b16 %v911, %v910
      %v1013 = vpack.c.b16 %v913, %v912
      %v1014 = vpack.c.b16 %v915, %v914
      %v1015 = vpack.c.b16 %v917, %v916
      %v1016 = vpack.c.b16 %v919, %v918
      %v1017 = vpack.c.b16 %v921, %v920
      %v1018 = vpack.c.b16 %v923, %v922
      %v1019 = vpack.c.b16 %v925, %v924
      %v1020 = vpack.c.b16 %v927, %v926
      %v1021 = vpack.c.b16 %v929, %v928
      %v1022 = vpack.c.b16 %v931, %v930
      %v1023 = vpack.c.b16 %v933, %v932
      %v1024 = vpack.c.b16 %v935, %v934
      %v1025 = vpack.c.b16 %v937, %v936
      %v1026 = vpack.c.b16 %v939, %v938
      %v1027 = vpack.c.b16 %v941, %v940
      %v1028 = vpack.c.b16 %v943, %v942
      %v1029 = vpack.c.b16 %v945, %v944
      %v1030 = vpack.c.b16 %v947, %v946
      %v1031 = vpack.c.b16 %v949, %v948
      %v1032 = vpack.c.b16 %v951, %v950
      %v1033 = vpack.c.b16 %v953, %v952
      %v1034 = vpack.c.b16 %v955, %v954
      %v1035 = vpack.c.b16 %v957, %v956
      %v1036 = vpack.c.b16 %v959, %v958
      %v1037 = vpack.c.b16 %v961, %v960
      %v1038 = vpack.c.b16 %v963, %v962
      %v1039 = vpack.c.b16 %v965, %v964
      %v1040 = vpack.c.b16 %v967, %v966
      %v1041 = vpack.c.b16 %v969, %v968
      %1114 = vmatprep.subr.bf16.mxu0 0
      %1115 = vmatpush1.bf16.msra.mxu0 %v970
      %1116 = vmatprep.subr.bf16.mxu0 0
      %1117 = vmatpush1.bf16.msra.mxu0 %v971
      %1118 = vmatprep.subr.bf16.mxu0 0
      %1119 = vmatpush1.bf16.msra.mxu0 %v972
      %1120 = vmatprep.subr.bf16.mxu0 0
      %1121 = vmatpush1.bf16.msra.mxu0 %v973
      %1122 = vmatprep.subr.bf16.mxu0 0
      %1123 = vmatpush1.bf16.msra.mxu0 %v974
      %1124 = vmatprep.subr.bf16.mxu0 0
      %1125 = vmatpush1.bf16.msra.mxu0 %v975
      %1126 = vmatprep.subr.bf16.mxu0 0
      %1127 = vmatpush1.bf16.msra.mxu0 %v976
      %1128 = vmatprep.subr.bf16.mxu0 0
      %1129 = vmatpush1.bf16.msra.mxu0 %v977
      %1130 = vmatprep.subr.bf16.mxu0 0
      %1131 = vmatpush1.bf16.msra.mxu0 %v978
      %1132 = vmatprep.subr.bf16.mxu0 0
      %1133 = vmatpush1.bf16.msra.mxu0 %v979
      %1134 = vmatprep.subr.bf16.mxu0 0
      %1135 = vmatpush1.bf16.msra.mxu0 %v980
      %1136 = vmatprep.subr.bf16.mxu0 0
      %1137 = vmatpush1.bf16.msra.mxu0 %v981
      %1138 = vmatprep.subr.bf16.mxu0 0
      %1139 = vmatpush1.bf16.msra.mxu0 %v982
      %1140 = vmatprep.subr.bf16.mxu0 0
      %1141 = vmatpush1.bf16.msra.mxu0 %v983
      %1142 = vmatprep.subr.bf16.mxu0 0
      %1143 = vmatpush1.bf16.msra.mxu0 %v984
      %1144 = vmatprep.subr.bf16.mxu0 0
      %1145 = vmatpush1.bf16.msra.mxu0 %v985
      %1146 = vmatprep.mubr.bf16.mxu0 %v496
      %1147 = vmatmul.mubr.bf16.gmra.mrb[0].mxu0 %v495
      %v1148 = vpop.f32.mrb[0].mxu0
      %v1149 = vadd.f32 %v680, %v1148
      %v1150 = vpop.f32.mrb[0].mxu0
      %v1151 = vpop.f32.mrb[0].mxu0
      %v1152 = vadd.f32 %v680, %v1151
      %v1153 = vpop.f32.mrb[0].mxu0
      %1154 = vmatprep.mubr.bf16.mxu0 %v505
      %1155 = vmatmul.mubr.bf16.gmra.mrb[0].mxu0 %v504
      %v1156 = vpop.f32.mrb[0].mxu0
      %v1157 = vadd.f32 %v680, %v1156
      %v1158 = vpop.f32.mrb[0].mxu0
      %v1159 = vpop.f32.mrb[0].mxu0
      %v1160 = vadd.f32 %v680, %v1159
      %v1161 = vpop.f32.mrb[0].mxu0
      %1162 = vmatprep.mubr.bf16.mxu0 %v514
      %1163 = vmatmul.mubr.bf16.gmra.mrb[0].mxu0 %v513
      %v1164 = vpop.f32.mrb[0].mxu0
      %v1165 = vadd.f32 %v680, %v1164
      %v1166 = vpop.f32.mrb[0].mxu0
      %v1167 = vpop.f32.mrb[0].mxu0
      %v1168 = vadd.f32 %v680, %v1167
      %v1169 = vpop.f32.mrb[0].mxu0
      %1170 = vmatprep.mubr.bf16.mxu0 %v523
      %1171 = vmatmul.mubr.bf16.gmra.mrb[0].mxu0 %v522
      %v1172 = vpop.f32.mrb[0].mxu0
      %v1173 = vadd.f32 %v680, %v1172
      %v1174 = vpop.f32.mrb[0].mxu0
      %v1175 = vpop.f32.mrb[0].mxu0
      %v1176 = vadd.f32 %v680, %v1175
      %v1177 = vpop.f32.mrb[0].mxu0
      %1178 = vdwg.mxu0
      %1179 = vmatprep.subr.bf16.mxu0 0
      %1180 = vmatpush1.bf16.msra.mxu0 %v986
      %1181 = vmatprep.subr.bf16.mxu0 0
      %1182 = vmatpush1.bf16.msra.mxu0 %v987
      %1183 = vmatprep.subr.bf16.mxu0 0
      %1184 = vmatpush1.bf16.msra.mxu0 %v988
      %1185 = vmatprep.subr.bf16.mxu0 0
      %1186 = vmatpush1.bf16.msra.mxu0 %v989
      %1187 = vmatprep.subr.bf16.mxu0 0
      %1188 = vmatpush1.bf16.msra.mxu0 %v990
      %1189 = vmatprep.subr.bf16.mxu0 0
      %1190 = vmatpush1.bf16.msra.mxu0 %v991
      %1191 = vmatprep.subr.bf16.mxu0 0
      %1192 = vmatpush1.bf16.msra.mxu0 %v992
      %1193 = vmatprep.subr.bf16.mxu0 0
      %1194 = vmatpush1.bf16.msra.mxu0 %v993
      %1195 = vmatprep.subr.bf16.mxu0 0
      %1196 = vmatpush1.bf16.msra.mxu0 %v994
      %1197 = vmatprep.subr.bf16.mxu0 0
      %1198 = vmatpush1.bf16.msra.mxu0 %v995
      %1199 = vmatprep.subr.bf16.mxu0 0
      %1200 = vmatpush1.bf16.msra.mxu0 %v996
      %1201 = vmatprep.subr.bf16.mxu0 0
      %1202 = vmatpush1.bf16.msra.mxu0 %v997
      %1203 = vmatprep.subr.bf16.mxu0 0
      %1204 = vmatpush1.bf16.msra.mxu0 %v998
      %1205 = vmatprep.subr.bf16.mxu0 0
      %1206 = vmatpush1.bf16.msra.mxu0 %v999
      %1207 = vmatprep.subr.bf16.mxu0 0
      %1208 = vmatpush1.bf16.msra.mxu0 %v1000
      %1209 = vmatprep.subr.bf16.mxu0 0
      %1210 = vmatpush1.bf16.msra.mxu0 %v1001
      %1211 = vmatprep.mubr.bf16.mxu0 %v498
      %1212 = vmatmul.mubr.bf16.gmra.mrb[0].mxu0 %v497
      %v1213 = vpop.f32.mrb[0].mxu0
      %v1214 = vadd.f32 %v1149, %v1213
      %v1215 = vpop.f32.mrb[0].mxu0
      %v1216 = vpop.f32.mrb[0].mxu0
      %v1217 = vadd.f32 %v1152, %v1216
      %v1218 = vpop.f32.mrb[0].mxu0
      %1219 = vmatprep.mubr.bf16.mxu0 %v507
      %1220 = vmatmul.mubr.bf16.gmra.mrb[0].mxu0 %v506
      %v1221 = vpop.f32.mrb[0].mxu0
      %v1222 = vadd.f32 %v1157, %v1221
      %v1223 = vpop.f32.mrb[0].mxu0
      %v1224 = vpop.f32.mrb[0].mxu0
      %v1225 = vadd.f32 %v1160, %v1224
      %v1226 = vpop.f32.mrb[0].mxu0
      %1227 = vmatprep.mubr.bf16.mxu0 %v516
      %1228 = vmatmul.mubr.bf16.gmra.mrb[0].mxu0 %v515
      %v1229 = vpop.f32.mrb[0].mxu0
      %v1230 = vadd.f32 %v1165, %v1229
      %v1231 = vpop.f32.mrb[0].mxu0
      %v1232 = vpop.f32.mrb[0].mxu0
      %v1233 = vadd.f32 %v1168, %v1232
      %v1234 = vpop.f32.mrb[0].mxu0
      %1235 = vmatprep.mubr.bf16.mxu0 %v525
      %1236 = vmatmul.mubr.bf16.gmra.mrb[0].mxu0 %v524
      %v1237 = vpop.f32.mrb[0].mxu0
      %v1238 = vadd.f32 %v1173, %v1237
      %v1239 = vpop.f32.mrb[0].mxu0
      %v1240 = vpop.f32.mrb[0].mxu0
      %v1241 = vadd.f32 %v1176, %v1240
      %v1242 = vpop.f32.mrb[0].mxu0
      %1243 = vdwg.mxu0
      %1244 = vmatprep.subr.bf16.mxu0 0
      %1245 = vmatpush1.bf16.msra.mxu0 %v1002
      %1246 = vmatprep.subr.bf16.mxu0 0
      %1247 = vmatpush1.bf16.msra.mxu0 %v1003
      %1248 = vmatprep.subr.bf16.mxu0 0
      %1249 = vmatpush1.bf16.msra.mxu0 %v1004
      %1250 = vmatprep.subr.bf16.mxu0 0
      %1251 = vmatpush1.bf16.msra.mxu0 %v1005
      %1252 = vmatprep.subr.bf16.mxu0 0
      %1253 = vmatpush1.bf16.msra.mxu0 %v1006
      %1254 = vmatprep.subr.bf16.mxu0 0
      %1255 = vmatpush1.bf16.msra.mxu0 %v1007
      %1256 = vmatprep.subr.bf16.mxu0 0
      %1257 = vmatpush1.bf16.msra.mxu0 %v1008
      %1258 = vmatprep.subr.bf16.mxu0 0
      %1259 = vmatpush1.bf16.msra.mxu0 %v1009
      %1260 = vmatprep.subr.bf16.mxu0 0
      %1261 = vmatpush1.bf16.msra.mxu0 %v1010
      %1262 = vmatprep.subr.bf16.mxu0 0
      %1263 = vmatpush1.bf16.msra.mxu0 %v1011
      %1264 = vmatprep.subr.bf16.mxu0 0
      %1265 = vmatpush1.bf16.msra.mxu0 %v1012
      %1266 = vmatprep.subr.bf16.mxu0 0
      %1267 = vmatpush1.bf16.msra.mxu0 %v1013
      %1268 = vmatprep.subr.bf16.mxu0 0
      %1269 = vmatpush1.bf16.msra.mxu0 %v1014
      %1270 = vmatprep.subr.bf16.mxu0 0
      %1271 = vmatpush1.bf16.msra.mxu0 %v1015
      %1272 = vmatprep.subr.bf16.mxu0 0
      %1273 = vmatpush1.bf16.msra.mxu0 %v1016
      %1274 = vmatprep.subr.bf16.mxu0 0
      %1275 = vmatpush1.bf16.msra.mxu0 %v1017
      %1276 = vmatprep.mubr.bf16.mxu0 %v500
      %1277 = vmatmul.mubr.bf16.gmra.mrb[0].mxu0 %v499
      %v1278 = vpop.f32.mrb[0].mxu0
      %v1279 = vadd.f32 %v1214, %v1278
      %v1280 = vpop.f32.mrb[0].mxu0
      %v1281 = vpop.f32.mrb[0].mxu0
      %v1282 = vadd.f32 %v1217, %v1281
      %v1283 = vpop.f32.mrb[0].mxu0
      %1284 = vmatprep.mubr.bf16.mxu0 %v509
      %1285 = vmatmul.mubr.bf16.gmra.mrb[0].mxu0 %v508
      %v1286 = vpop.f32.mrb[0].mxu0
      %v1287 = vadd.f32 %v1222, %v1286
      %v1288 = vpop.f32.mrb[0].mxu0
      %v1289 = vpop.f32.mrb[0].mxu0
      %v1290 = vadd.f32 %v1225, %v1289
      %v1291 = vpop.f32.mrb[0].mxu0
      %1292 = vmatprep.mubr.bf16.mxu0 %v518
      %1293 = vmatmul.mubr.bf16.gmra.mrb[0].mxu0 %v517
      %v1294 = vpop.f32.mrb[0].mxu0
      %v1295 = vadd.f32 %v1230, %v1294
      %v1296 = vpop.f32.mrb[0].mxu0
      %v1297 = vpop.f32.mrb[0].mxu0
      %v1298 = vadd.f32 %v1233, %v1297
      %v1299 = vpop.f32.mrb[0].mxu0
      %1300 = vmatprep.mubr.bf16.mxu0 %v527
      %1301 = vmatmul.mubr.bf16.gmra.mrb[0].mxu0 %v526
      %v1302 = vpop.f32.mrb[0].mxu0
      %v1303 = vadd.f32 %v1238, %v1302
      %v1304 = vpop.f32.mrb[0].mxu0
      %v1305 = vpop.f32.mrb[0].mxu0
      %v1306 = vadd.f32 %v1241, %v1305
      %v1307 = vpop.f32.mrb[0].mxu0
      %1308 = vdwg.mxu0
      %1309 = vmatprep.subr.bf16.mxu0 0
      %1310 = vmatpush1.bf16.msra.mxu0 %v1018
      %1311 = vmatprep.subr.bf16.mxu0 0
      %1312 = vmatpush1.bf16.msra.mxu0 %v1019
      %1313 = vmatprep.subr.bf16.mxu0 0
      %1314 = vmatpush1.bf16.msra.mxu0 %v1020
      %1315 = vmatprep.subr.bf16.mxu0 0
      %1316 = vmatpush1.bf16.msra.mxu0 %v1021
      %1317 = vmatprep.subr.bf16.mxu0 0
      %1318 = vmatpush1.bf16.msra.mxu0 %v1022
      %1319 = vmatprep.subr.bf16.mxu0 0
      %1320 = vmatpush1.bf16.msra.mxu0 %v1023
      %1321 = vmatprep.subr.bf16.mxu0 0
      %1322 = vmatpush1.bf16.msra.mxu0 %v1024
      %1323 = vmatprep.subr.bf16.mxu0 0
      %1324 = vmatpush1.bf16.msra.mxu0 %v1025
      %1325 = vmatprep.subr.bf16.mxu0 0
      %1326 = vmatpush1.bf16.msra.mxu0 %v1026
      %1327 = vmatprep.subr.bf16.mxu0 0
      %1328 = vmatpush1.bf16.msra.mxu0 %v1027
      %1329 = vmatprep.subr.bf16.mxu0 0
      %1330 = vmatpush1.bf16.msra.mxu0 %v1028
      %1331 = vmatprep.subr.bf16.mxu0 0
      %1332 = vmatpush1.bf16.msra.mxu0 %v1029
      %1333 = vmatprep.subr.bf16.mxu0 0
      %1334 = vmatpush1.bf16.msra.mxu0 %v1030
      %1335 = vmatprep.subr.bf16.mxu0 0
      %1336 = vmatpush1.bf16.msra.mxu0 %v1031
      %1337 = vmatprep.subr.bf16.mxu0 0
      %1338 = vmatpush1.bf16.msra.mxu0 %v1032
      %1339 = vmatprep.subr.bf16.mxu0 0
      %1340 = vmatpush1.bf16.msra.mxu0 %v1033
      %1341 = vmatprep.mubr.bf16.mxu0 %v502
      %1342 = vmatmul.mubr.bf16.gmra.mrb[0].mxu0 %v501
      %v1343 = vpop.f32.mrb[0].mxu0
      %v1344 = vadd.f32 %v1279, %v1343
      %v1345 = vpop.f32.mrb[0].mxu0
      %v1346 = vpop.f32.mrb[0].mxu0
      %v1347 = vadd.f32 %v1282, %v1346
      %v1348 = vpop.f32.mrb[0].mxu0
      %1349 = vmatprep.mubr.bf16.mxu0 %v511
      %1350 = vmatmul.mubr.bf16.gmra.mrb[0].mxu0 %v510
      %v1351 = vpop.f32.mrb[0].mxu0
      %v1352 = vadd.f32 %v1287, %v1351
      %v1353 = vpop.f32.mrb[0].mxu0
      %v1354 = vpop.f32.mrb[0].mxu0
      %v1355 = vadd.f32 %v1290, %v1354
      %v1356 = vpop.f32.mrb[0].mxu0
      %1357 = vmatprep.mubr.bf16.mxu0 %v520
      %1358 = vmatmul.mubr.bf16.gmra.mrb[0].mxu0 %v519
      %v1359 = vpop.f32.mrb[0].mxu0
      %v1360 = vadd.f32 %v1295, %v1359
      %v1361 = vpop.f32.mrb[0].mxu0
      %v1362 = vpop.f32.mrb[0].mxu0
      %v1363 = vadd.f32 %v1298, %v1362
      %v1364 = vpop.f32.mrb[0].mxu0
      %1365 = vmatprep.mubr.bf16.mxu0 %v529
      %1366 = vmatmul.mubr.bf16.gmra.mrb[0].mxu0 %v528
      %v1367 = vpop.f32.mrb[0].mxu0
      %v1368 = vadd.f32 %v1303, %v1367
      %v1369 = vpop.f32.mrb[0].mxu0
      %v1370 = vpop.f32.mrb[0].mxu0
      %v1371 = vadd.f32 %v1306, %v1370
      %v1372 = vpop.f32.mrb[0].mxu0
      %1373 = vdwg.mxu0
      %1374 = vmatprep.subr.bf16.mxu0 0
      %1375 = vmatpush1.bf16.msra.mxu0 %v1034
      %1376 = vmatprep.subr.bf16.mxu0 0
      %1377 = vmatpush1.bf16.msra.mxu0 %v1035
      %1378 = vmatprep.subr.bf16.mxu0 0
      %1379 = vmatpush1.bf16.msra.mxu0 %v1036
      %1380 = vmatprep.subr.bf16.mxu0 0
      %1381 = vmatpush1.bf16.msra.mxu0 %v1037
      %1382 = vmatprep.subr.bf16.mxu0 0
      %1383 = vmatpush1.bf16.msra.mxu0 %v1038
      %1384 = vmatprep.subr.bf16.mxu0 0
      %1385 = vmatpush1.bf16.msra.mxu0 %v1039
      %1386 = vmatprep.subr.bf16.mxu0 0
      %1387 = vmatpush1.bf16.msra.mxu0 %v1040
      %1388 = vmatprep.subr.bf16.mxu0 0
      %1389 = vmatpush1.bf16.msra.mxu0 %v1041
      %1390 = vmatprep.subr.bf16.mxu0 0
      %1391 = vmatpush1.bf16.msra.mxu0 0
      %1392 = vmatprep.subr.bf16.mxu0 0
      %1393 = vmatpush1.bf16.msra.mxu0 0
      %1394 = vmatprep.subr.bf16.mxu0 0
      %1395 = vmatpush1.bf16.msra.mxu0 0
      %1396 = vmatprep.subr.bf16.mxu0 0
      %1397 = vmatpush1.bf16.msra.mxu0 0
      %1398 = vmatprep.subr.bf16.mxu0 0
      %1399 = vmatpush1.bf16.msra.mxu0 0
      %1400 = vmatprep.subr.bf16.mxu0 0
      %1401 = vmatpush1.bf16.msra.mxu0 0
      %1402 = vmatprep.subr.bf16.mxu0 0
      %1403 = vmatpush1.bf16.msra.mxu0 0
      %1404 = vmatprep.subr.bf16.mxu0 0
      %1405 = vmatpush1.bf16.msra.mxu0 0
      %1406 = vmatprep.mubr.bf16.mxu0 0
      %1407 = vmatmul.mubr.bf16.gmra.mrb[0].mxu0 %v503
      %v1408 = vpop.f32.mrb[0].mxu0
      %v1409 = vadd.f32 %v1344, %v1408
      %v1410 = vpop.f32.mrb[0].mxu0
      %v1411 = vpop.f32.mrb[0].mxu0
      %v1412 = vadd.f32 %v1347, %v1411
      %v1413 = vpop.f32.mrb[0].mxu0
      %1414 = vmatprep.mubr.bf16.mxu0 0
      %1415 = vmatmul.mubr.bf16.gmra.mrb[0].mxu0 %v512
      %v1416 = vpop.f32.mrb[0].mxu0
      %v1417 = vadd.f32 %v1352, %v1416
      %v1418 = vpop.f32.mrb[0].mxu0
      %v1419 = vpop.f32.mrb[0].mxu0
      %v1420 = vadd.f32 %v1355, %v1419
      %v1421 = vpop.f32.mrb[0].mxu0
      %1422 = vmatprep.mubr.bf16.mxu0 0
      %1423 = vmatmul.mubr.bf16.gmra.mrb[0].mxu0 %v521
      %v1424 = vpop.f32.mrb[0].mxu0
      %v1425 = vadd.f32 %v1360, %v1424
      %v1426 = vpop.f32.mrb[0].mxu0
      %v1427 = vpop.f32.mrb[0].mxu0
      %v1428 = vadd.f32 %v1363, %v1427
      %v1429 = vpop.f32.mrb[0].mxu0
      %1430 = vmatprep.mubr.bf16.mxu0 0
      %1431 = vmatmul.mubr.bf16.gmra.mrb[0].mxu0 %v530
      %v1432 = vpop.f32.mrb[0].mxu0
      %v1433 = vadd.f32 %v1368, %v1432
      %v1434 = vpop.f32.mrb[0].mxu0
      %v1435 = vpop.f32.mrb[0].mxu0
      %v1436 = vadd.f32 %v1371, %v1435
      %v1437 = vpop.f32.mrb[0].mxu0
      %1438 = vdwg.mxu0
      %vm1439 = vcmp.ge.f32.partialorder %v1409, 0.0
      %vm1440 = vcmp.ge.f32.partialorder %v1412, 0.0
      %vm1441 = vcmp.ge.f32.partialorder %v1417, 0.0
      %vm1442 = vcmp.ge.f32.partialorder %v1420, 0.0
      %vm1443 = vcmp.ge.f32.partialorder %v1425, 0.0
      %vm1444 = vcmp.ge.f32.partialorder %v1428, 0.0
      %vm1445 = vcmp.ge.f32.partialorder %v1433, 0.0
      %vm1446 = vcmp.ge.f32.partialorder %v1436, 0.0
      %v1447 = vmul.f32 %v1409, 0.1
      %v1448 = vmul.f32 %v1412, 0.1
      %v1449 = vmul.f32 %v1417, 0.1
      %v1450 = vmul.f32 %v1420, 0.1
      %v1451 = vmul.f32 %v1425, 0.1
      %v1452 = vmul.f32 %v1428, 0.1
      %v1453 = vmul.f32 %v1433, 0.1
      %v1454 = vmul.f32 %v1436, 0.1
      %v1455 = vsel %vm1439, %v1409, %v1447
      %v1456 = vsel %vm1440, %v1412, %v1448
      %v1457 = vsel %vm1441, %v1417, %v1449
      %v1458 = vsel %vm1442, %v1420, %v1450
      %v1459 = vsel %vm1443, %v1425, %v1451
      %v1460 = vsel %vm1444, %v1428, %v1452
      %v1461 = vsel %vm1445, %v1433, %v1453
      %v1462 = vsel %vm1446, %v1436, %v1454
      %1463 = vst [vmem:[%s413 + $0x1] sm:$0xff] %v1455
      %1464 = vst [vmem:[%s413 + $0x11] sm:$0xff] %v1456
      %1465 = vst [vmem:[%s413 + $0x21] sm:$0xff] %v1457
      %1466 = vst [vmem:[%s413 + $0x31] sm:$0xff] %v1458
      %1467 = vst [vmem:[%s413 + $0x41] sm:$0xff] %v1459
      %1468 = vst [vmem:[%s413 + $0x51] sm:$0xff] %v1460
      %1469 = vst [vmem:[%s413 + $0x61] sm:$0xff] %v1461
      %1470 = vst [vmem:[%s413 + $0x71] sm:$0xff] %v1462
      %v1471 = vld [vmem:[#allocation2] sm:$0xff]
      %v1472 = vld [vmem:[#allocation2 + $0x10] sm:$0xff]
      %v1473 = vld [vmem:[#allocation2 + $0x20] sm:$0xff]
      %v1474 = vld [vmem:[#allocation2 + $0x30] sm:$0xff]
      %v1475 = vld [vmem:[#allocation2 + $0x40] sm:$0xff]
      %v1476 = vld [vmem:[#allocation2 + $0x50] sm:$0xff]
      %v1477 = vld [vmem:[#allocation2 + $0x60] sm:$0xff]
      %v1478 = vld [vmem:[#allocation2 + $0x70] sm:$0xff]
      %v1479 = vld [vmem:[#allocation2 + $0x1] sm:$0xff]
      %v1480 = vld [vmem:[#allocation2 + $0x11] sm:$0xff]
      %v1481 = vld [vmem:[#allocation2 + $0x21] sm:$0xff]
      %v1482 = vld [vmem:[#allocation2 + $0x31] sm:$0xff]
      %v1483 = vld [vmem:[#allocation2 + $0x41] sm:$0xff]
      %v1484 = vld [vmem:[#allocation2 + $0x51] sm:$0xff]
      %v1485 = vld [vmem:[#allocation2 + $0x61] sm:$0xff]
      %v1486 = vld [vmem:[#allocation2 + $0x71] sm:$0xff]
      %v1487 = vld [vmem:[#allocation2 + $0x2] sm:$0xff]
      %v1488 = vld [vmem:[#allocation2 + $0x12] sm:$0xff]
      %v1489 = vld [vmem:[#allocation2 + $0x22] sm:$0xff]
      %v1490 = vld [vmem:[#allocation2 + $0x32] sm:$0xff]
      %v1491 = vld [vmem:[#allocation2 + $0x42] sm:$0xff]
      %v1492 = vld [vmem:[#allocation2 + $0x52] sm:$0xff]
      %v1493 = vld [vmem:[#allocation2 + $0x62] sm:$0xff]
      %v1494 = vld [vmem:[#allocation2 + $0x72] sm:$0xff]
      %v1495 = vld [vmem:[%s413] sm:$0xff]
      %v1496 = vld [vmem:[%s413 + $0x10] sm:$0xff]
      %v1497 = vld [vmem:[%s413 + $0x20] sm:$0xff]
      %v1498 = vld [vmem:[%s413 + $0x30] sm:$0xff]
      %v1499 = vld [vmem:[%s413 + $0x40] sm:$0xff]
      %v1500 = vld [vmem:[%s413 + $0x50] sm:$0xff]
      %v1501 = vld [vmem:[%s413 + $0x60] sm:$0xff]
      %v1502 = vld [vmem:[%s413 + $0x70] sm:$0xff]
      %v1503 = vld [vmem:[%s413 + $0x1] sm:$0xff]
      %v1504 = vld [vmem:[%s413 + $0x11] sm:$0xff]
      %v1505 = vld [vmem:[%s413 + $0x21] sm:$0xff]
      %v1506 = vld [vmem:[%s413 + $0x31] sm:$0xff]
      %v1507 = vld [vmem:[%s413 + $0x41] sm:$0xff]
      %v1508 = vld [vmem:[%s413 + $0x51] sm:$0xff]
      %v1509 = vld [vmem:[%s413 + $0x61] sm:$0xff]
      %v1510 = vld [vmem:[%s413 + $0x71] sm:$0xff]
      %v1511 = vld [vmem:[%s413 + $0x2] sm:$0xff]
      %v1512 = vld [vmem:[%s413 + $0x12] sm:$0xff]
      %v1513 = vld [vmem:[%s413 + $0x22] sm:$0xff]
      %v1514 = vld [vmem:[%s413 + $0x32] sm:$0xff]
      %v1515 = vld [vmem:[%s413 + $0x42] sm:$0xff]
      %v1516 = vld [vmem:[%s413 + $0x52] sm:$0xff]
      %v1517 = vld [vmem:[%s413 + $0x62] sm:$0xff]
      %v1518 = vld [vmem:[%s413 + $0x72] sm:$0xff]
      %v1519 = vld [vmem:[%s470] sm:$0xff]
      %v1520 = vld [vmem:[%s470 + $0x10] sm:$0xff]
      %v1521 = vld [vmem:[%s470 + $0x20] sm:$0xff]
      %v1522 = vld [vmem:[%s470 + $0x30] sm:$0xff]
      %v1523 = vld [vmem:[%s470 + $0x40] sm:$0xff]
      %v1524 = vld [vmem:[%s470 + $0x50] sm:$0xff]
      %v1525 = vld [vmem:[%s470 + $0x60] sm:$0xff]
      %v1526 = vld [vmem:[%s470 + $0x70] sm:$0xff]
      %v1527 = vld [vmem:[%s470 + $0x1] sm:$0xff]
      %v1528 = vld [vmem:[%s470 + $0x11] sm:$0xff]
      %v1529 = vld [vmem:[%s470 + $0x21] sm:$0xff]
      %v1530 = vld [vmem:[%s470 + $0x31] sm:$0xff]
      %v1531 = vld [vmem:[%s470 + $0x41] sm:$0xff]
      %v1532 = vld [vmem:[%s470 + $0x51] sm:$0xff]
      %v1533 = vld [vmem:[%s470 + $0x61] sm:$0xff]
      %v1534 = vld [vmem:[%s470 + $0x71] sm:$0xff]
      %v1535 = vld [vmem:[%s470 + $0x2] sm:$0xff]
      %v1536 = vld [vmem:[%s470 + $0x12] sm:$0xff]
      %v1537 = vld [vmem:[%s470 + $0x22] sm:$0xff]
      %v1538 = vld [vmem:[%s470 + $0x32] sm:$0xff]
      %v1539 = vld [vmem:[%s470 + $0x42] sm:$0xff]
      %v1540 = vld [vmem:[%s470 + $0x52] sm:$0xff]
      %v1541 = vld [vmem:[%s470 + $0x62] sm:$0xff]
      %v1542 = vld [vmem:[%s470 + $0x72] sm:$0xff]
      %v1543 = vpack.c.bf16 %v1472, %v1471
      %v1544 = vpack.c.bf16 %v1480, %v1479
      %v1545 = vpack.c.bf16 %v1488, %v1487
      %v1546 = vpack.c.bf16 %v1496, %v1495
      %v1547 = vpack.c.bf16 %v1504, %v1503
      %v1548 = vpack.c.bf16 %v1512, %v1511
      %v1549 = vpack.c.bf16 %v1520, %v1519
      %v1550 = vpack.c.bf16 %v1528, %v1527
      %v1551 = vpack.c.bf16 %v1536, %v1535
      %v1552 = vpack.c.bf16 %v1474, %v1473
      %v1553 = vpack.c.bf16 %v1482, %v1481
      %v1554 = vpack.c.bf16 %v1490, %v1489
      %v1555 = vpack.c.bf16 %v1498, %v1497
      %v1556 = vpack.c.bf16 %v1506, %v1505
      %v1557 = vpack.c.bf16 %v1514, %v1513
      %v1558 = vpack.c.bf16 %v1522, %v1521
      %v1559 = vpack.c.bf16 %v1530, %v1529
      %v1560 = vpack.c.bf16 %v1538, %v1537
      %v1561 = vpack.c.bf16 %v1476, %v1475
      %v1562 = vpack.c.bf16 %v1484, %v1483
      %v1563 = vpack.c.bf16 %v1492, %v1491
      %v1564 = vpack.c.bf16 %v1500, %v1499
      %v1565 = vpack.c.bf16 %v1508, %v1507
      %v1566 = vpack.c.bf16 %v1516, %v1515
      %v1567 = vpack.c.bf16 %v1524, %v1523
      %v1568 = vpack.c.bf16 %v1532, %v1531
      %v1569 = vpack.c.bf16 %v1540, %v1539
      %v1570 = vpack.c.bf16 %v1478, %v1477
      %v1571 = vpack.c.bf16 %v1486, %v1485
      %v1572 = vpack.c.bf16 %v1494, %v1493
      %v1573 = vpack.c.bf16 %v1502, %v1501
      %v1574 = vpack.c.bf16 %v1510, %v1509
      %v1575 = vpack.c.bf16 %v1518, %v1517
      %v1576 = vpack.c.bf16 %v1526, %v1525
      %v1577 = vpack.c.bf16 %v1534, %v1533
      %v1578 = vpack.c.bf16 %v1542, %v1541
      %v1579 = vld [vmem:[%s3] sm:$0xf]
      %v1580 = vld [vmem:[%s3 + $0x4] sm:$0xf]
      %v1581 = vld [vmem:[%s3 + $0x8] sm:$0xf]
      %v1582 = vld [vmem:[%s3 + $0xc] sm:$0xf]
      %v1583 = vld [vmem:[%s3 + $0x10] sm:$0xf]
      %v1584 = vld [vmem:[%s3 + $0x14] sm:$0xf]
      %v1585 = vld [vmem:[%s3 + $0x18] sm:$0xf]
      %v1586 = vld [vmem:[%s3 + $0x1c] sm:$0xf]
      %v1587 = vld [vmem:[%s3 + $0x20] sm:$0xf]
      %v1588 = vld [vmem:[%s3 + $0x24] sm:$0xf]
      %v1589 = vld [vmem:[%s3 + $0x28] sm:$0xf]
      %v1590 = vld [vmem:[%s3 + $0x2c] sm:$0xf]
      %v1591 = vld [vmem:[%s3 + $0x30] sm:$0xf]
      %v1592 = vld [vmem:[%s3 + $0x34] sm:$0xf]
      %v1593 = vld [vmem:[%s3 + $0x38] sm:$0xf]
      %v1594 = vld [vmem:[%s3 + $0x3c] sm:$0xf]
      %v1595 = vld [vmem:[%s3 + $0x40] sm:$0xf]
      %v1596 = vld [vmem:[%s3 + $0x44] sm:$0xf]
      %v1597 = vld [vmem:[%s3 + $0x48] sm:$0xf]
      %v1598 = vld [vmem:[%s3 + $0x4c] sm:$0xf]
      %v1599 = vld [vmem:[%s3 + $0x50] sm:$0xf]
      %v1600 = vld [vmem:[%s3 + $0x54] sm:$0xf]
      %v1601 = vld [vmem:[%s3 + $0x58] sm:$0xf]
      %v1602 = vld [vmem:[%s3 + $0x5c] sm:$0xf]
      %v1603 = vld [vmem:[%s3 + $0x60] sm:$0xf]
      %v1604 = vld [vmem:[%s3 + $0x64] sm:$0xf]
      %v1605 = vld [vmem:[%s3 + $0x68] sm:$0xf]
      %v1606 = vld [vmem:[%s3 + $0x6c] sm:$0xf]
      %v1607 = vld [vmem:[%s3 + $0x70] sm:$0xf]
      %v1608 = vld [vmem:[%s3 + $0x74] sm:$0xf]
      %v1609 = vld [vmem:[%s3 + $0x78] sm:$0xf]
      %v1610 = vld [vmem:[%s3 + $0x7c] sm:$0xf]
      %v1611 = vld [vmem:[%s3 + $0x80] sm:$0xf]
      %v1612 = vld [vmem:[%s3 + $0x84] sm:$0xf]
      %v1613 = vld [vmem:[%s3 + $0x88] sm:$0xf]
      %v1614 = vld [vmem:[%s3 + $0x8c] sm:$0xf]
      %v1615 = vld [vmem:[%s3 + $0x90] sm:$0xf]
      %v1616 = vld [vmem:[%s3 + $0x94] sm:$0xf]
      %v1617 = vld [vmem:[%s3 + $0x98] sm:$0xf]
      %v1618 = vld [vmem:[%s3 + $0x9c] sm:$0xf]
      %v1619 = vld [vmem:[%s3 + $0xa0] sm:$0xf]
      %v1620 = vld [vmem:[%s3 + $0xa4] sm:$0xf]
      %v1621 = vld [vmem:[%s3 + $0xa8] sm:$0xf]
      %v1622 = vld [vmem:[%s3 + $0xac] sm:$0xf]
      %v1623 = vld [vmem:[%s3 + $0xb0] sm:$0xf]
      %v1624 = vld [vmem:[%s3 + $0xb4] sm:$0xf]
      %v1625 = vld [vmem:[%s3 + $0xb8] sm:$0xf]
      %v1626 = vld [vmem:[%s3 + $0xbc] sm:$0xf]
      %v1627 = vld [vmem:[%s3 + $0xc0] sm:$0xf]
      %v1628 = vld [vmem:[%s3 + $0xc4] sm:$0xf]
      %v1629 = vld [vmem:[%s3 + $0xc8] sm:$0xf]
      %v1630 = vld [vmem:[%s3 + $0xcc] sm:$0xf]
      %v1631 = vld [vmem:[%s3 + $0xd0] sm:$0xf]
      %v1632 = vld [vmem:[%s3 + $0xd4] sm:$0xf]
      %v1633 = vld [vmem:[%s3 + $0xd8] sm:$0xf]
      %v1634 = vld [vmem:[%s3 + $0xdc] sm:$0xf]
      %v1635 = vld [vmem:[%s3 + $0xe0] sm:$0xf]
      %v1636 = vld [vmem:[%s3 + $0xe4] sm:$0xf]
      %v1637 = vld [vmem:[%s3 + $0xe8] sm:$0xf]
      %v1638 = vld [vmem:[%s3 + $0xec] sm:$0xf]
      %v1639 = vld [vmem:[%s3 + $0xf0] sm:$0xf]
      %v1640 = vld [vmem:[%s3 + $0xf4] sm:$0xf]
      %v1641 = vld [vmem:[%s3 + $0xf8] sm:$0xf]
      %v1642 = vld [vmem:[%s3 + $0xfc] sm:$0xf]
      %v1643 = vld [vmem:[%s3 + $0x100] sm:$0xf]
      %v1644 = vld [vmem:[%s3 + $0x104] sm:$0xf]
      %v1645 = vld [vmem:[%s3 + $0x108] sm:$0xf]
      %v1646 = vld [vmem:[%s3 + $0x10c] sm:$0xf]
      %v1647 = vld [vmem:[%s3 + $0x110] sm:$0xf]
      %v1648 = vld [vmem:[%s3 + $0x114] sm:$0xf]
      %v1649 = vld [vmem:[%s3 + $0x118] sm:$0xf]
      %v1650 = vld [vmem:[%s3 + $0x11c] sm:$0xf]
      %v1651 = vld [vmem:[%s3 + $0x120] sm:$0xf]
      %v1652 = vld [vmem:[%s3 + $0x124] sm:$0xf]
      %v1653 = vld [vmem:[%s3 + $0x128] sm:$0xf]
      %v1654 = vld [vmem:[%s3 + $0x12c] sm:$0xf]
      %v1655 = vld [vmem:[%s3 + $0x130] sm:$0xf]
      %v1656 = vld [vmem:[%s3 + $0x134] sm:$0xf]
      %v1657 = vld [vmem:[%s3 + $0x138] sm:$0xf]
      %v1658 = vld [vmem:[%s3 + $0x13c] sm:$0xf]
      %v1659 = vld [vmem:[%s3 + $0x140] sm:$0xf]
      %v1660 = vld [vmem:[%s3 + $0x144] sm:$0xf]
      %v1661 = vld [vmem:[%s3 + $0x148] sm:$0xf]
      %v1662 = vld [vmem:[%s3 + $0x14c] sm:$0xf]
      %v1663 = vld [vmem:[%s3 + $0x150] sm:$0xf]
      %v1664 = vld [vmem:[%s3 + $0x154] sm:$0xf]
      %v1665 = vld [vmem:[%s3 + $0x158] sm:$0xf]
      %v1666 = vld [vmem:[%s3 + $0x15c] sm:$0xf]
      %v1667 = vld [vmem:[%s3 + $0x160] sm:$0xf]
      %v1668 = vld [vmem:[%s3 + $0x164] sm:$0xf]
      %v1669 = vld [vmem:[%s3 + $0x168] sm:$0xf]
      %v1670 = vld [vmem:[%s3 + $0x16c] sm:$0xf]
      %v1671 = vld [vmem:[%s3 + $0x170] sm:$0xf]
      %v1672 = vld [vmem:[%s3 + $0x174] sm:$0xf]
      %v1673 = vld [vmem:[%s3 + $0x178] sm:$0xf]
      %v1674 = vld [vmem:[%s3 + $0x17c] sm:$0xf]
      %v1675 = vld [vmem:[%s3 + $0x180] sm:$0xf]
      %v1676 = vld [vmem:[%s3 + $0x184] sm:$0xf]
      %v1677 = vld [vmem:[%s3 + $0x188] sm:$0xf]
      %v1678 = vld [vmem:[%s3 + $0x18c] sm:$0xf]
      %v1679 = vld [vmem:[%s3 + $0x190] sm:$0xf]
      %v1680 = vld [vmem:[%s3 + $0x194] sm:$0xf]
      %v1681 = vld [vmem:[%s3 + $0x198] sm:$0xf]
      %v1682 = vld [vmem:[%s3 + $0x19c] sm:$0xf]
      %v1683 = vld [vmem:[%s3 + $0x1a0] sm:$0xf]
      %v1684 = vld [vmem:[%s3 + $0x1a4] sm:$0xf]
      %v1685 = vld [vmem:[%s3 + $0x1a8] sm:$0xf]
      %v1686 = vld [vmem:[%s3 + $0x1ac] sm:$0xf]
      %v1687 = vld [vmem:[%s3 + $0x1b0] sm:$0xf]
      %v1688 = vld [vmem:[%s3 + $0x1b4] sm:$0xf]
      %v1689 = vld [vmem:[%s3 + $0x1b8] sm:$0xf]
      %v1690 = vld [vmem:[%s3 + $0x1bc] sm:$0xf]
      %v1691 = vld [vmem:[%s3 + $0x1c0] sm:$0xf]
      %v1692 = vld [vmem:[%s3 + $0x1c4] sm:$0xf]
      %v1693 = vld [vmem:[%s3 + $0x1c8] sm:$0xf]
      %v1694 = vld [vmem:[%s3 + $0x1cc] sm:$0xf]
      %v1695 = vld [vmem:[%s3 + $0x1d0] sm:$0xf]
      %v1696 = vld [vmem:[%s3 + $0x1d4] sm:$0xf]
      %v1697 = vld [vmem:[%s3 + $0x1d8] sm:$0xf]
      %v1698 = vld [vmem:[%s3 + $0x1dc] sm:$0xf]
      %v1699 = vld [vmem:[%s3 + $0x1e0] sm:$0xf]
      %v1700 = vld [vmem:[%s3 + $0x1e4] sm:$0xf]
      %v1701 = vld [vmem:[%s3 + $0x1e8] sm:$0xf]
      %v1702 = vld [vmem:[%s3 + $0x1ec] sm:$0xf]
      %v1703 = vld [vmem:[%s3 + $0x1f0] sm:$0xf]
      %v1704 = vld [vmem:[%s3 + $0x1f4] sm:$0xf]
      %v1705 = vld [vmem:[%s3 + $0x1f8] sm:$0xf]
      %v1706 = vld [vmem:[%s3 + $0x1fc] sm:$0xf]
      %v1707 = vld [vmem:[%s3 + $0x200] sm:$0xf]
      %v1708 = vld [vmem:[%s3 + $0x204] sm:$0xf]
      %v1709 = vld [vmem:[%s3 + $0x208] sm:$0xf]
      %v1710 = vld [vmem:[%s3 + $0x20c] sm:$0xf]
      %v1711 = vld [vmem:[%s3 + $0x210] sm:$0xf]
      %v1712 = vld [vmem:[%s3 + $0x214] sm:$0xf]
      %v1713 = vld [vmem:[%s3 + $0x218] sm:$0xf]
      %v1714 = vld [vmem:[%s3 + $0x21c] sm:$0xf]
      %v1715 = vld [vmem:[%s3 + $0x220] sm:$0xf]
      %v1716 = vld [vmem:[%s3 + $0x224] sm:$0xf]
      %v1717 = vld [vmem:[%s3 + $0x228] sm:$0xf]
      %v1718 = vld [vmem:[%s3 + $0x22c] sm:$0xf]
      %v1719 = vld [vmem:[%s3 + $0x230] sm:$0xf]
      %v1720 = vld [vmem:[%s3 + $0x234] sm:$0xf]
      %v1721 = vld [vmem:[%s3 + $0x238] sm:$0xf]
      %v1722 = vld [vmem:[%s3 + $0x23c] sm:$0xf]
      %v1723 = vld [vmem:[%s4] sm:$0x1]
      %v1725 = vlaneseq
      %v1726 = vshrl.u32 %v1725, 7
      %v1727 = vsub.s32 0, %v1726
      %v1728 = vrot.slane %v1723, %v1727
      %v1874 = vunpack.c.l.b16 %v1579
      %v1875 = vunpack.c.l.b16 %v1580
      %v1876 = vunpack.c.l.b16 %v1581
      %v1877 = vunpack.c.l.b16 %v1582
      %v1878 = vunpack.c.l.b16 %v1583
      %v1879 = vunpack.c.l.b16 %v1584
      %v1880 = vunpack.c.l.b16 %v1585
      %v1881 = vunpack.c.l.b16 %v1586
      %v1882 = vunpack.c.l.b16 %v1587
      %v1883 = vunpack.c.l.b16 %v1588
      %v1884 = vunpack.c.l.b16 %v1589
      %v1885 = vunpack.c.l.b16 %v1590
      %v1886 = vunpack.c.l.b16 %v1591
      %v1887 = vunpack.c.l.b16 %v1592
      %v1888 = vunpack.c.l.b16 %v1593
      %v1889 = vunpack.c.l.b16 %v1594
      %v1890 = vunpack.c.l.b16 %v1595
      %v1891 = vunpack.c.l.b16 %v1596
      %v1892 = vunpack.c.l.b16 %v1597
      %v1893 = vunpack.c.l.b16 %v1598
      %v1894 = vunpack.c.l.b16 %v1599
      %v1895 = vunpack.c.l.b16 %v1600
      %v1896 = vunpack.c.l.b16 %v1601
      %v1897 = vunpack.c.l.b16 %v1602
      %v1898 = vunpack.c.l.b16 %v1603
      %v1899 = vunpack.c.l.b16 %v1604
      %v1900 = vunpack.c.l.b16 %v1605
      %v1901 = vunpack.c.l.b16 %v1606
      %v1902 = vunpack.c.l.b16 %v1607
      %v1903 = vunpack.c.l.b16 %v1608
      %v1904 = vunpack.c.l.b16 %v1609
      %v1905 = vunpack.c.l.b16 %v1610
      %v1906 = vunpack.c.l.b16 %v1611
      %v1907 = vunpack.c.l.b16 %v1612
      %v1908 = vunpack.c.l.b16 %v1613
      %v1909 = vunpack.c.l.b16 %v1614
      %v1910 = vunpack.c.l.b16 %v1615
      %v1911 = vunpack.c.l.b16 %v1616
      %v1912 = vunpack.c.l.b16 %v1617
      %v1913 = vunpack.c.l.b16 %v1618
      %v1914 = vunpack.c.l.b16 %v1619
      %v1915 = vunpack.c.l.b16 %v1620
      %v1916 = vunpack.c.l.b16 %v1621
      %v1917 = vunpack.c.l.b16 %v1622
      %v1918 = vunpack.c.l.b16 %v1623
      %v1919 = vunpack.c.l.b16 %v1624
      %v1920 = vunpack.c.l.b16 %v1625
      %v1921 = vunpack.c.l.b16 %v1626
      %v1922 = vunpack.c.l.b16 %v1627
      %v1923 = vunpack.c.l.b16 %v1628
      %v1924 = vunpack.c.l.b16 %v1629
      %v1925 = vunpack.c.l.b16 %v1630
      %v1926 = vunpack.c.l.b16 %v1631
      %v1927 = vunpack.c.l.b16 %v1632
      %v1928 = vunpack.c.l.b16 %v1633
      %v1929 = vunpack.c.l.b16 %v1634
      %v1930 = vunpack.c.l.b16 %v1635
      %v1931 = vunpack.c.l.b16 %v1636
      %v1932 = vunpack.c.l.b16 %v1637
      %v1933 = vunpack.c.l.b16 %v1638
      %v1934 = vunpack.c.l.b16 %v1639
      %v1935 = vunpack.c.l.b16 %v1640
      %v1936 = vunpack.c.l.b16 %v1641
      %v1937 = vunpack.c.l.b16 %v1642
      %v1938 = vunpack.c.l.b16 %v1643
      %v1939 = vunpack.c.l.b16 %v1644
      %v1940 = vunpack.c.l.b16 %v1645
      %v1941 = vunpack.c.l.b16 %v1646
      %v1942 = vunpack.c.l.b16 %v1647
      %v1943 = vunpack.c.l.b16 %v1648
      %v1944 = vunpack.c.l.b16 %v1649
      %v1945 = vunpack.c.l.b16 %v1650
      %v1946 = vunpack.c.l.b16 %v1651
      %v1947 = vunpack.c.l.b16 %v1652
      %v1948 = vunpack.c.l.b16 %v1653
      %v1949 = vunpack.c.l.b16 %v1654
      %v1950 = vunpack.c.l.b16 %v1655
      %v1951 = vunpack.c.l.b16 %v1656
      %v1952 = vunpack.c.l.b16 %v1657
      %v1953 = vunpack.c.l.b16 %v1658
      %v1954 = vunpack.c.l.b16 %v1659
      %v1955 = vunpack.c.l.b16 %v1660
      %v1956 = vunpack.c.l.b16 %v1661
      %v1957 = vunpack.c.l.b16 %v1662
      %v1958 = vunpack.c.l.b16 %v1663
      %v1959 = vunpack.c.l.b16 %v1664
      %v1960 = vunpack.c.l.b16 %v1665
      %v1961 = vunpack.c.l.b16 %v1666
      %v1962 = vunpack.c.l.b16 %v1667
      %v1963 = vunpack.c.l.b16 %v1668
      %v1964 = vunpack.c.l.b16 %v1669
      %v1965 = vunpack.c.l.b16 %v1670
      %v1966 = vunpack.c.l.b16 %v1671
      %v1967 = vunpack.c.l.b16 %v1672
      %v1968 = vunpack.c.l.b16 %v1673
      %v1969 = vunpack.c.l.b16 %v1674
      %v1970 = vunpack.c.l.b16 %v1675
      %v1971 = vunpack.c.l.b16 %v1676
      %v1972 = vunpack.c.l.b16 %v1677
      %v1973 = vunpack.c.l.b16 %v1678
      %v1974 = vunpack.c.l.b16 %v1679
      %v1975 = vunpack.c.l.b16 %v1680
      %v1976 = vunpack.c.l.b16 %v1681
      %v1977 = vunpack.c.l.b16 %v1682
      %v1978 = vunpack.c.l.b16 %v1683
      %v1979 = vunpack.c.l.b16 %v1684
      %v1980 = vunpack.c.l.b16 %v1685
      %v1981 = vunpack.c.l.b16 %v1686
      %v1982 = vunpack.c.l.b16 %v1687
      %v1983 = vunpack.c.l.b16 %v1688
      %v1984 = vunpack.c.l.b16 %v1689
      %v1985 = vunpack.c.l.b16 %v1690
      %v1986 = vunpack.c.l.b16 %v1691
      %v1987 = vunpack.c.l.b16 %v1692
      %v1988 = vunpack.c.l.b16 %v1693
      %v1989 = vunpack.c.l.b16 %v1694
      %v1990 = vunpack.c.l.b16 %v1695
      %v1991 = vunpack.c.l.b16 %v1696
      %v1992 = vunpack.c.l.b16 %v1697
      %v1993 = vunpack.c.l.b16 %v1698
      %v1994 = vunpack.c.l.b16 %v1699
      %v1995 = vunpack.c.l.b16 %v1700
      %v1996 = vunpack.c.l.b16 %v1701
      %v1997 = vunpack.c.l.b16 %v1702
      %v1998 = vunpack.c.l.b16 %v1703
      %v1999 = vunpack.c.l.b16 %v1704
      %v2000 = vunpack.c.l.b16 %v1705
      %v2001 = vunpack.c.l.b16 %v1706
      %v2002 = vunpack.c.l.b16 %v1707
      %v2003 = vunpack.c.l.b16 %v1708
      %v2004 = vunpack.c.l.b16 %v1709
      %v2005 = vunpack.c.l.b16 %v1710
      %v2006 = vunpack.c.l.b16 %v1711
      %v2007 = vunpack.c.l.b16 %v1712
      %v2008 = vunpack.c.l.b16 %v1713
      %v2009 = vunpack.c.l.b16 %v1714
      %v2010 = vunpack.c.l.b16 %v1715
      %v2011 = vunpack.c.l.b16 %v1716
      %v2012 = vunpack.c.l.b16 %v1717
      %v2013 = vunpack.c.l.b16 %v1718
      %v2014 = vunpack.c.l.b16 %v1719
      %v2015 = vunpack.c.l.b16 %v1720
      %v2016 = vunpack.c.l.b16 %v1721
      %v2017 = vunpack.c.l.b16 %v1722
      %v2018 = vpack.c.b16 %v1875, %v1874
      %v2019 = vpack.c.b16 %v1877, %v1876
      %v2020 = vpack.c.b16 %v1879, %v1878
      %v2021 = vpack.c.b16 %v1881, %v1880
      %v2022 = vpack.c.b16 %v1883, %v1882
      %v2023 = vpack.c.b16 %v1885, %v1884
      %v2024 = vpack.c.b16 %v1887, %v1886
      %v2025 = vpack.c.b16 %v1889, %v1888
      %v2026 = vpack.c.b16 %v1891, %v1890
      %v2027 = vpack.c.b16 %v1893, %v1892
      %v2028 = vpack.c.b16 %v1895, %v1894
      %v2029 = vpack.c.b16 %v1897, %v1896
      %v2030 = vpack.c.b16 %v1899, %v1898
      %v2031 = vpack.c.b16 %v1901, %v1900
      %v2032 = vpack.c.b16 %v1903, %v1902
      %v2033 = vpack.c.b16 %v1905, %v1904
      %v2034 = vpack.c.b16 %v1907, %v1906
      %v2035 = vpack.c.b16 %v1909, %v1908
      %v2036 = vpack.c.b16 %v1911, %v1910
      %v2037 = vpack.c.b16 %v1913, %v1912
      %v2038 = vpack.c.b16 %v1915, %v1914
      %v2039 = vpack.c.b16 %v1917, %v1916
      %v2040 = vpack.c.b16 %v1919, %v1918
      %v2041 = vpack.c.b16 %v1921, %v1920
      %v2042 = vpack.c.b16 %v1923, %v1922
      %v2043 = vpack.c.b16 %v1925, %v1924
      %v2044 = vpack.c.b16 %v1927, %v1926
      %v2045 = vpack.c.b16 %v1929, %v1928
      %v2046 = vpack.c.b16 %v1931, %v1930
      %v2047 = vpack.c.b16 %v1933, %v1932
      %v2048 = vpack.c.b16 %v1935, %v1934
      %v2049 = vpack.c.b16 %v1937, %v1936
      %v2050 = vpack.c.b16 %v1939, %v1938
      %v2051 = vpack.c.b16 %v1941, %v1940
      %v2052 = vpack.c.b16 %v1943, %v1942
      %v2053 = vpack.c.b16 %v1945, %v1944
      %v2054 = vpack.c.b16 %v1947, %v1946
      %v2055 = vpack.c.b16 %v1949, %v1948
      %v2056 = vpack.c.b16 %v1951, %v1950
      %v2057 = vpack.c.b16 %v1953, %v1952
      %v2058 = vpack.c.b16 %v1955, %v1954
      %v2059 = vpack.c.b16 %v1957, %v1956
      %v2060 = vpack.c.b16 %v1959, %v1958
      %v2061 = vpack.c.b16 %v1961, %v1960
      %v2062 = vpack.c.b16 %v1963, %v1962
      %v2063 = vpack.c.b16 %v1965, %v1964
      %v2064 = vpack.c.b16 %v1967, %v1966
      %v2065 = vpack.c.b16 %v1969, %v1968
      %v2066 = vpack.c.b16 %v1971, %v1970
      %v2067 = vpack.c.b16 %v1973, %v1972
      %v2068 = vpack.c.b16 %v1975, %v1974
      %v2069 = vpack.c.b16 %v1977, %v1976
      %v2070 = vpack.c.b16 %v1979, %v1978
      %v2071 = vpack.c.b16 %v1981, %v1980
      %v2072 = vpack.c.b16 %v1983, %v1982
      %v2073 = vpack.c.b16 %v1985, %v1984
      %v2074 = vpack.c.b16 %v1987, %v1986
      %v2075 = vpack.c.b16 %v1989, %v1988
      %v2076 = vpack.c.b16 %v1991, %v1990
      %v2077 = vpack.c.b16 %v1993, %v1992
      %v2078 = vpack.c.b16 %v1995, %v1994
      %v2079 = vpack.c.b16 %v1997, %v1996
      %v2080 = vpack.c.b16 %v1999, %v1998
      %v2081 = vpack.c.b16 %v2001, %v2000
      %v2082 = vpack.c.b16 %v2003, %v2002
      %v2083 = vpack.c.b16 %v2005, %v2004
      %v2084 = vpack.c.b16 %v2007, %v2006
      %v2085 = vpack.c.b16 %v2009, %v2008
      %v2086 = vpack.c.b16 %v2011, %v2010
      %v2087 = vpack.c.b16 %v2013, %v2012
      %v2088 = vpack.c.b16 %v2015, %v2014
      %v2089 = vpack.c.b16 %v2017, %v2016
      %2162 = vmatprep.subr.bf16.mxu0 0
      %2163 = vmatpush1.bf16.msra.mxu0 %v2018
      %2164 = vmatprep.subr.bf16.mxu0 0
      %2165 = vmatpush1.bf16.msra.mxu0 %v2019
      %2166 = vmatprep.subr.bf16.mxu0 0
      %2167 = vmatpush1.bf16.msra.mxu0 %v2020
      %2168 = vmatprep.subr.bf16.mxu0 0
      %2169 = vmatpush1.bf16.msra.mxu0 %v2021
      %2170 = vmatprep.subr.bf16.mxu0 0
      %2171 = vmatpush1.bf16.msra.mxu0 %v2022
      %2172 = vmatprep.subr.bf16.mxu0 0
      %2173 = vmatpush1.bf16.msra.mxu0 %v2023
      %2174 = vmatprep.subr.bf16.mxu0 0
      %2175 = vmatpush1.bf16.msra.mxu0 %v2024
      %2176 = vmatprep.subr.bf16.mxu0 0
      %2177 = vmatpush1.bf16.msra.mxu0 %v2025
      %2178 = vmatprep.subr.bf16.mxu0 0
      %2179 = vmatpush1.bf16.msra.mxu0 %v2026
      %2180 = vmatprep.subr.bf16.mxu0 0
      %2181 = vmatpush1.bf16.msra.mxu0 %v2027
      %2182 = vmatprep.subr.bf16.mxu0 0
      %2183 = vmatpush1.bf16.msra.mxu0 %v2028
      %2184 = vmatprep.subr.bf16.mxu0 0
      %2185 = vmatpush1.bf16.msra.mxu0 %v2029
      %2186 = vmatprep.subr.bf16.mxu0 0
      %2187 = vmatpush1.bf16.msra.mxu0 %v2030
      %2188 = vmatprep.subr.bf16.mxu0 0
      %2189 = vmatpush1.bf16.msra.mxu0 %v2031
      %2190 = vmatprep.subr.bf16.mxu0 0
      %2191 = vmatpush1.bf16.msra.mxu0 %v2032
      %2192 = vmatprep.subr.bf16.mxu0 0
      %2193 = vmatpush1.bf16.msra.mxu0 %v2033
      %2194 = vmatprep.mubr.bf16.mxu0 %v1544
      %2195 = vmatmul.mubr.bf16.gmra.mrb[0].mxu0 %v1543
      %v2196 = vpop.f32.mrb[0].mxu0
      %v2197 = vadd.f32 %v1728, %v2196
      %v2198 = vpop.f32.mrb[0].mxu0
      %v2199 = vpop.f32.mrb[0].mxu0
      %v2200 = vadd.f32 %v1728, %v2199
      %v2201 = vpop.f32.mrb[0].mxu0
      %2202 = vmatprep.mubr.bf16.mxu0 %v1553
      %2203 = vmatmul.mubr.bf16.gmra.mrb[0].mxu0 %v1552
      %v2204 = vpop.f32.mrb[0].mxu0
      %v2205 = vadd.f32 %v1728, %v2204
      %v2206 = vpop.f32.mrb[0].mxu0
      %v2207 = vpop.f32.mrb[0].mxu0
      %v2208 = vadd.f32 %v1728, %v2207
      %v2209 = vpop.f32.mrb[0].mxu0
      %2210 = vmatprep.mubr.bf16.mxu0 %v1562
      %2211 = vmatmul.mubr.bf16.gmra.mrb[0].mxu0 %v1561
      %v2212 = vpop.f32.mrb[0].mxu0
      %v2213 = vadd.f32 %v1728, %v2212
      %v2214 = vpop.f32.mrb[0].mxu0
      %v2215 = vpop.f32.mrb[0].mxu0
      %v2216 = vadd.f32 %v1728, %v2215
      %v2217 = vpop.f32.mrb[0].mxu0
      %2218 = vmatprep.mubr.bf16.mxu0 %v1571
      %2219 = vmatmul.mubr.bf16.gmra.mrb[0].mxu0 %v1570
      %v2220 = vpop.f32.mrb[0].mxu0
      %v2221 = vadd.f32 %v1728, %v2220
      %v2222 = vpop.f32.mrb[0].mxu0
      %v2223 = vpop.f32.mrb[0].mxu0
      %v2224 = vadd.f32 %v1728, %v2223
      %v2225 = vpop.f32.mrb[0].mxu0
      %2226 = vdwg.mxu0
      %2227 = vmatprep.subr.bf16.mxu0 0
      %2228 = vmatpush1.bf16.msra.mxu0 %v2034
      %2229 = vmatprep.subr.bf16.mxu0 0
      %2230 = vmatpush1.bf16.msra.mxu0 %v2035
      %2231 = vmatprep.subr.bf16.mxu0 0
      %2232 = vmatpush1.bf16.msra.mxu0 %v2036
      %2233 = vmatprep.subr.bf16.mxu0 0
      %2234 = vmatpush1.bf16.msra.mxu0 %v2037
      %2235 = vmatprep.subr.bf16.mxu0 0
      %2236 = vmatpush1.bf16.msra.mxu0 %v2038
      %2237 = vmatprep.subr.bf16.mxu0 0
      %2238 = vmatpush1.bf16.msra.mxu0 %v2039
      %2239 = vmatprep.subr.bf16.mxu0 0
      %2240 = vmatpush1.bf16.msra.mxu0 %v2040
      %2241 = vmatprep.subr.bf16.mxu0 0
      %2242 = vmatpush1.bf16.msra.mxu0 %v2041
      %2243 = vmatprep.subr.bf16.mxu0 0
      %2244 = vmatpush1.bf16.msra.mxu0 %v2042
      %2245 = vmatprep.subr.bf16.mxu0 0
      %2246 = vmatpush1.bf16.msra.mxu0 %v2043
      %2247 = vmatprep.subr.bf16.mxu0 0
      %2248 = vmatpush1.bf16.msra.mxu0 %v2044
      %2249 = vmatprep.subr.bf16.mxu0 0
      %2250 = vmatpush1.bf16.msra.mxu0 %v2045
      %2251 = vmatprep.subr.bf16.mxu0 0
      %2252 = vmatpush1.bf16.msra.mxu0 %v2046
      %2253 = vmatprep.subr.bf16.mxu0 0
      %2254 = vmatpush1.bf16.msra.mxu0 %v2047
      %2255 = vmatprep.subr.bf16.mxu0 0
      %2256 = vmatpush1.bf16.msra.mxu0 %v2048
      %2257 = vmatprep.subr.bf16.mxu0 0
      %2258 = vmatpush1.bf16.msra.mxu0 %v2049
      %2259 = vmatprep.mubr.bf16.mxu0 %v1546
      %2260 = vmatmul.mubr.bf16.gmra.mrb[0].mxu0 %v1545
      %v2261 = vpop.f32.mrb[0].mxu0
      %v2262 = vadd.f32 %v2197, %v2261
      %v2263 = vpop.f32.mrb[0].mxu0
      %v2264 = vpop.f32.mrb[0].mxu0
      %v2265 = vadd.f32 %v2200, %v2264
      %v2266 = vpop.f32.mrb[0].mxu0
      %2267 = vmatprep.mubr.bf16.mxu0 %v1555
      %2268 = vmatmul.mubr.bf16.gmra.mrb[0].mxu0 %v1554
      %v2269 = vpop.f32.mrb[0].mxu0
      %v2270 = vadd.f32 %v2205, %v2269
      %v2271 = vpop.f32.mrb[0].mxu0
      %v2272 = vpop.f32.mrb[0].mxu0
      %v2273 = vadd.f32 %v2208, %v2272
      %v2274 = vpop.f32.mrb[0].mxu0
      %2275 = vmatprep.mubr.bf16.mxu0 %v1564
      %2276 = vmatmul.mubr.bf16.gmra.mrb[0].mxu0 %v1563
      %v2277 = vpop.f32.mrb[0].mxu0
      %v2278 = vadd.f32 %v2213, %v2277
      %v2279 = vpop.f32.mrb[0].mxu0
      %v2280 = vpop.f32.mrb[0].mxu0
      %v2281 = vadd.f32 %v2216, %v2280
      %v2282 = vpop.f32.mrb[0].mxu0
      %2283 = vmatprep.mubr.bf16.mxu0 %v1573
      %2284 = vmatmul.mubr.bf16.gmra.mrb[0].mxu0 %v1572
      %v2285 = vpop.f32.mrb[0].mxu0
      %v2286 = vadd.f32 %v2221, %v2285
      %v2287 = vpop.f32.mrb[0].mxu0
      %v2288 = vpop.f32.mrb[0].mxu0
      %v2289 = vadd.f32 %v2224, %v2288
      %v2290 = vpop.f32.mrb[0].mxu0
      %2291 = vdwg.mxu0
      %2292 = vmatprep.subr.bf16.mxu0 0
      %2293 = vmatpush1.bf16.msra.mxu0 %v2050
      %2294 = vmatprep.subr.bf16.mxu0 0
      %2295 = vmatpush1.bf16.msra.mxu0 %v2051
      %2296 = vmatprep.subr.bf16.mxu0 0
      %2297 = vmatpush1.bf16.msra.mxu0 %v2052
      %2298 = vmatprep.subr.bf16.mxu0 0
      %2299 = vmatpush1.bf16.msra.mxu0 %v2053
      %2300 = vmatprep.subr.bf16.mxu0 0
      %2301 = vmatpush1.bf16.msra.mxu0 %v2054
      %2302 = vmatprep.subr.bf16.mxu0 0
      %2303 = vmatpush1.bf16.msra.mxu0 %v2055
      %2304 = vmatprep.subr.bf16.mxu0 0
      %2305 = vmatpush1.bf16.msra.mxu0 %v2056
      %2306 = vmatprep.subr.bf16.mxu0 0
      %2307 = vmatpush1.bf16.msra.mxu0 %v2057
      %2308 = vmatprep.subr.bf16.mxu0 0
      %2309 = vmatpush1.bf16.msra.mxu0 %v2058
      %2310 = vmatprep.subr.bf16.mxu0 0
      %2311 = vmatpush1.bf16.msra.mxu0 %v2059
      %2312 = vmatprep.subr.bf16.mxu0 0
      %2313 = vmatpush1.bf16.msra.mxu0 %v2060
      %2314 = vmatprep.subr.bf16.mxu0 0
      %2315 = vmatpush1.bf16.msra.mxu0 %v2061
      %2316 = vmatprep.subr.bf16.mxu0 0
      %2317 = vmatpush1.bf16.msra.mxu0 %v2062
      %2318 = vmatprep.subr.bf16.mxu0 0
      %2319 = vmatpush1.bf16.msra.mxu0 %v2063
      %2320 = vmatprep.subr.bf16.mxu0 0
      %2321 = vmatpush1.bf16.msra.mxu0 %v2064
      %2322 = vmatprep.subr.bf16.mxu0 0
      %2323 = vmatpush1.bf16.msra.mxu0 %v2065
      %2324 = vmatprep.mubr.bf16.mxu0 %v1548
      %2325 = vmatmul.mubr.bf16.gmra.mrb[0].mxu0 %v1547
      %v2326 = vpop.f32.mrb[0].mxu0
      %v2327 = vadd.f32 %v2262, %v2326
      %v2328 = vpop.f32.mrb[0].mxu0
      %v2329 = vpop.f32.mrb[0].mxu0
      %v2330 = vadd.f32 %v2265, %v2329
      %v2331 = vpop.f32.mrb[0].mxu0
      %2332 = vmatprep.mubr.bf16.mxu0 %v1557
      %2333 = vmatmul.mubr.bf16.gmra.mrb[0].mxu0 %v1556
      %v2334 = vpop.f32.mrb[0].mxu0
      %v2335 = vadd.f32 %v2270, %v2334
      %v2336 = vpop.f32.mrb[0].mxu0
      %v2337 = vpop.f32.mrb[0].mxu0
      %v2338 = vadd.f32 %v2273, %v2337
      %v2339 = vpop.f32.mrb[0].mxu0
      %2340 = vmatprep.mubr.bf16.mxu0 %v1566
      %2341 = vmatmul.mubr.bf16.gmra.mrb[0].mxu0 %v1565
      %v2342 = vpop.f32.mrb[0].mxu0
      %v2343 = vadd.f32 %v2278, %v2342
      %v2344 = vpop.f32.mrb[0].mxu0
      %v2345 = vpop.f32.mrb[0].mxu0
      %v2346 = vadd.f32 %v2281, %v2345
      %v2347 = vpop.f32.mrb[0].mxu0
      %2348 = vmatprep.mubr.bf16.mxu0 %v1575
      %2349 = vmatmul.mubr.bf16.gmra.mrb[0].mxu0 %v1574
      %v2350 = vpop.f32.mrb[0].mxu0
      %v2351 = vadd.f32 %v2286, %v2350
      %v2352 = vpop.f32.mrb[0].mxu0
      %v2353 = vpop.f32.mrb[0].mxu0
      %v2354 = vadd.f32 %v2289, %v2353
      %v2355 = vpop.f32.mrb[0].mxu0
      %2356 = vdwg.mxu0
      %2357 = vmatprep.subr.bf16.mxu0 0
      %2358 = vmatpush1.bf16.msra.mxu0 %v2066
      %2359 = vmatprep.subr.bf16.mxu0 0
      %2360 = vmatpush1.bf16.msra.mxu0 %v2067
      %2361 = vmatprep.subr.bf16.mxu0 0
      %2362 = vmatpush1.bf16.msra.mxu0 %v2068
      %2363 = vmatprep.subr.bf16.mxu0 0
      %2364 = vmatpush1.bf16.msra.mxu0 %v2069
      %2365 = vmatprep.subr.bf16.mxu0 0
      %2366 = vmatpush1.bf16.msra.mxu0 %v2070
      %2367 = vmatprep.subr.bf16.mxu0 0
      %2368 = vmatpush1.bf16.msra.mxu0 %v2071
      %2369 = vmatprep.subr.bf16.mxu0 0
      %2370 = vmatpush1.bf16.msra.mxu0 %v2072
      %2371 = vmatprep.subr.bf16.mxu0 0
      %2372 = vmatpush1.bf16.msra.mxu0 %v2073
      %2373 = vmatprep.subr.bf16.mxu0 0
      %2374 = vmatpush1.bf16.msra.mxu0 %v2074
      %2375 = vmatprep.subr.bf16.mxu0 0
      %2376 = vmatpush1.bf16.msra.mxu0 %v2075
      %2377 = vmatprep.subr.bf16.mxu0 0
      %2378 = vmatpush1.bf16.msra.mxu0 %v2076
      %2379 = vmatprep.subr.bf16.mxu0 0
      %2380 = vmatpush1.bf16.msra.mxu0 %v2077
      %2381 = vmatprep.subr.bf16.mxu0 0
      %2382 = vmatpush1.bf16.msra.mxu0 %v2078
      %2383 = vmatprep.subr.bf16.mxu0 0
      %2384 = vmatpush1.bf16.msra.mxu0 %v2079
      %2385 = vmatprep.subr.bf16.mxu0 0
      %2386 = vmatpush1.bf16.msra.mxu0 %v2080
      %2387 = vmatprep.subr.bf16.mxu0 0
      %2388 = vmatpush1.bf16.msra.mxu0 %v2081
      %2389 = vmatprep.mubr.bf16.mxu0 %v1550
      %2390 = vmatmul.mubr.bf16.gmra.mrb[0].mxu0 %v1549
      %v2391 = vpop.f32.mrb[0].mxu0
      %v2392 = vadd.f32 %v2327, %v2391
      %v2393 = vpop.f32.mrb[0].mxu0
      %v2394 = vpop.f32.mrb[0].mxu0
      %v2395 = vadd.f32 %v2330, %v2394
      %v2396 = vpop.f32.mrb[0].mxu0
      %2397 = vmatprep.mubr.bf16.mxu0 %v1559
      %2398 = vmatmul.mubr.bf16.gmra.mrb[0].mxu0 %v1558
      %v2399 = vpop.f32.mrb[0].mxu0
      %v2400 = vadd.f32 %v2335, %v2399
      %v2401 = vpop.f32.mrb[0].mxu0
      %v2402 = vpop.f32.mrb[0].mxu0
      %v2403 = vadd.f32 %v2338, %v2402
      %v2404 = vpop.f32.mrb[0].mxu0
      %2405 = vmatprep.mubr.bf16.mxu0 %v1568
      %2406 = vmatmul.mubr.bf16.gmra.mrb[0].mxu0 %v1567
      %v2407 = vpop.f32.mrb[0].mxu0
      %v2408 = vadd.f32 %v2343, %v2407
      %v2409 = vpop.f32.mrb[0].mxu0
      %v2410 = vpop.f32.mrb[0].mxu0
      %v2411 = vadd.f32 %v2346, %v2410
      %v2412 = vpop.f32.mrb[0].mxu0
      %2413 = vmatprep.mubr.bf16.mxu0 %v1577
      %2414 = vmatmul.mubr.bf16.gmra.mrb[0].mxu0 %v1576
      %v2415 = vpop.f32.mrb[0].mxu0
      %v2416 = vadd.f32 %v2351, %v2415
      %v2417 = vpop.f32.mrb[0].mxu0
      %v2418 = vpop.f32.mrb[0].mxu0
      %v2419 = vadd.f32 %v2354, %v2418
      %v2420 = vpop.f32.mrb[0].mxu0
      %2421 = vdwg.mxu0
      %2422 = vmatprep.subr.bf16.mxu0 0
      %2423 = vmatpush1.bf16.msra.mxu0 %v2082
      %2424 = vmatprep.subr.bf16.mxu0 0
      %2425 = vmatpush1.bf16.msra.mxu0 %v2083
      %2426 = vmatprep.subr.bf16.mxu0 0
      %2427 = vmatpush1.bf16.msra.mxu0 %v2084
      %2428 = vmatprep.subr.bf16.mxu0 0
      %2429 = vmatpush1.bf16.msra.mxu0 %v2085
      %2430 = vmatprep.subr.bf16.mxu0 0
      %2431 = vmatpush1.bf16.msra.mxu0 %v2086
      %2432 = vmatprep.subr.bf16.mxu0 0
      %2433 = vmatpush1.bf16.msra.mxu0 %v2087
      %2434 = vmatprep.subr.bf16.mxu0 0
      %2435 = vmatpush1.bf16.msra.mxu0 %v2088
      %2436 = vmatprep.subr.bf16.mxu0 0
      %2437 = vmatpush1.bf16.msra.mxu0 %v2089
      %2438 = vmatprep.subr.bf16.mxu0 0
      %2439 = vmatpush1.bf16.msra.mxu0 0
      %2440 = vmatprep.subr.bf16.mxu0 0
      %2441 = vmatpush1.bf16.msra.mxu0 0
      %2442 = vmatprep.subr.bf16.mxu0 0
      %2443 = vmatpush1.bf16.msra.mxu0 0
      %2444 = vmatprep.subr.bf16.mxu0 0
      %2445 = vmatpush1.bf16.msra.mxu0 0
      %2446 = vmatprep.subr.bf16.mxu0 0
      %2447 = vmatpush1.bf16.msra.mxu0 0
      %2448 = vmatprep.subr.bf16.mxu0 0
      %2449 = vmatpush1.bf16.msra.mxu0 0
      %2450 = vmatprep.subr.bf16.mxu0 0
      %2451 = vmatpush1.bf16.msra.mxu0 0
      %2452 = vmatprep.subr.bf16.mxu0 0
      %2453 = vmatpush1.bf16.msra.mxu0 0
      %2454 = vmatprep.mubr.bf16.mxu0 0
      %2455 = vmatmul.mubr.bf16.gmra.mrb[0].mxu0 %v1551
      %v2456 = vpop.f32.mrb[0].mxu0
      %v2457 = vadd.f32 %v2392, %v2456
      %v2458 = vpop.f32.mrb[0].mxu0
      %v2459 = vpop.f32.mrb[0].mxu0
      %v2460 = vadd.f32 %v2395, %v2459
      %v2461 = vpop.f32.mrb[0].mxu0
      %2462 = vmatprep.mubr.bf16.mxu0 0
      %2463 = vmatmul.mubr.bf16.gmra.mrb[0].mxu0 %v1560
      %v2464 = vpop.f32.mrb[0].mxu0
      %v2465 = vadd.f32 %v2400, %v2464
      %v2466 = vpop.f32.mrb[0].mxu0
      %v2467 = vpop.f32.mrb[0].mxu0
      %v2468 = vadd.f32 %v2403, %v2467
      %v2469 = vpop.f32.mrb[0].mxu0
      %2470 = vmatprep.mubr.bf16.mxu0 0
      %2471 = vmatmul.mubr.bf16.gmra.mrb[0].mxu0 %v1569
      %v2472 = vpop.f32.mrb[0].mxu0
      %v2473 = vadd.f32 %v2408, %v2472
      %v2474 = vpop.f32.mrb[0].mxu0
      %v2475 = vpop.f32.mrb[0].mxu0
      %v2476 = vadd.f32 %v2411, %v2475
      %v2477 = vpop.f32.mrb[0].mxu0
      %2478 = vmatprep.mubr.bf16.mxu0 0
      %2479 = vmatmul.mubr.bf16.gmra.mrb[0].mxu0 %v1578
      %v2480 = vpop.f32.mrb[0].mxu0
      %v2481 = vadd.f32 %v2416, %v2480
      %v2482 = vpop.f32.mrb[0].mxu0
      %v2483 = vpop.f32.mrb[0].mxu0
      %v2484 = vadd.f32 %v2419, %v2483
      %v2485 = vpop.f32.mrb[0].mxu0
      %2486 = vdwg.mxu0
      %vm2487 = vcmp.ge.f32.partialorder %v2457, 0.0
      %vm2488 = vcmp.ge.f32.partialorder %v2460, 0.0
      %vm2489 = vcmp.ge.f32.partialorder %v2465, 0.0
      %vm2490 = vcmp.ge.f32.partialorder %v2468, 0.0
      %vm2491 = vcmp.ge.f32.partialorder %v2473, 0.0
      %vm2492 = vcmp.ge.f32.partialorder %v2476, 0.0
      %vm2493 = vcmp.ge.f32.partialorder %v2481, 0.0
      %vm2494 = vcmp.ge.f32.partialorder %v2484, 0.0
      %v2495 = vmul.f32 %v2457, 0.1
      %v2496 = vmul.f32 %v2460, 0.1
      %v2497 = vmul.f32 %v2465, 0.1
      %v2498 = vmul.f32 %v2468, 0.1
      %v2499 = vmul.f32 %v2473, 0.1
      %v2500 = vmul.f32 %v2476, 0.1
      %v2501 = vmul.f32 %v2481, 0.1
      %v2502 = vmul.f32 %v2484, 0.1
      %v2503 = vsel %vm2487, %v2457, %v2495
      %v2504 = vsel %vm2488, %v2460, %v2496
      %v2505 = vsel %vm2489, %v2465, %v2497
      %v2506 = vsel %vm2490, %v2468, %v2498
      %v2507 = vsel %vm2491, %v2473, %v2499
      %v2508 = vsel %vm2492, %v2476, %v2500
      %v2509 = vsel %vm2493, %v2481, %v2501
      %v2510 = vsel %vm2494, %v2484, %v2502
      %2511 = vst [vmem:[%s413 + $0x1] sm:$0xff] %v2503
      %2512 = vst [vmem:[%s413 + $0x11] sm:$0xff] %v2504
      %2513 = vst [vmem:[%s413 + $0x21] sm:$0xff] %v2505
      %2514 = vst [vmem:[%s413 + $0x31] sm:$0xff] %v2506
      %2515 = vst [vmem:[%s413 + $0x41] sm:$0xff] %v2507
      %2516 = vst [vmem:[%s413 + $0x51] sm:$0xff] %v2508
      %2517 = vst [vmem:[%s413 + $0x61] sm:$0xff] %v2509
      %2518 = vst [vmem:[%s413 + $0x71] sm:$0xff] %v2510
      %v2519 = vld [vmem:[#allocation2] sm:$0xff]
      %v2520 = vld [vmem:[#allocation2 + $0x10] sm:$0xff]
      %v2521 = vld [vmem:[#allocation2 + $0x20] sm:$0xff]
      %v2522 = vld [vmem:[#allocation2 + $0x30] sm:$0xff]
      %v2523 = vld [vmem:[#allocation2 + $0x40] sm:$0xff]
      %v2524 = vld [vmem:[#allocation2 + $0x50] sm:$0xff]
      %v2525 = vld [vmem:[#allocation2 + $0x60] sm:$0xff]
      %v2526 = vld [vmem:[#allocation2 + $0x70] sm:$0xff]
      %v2527 = vld [vmem:[#allocation2 + $0x1] sm:$0xff]
      %v2528 = vld [vmem:[#allocation2 + $0x11] sm:$0xff]
      %v2529 = vld [vmem:[#allocation2 + $0x21] sm:$0xff]
      %v2530 = vld [vmem:[#allocation2 + $0x31] sm:$0xff]
      %v2531 = vld [vmem:[#allocation2 + $0x41] sm:$0xff]
      %v2532 = vld [vmem:[#allocation2 + $0x51] sm:$0xff]
      %v2533 = vld [vmem:[#allocation2 + $0x61] sm:$0xff]
      %v2534 = vld [vmem:[#allocation2 + $0x71] sm:$0xff]
      %v2535 = vld [vmem:[%s413] sm:$0xff]
      %v2536 = vld [vmem:[%s413 + $0x10] sm:$0xff]
      %v2537 = vld [vmem:[%s413 + $0x20] sm:$0xff]
      %v2538 = vld [vmem:[%s413 + $0x30] sm:$0xff]
      %v2539 = vld [vmem:[%s413 + $0x40] sm:$0xff]
      %v2540 = vld [vmem:[%s413 + $0x50] sm:$0xff]
      %v2541 = vld [vmem:[%s413 + $0x60] sm:$0xff]
      %v2542 = vld [vmem:[%s413 + $0x70] sm:$0xff]
      %v2543 = vld [vmem:[%s413 + $0x1] sm:$0xff]
      %v2544 = vld [vmem:[%s413 + $0x11] sm:$0xff]
      %v2545 = vld [vmem:[%s413 + $0x21] sm:$0xff]
      %v2546 = vld [vmem:[%s413 + $0x31] sm:$0xff]
      %v2547 = vld [vmem:[%s413 + $0x41] sm:$0xff]
      %v2548 = vld [vmem:[%s413 + $0x51] sm:$0xff]
      %v2549 = vld [vmem:[%s413 + $0x61] sm:$0xff]
      %v2550 = vld [vmem:[%s413 + $0x71] sm:$0xff]
      %v2551 = vpack.c.bf16 %v2520, %v2519
      %v2552 = vpack.c.bf16 %v2528, %v2527
      %v2553 = vpack.c.bf16 %v2536, %v2535
      %v2554 = vpack.c.bf16 %v2544, %v2543
      %v2555 = vpack.c.bf16 %v2522, %v2521
      %v2556 = vpack.c.bf16 %v2530, %v2529
      %v2557 = vpack.c.bf16 %v2538, %v2537
      %v2558 = vpack.c.bf16 %v2546, %v2545
      %v2559 = vpack.c.bf16 %v2524, %v2523
      %v2560 = vpack.c.bf16 %v2532, %v2531
      %v2561 = vpack.c.bf16 %v2540, %v2539
      %v2562 = vpack.c.bf16 %v2548, %v2547
      %v2563 = vpack.c.bf16 %v2526, %v2525
      %v2564 = vpack.c.bf16 %v2534, %v2533
      %v2565 = vpack.c.bf16 %v2542, %v2541
      %v2566 = vpack.c.bf16 %v2550, %v2549
      %v2567 = vld [vmem:[%s5] sm:$0xf]
      %v2568 = vld [vmem:[%s5 + $0x4] sm:$0xf]
      %v2569 = vld [vmem:[%s5 + $0x8] sm:$0xf]
      %v2570 = vld [vmem:[%s5 + $0xc] sm:$0xf]
      %v2571 = vld [vmem:[%s5 + $0x10] sm:$0xf]
      %v2572 = vld [vmem:[%s5 + $0x14] sm:$0xf]
      %v2573 = vld [vmem:[%s5 + $0x18] sm:$0xf]
      %v2574 = vld [vmem:[%s5 + $0x1c] sm:$0xf]
      %v2575 = vld [vmem:[%s5 + $0x20] sm:$0xf]
      %v2576 = vld [vmem:[%s5 + $0x24] sm:$0xf]
      %v2577 = vld [vmem:[%s5 + $0x28] sm:$0xf]
      %v2578 = vld [vmem:[%s5 + $0x2c] sm:$0xf]
      %v2579 = vld [vmem:[%s5 + $0x30] sm:$0xf]
      %v2580 = vld [vmem:[%s5 + $0x34] sm:$0xf]
      %v2581 = vld [vmem:[%s5 + $0x38] sm:$0xf]
      %v2582 = vld [vmem:[%s5 + $0x3c] sm:$0xf]
      %v2583 = vld [vmem:[%s5 + $0x40] sm:$0xf]
      %v2584 = vld [vmem:[%s5 + $0x44] sm:$0xf]
      %v2585 = vld [vmem:[%s5 + $0x48] sm:$0xf]
      %v2586 = vld [vmem:[%s5 + $0x4c] sm:$0xf]
      %v2587 = vld [vmem:[%s5 + $0x50] sm:$0xf]
      %v2588 = vld [vmem:[%s5 + $0x54] sm:$0xf]
      %v2589 = vld [vmem:[%s5 + $0x58] sm:$0xf]
      %v2590 = vld [vmem:[%s5 + $0x5c] sm:$0xf]
      %v2591 = vld [vmem:[%s5 + $0x60] sm:$0xf]
      %v2592 = vld [vmem:[%s5 + $0x64] sm:$0xf]
      %v2593 = vld [vmem:[%s5 + $0x68] sm:$0xf]
      %v2594 = vld [vmem:[%s5 + $0x6c] sm:$0xf]
      %v2595 = vld [vmem:[%s5 + $0x70] sm:$0xf]
      %v2596 = vld [vmem:[%s5 + $0x74] sm:$0xf]
      %v2597 = vld [vmem:[%s5 + $0x78] sm:$0xf]
      %v2598 = vld [vmem:[%s5 + $0x7c] sm:$0xf]
      %v2599 = vld [vmem:[%s5 + $0x80] sm:$0xf]
      %v2600 = vld [vmem:[%s5 + $0x84] sm:$0xf]
      %v2601 = vld [vmem:[%s5 + $0x88] sm:$0xf]
      %v2602 = vld [vmem:[%s5 + $0x8c] sm:$0xf]
      %v2603 = vld [vmem:[%s5 + $0x90] sm:$0xf]
      %v2604 = vld [vmem:[%s5 + $0x94] sm:$0xf]
      %v2605 = vld [vmem:[%s5 + $0x98] sm:$0xf]
      %v2606 = vld [vmem:[%s5 + $0x9c] sm:$0xf]
      %v2607 = vld [vmem:[%s5 + $0xa0] sm:$0xf]
      %v2608 = vld [vmem:[%s5 + $0xa4] sm:$0xf]
      %v2609 = vld [vmem:[%s5 + $0xa8] sm:$0xf]
      %v2610 = vld [vmem:[%s5 + $0xac] sm:$0xf]
      %v2611 = vld [vmem:[%s5 + $0xb0] sm:$0xf]
      %v2612 = vld [vmem:[%s5 + $0xb4] sm:$0xf]
      %v2613 = vld [vmem:[%s5 + $0xb8] sm:$0xf]
      %v2614 = vld [vmem:[%s5 + $0xbc] sm:$0xf]
      %v2615 = vld [vmem:[%s5 + $0xc0] sm:$0xf]
      %v2616 = vld [vmem:[%s5 + $0xc4] sm:$0xf]
      %v2617 = vld [vmem:[%s5 + $0xc8] sm:$0xf]
      %v2618 = vld [vmem:[%s5 + $0xcc] sm:$0xf]
      %v2619 = vld [vmem:[%s5 + $0xd0] sm:$0xf]
      %v2620 = vld [vmem:[%s5 + $0xd4] sm:$0xf]
      %v2621 = vld [vmem:[%s5 + $0xd8] sm:$0xf]
      %v2622 = vld [vmem:[%s5 + $0xdc] sm:$0xf]
      %v2623 = vld [vmem:[%s5 + $0xe0] sm:$0xf]
      %v2624 = vld [vmem:[%s5 + $0xe4] sm:$0xf]
      %v2625 = vld [vmem:[%s5 + $0xe8] sm:$0xf]
      %v2626 = vld [vmem:[%s5 + $0xec] sm:$0xf]
      %v2627 = vld [vmem:[%s5 + $0xf0] sm:$0xf]
      %v2628 = vld [vmem:[%s5 + $0xf4] sm:$0xf]
      %v2629 = vld [vmem:[%s5 + $0xf8] sm:$0xf]
      %v2630 = vld [vmem:[%s5 + $0xfc] sm:$0xf]
      %v2695 = vunpack.c.l.b16 %v2567
      %v2696 = vunpack.c.l.b16 %v2568
      %v2697 = vunpack.c.l.b16 %v2569
      %v2698 = vunpack.c.l.b16 %v2570
      %v2699 = vunpack.c.l.b16 %v2571
      %v2700 = vunpack.c.l.b16 %v2572
      %v2701 = vunpack.c.l.b16 %v2573
      %v2702 = vunpack.c.l.b16 %v2574
      %v2703 = vunpack.c.l.b16 %v2575
      %v2704 = vunpack.c.l.b16 %v2576
      %v2705 = vunpack.c.l.b16 %v2577
      %v2706 = vunpack.c.l.b16 %v2578
      %v2707 = vunpack.c.l.b16 %v2579
      %v2708 = vunpack.c.l.b16 %v2580
      %v2709 = vunpack.c.l.b16 %v2581
      %v2710 = vunpack.c.l.b16 %v2582
      %v2711 = vunpack.c.l.b16 %v2583
      %v2712 = vunpack.c.l.b16 %v2584
      %v2713 = vunpack.c.l.b16 %v2585
      %v2714 = vunpack.c.l.b16 %v2586
      %v2715 = vunpack.c.l.b16 %v2587
      %v2716 = vunpack.c.l.b16 %v2588
      %v2717 = vunpack.c.l.b16 %v2589
      %v2718 = vunpack.c.l.b16 %v2590
      %v2719 = vunpack.c.l.b16 %v2591
      %v2720 = vunpack.c.l.b16 %v2592
      %v2721 = vunpack.c.l.b16 %v2593
      %v2722 = vunpack.c.l.b16 %v2594
      %v2723 = vunpack.c.l.b16 %v2595
      %v2724 = vunpack.c.l.b16 %v2596
      %v2725 = vunpack.c.l.b16 %v2597
      %v2726 = vunpack.c.l.b16 %v2598
      %v2727 = vunpack.c.l.b16 %v2599
      %v2728 = vunpack.c.l.b16 %v2600
      %v2729 = vunpack.c.l.b16 %v2601
      %v2730 = vunpack.c.l.b16 %v2602
      %v2731 = vunpack.c.l.b16 %v2603
      %v2732 = vunpack.c.l.b16 %v2604
      %v2733 = vunpack.c.l.b16 %v2605
      %v2734 = vunpack.c.l.b16 %v2606
      %v2735 = vunpack.c.l.b16 %v2607
      %v2736 = vunpack.c.l.b16 %v2608
      %v2737 = vunpack.c.l.b16 %v2609
      %v2738 = vunpack.c.l.b16 %v2610
      %v2739 = vunpack.c.l.b16 %v2611
      %v2740 = vunpack.c.l.b16 %v2612
      %v2741 = vunpack.c.l.b16 %v2613
      %v2742 = vunpack.c.l.b16 %v2614
      %v2743 = vunpack.c.l.b16 %v2615
      %v2744 = vunpack.c.l.b16 %v2616
      %v2745 = vunpack.c.l.b16 %v2617
      %v2746 = vunpack.c.l.b16 %v2618
      %v2747 = vunpack.c.l.b16 %v2619
      %v2748 = vunpack.c.l.b16 %v2620
      %v2749 = vunpack.c.l.b16 %v2621
      %v2750 = vunpack.c.l.b16 %v2622
      %v2751 = vunpack.c.l.b16 %v2623
      %v2752 = vunpack.c.l.b16 %v2624
      %v2753 = vunpack.c.l.b16 %v2625
      %v2754 = vunpack.c.l.b16 %v2626
      %v2755 = vunpack.c.l.b16 %v2627
      %v2756 = vunpack.c.l.b16 %v2628
      %v2757 = vunpack.c.l.b16 %v2629
      %v2758 = vunpack.c.l.b16 %v2630
      %v2759 = vpack.c.b16 %v2696, %v2695
      %v2760 = vpack.c.b16 %v2698, %v2697
      %v2761 = vpack.c.b16 %v2700, %v2699
      %v2762 = vpack.c.b16 %v2702, %v2701
      %v2763 = vpack.c.b16 %v2704, %v2703
      %v2764 = vpack.c.b16 %v2706, %v2705
      %v2765 = vpack.c.b16 %v2708, %v2707
      %v2766 = vpack.c.b16 %v2710, %v2709
      %v2767 = vpack.c.b16 %v2712, %v2711
      %v2768 = vpack.c.b16 %v2714, %v2713
      %v2769 = vpack.c.b16 %v2716, %v2715
      %v2770 = vpack.c.b16 %v2718, %v2717
      %v2771 = vpack.c.b16 %v2720, %v2719
      %v2772 = vpack.c.b16 %v2722, %v2721
      %v2773 = vpack.c.b16 %v2724, %v2723
      %v2774 = vpack.c.b16 %v2726, %v2725
      %v2775 = vpack.c.b16 %v2728, %v2727
      %v2776 = vpack.c.b16 %v2730, %v2729
      %v2777 = vpack.c.b16 %v2732, %v2731
      %v2778 = vpack.c.b16 %v2734, %v2733
      %v2779 = vpack.c.b16 %v2736, %v2735
      %v2780 = vpack.c.b16 %v2738, %v2737
      %v2781 = vpack.c.b16 %v2740, %v2739
      %v2782 = vpack.c.b16 %v2742, %v2741
      %v2783 = vpack.c.b16 %v2744, %v2743
      %v2784 = vpack.c.b16 %v2746, %v2745
      %v2785 = vpack.c.b16 %v2748, %v2747
      %v2786 = vpack.c.b16 %v2750, %v2749
      %v2787 = vpack.c.b16 %v2752, %v2751
      %v2788 = vpack.c.b16 %v2754, %v2753
      %v2789 = vpack.c.b16 %v2756, %v2755
      %v2790 = vpack.c.b16 %v2758, %v2757
      %2823 = vmatprep.subr.bf16.mxu0 0
      %2824 = vmatpush1.bf16.msra.mxu0 %v2759
      %2825 = vmatprep.subr.bf16.mxu0 0
      %2826 = vmatpush1.bf16.msra.mxu0 %v2760
      %2827 = vmatprep.subr.bf16.mxu0 0
      %2828 = vmatpush1.bf16.msra.mxu0 %v2761
      %2829 = vmatprep.subr.bf16.mxu0 0
      %2830 = vmatpush1.bf16.msra.mxu0 %v2762
      %2831 = vmatprep.subr.bf16.mxu0 0
      %2832 = vmatpush1.bf16.msra.mxu0 %v2763
      %2833 = vmatprep.subr.bf16.mxu0 0
      %2834 = vmatpush1.bf16.msra.mxu0 %v2764
      %2835 = vmatprep.subr.bf16.mxu0 0
      %2836 = vmatpush1.bf16.msra.mxu0 %v2765
      %2837 = vmatprep.subr.bf16.mxu0 0
      %2838 = vmatpush1.bf16.msra.mxu0 %v2766
      %2839 = vmatprep.subr.bf16.mxu0 0
      %2840 = vmatpush1.bf16.msra.mxu0 %v2767
      %2841 = vmatprep.subr.bf16.mxu0 0
      %2842 = vmatpush1.bf16.msra.mxu0 %v2768
      %2843 = vmatprep.subr.bf16.mxu0 0
      %2844 = vmatpush1.bf16.msra.mxu0 %v2769
      %2845 = vmatprep.subr.bf16.mxu0 0
      %2846 = vmatpush1.bf16.msra.mxu0 %v2770
      %2847 = vmatprep.subr.bf16.mxu0 0
      %2848 = vmatpush1.bf16.msra.mxu0 %v2771
      %2849 = vmatprep.subr.bf16.mxu0 0
      %2850 = vmatpush1.bf16.msra.mxu0 %v2772
      %2851 = vmatprep.subr.bf16.mxu0 0
      %2852 = vmatpush1.bf16.msra.mxu0 %v2773
      %2853 = vmatprep.subr.bf16.mxu0 0
      %2854 = vmatpush1.bf16.msra.mxu0 %v2774
      %2855 = vmatprep.mubr.bf16.mxu0 %v2552
      %2856 = vmatmul.mubr.bf16.gmra.mrb[0].mxu0 %v2551
      %v2857 = vpop.f32.mrb[0].mxu0
      %v2858 = vadd.f32 0.0, %v2857
      %v2859 = vpop.f32.mrb[0].mxu0
      %v2860 = vpop.f32.mrb[0].mxu0
      %v2861 = vadd.f32 0.0, %v2860
      %v2862 = vpop.f32.mrb[0].mxu0
      %2863 = vmatprep.mubr.bf16.mxu0 %v2556
      %2864 = vmatmul.mubr.bf16.gmra.mrb[0].mxu0 %v2555
      %v2865 = vpop.f32.mrb[0].mxu0
      %v2866 = vadd.f32 0.0, %v2865
      %v2867 = vpop.f32.mrb[0].mxu0
      %v2868 = vpop.f32.mrb[0].mxu0
      %v2869 = vadd.f32 0.0, %v2868
      %v2870 = vpop.f32.mrb[0].mxu0
      %2871 = vmatprep.mubr.bf16.mxu0 %v2560
      %2872 = vmatmul.mubr.bf16.gmra.mrb[0].mxu0 %v2559
      %v2873 = vpop.f32.mrb[0].mxu0
      %v2874 = vadd.f32 0.0, %v2873
      %v2875 = vpop.f32.mrb[0].mxu0
      %v2876 = vpop.f32.mrb[0].mxu0
      %v2877 = vadd.f32 0.0, %v2876
      %v2878 = vpop.f32.mrb[0].mxu0
      %2879 = vmatprep.mubr.bf16.mxu0 %v2564
      %2880 = vmatmul.mubr.bf16.gmra.mrb[0].mxu0 %v2563
      %v2881 = vpop.f32.mrb[0].mxu0
      %v2882 = vadd.f32 0.0, %v2881
      %v2883 = vpop.f32.mrb[0].mxu0
      %v2884 = vpop.f32.mrb[0].mxu0
      %v2885 = vadd.f32 0.0, %v2884
      %v2886 = vpop.f32.mrb[0].mxu0
      %2887 = vdwg.mxu0
      %2888 = vmatprep.subr.bf16.mxu0 0
      %2889 = vmatpush1.bf16.msra.mxu0 %v2775
      %2890 = vmatprep.subr.bf16.mxu0 0
      %2891 = vmatpush1.bf16.msra.mxu0 %v2776
      %2892 = vmatprep.subr.bf16.mxu0 0
      %2893 = vmatpush1.bf16.msra.mxu0 %v2777
      %2894 = vmatprep.subr.bf16.mxu0 0
      %2895 = vmatpush1.bf16.msra.mxu0 %v2778
      %2896 = vmatprep.subr.bf16.mxu0 0
      %2897 = vmatpush1.bf16.msra.mxu0 %v2779
      %2898 = vmatprep.subr.bf16.mxu0 0
      %2899 = vmatpush1.bf16.msra.mxu0 %v2780
      %2900 = vmatprep.subr.bf16.mxu0 0
      %2901 = vmatpush1.bf16.msra.mxu0 %v2781
      %2902 = vmatprep.subr.bf16.mxu0 0
      %2903 = vmatpush1.bf16.msra.mxu0 %v2782
      %2904 = vmatprep.subr.bf16.mxu0 0
      %2905 = vmatpush1.bf16.msra.mxu0 %v2783
      %2906 = vmatprep.subr.bf16.mxu0 0
      %2907 = vmatpush1.bf16.msra.mxu0 %v2784
      %2908 = vmatprep.subr.bf16.mxu0 0
      %2909 = vmatpush1.bf16.msra.mxu0 %v2785
      %2910 = vmatprep.subr.bf16.mxu0 0
      %2911 = vmatpush1.bf16.msra.mxu0 %v2786
      %2912 = vmatprep.subr.bf16.mxu0 0
      %2913 = vmatpush1.bf16.msra.mxu0 %v2787
      %2914 = vmatprep.subr.bf16.mxu0 0
      %2915 = vmatpush1.bf16.msra.mxu0 %v2788
      %2916 = vmatprep.subr.bf16.mxu0 0
      %2917 = vmatpush1.bf16.msra.mxu0 %v2789
      %2918 = vmatprep.subr.bf16.mxu0 0
      %2919 = vmatpush1.bf16.msra.mxu0 %v2790
      %2920 = vmatprep.mubr.bf16.mxu0 %v2554
      %2921 = vmatmul.mubr.bf16.gmra.mrb[0].mxu0 %v2553
      %v2922 = vpop.f32.mrb[0].mxu0
      %v2923 = vadd.f32 %v2858, %v2922
      %v2924 = vpop.f32.mrb[0].mxu0
      %v2925 = vpop.f32.mrb[0].mxu0
      %v2926 = vadd.f32 %v2861, %v2925
      %v2927 = vpop.f32.mrb[0].mxu0
      %2928 = vmatprep.mubr.bf16.mxu0 %v2558
      %2929 = vmatmul.mubr.bf16.gmra.mrb[0].mxu0 %v2557
      %v2930 = vpop.f32.mrb[0].mxu0
      %v2931 = vadd.f32 %v2866, %v2930
      %v2932 = vpop.f32.mrb[0].mxu0
      %v2933 = vpop.f32.mrb[0].mxu0
      %v2934 = vadd.f32 %v2869, %v2933
      %v2935 = vpop.f32.mrb[0].mxu0
      %2936 = vmatprep.mubr.bf16.mxu0 %v2562
      %2937 = vmatmul.mubr.bf16.gmra.mrb[0].mxu0 %v2561
      %v2938 = vpop.f32.mrb[0].mxu0
      %v2939 = vadd.f32 %v2874, %v2938
      %v2940 = vpop.f32.mrb[0].mxu0
      %v2941 = vpop.f32.mrb[0].mxu0
      %v2942 = vadd.f32 %v2877, %v2941
      %v2943 = vpop.f32.mrb[0].mxu0
      %2944 = vmatprep.mubr.bf16.mxu0 %v2566
      %2945 = vmatmul.mubr.bf16.gmra.mrb[0].mxu0 %v2565
      %v2946 = vpop.f32.mrb[0].mxu0
      %v2947 = vadd.f32 %v2882, %v2946
      %v2948 = vpop.f32.mrb[0].mxu0
      %v2949 = vpop.f32.mrb[0].mxu0
      %v2950 = vadd.f32 %v2885, %v2949
      %v2951 = vpop.f32.mrb[0].mxu0
      %2952 = vdwg.mxu0
      %vm2953 = vcmp.ge.f32.partialorder %v2923, 0.0
      %vm2954 = vcmp.ge.f32.partialorder %v2926, 0.0
      %vm2955 = vcmp.ge.f32.partialorder %v2931, 0.0
      %vm2956 = vcmp.ge.f32.partialorder %v2934, 0.0
      %vm2957 = vcmp.ge.f32.partialorder %v2939, 0.0
      %vm2958 = vcmp.ge.f32.partialorder %v2942, 0.0
      %vm2959 = vcmp.ge.f32.partialorder %v2947, 0.0
      %vm2960 = vcmp.ge.f32.partialorder %v2950, 0.0
      %v2961 = vmul.f32 %v2923, 0.1
      %v2962 = vmul.f32 %v2926, 0.1
      %v2963 = vmul.f32 %v2931, 0.1
      %v2964 = vmul.f32 %v2934, 0.1
      %v2965 = vmul.f32 %v2939, 0.1
      %v2966 = vmul.f32 %v2942, 0.1
      %v2967 = vmul.f32 %v2947, 0.1
      %v2968 = vmul.f32 %v2950, 0.1
      %v2969 = vsel %vm2953, %v2923, %v2961
      %v2970 = vsel %vm2954, %v2926, %v2962
      %v2971 = vsel %vm2955, %v2931, %v2963
      %v2972 = vsel %vm2956, %v2934, %v2964
      %v2973 = vsel %vm2957, %v2939, %v2965
      %v2974 = vsel %vm2958, %v2942, %v2966
      %v2975 = vsel %vm2959, %v2947, %v2967
      %v2976 = vsel %vm2960, %v2950, %v2968
      %s2977 = scalar_lea.vmem [#allocation3], 16
      %2978 = vst.msk [vmem:[%s2977 + $0x1] sm:$0xff] %vm305, %v2969
      %2979 = vst.msk [vmem:[%s2977 + $0x11] sm:$0xff] %vm305, %v2970
      %2980 = vst.msk [vmem:[%s2977 + $0x21] sm:$0xff] %vm305, %v2971
      %2981 = vst.msk [vmem:[%s2977 + $0x31] sm:$0xff] %vm305, %v2972
      %2982 = vst.msk [vmem:[%s2977 + $0x41] sm:$0xff] %vm305, %v2973
      %2983 = vst.msk [vmem:[%s2977 + $0x51] sm:$0xff] %vm305, %v2974
      %2984 = vst.msk [vmem:[%s2977 + $0x61] sm:$0xff] %vm305, %v2975
      %2985 = vst.msk [vmem:[%s2977 + $0x71] sm:$0xff] %vm305, %v2976
      %v2986 = vld [vmem:[#allocation2 + $0x1] sm:$0xff]
      %v2987 = vld [vmem:[#allocation2 + $0x11] sm:$0xff]
      %v2988 = vld [vmem:[#allocation2 + $0x21] sm:$0xff]
      %v2989 = vld [vmem:[#allocation2 + $0x31] sm:$0xff]
      %v2990 = vld [vmem:[#allocation2 + $0x41] sm:$0xff]
      %v2991 = vld [vmem:[#allocation2 + $0x51] sm:$0xff]
      %v2992 = vld [vmem:[#allocation2 + $0x61] sm:$0xff]
      %v2993 = vld [vmem:[#allocation2 + $0x71] sm:$0xff]
      %v2994 = vld [vmem:[#allocation2 + $0x2] sm:$0xff]
      %v2995 = vld [vmem:[#allocation2 + $0x12] sm:$0xff]
      %v2996 = vld [vmem:[#allocation2 + $0x22] sm:$0xff]
      %v2997 = vld [vmem:[#allocation2 + $0x32] sm:$0xff]
      %v2998 = vld [vmem:[#allocation2 + $0x42] sm:$0xff]
      %v2999 = vld [vmem:[#allocation2 + $0x52] sm:$0xff]
      %v3000 = vld [vmem:[#allocation2 + $0x62] sm:$0xff]
      %v3001 = vld [vmem:[#allocation2 + $0x72] sm:$0xff]
      %v3002 = vld [vmem:[%s413 + $0x1] sm:$0xff]
      %v3003 = vld [vmem:[%s413 + $0x11] sm:$0xff]
      %v3004 = vld [vmem:[%s413 + $0x21] sm:$0xff]
      %v3005 = vld [vmem:[%s413 + $0x31] sm:$0xff]
      %v3006 = vld [vmem:[%s413 + $0x41] sm:$0xff]
      %v3007 = vld [vmem:[%s413 + $0x51] sm:$0xff]
      %v3008 = vld [vmem:[%s413 + $0x61] sm:$0xff]
      %v3009 = vld [vmem:[%s413 + $0x71] sm:$0xff]
      %v3010 = vld [vmem:[%s413 + $0x2] sm:$0xff]
      %v3011 = vld [vmem:[%s413 + $0x12] sm:$0xff]
      %v3012 = vld [vmem:[%s413 + $0x22] sm:$0xff]
      %v3013 = vld [vmem:[%s413 + $0x32] sm:$0xff]
      %v3014 = vld [vmem:[%s413 + $0x42] sm:$0xff]
      %v3015 = vld [vmem:[%s413 + $0x52] sm:$0xff]
      %v3016 = vld [vmem:[%s413 + $0x62] sm:$0xff]
      %v3017 = vld [vmem:[%s413 + $0x72] sm:$0xff]
      %v3018 = vpack.c.bf16 %v2987, %v2986
      %v3019 = vpack.c.bf16 %v2995, %v2994
      %v3020 = vpack.c.bf16 %v3003, %v3002
      %v3021 = vpack.c.bf16 %v3011, %v3010
      %v3022 = vpack.c.bf16 %v2989, %v2988
      %v3023 = vpack.c.bf16 %v2997, %v2996
      %v3024 = vpack.c.bf16 %v3005, %v3004
      %v3025 = vpack.c.bf16 %v3013, %v3012
      %v3026 = vpack.c.bf16 %v2991, %v2990
      %v3027 = vpack.c.bf16 %v2999, %v2998
      %v3028 = vpack.c.bf16 %v3007, %v3006
      %v3029 = vpack.c.bf16 %v3015, %v3014
      %v3030 = vpack.c.bf16 %v2993, %v2992
      %v3031 = vpack.c.bf16 %v3001, %v3000
      %v3032 = vpack.c.bf16 %v3009, %v3008
      %v3033 = vpack.c.bf16 %v3017, %v3016
      %s3034 = scalar_lea.vmem %s5, 256
      %v3035 = vld [vmem:[%s3034] sm:$0xf]
      %v3036 = vld [vmem:[%s3034 + $0x4] sm:$0xf]
      %v3037 = vld [vmem:[%s3034 + $0x8] sm:$0xf]
      %v3038 = vld [vmem:[%s3034 + $0xc] sm:$0xf]
      %v3039 = vld [vmem:[%s3034 + $0x10] sm:$0xf]
      %v3040 = vld [vmem:[%s3034 + $0x14] sm:$0xf]
      %v3041 = vld [vmem:[%s3034 + $0x18] sm:$0xf]
      %v3042 = vld [vmem:[%s3034 + $0x1c] sm:$0xf]
      %v3043 = vld [vmem:[%s3034 + $0x20] sm:$0xf]
      %v3044 = vld [vmem:[%s3034 + $0x24] sm:$0xf]
      %v3045 = vld [vmem:[%s3034 + $0x28] sm:$0xf]
      %v3046 = vld [vmem:[%s3034 + $0x2c] sm:$0xf]
      %v3047 = vld [vmem:[%s3034 + $0x30] sm:$0xf]
      %v3048 = vld [vmem:[%s3034 + $0x34] sm:$0xf]
      %v3049 = vld [vmem:[%s3034 + $0x38] sm:$0xf]
      %v3050 = vld [vmem:[%s3034 + $0x3c] sm:$0xf]
      %v3051 = vld [vmem:[%s3034 + $0x40] sm:$0xf]
      %v3052 = vld [vmem:[%s3034 + $0x44] sm:$0xf]
      %v3053 = vld [vmem:[%s3034 + $0x48] sm:$0xf]
      %v3054 = vld [vmem:[%s3034 + $0x4c] sm:$0xf]
      %v3055 = vld [vmem:[%s3034 + $0x50] sm:$0xf]
      %v3056 = vld [vmem:[%s3034 + $0x54] sm:$0xf]
      %v3057 = vld [vmem:[%s3034 + $0x58] sm:$0xf]
      %v3058 = vld [vmem:[%s3034 + $0x5c] sm:$0xf]
      %v3059 = vld [vmem:[%s3034 + $0x60] sm:$0xf]
      %v3060 = vld [vmem:[%s3034 + $0x64] sm:$0xf]
      %v3061 = vld [vmem:[%s3034 + $0x68] sm:$0xf]
      %v3062 = vld [vmem:[%s3034 + $0x6c] sm:$0xf]
      %v3063 = vld [vmem:[%s3034 + $0x70] sm:$0xf]
      %v3064 = vld [vmem:[%s3034 + $0x74] sm:$0xf]
      %v3065 = vld [vmem:[%s3034 + $0x78] sm:$0xf]
      %v3066 = vld [vmem:[%s3034 + $0x7c] sm:$0xf]
      %v3067 = vld [vmem:[%s3034 + $0x80] sm:$0xf]
      %v3068 = vld [vmem:[%s3034 + $0x84] sm:$0xf]
      %v3069 = vld [vmem:[%s3034 + $0x88] sm:$0xf]
      %v3070 = vld [vmem:[%s3034 + $0x8c] sm:$0xf]
      %v3071 = vld [vmem:[%s3034 + $0x90] sm:$0xf]
      %v3072 = vld [vmem:[%s3034 + $0x94] sm:$0xf]
      %v3073 = vld [vmem:[%s3034 + $0x98] sm:$0xf]
      %v3074 = vld [vmem:[%s3034 + $0x9c] sm:$0xf]
      %v3075 = vld [vmem:[%s3034 + $0xa0] sm:$0xf]
      %v3076 = vld [vmem:[%s3034 + $0xa4] sm:$0xf]
      %v3077 = vld [vmem:[%s3034 + $0xa8] sm:$0xf]
      %v3078 = vld [vmem:[%s3034 + $0xac] sm:$0xf]
      %v3079 = vld [vmem:[%s3034 + $0xb0] sm:$0xf]
      %v3080 = vld [vmem:[%s3034 + $0xb4] sm:$0xf]
      %v3081 = vld [vmem:[%s3034 + $0xb8] sm:$0xf]
      %v3082 = vld [vmem:[%s3034 + $0xbc] sm:$0xf]
      %v3083 = vld [vmem:[%s3034 + $0xc0] sm:$0xf]
      %v3084 = vld [vmem:[%s3034 + $0xc4] sm:$0xf]
      %v3085 = vld [vmem:[%s3034 + $0xc8] sm:$0xf]
      %v3086 = vld [vmem:[%s3034 + $0xcc] sm:$0xf]
      %v3087 = vld [vmem:[%s3034 + $0xd0] sm:$0xf]
      %v3088 = vld [vmem:[%s3034 + $0xd4] sm:$0xf]
      %v3089 = vld [vmem:[%s3034 + $0xd8] sm:$0xf]
      %v3090 = vld [vmem:[%s3034 + $0xdc] sm:$0xf]
      %v3091 = vld [vmem:[%s3034 + $0xe0] sm:$0xf]
      %v3092 = vld [vmem:[%s3034 + $0xe4] sm:$0xf]
      %v3093 = vld [vmem:[%s3034 + $0xe8] sm:$0xf]
      %v3094 = vld [vmem:[%s3034 + $0xec] sm:$0xf]
      %v3095 = vld [vmem:[%s3034 + $0xf0] sm:$0xf]
      %v3096 = vld [vmem:[%s3034 + $0xf4] sm:$0xf]
      %v3097 = vld [vmem:[%s3034 + $0xf8] sm:$0xf]
      %v3098 = vld [vmem:[%s3034 + $0xfc] sm:$0xf]
      %v3163 = vunpack.c.l.b16 %v3035
      %v3164 = vunpack.c.l.b16 %v3036
      %v3165 = vunpack.c.l.b16 %v3037
      %v3166 = vunpack.c.l.b16 %v3038
      %v3167 = vunpack.c.l.b16 %v3039
      %v3168 = vunpack.c.l.b16 %v3040
      %v3169 = vunpack.c.l.b16 %v3041
      %v3170 = vunpack.c.l.b16 %v3042
      %v3171 = vunpack.c.l.b16 %v3043
      %v3172 = vunpack.c.l.b16 %v3044
      %v3173 = vunpack.c.l.b16 %v3045
      %v3174 = vunpack.c.l.b16 %v3046
      %v3175 = vunpack.c.l.b16 %v3047
      %v3176 = vunpack.c.l.b16 %v3048
      %v3177 = vunpack.c.l.b16 %v3049
      %v3178 = vunpack.c.l.b16 %v3050
      %v3179 = vunpack.c.l.b16 %v3051
      %v3180 = vunpack.c.l.b16 %v3052
      %v3181 = vunpack.c.l.b16 %v3053
      %v3182 = vunpack.c.l.b16 %v3054
      %v3183 = vunpack.c.l.b16 %v3055
      %v3184 = vunpack.c.l.b16 %v3056
      %v3185 = vunpack.c.l.b16 %v3057
      %v3186 = vunpack.c.l.b16 %v3058
      %v3187 = vunpack.c.l.b16 %v3059
      %v3188 = vunpack.c.l.b16 %v3060
      %v3189 = vunpack.c.l.b16 %v3061
      %v3190 = vunpack.c.l.b16 %v3062
      %v3191 = vunpack.c.l.b16 %v3063
      %v3192 = vunpack.c.l.b16 %v3064
      %v3193 = vunpack.c.l.b16 %v3065
      %v3194 = vunpack.c.l.b16 %v3066
      %v3195 = vunpack.c.l.b16 %v3067
      %v3196 = vunpack.c.l.b16 %v3068
      %v3197 = vunpack.c.l.b16 %v3069
      %v3198 = vunpack.c.l.b16 %v3070
      %v3199 = vunpack.c.l.b16 %v3071
      %v3200 = vunpack.c.l.b16 %v3072
      %v3201 = vunpack.c.l.b16 %v3073
      %v3202 = vunpack.c.l.b16 %v3074
      %v3203 = vunpack.c.l.b16 %v3075
      %v3204 = vunpack.c.l.b16 %v3076
      %v3205 = vunpack.c.l.b16 %v3077
      %v3206 = vunpack.c.l.b16 %v3078
      %v3207 = vunpack.c.l.b16 %v3079
      %v3208 = vunpack.c.l.b16 %v3080
      %v3209 = vunpack.c.l.b16 %v3081
      %v3210 = vunpack.c.l.b16 %v3082
      %v3211 = vunpack.c.l.b16 %v3083
      %v3212 = vunpack.c.l.b16 %v3084
      %v3213 = vunpack.c.l.b16 %v3085
      %v3214 = vunpack.c.l.b16 %v3086
      %v3215 = vunpack.c.l.b16 %v3087
      %v3216 = vunpack.c.l.b16 %v3088
      %v3217 = vunpack.c.l.b16 %v3089
      %v3218 = vunpack.c.l.b16 %v3090
      %v3219 = vunpack.c.l.b16 %v3091
      %v3220 = vunpack.c.l.b16 %v3092
      %v3221 = vunpack.c.l.b16 %v3093
      %v3222 = vunpack.c.l.b16 %v3094
      %v3223 = vunpack.c.l.b16 %v3095
      %v3224 = vunpack.c.l.b16 %v3096
      %v3225 = vunpack.c.l.b16 %v3097
      %v3226 = vunpack.c.l.b16 %v3098
      %v3227 = vpack.c.b16 %v3164, %v3163
      %v3228 = vpack.c.b16 %v3166, %v3165
      %v3229 = vpack.c.b16 %v3168, %v3167
      %v3230 = vpack.c.b16 %v3170, %v3169
      %v3231 = vpack.c.b16 %v3172, %v3171
      %v3232 = vpack.c.b16 %v3174, %v3173
      %v3233 = vpack.c.b16 %v3176, %v3175
      %v3234 = vpack.c.b16 %v3178, %v3177
      %v3235 = vpack.c.b16 %v3180, %v3179
      %v3236 = vpack.c.b16 %v3182, %v3181
      %v3237 = vpack.c.b16 %v3184, %v3183
      %v3238 = vpack.c.b16 %v3186, %v3185
      %v3239 = vpack.c.b16 %v3188, %v3187
      %v3240 = vpack.c.b16 %v3190, %v3189
      %v3241 = vpack.c.b16 %v3192, %v3191
      %v3242 = vpack.c.b16 %v3194, %v3193
      %v3243 = vpack.c.b16 %v3196, %v3195
      %v3244 = vpack.c.b16 %v3198, %v3197
      %v3245 = vpack.c.b16 %v3200, %v3199
      %v3246 = vpack.c.b16 %v3202, %v3201
      %v3247 = vpack.c.b16 %v3204, %v3203
      %v3248 = vpack.c.b16 %v3206, %v3205
      %v3249 = vpack.c.b16 %v3208, %v3207
      %v3250 = vpack.c.b16 %v3210, %v3209
      %v3251 = vpack.c.b16 %v3212, %v3211
      %v3252 = vpack.c.b16 %v3214, %v3213
      %v3253 = vpack.c.b16 %v3216, %v3215
      %v3254 = vpack.c.b16 %v3218, %v3217
      %v3255 = vpack.c.b16 %v3220, %v3219
      %v3256 = vpack.c.b16 %v3222, %v3221
      %v3257 = vpack.c.b16 %v3224, %v3223
      %v3258 = vpack.c.b16 %v3226, %v3225
      %3291 = vmatprep.subr.bf16.mxu0 0
      %3292 = vmatpush1.bf16.msra.mxu0 %v3227
      %3293 = vmatprep.subr.bf16.mxu0 0
      %3294 = vmatpush1.bf16.msra.mxu0 %v3228
      %3295 = vmatprep.subr.bf16.mxu0 0
      %3296 = vmatpush1.bf16.msra.mxu0 %v3229
      %3297 = vmatprep.subr.bf16.mxu0 0
      %3298 = vmatpush1.bf16.msra.mxu0 %v3230
      %3299 = vmatprep.subr.bf16.mxu0 0
      %3300 = vmatpush1.bf16.msra.mxu0 %v3231
      %3301 = vmatprep.subr.bf16.mxu0 0
      %3302 = vmatpush1.bf16.msra.mxu0 %v3232
      %3303 = vmatprep.subr.bf16.mxu0 0
      %3304 = vmatpush1.bf16.msra.mxu0 %v3233
      %3305 = vmatprep.subr.bf16.mxu0 0
      %3306 = vmatpush1.bf16.msra.mxu0 %v3234
      %3307 = vmatprep.subr.bf16.mxu0 0
      %3308 = vmatpush1.bf16.msra.mxu0 %v3235
      %3309 = vmatprep.subr.bf16.mxu0 0
      %3310 = vmatpush1.bf16.msra.mxu0 %v3236
      %3311 = vmatprep.subr.bf16.mxu0 0
      %3312 = vmatpush1.bf16.msra.mxu0 %v3237
      %3313 = vmatprep.subr.bf16.mxu0 0
      %3314 = vmatpush1.bf16.msra.mxu0 %v3238
      %3315 = vmatprep.subr.bf16.mxu0 0
      %3316 = vmatpush1.bf16.msra.mxu0 %v3239
      %3317 = vmatprep.subr.bf16.mxu0 0
      %3318 = vmatpush1.bf16.msra.mxu0 %v3240
      %3319 = vmatprep.subr.bf16.mxu0 0
      %3320 = vmatpush1.bf16.msra.mxu0 %v3241
      %3321 = vmatprep.subr.bf16.mxu0 0
      %3322 = vmatpush1.bf16.msra.mxu0 %v3242
      %3323 = vmatprep.mubr.bf16.mxu0 %v3019
      %3324 = vmatmul.mubr.bf16.gmra.mrb[0].mxu0 %v3018
      %v3325 = vpop.f32.mrb[0].mxu0
      %v3326 = vadd.f32 0.0, %v3325
      %v3327 = vpop.f32.mrb[0].mxu0
      %v3328 = vpop.f32.mrb[0].mxu0
      %v3329 = vadd.f32 0.0, %v3328
      %v3330 = vpop.f32.mrb[0].mxu0
      %3331 = vmatprep.mubr.bf16.mxu0 %v3023
      %3332 = vmatmul.mubr.bf16.gmra.mrb[0].mxu0 %v3022
      %v3333 = vpop.f32.mrb[0].mxu0
      %v3334 = vadd.f32 0.0, %v3333
      %v3335 = vpop.f32.mrb[0].mxu0
      %v3336 = vpop.f32.mrb[0].mxu0
      %v3337 = vadd.f32 0.0, %v3336
      %v3338 = vpop.f32.mrb[0].mxu0
      %3339 = vmatprep.mubr.bf16.mxu0 %v3027
      %3340 = vmatmul.mubr.bf16.gmra.mrb[0].mxu0 %v3026
      %v3341 = vpop.f32.mrb[0].mxu0
      %v3342 = vadd.f32 0.0, %v3341
      %v3343 = vpop.f32.mrb[0].mxu0
      %v3344 = vpop.f32.mrb[0].mxu0
      %v3345 = vadd.f32 0.0, %v3344
      %v3346 = vpop.f32.mrb[0].mxu0
      %3347 = vmatprep.mubr.bf16.mxu0 %v3031
      %3348 = vmatmul.mubr.bf16.gmra.mrb[0].mxu0 %v3030
      %v3349 = vpop.f32.mrb[0].mxu0
      %v3350 = vadd.f32 0.0, %v3349
      %v3351 = vpop.f32.mrb[0].mxu0
      %v3352 = vpop.f32.mrb[0].mxu0
      %v3353 = vadd.f32 0.0, %v3352
      %v3354 = vpop.f32.mrb[0].mxu0
      %3355 = vdwg.mxu0
      %3356 = vmatprep.subr.bf16.mxu0 0
      %3357 = vmatpush1.bf16.msra.mxu0 %v3243
      %3358 = vmatprep.subr.bf16.mxu0 0
      %3359 = vmatpush1.bf16.msra.mxu0 %v3244
      %3360 = vmatprep.subr.bf16.mxu0 0
      %3361 = vmatpush1.bf16.msra.mxu0 %v3245
      %3362 = vmatprep.subr.bf16.mxu0 0
      %3363 = vmatpush1.bf16.msra.mxu0 %v3246
      %3364 = vmatprep.subr.bf16.mxu0 0
      %3365 = vmatpush1.bf16.msra.mxu0 %v3247
      %3366 = vmatprep.subr.bf16.mxu0 0
      %3367 = vmatpush1.bf16.msra.mxu0 %v3248
      %3368 = vmatprep.subr.bf16.mxu0 0
      %3369 = vmatpush1.bf16.msra.mxu0 %v3249
      %3370 = vmatprep.subr.bf16.mxu0 0
      %3371 = vmatpush1.bf16.msra.mxu0 %v3250
      %3372 = vmatprep.subr.bf16.mxu0 0
      %3373 = vmatpush1.bf16.msra.mxu0 %v3251
      %3374 = vmatprep.subr.bf16.mxu0 0
      %3375 = vmatpush1.bf16.msra.mxu0 %v3252
      %3376 = vmatprep.subr.bf16.mxu0 0
      %3377 = vmatpush1.bf16.msra.mxu0 %v3253
      %3378 = vmatprep.subr.bf16.mxu0 0
      %3379 = vmatpush1.bf16.msra.mxu0 %v3254
      %3380 = vmatprep.subr.bf16.mxu0 0
      %3381 = vmatpush1.bf16.msra.mxu0 %v3255
      %3382 = vmatprep.subr.bf16.mxu0 0
      %3383 = vmatpush1.bf16.msra.mxu0 %v3256
      %3384 = vmatprep.subr.bf16.mxu0 0
      %3385 = vmatpush1.bf16.msra.mxu0 %v3257
      %3386 = vmatprep.subr.bf16.mxu0 0
      %3387 = vmatpush1.bf16.msra.mxu0 %v3258
      %3388 = vmatprep.mubr.bf16.mxu0 %v3021
      %3389 = vmatmul.mubr.bf16.gmra.mrb[0].mxu0 %v3020
      %v3390 = vpop.f32.mrb[0].mxu0
      %v3391 = vadd.f32 %v3326, %v3390
      %v3392 = vpop.f32.mrb[0].mxu0
      %v3393 = vpop.f32.mrb[0].mxu0
      %v3394 = vadd.f32 %v3329, %v3393
      %v3395 = vpop.f32.mrb[0].mxu0
      %3396 = vmatprep.mubr.bf16.mxu0 %v3025
      %3397 = vmatmul.mubr.bf16.gmra.mrb[0].mxu0 %v3024
      %v3398 = vpop.f32.mrb[0].mxu0
      %v3399 = vadd.f32 %v3334, %v3398
      %v3400 = vpop.f32.mrb[0].mxu0
      %v3401 = vpop.f32.mrb[0].mxu0
      %v3402 = vadd.f32 %v3337, %v3401
      %v3403 = vpop.f32.mrb[0].mxu0
      %3404 = vmatprep.mubr.bf16.mxu0 %v3029
      %3405 = vmatmul.mubr.bf16.gmra.mrb[0].mxu0 %v3028
      %v3406 = vpop.f32.mrb[0].mxu0
      %v3407 = vadd.f32 %v3342, %v3406
      %v3408 = vpop.f32.mrb[0].mxu0
      %v3409 = vpop.f32.mrb[0].mxu0
      %v3410 = vadd.f32 %v3345, %v3409
      %v3411 = vpop.f32.mrb[0].mxu0
      %3412 = vmatprep.mubr.bf16.mxu0 %v3033
      %3413 = vmatmul.mubr.bf16.gmra.mrb[0].mxu0 %v3032
      %v3414 = vpop.f32.mrb[0].mxu0
      %v3415 = vadd.f32 %v3350, %v3414
      %v3416 = vpop.f32.mrb[0].mxu0
      %v3417 = vpop.f32.mrb[0].mxu0
      %v3418 = vadd.f32 %v3353, %v3417
      %v3419 = vpop.f32.mrb[0].mxu0
      %3420 = vdwg.mxu0
      %vm3421 = vcmp.ge.f32.partialorder %v3391, 0.0
      %vm3422 = vcmp.ge.f32.partialorder %v3394, 0.0
      %vm3423 = vcmp.ge.f32.partialorder %v3399, 0.0
      %vm3424 = vcmp.ge.f32.partialorder %v3402, 0.0
      %vm3425 = vcmp.ge.f32.partialorder %v3407, 0.0
      %vm3426 = vcmp.ge.f32.partialorder %v3410, 0.0
      %vm3427 = vcmp.ge.f32.partialorder %v3415, 0.0
      %vm3428 = vcmp.ge.f32.partialorder %v3418, 0.0
      %v3429 = vmul.f32 %v3391, 0.1
      %v3430 = vmul.f32 %v3394, 0.1
      %v3431 = vmul.f32 %v3399, 0.1
      %v3432 = vmul.f32 %v3402, 0.1
      %v3433 = vmul.f32 %v3407, 0.1
      %v3434 = vmul.f32 %v3410, 0.1
      %v3435 = vmul.f32 %v3415, 0.1
      %v3436 = vmul.f32 %v3418, 0.1
      %v3437 = vsel %vm3421, %v3391, %v3429
      %v3438 = vsel %vm3422, %v3394, %v3430
      %v3439 = vsel %vm3423, %v3399, %v3431
      %v3440 = vsel %vm3424, %v3402, %v3432
      %v3441 = vsel %vm3425, %v3407, %v3433
      %v3442 = vsel %vm3426, %v3410, %v3434
      %v3443 = vsel %vm3427, %v3415, %v3435
      %v3444 = vsel %vm3428, %v3418, %v3436
      %s3445 = scalar_lea.vmem [#allocation3], 176
      %3446 = vst.msk [vmem:[%s3445 + $0x1] sm:$0xff] %vm305, %v3437
      %3447 = vst.msk [vmem:[%s3445 + $0x11] sm:$0xff] %vm305, %v3438
      %3448 = vst.msk [vmem:[%s3445 + $0x21] sm:$0xff] %vm305, %v3439
      %3449 = vst.msk [vmem:[%s3445 + $0x31] sm:$0xff] %vm305, %v3440
      %3450 = vst.msk [vmem:[%s3445 + $0x41] sm:$0xff] %vm305, %v3441
      %3451 = vst.msk [vmem:[%s3445 + $0x51] sm:$0xff] %vm305, %v3442
      %3452 = vst.msk [vmem:[%s3445 + $0x61] sm:$0xff] %vm305, %v3443
      %3453 = vst.msk [vmem:[%s3445 + $0x71] sm:$0xff] %vm305, %v3444
      %v3454 = vld [vmem:[%s413] sm:$0xff]
      %v3455 = vld [vmem:[%s413 + $0x10] sm:$0xff]
      %v3456 = vld [vmem:[%s413 + $0x20] sm:$0xff]
      %v3457 = vld [vmem:[%s413 + $0x30] sm:$0xff]
      %v3458 = vld [vmem:[%s413 + $0x40] sm:$0xff]
      %v3459 = vld [vmem:[%s413 + $0x50] sm:$0xff]
      %v3460 = vld [vmem:[%s413 + $0x60] sm:$0xff]
      %v3461 = vld [vmem:[%s413 + $0x70] sm:$0xff]
      %v3462 = vld [vmem:[%s413 + $0x1] sm:$0xff]
      %v3463 = vld [vmem:[%s413 + $0x11] sm:$0xff]
      %v3464 = vld [vmem:[%s413 + $0x21] sm:$0xff]
      %v3465 = vld [vmem:[%s413 + $0x31] sm:$0xff]
      %v3466 = vld [vmem:[%s413 + $0x41] sm:$0xff]
      %v3467 = vld [vmem:[%s413 + $0x51] sm:$0xff]
      %v3468 = vld [vmem:[%s413 + $0x61] sm:$0xff]
      %v3469 = vld [vmem:[%s413 + $0x71] sm:$0xff]
      %v3470 = vld [vmem:[%s470] sm:$0xff]
      %v3471 = vld [vmem:[%s470 + $0x10] sm:$0xff]
      %v3472 = vld [vmem:[%s470 + $0x20] sm:$0xff]
      %v3473 = vld [vmem:[%s470 + $0x30] sm:$0xff]
      %v3474 = vld [vmem:[%s470 + $0x40] sm:$0xff]
      %v3475 = vld [vmem:[%s470 + $0x50] sm:$0xff]
      %v3476 = vld [vmem:[%s470 + $0x60] sm:$0xff]
      %v3477 = vld [vmem:[%s470 + $0x70] sm:$0xff]
      %v3478 = vld [vmem:[%s470 + $0x1] sm:$0xff]
      %v3479 = vld [vmem:[%s470 + $0x11] sm:$0xff]
      %v3480 = vld [vmem:[%s470 + $0x21] sm:$0xff]
      %v3481 = vld [vmem:[%s470 + $0x31] sm:$0xff]
      %v3482 = vld [vmem:[%s470 + $0x41] sm:$0xff]
      %v3483 = vld [vmem:[%s470 + $0x51] sm:$0xff]
      %v3484 = vld [vmem:[%s470 + $0x61] sm:$0xff]
      %v3485 = vld [vmem:[%s470 + $0x71] sm:$0xff]
      %v3486 = vpack.c.bf16 %v3455, %v3454
      %v3487 = vpack.c.bf16 %v3463, %v3462
      %v3488 = vpack.c.bf16 %v3471, %v3470
      %v3489 = vpack.c.bf16 %v3479, %v3478
      %v3490 = vpack.c.bf16 %v3457, %v3456
      %v3491 = vpack.c.bf16 %v3465, %v3464
      %v3492 = vpack.c.bf16 %v3473, %v3472
      %v3493 = vpack.c.bf16 %v3481, %v3480
      %v3494 = vpack.c.bf16 %v3459, %v3458
      %v3495 = vpack.c.bf16 %v3467, %v3466
      %v3496 = vpack.c.bf16 %v3475, %v3474
      %v3497 = vpack.c.bf16 %v3483, %v3482
      %v3498 = vpack.c.bf16 %v3461, %v3460
      %v3499 = vpack.c.bf16 %v3469, %v3468
      %v3500 = vpack.c.bf16 %v3477, %v3476
      %v3501 = vpack.c.bf16 %v3485, %v3484
      %s3502 = scalar_lea.vmem %s5, 512
      %v3503 = vld [vmem:[%s3502] sm:$0xf]
      %v3504 = vld [vmem:[%s3502 + $0x4] sm:$0xf]
      %v3505 = vld [vmem:[%s3502 + $0x8] sm:$0xf]
      %v3506 = vld [vmem:[%s3502 + $0xc] sm:$0xf]
      %v3507 = vld [vmem:[%s3502 + $0x10] sm:$0xf]
      %v3508 = vld [vmem:[%s3502 + $0x14] sm:$0xf]
      %v3509 = vld [vmem:[%s3502 + $0x18] sm:$0xf]
      %v3510 = vld [vmem:[%s3502 + $0x1c] sm:$0xf]
      %v3511 = vld [vmem:[%s3502 + $0x20] sm:$0xf]
      %v3512 = vld [vmem:[%s3502 + $0x24] sm:$0xf]
      %v3513 = vld [vmem:[%s3502 + $0x28] sm:$0xf]
      %v3514 = vld [vmem:[%s3502 + $0x2c] sm:$0xf]
      %v3515 = vld [vmem:[%s3502 + $0x30] sm:$0xf]
      %v3516 = vld [vmem:[%s3502 + $0x34] sm:$0xf]
      %v3517 = vld [vmem:[%s3502 + $0x38] sm:$0xf]
      %v3518 = vld [vmem:[%s3502 + $0x3c] sm:$0xf]
      %v3519 = vld [vmem:[%s3502 + $0x40] sm:$0xf]
      %v3520 = vld [vmem:[%s3502 + $0x44] sm:$0xf]
      %v3521 = vld [vmem:[%s3502 + $0x48] sm:$0xf]
      %v3522 = vld [vmem:[%s3502 + $0x4c] sm:$0xf]
      %v3523 = vld [vmem:[%s3502 + $0x50] sm:$0xf]
      %v3524 = vld [vmem:[%s3502 + $0x54] sm:$0xf]
      %v3525 = vld [vmem:[%s3502 + $0x58] sm:$0xf]
      %v3526 = vld [vmem:[%s3502 + $0x5c] sm:$0xf]
      %v3527 = vld [vmem:[%s3502 + $0x60] sm:$0xf]
      %v3528 = vld [vmem:[%s3502 + $0x64] sm:$0xf]
      %v3529 = vld [vmem:[%s3502 + $0x68] sm:$0xf]
      %v3530 = vld [vmem:[%s3502 + $0x6c] sm:$0xf]
      %v3531 = vld [vmem:[%s3502 + $0x70] sm:$0xf]
      %v3532 = vld [vmem:[%s3502 + $0x74] sm:$0xf]
      %v3533 = vld [vmem:[%s3502 + $0x78] sm:$0xf]
      %v3534 = vld [vmem:[%s3502 + $0x7c] sm:$0xf]
      %v3535 = vld [vmem:[%s3502 + $0x80] sm:$0xf]
      %v3536 = vld [vmem:[%s3502 + $0x84] sm:$0xf]
      %v3537 = vld [vmem:[%s3502 + $0x88] sm:$0xf]
      %v3538 = vld [vmem:[%s3502 + $0x8c] sm:$0xf]
      %v3539 = vld [vmem:[%s3502 + $0x90] sm:$0xf]
      %v3540 = vld [vmem:[%s3502 + $0x94] sm:$0xf]
      %v3541 = vld [vmem:[%s3502 + $0x98] sm:$0xf]
      %v3542 = vld [vmem:[%s3502 + $0x9c] sm:$0xf]
      %v3543 = vld [vmem:[%s3502 + $0xa0] sm:$0xf]
      %v3544 = vld [vmem:[%s3502 + $0xa4] sm:$0xf]
      %v3545 = vld [vmem:[%s3502 + $0xa8] sm:$0xf]
      %v3546 = vld [vmem:[%s3502 + $0xac] sm:$0xf]
      %v3547 = vld [vmem:[%s3502 + $0xb0] sm:$0xf]
      %v3548 = vld [vmem:[%s3502 + $0xb4] sm:$0xf]
      %v3549 = vld [vmem:[%s3502 + $0xb8] sm:$0xf]
      %v3550 = vld [vmem:[%s3502 + $0xbc] sm:$0xf]
      %v3551 = vld [vmem:[%s3502 + $0xc0] sm:$0xf]
      %v3552 = vld [vmem:[%s3502 + $0xc4] sm:$0xf]
      %v3553 = vld [vmem:[%s3502 + $0xc8] sm:$0xf]
      %v3554 = vld [vmem:[%s3502 + $0xcc] sm:$0xf]
      %v3555 = vld [vmem:[%s3502 + $0xd0] sm:$0xf]
      %v3556 = vld [vmem:[%s3502 + $0xd4] sm:$0xf]
      %v3557 = vld [vmem:[%s3502 + $0xd8] sm:$0xf]
      %v3558 = vld [vmem:[%s3502 + $0xdc] sm:$0xf]
      %v3559 = vld [vmem:[%s3502 + $0xe0] sm:$0xf]
      %v3560 = vld [vmem:[%s3502 + $0xe4] sm:$0xf]
      %v3561 = vld [vmem:[%s3502 + $0xe8] sm:$0xf]
      %v3562 = vld [vmem:[%s3502 + $0xec] sm:$0xf]
      %v3563 = vld [vmem:[%s3502 + $0xf0] sm:$0xf]
      %v3564 = vld [vmem:[%s3502 + $0xf4] sm:$0xf]
      %v3565 = vld [vmem:[%s3502 + $0xf8] sm:$0xf]
      %v3566 = vld [vmem:[%s3502 + $0xfc] sm:$0xf]
      %v3631 = vunpack.c.l.b16 %v3503
      %v3632 = vunpack.c.l.b16 %v3504
      %v3633 = vunpack.c.l.b16 %v3505
      %v3634 = vunpack.c.l.b16 %v3506
      %v3635 = vunpack.c.l.b16 %v3507
      %v3636 = vunpack.c.l.b16 %v3508
      %v3637 = vunpack.c.l.b16 %v3509
      %v3638 = vunpack.c.l.b16 %v3510
      %v3639 = vunpack.c.l.b16 %v3511
      %v3640 = vunpack.c.l.b16 %v3512
      %v3641 = vunpack.c.l.b16 %v3513
      %v3642 = vunpack.c.l.b16 %v3514
      %v3643 = vunpack.c.l.b16 %v3515
      %v3644 = vunpack.c.l.b16 %v3516
      %v3645 = vunpack.c.l.b16 %v3517
      %v3646 = vunpack.c.l.b16 %v3518
      %v3647 = vunpack.c.l.b16 %v3519
      %v3648 = vunpack.c.l.b16 %v3520
      %v3649 = vunpack.c.l.b16 %v3521
      %v3650 = vunpack.c.l.b16 %v3522
      %v3651 = vunpack.c.l.b16 %v3523
      %v3652 = vunpack.c.l.b16 %v3524
      %v3653 = vunpack.c.l.b16 %v3525
      %v3654 = vunpack.c.l.b16 %v3526
      %v3655 = vunpack.c.l.b16 %v3527
      %v3656 = vunpack.c.l.b16 %v3528
      %v3657 = vunpack.c.l.b16 %v3529
      %v3658 = vunpack.c.l.b16 %v3530
      %v3659 = vunpack.c.l.b16 %v3531
      %v3660 = vunpack.c.l.b16 %v3532
      %v3661 = vunpack.c.l.b16 %v3533
      %v3662 = vunpack.c.l.b16 %v3534
      %v3663 = vunpack.c.l.b16 %v3535
      %v3664 = vunpack.c.l.b16 %v3536
      %v3665 = vunpack.c.l.b16 %v3537
      %v3666 = vunpack.c.l.b16 %v3538
      %v3667 = vunpack.c.l.b16 %v3539
      %v3668 = vunpack.c.l.b16 %v3540
      %v3669 = vunpack.c.l.b16 %v3541
      %v3670 = vunpack.c.l.b16 %v3542
      %v3671 = vunpack.c.l.b16 %v3543
      %v3672 = vunpack.c.l.b16 %v3544
      %v3673 = vunpack.c.l.b16 %v3545
      %v3674 = vunpack.c.l.b16 %v3546
      %v3675 = vunpack.c.l.b16 %v3547
      %v3676 = vunpack.c.l.b16 %v3548
      %v3677 = vunpack.c.l.b16 %v3549
      %v3678 = vunpack.c.l.b16 %v3550
      %v3679 = vunpack.c.l.b16 %v3551
      %v3680 = vunpack.c.l.b16 %v3552
      %v3681 = vunpack.c.l.b16 %v3553
      %v3682 = vunpack.c.l.b16 %v3554
      %v3683 = vunpack.c.l.b16 %v3555
      %v3684 = vunpack.c.l.b16 %v3556
      %v3685 = vunpack.c.l.b16 %v3557
      %v3686 = vunpack.c.l.b16 %v3558
      %v3687 = vunpack.c.l.b16 %v3559
      %v3688 = vunpack.c.l.b16 %v3560
      %v3689 = vunpack.c.l.b16 %v3561
      %v3690 = vunpack.c.l.b16 %v3562
      %v3691 = vunpack.c.l.b16 %v3563
      %v3692 = vunpack.c.l.b16 %v3564
      %v3693 = vunpack.c.l.b16 %v3565
      %v3694 = vunpack.c.l.b16 %v3566
      %v3695 = vpack.c.b16 %v3632, %v3631
      %v3696 = vpack.c.b16 %v3634, %v3633
      %v3697 = vpack.c.b16 %v3636, %v3635
      %v3698 = vpack.c.b16 %v3638, %v3637
      %v3699 = vpack.c.b16 %v3640, %v3639
      %v3700 = vpack.c.b16 %v3642, %v3641
      %v3701 = vpack.c.b16 %v3644, %v3643
      %v3702 = vpack.c.b16 %v3646, %v3645
      %v3703 = vpack.c.b16 %v3648, %v3647
      %v3704 = vpack.c.b16 %v3650, %v3649
      %v3705 = vpack.c.b16 %v3652, %v3651
      %v3706 = vpack.c.b16 %v3654, %v3653
      %v3707 = vpack.c.b16 %v3656, %v3655
      %v3708 = vpack.c.b16 %v3658, %v3657
      %v3709 = vpack.c.b16 %v3660, %v3659
      %v3710 = vpack.c.b16 %v3662, %v3661
      %v3711 = vpack.c.b16 %v3664, %v3663
      %v3712 = vpack.c.b16 %v3666, %v3665
      %v3713 = vpack.c.b16 %v3668, %v3667
      %v3714 = vpack.c.b16 %v3670, %v3669
      %v3715 = vpack.c.b16 %v3672, %v3671
      %v3716 = vpack.c.b16 %v3674, %v3673
      %v3717 = vpack.c.b16 %v3676, %v3675
      %v3718 = vpack.c.b16 %v3678, %v3677
      %v3719 = vpack.c.b16 %v3680, %v3679
      %v3720 = vpack.c.b16 %v3682, %v3681
      %v3721 = vpack.c.b16 %v3684, %v3683
      %v3722 = vpack.c.b16 %v3686, %v3685
      %v3723 = vpack.c.b16 %v3688, %v3687
      %v3724 = vpack.c.b16 %v3690, %v3689
      %v3725 = vpack.c.b16 %v3692, %v3691
      %v3726 = vpack.c.b16 %v3694, %v3693
      %3759 = vmatprep.subr.bf16.mxu0 0
      %3760 = vmatpush1.bf16.msra.mxu0 %v3695
      %3761 = vmatprep.subr.bf16.mxu0 0
      %3762 = vmatpush1.bf16.msra.mxu0 %v3696
      %3763 = vmatprep.subr.bf16.mxu0 0
      %3764 = vmatpush1.bf16.msra.mxu0 %v3697
      %3765 = vmatprep.subr.bf16.mxu0 0
      %3766 = vmatpush1.bf16.msra.mxu0 %v3698
      %3767 = vmatprep.subr.bf16.mxu0 0
      %3768 = vmatpush1.bf16.msra.mxu0 %v3699
      %3769 = vmatprep.subr.bf16.mxu0 0
      %3770 = vmatpush1.bf16.msra.mxu0 %v3700
      %3771 = vmatprep.subr.bf16.mxu0 0
      %3772 = vmatpush1.bf16.msra.mxu0 %v3701
      %3773 = vmatprep.subr.bf16.mxu0 0
      %3774 = vmatpush1.bf16.msra.mxu0 %v3702
      %3775 = vmatprep.subr.bf16.mxu0 0
      %3776 = vmatpush1.bf16.msra.mxu0 %v3703
      %3777 = vmatprep.subr.bf16.mxu0 0
      %3778 = vmatpush1.bf16.msra.mxu0 %v3704
      %3779 = vmatprep.subr.bf16.mxu0 0
      %3780 = vmatpush1.bf16.msra.mxu0 %v3705
      %3781 = vmatprep.subr.bf16.mxu0 0
      %3782 = vmatpush1.bf16.msra.mxu0 %v3706
      %3783 = vmatprep.subr.bf16.mxu0 0
      %3784 = vmatpush1.bf16.msra.mxu0 %v3707
      %3785 = vmatprep.subr.bf16.mxu0 0
      %3786 = vmatpush1.bf16.msra.mxu0 %v3708
      %3787 = vmatprep.subr.bf16.mxu0 0
      %3788 = vmatpush1.bf16.msra.mxu0 %v3709
      %3789 = vmatprep.subr.bf16.mxu0 0
      %3790 = vmatpush1.bf16.msra.mxu0 %v3710
      %3791 = vmatprep.mubr.bf16.mxu0 %v3487
      %3792 = vmatmul.mubr.bf16.gmra.mrb[0].mxu0 %v3486
      %v3793 = vpop.f32.mrb[0].mxu0
      %v3794 = vadd.f32 0.0, %v3793
      %v3795 = vpop.f32.mrb[0].mxu0
      %v3796 = vpop.f32.mrb[0].mxu0
      %v3797 = vadd.f32 0.0, %v3796
      %v3798 = vpop.f32.mrb[0].mxu0
      %3799 = vmatprep.mubr.bf16.mxu0 %v3491
      %3800 = vmatmul.mubr.bf16.gmra.mrb[0].mxu0 %v3490
      %v3801 = vpop.f32.mrb[0].mxu0
      %v3802 = vadd.f32 0.0, %v3801
      %v3803 = vpop.f32.mrb[0].mxu0
      %v3804 = vpop.f32.mrb[0].mxu0
      %v3805 = vadd.f32 0.0, %v3804
      %v3806 = vpop.f32.mrb[0].mxu0
      %3807 = vmatprep.mubr.bf16.mxu0 %v3495
      %3808 = vmatmul.mubr.bf16.gmra.mrb[0].mxu0 %v3494
      %v3809 = vpop.f32.mrb[0].mxu0
      %v3810 = vadd.f32 0.0, %v3809
      %v3811 = vpop.f32.mrb[0].mxu0
      %v3812 = vpop.f32.mrb[0].mxu0
      %v3813 = vadd.f32 0.0, %v3812
      %v3814 = vpop.f32.mrb[0].mxu0
      %3815 = vmatprep.mubr.bf16.mxu0 %v3499
      %3816 = vmatmul.mubr.bf16.gmra.mrb[0].mxu0 %v3498
      %v3817 = vpop.f32.mrb[0].mxu0
      %v3818 = vadd.f32 0.0, %v3817
      %v3819 = vpop.f32.mrb[0].mxu0
      %v3820 = vpop.f32.mrb[0].mxu0
      %v3821 = vadd.f32 0.0, %v3820
      %v3822 = vpop.f32.mrb[0].mxu0
      %3823 = vdwg.mxu0
      %3824 = vmatprep.subr.bf16.mxu0 0
      %3825 = vmatpush1.bf16.msra.mxu0 %v3711
      %3826 = vmatprep.subr.bf16.mxu0 0
      %3827 = vmatpush1.bf16.msra.mxu0 %v3712
      %3828 = vmatprep.subr.bf16.mxu0 0
      %3829 = vmatpush1.bf16.msra.mxu0 %v3713
      %3830 = vmatprep.subr.bf16.mxu0 0
      %3831 = vmatpush1.bf16.msra.mxu0 %v3714
      %3832 = vmatprep.subr.bf16.mxu0 0
      %3833 = vmatpush1.bf16.msra.mxu0 %v3715
      %3834 = vmatprep.subr.bf16.mxu0 0
      %3835 = vmatpush1.bf16.msra.mxu0 %v3716
      %3836 = vmatprep.subr.bf16.mxu0 0
      %3837 = vmatpush1.bf16.msra.mxu0 %v3717
      %3838 = vmatprep.subr.bf16.mxu0 0
      %3839 = vmatpush1.bf16.msra.mxu0 %v3718
      %3840 = vmatprep.subr.bf16.mxu0 0
      %3841 = vmatpush1.bf16.msra.mxu0 %v3719
      %3842 = vmatprep.subr.bf16.mxu0 0
      %3843 = vmatpush1.bf16.msra.mxu0 %v3720
      %3844 = vmatprep.subr.bf16.mxu0 0
      %3845 = vmatpush1.bf16.msra.mxu0 %v3721
      %3846 = vmatprep.subr.bf16.mxu0 0
      %3847 = vmatpush1.bf16.msra.mxu0 %v3722
      %3848 = vmatprep.subr.bf16.mxu0 0
      %3849 = vmatpush1.bf16.msra.mxu0 %v3723
      %3850 = vmatprep.subr.bf16.mxu0 0
      %3851 = vmatpush1.bf16.msra.mxu0 %v3724
      %3852 = vmatprep.subr.bf16.mxu0 0
      %3853 = vmatpush1.bf16.msra.mxu0 %v3725
      %3854 = vmatprep.subr.bf16.mxu0 0
      %3855 = vmatpush1.bf16.msra.mxu0 %v3726
      %3856 = vmatprep.mubr.bf16.mxu0 %v3489
      %3857 = vmatmul.mubr.bf16.gmra.mrb[0].mxu0 %v3488
      %v3858 = vpop.f32.mrb[0].mxu0
      %v3859 = vadd.f32 %v3794, %v3858
      %v3860 = vpop.f32.mrb[0].mxu0
      %v3861 = vpop.f32.mrb[0].mxu0
      %v3862 = vadd.f32 %v3797, %v3861
      %v3863 = vpop.f32.mrb[0].mxu0
      %3864 = vmatprep.mubr.bf16.mxu0 %v3493
      %3865 = vmatmul.mubr.bf16.gmra.mrb[0].mxu0 %v3492
      %v3866 = vpop.f32.mrb[0].mxu0
      %v3867 = vadd.f32 %v3802, %v3866
      %v3868 = vpop.f32.mrb[0].mxu0
      %v3869 = vpop.f32.mrb[0].mxu0
      %v3870 = vadd.f32 %v3805, %v3869
      %v3871 = vpop.f32.mrb[0].mxu0
      %3872 = vmatprep.mubr.bf16.mxu0 %v3497
      %3873 = vmatmul.mubr.bf16.gmra.mrb[0].mxu0 %v3496
      %v3874 = vpop.f32.mrb[0].mxu0
      %v3875 = vadd.f32 %v3810, %v3874
      %v3876 = vpop.f32.mrb[0].mxu0
      %v3877 = vpop.f32.mrb[0].mxu0
      %v3878 = vadd.f32 %v3813, %v3877
      %v3879 = vpop.f32.mrb[0].mxu0
      %3880 = vmatprep.mubr.bf16.mxu0 %v3501
      %3881 = vmatmul.mubr.bf16.gmra.mrb[0].mxu0 %v3500
      %v3882 = vpop.f32.mrb[0].mxu0
      %v3883 = vadd.f32 %v3818, %v3882
      %v3884 = vpop.f32.mrb[0].mxu0
      %v3885 = vpop.f32.mrb[0].mxu0
      %v3886 = vadd.f32 %v3821, %v3885
      %v3887 = vpop.f32.mrb[0].mxu0
      %3888 = vdwg.mxu0
      %vm3889 = vcmp.ge.f32.partialorder %v3859, 0.0
      %vm3890 = vcmp.ge.f32.partialorder %v3862, 0.0
      %vm3891 = vcmp.ge.f32.partialorder %v3867, 0.0
      %vm3892 = vcmp.ge.f32.partialorder %v3870, 0.0
      %vm3893 = vcmp.ge.f32.partialorder %v3875, 0.0
      %vm3894 = vcmp.ge.f32.partialorder %v3878, 0.0
      %vm3895 = vcmp.ge.f32.partialorder %v3883, 0.0
      %vm3896 = vcmp.ge.f32.partialorder %v3886, 0.0
      %v3897 = vmul.f32 %v3859, 0.1
      %v3898 = vmul.f32 %v3862, 0.1
      %v3899 = vmul.f32 %v3867, 0.1
      %v3900 = vmul.f32 %v3870, 0.1
      %v3901 = vmul.f32 %v3875, 0.1
      %v3902 = vmul.f32 %v3878, 0.1
      %v3903 = vmul.f32 %v3883, 0.1
      %v3904 = vmul.f32 %v3886, 0.1
      %v3905 = vsel %vm3889, %v3859, %v3897
      %v3906 = vsel %vm3890, %v3862, %v3898
      %v3907 = vsel %vm3891, %v3867, %v3899
      %v3908 = vsel %vm3892, %v3870, %v3900
      %v3909 = vsel %vm3893, %v3875, %v3901
      %v3910 = vsel %vm3894, %v3878, %v3902
      %v3911 = vsel %vm3895, %v3883, %v3903
      %v3912 = vsel %vm3896, %v3886, %v3904
      %s3913 = scalar_lea.vmem [#allocation3], 336
      %3914 = vst.msk [vmem:[%s3913 + $0x1] sm:$0xff] %vm305, %v3905
      %3915 = vst.msk [vmem:[%s3913 + $0x11] sm:$0xff] %vm305, %v3906
      %3916 = vst.msk [vmem:[%s3913 + $0x21] sm:$0xff] %vm305, %v3907
      %3917 = vst.msk [vmem:[%s3913 + $0x31] sm:$0xff] %vm305, %v3908
      %3918 = vst.msk [vmem:[%s3913 + $0x41] sm:$0xff] %vm305, %v3909
      %3919 = vst.msk [vmem:[%s3913 + $0x51] sm:$0xff] %vm305, %v3910
      %3920 = vst.msk [vmem:[%s3913 + $0x61] sm:$0xff] %vm305, %v3911
      %3921 = vst.msk [vmem:[%s3913 + $0x71] sm:$0xff] %vm305, %v3912
      %v3922 = vld [vmem:[%s413 + $0x1] sm:$0xff]
      %v3923 = vld [vmem:[%s413 + $0x11] sm:$0xff]
      %v3924 = vld [vmem:[%s413 + $0x21] sm:$0xff]
      %v3925 = vld [vmem:[%s413 + $0x31] sm:$0xff]
      %v3926 = vld [vmem:[%s413 + $0x41] sm:$0xff]
      %v3927 = vld [vmem:[%s413 + $0x51] sm:$0xff]
      %v3928 = vld [vmem:[%s413 + $0x61] sm:$0xff]
      %v3929 = vld [vmem:[%s413 + $0x71] sm:$0xff]
      %v3930 = vld [vmem:[%s413 + $0x2] sm:$0xff]
      %v3931 = vld [vmem:[%s413 + $0x12] sm:$0xff]
      %v3932 = vld [vmem:[%s413 + $0x22] sm:$0xff]
      %v3933 = vld [vmem:[%s413 + $0x32] sm:$0xff]
      %v3934 = vld [vmem:[%s413 + $0x42] sm:$0xff]
      %v3935 = vld [vmem:[%s413 + $0x52] sm:$0xff]
      %v3936 = vld [vmem:[%s413 + $0x62] sm:$0xff]
      %v3937 = vld [vmem:[%s413 + $0x72] sm:$0xff]
      %v3938 = vld [vmem:[%s470 + $0x1] sm:$0xff]
      %v3939 = vld [vmem:[%s470 + $0x11] sm:$0xff]
      %v3940 = vld [vmem:[%s470 + $0x21] sm:$0xff]
      %v3941 = vld [vmem:[%s470 + $0x31] sm:$0xff]
      %v3942 = vld [vmem:[%s470 + $0x41] sm:$0xff]
      %v3943 = vld [vmem:[%s470 + $0x51] sm:$0xff]
      %v3944 = vld [vmem:[%s470 + $0x61] sm:$0xff]
      %v3945 = vld [vmem:[%s470 + $0x71] sm:$0xff]
      %v3946 = vld [vmem:[%s470 + $0x2] sm:$0xff]
      %v3947 = vld [vmem:[%s470 + $0x12] sm:$0xff]
      %v3948 = vld [vmem:[%s470 + $0x22] sm:$0xff]
      %v3949 = vld [vmem:[%s470 + $0x32] sm:$0xff]
      %v3950 = vld [vmem:[%s470 + $0x42] sm:$0xff]
      %v3951 = vld [vmem:[%s470 + $0x52] sm:$0xff]
      %v3952 = vld [vmem:[%s470 + $0x62] sm:$0xff]
      %v3953 = vld [vmem:[%s470 + $0x72] sm:$0xff]
      %v3954 = vpack.c.bf16 %v3923, %v3922
      %v3955 = vpack.c.bf16 %v3931, %v3930
      %v3956 = vpack.c.bf16 %v3939, %v3938
      %v3957 = vpack.c.bf16 %v3947, %v3946
      %v3958 = vpack.c.bf16 %v3925, %v3924
      %v3959 = vpack.c.bf16 %v3933, %v3932
      %v3960 = vpack.c.bf16 %v3941, %v3940
      %v3961 = vpack.c.bf16 %v3949, %v3948
      %v3962 = vpack.c.bf16 %v3927, %v3926
      %v3963 = vpack.c.bf16 %v3935, %v3934
      %v3964 = vpack.c.bf16 %v3943, %v3942
      %v3965 = vpack.c.bf16 %v3951, %v3950
      %v3966 = vpack.c.bf16 %v3929, %v3928
      %v3967 = vpack.c.bf16 %v3937, %v3936
      %v3968 = vpack.c.bf16 %v3945, %v3944
      %v3969 = vpack.c.bf16 %v3953, %v3952
      %s3970 = scalar_lea.vmem %s5, 768
      %v3971 = vld [vmem:[%s3970] sm:$0xf]
      %v3972 = vld [vmem:[%s3970 + $0x4] sm:$0xf]
      %v3973 = vld [vmem:[%s3970 + $0x8] sm:$0xf]
      %v3974 = vld [vmem:[%s3970 + $0xc] sm:$0xf]
      %v3975 = vld [vmem:[%s3970 + $0x10] sm:$0xf]
      %v3976 = vld [vmem:[%s3970 + $0x14] sm:$0xf]
      %v3977 = vld [vmem:[%s3970 + $0x18] sm:$0xf]
      %v3978 = vld [vmem:[%s3970 + $0x1c] sm:$0xf]
      %v3979 = vld [vmem:[%s3970 + $0x20] sm:$0xf]
      %v3980 = vld [vmem:[%s3970 + $0x24] sm:$0xf]
      %v3981 = vld [vmem:[%s3970 + $0x28] sm:$0xf]
      %v3982 = vld [vmem:[%s3970 + $0x2c] sm:$0xf]
      %v3983 = vld [vmem:[%s3970 + $0x30] sm:$0xf]
      %v3984 = vld [vmem:[%s3970 + $0x34] sm:$0xf]
      %v3985 = vld [vmem:[%s3970 + $0x38] sm:$0xf]
      %v3986 = vld [vmem:[%s3970 + $0x3c] sm:$0xf]
      %v3987 = vld [vmem:[%s3970 + $0x40] sm:$0xf]
      %v3988 = vld [vmem:[%s3970 + $0x44] sm:$0xf]
      %v3989 = vld [vmem:[%s3970 + $0x48] sm:$0xf]
      %v3990 = vld [vmem:[%s3970 + $0x4c] sm:$0xf]
      %v3991 = vld [vmem:[%s3970 + $0x50] sm:$0xf]
      %v3992 = vld [vmem:[%s3970 + $0x54] sm:$0xf]
      %v3993 = vld [vmem:[%s3970 + $0x58] sm:$0xf]
      %v3994 = vld [vmem:[%s3970 + $0x5c] sm:$0xf]
      %v3995 = vld [vmem:[%s3970 + $0x60] sm:$0xf]
      %v3996 = vld [vmem:[%s3970 + $0x64] sm:$0xf]
      %v3997 = vld [vmem:[%s3970 + $0x68] sm:$0xf]
      %v3998 = vld [vmem:[%s3970 + $0x6c] sm:$0xf]
      %v3999 = vld [vmem:[%s3970 + $0x70] sm:$0xf]
      %v4000 = vld [vmem:[%s3970 + $0x74] sm:$0xf]
      %v4001 = vld [vmem:[%s3970 + $0x78] sm:$0xf]
      %v4002 = vld [vmem:[%s3970 + $0x7c] sm:$0xf]
      %v4003 = vld [vmem:[%s3970 + $0x80] sm:$0xf]
      %v4004 = vld [vmem:[%s3970 + $0x84] sm:$0xf]
      %v4005 = vld [vmem:[%s3970 + $0x88] sm:$0xf]
      %v4006 = vld [vmem:[%s3970 + $0x8c] sm:$0xf]
      %v4007 = vld [vmem:[%s3970 + $0x90] sm:$0xf]
      %v4008 = vld [vmem:[%s3970 + $0x94] sm:$0xf]
      %v4009 = vld [vmem:[%s3970 + $0x98] sm:$0xf]
      %v4010 = vld [vmem:[%s3970 + $0x9c] sm:$0xf]
      %v4011 = vld [vmem:[%s3970 + $0xa0] sm:$0xf]
      %v4012 = vld [vmem:[%s3970 + $0xa4] sm:$0xf]
      %v4013 = vld [vmem:[%s3970 + $0xa8] sm:$0xf]
      %v4014 = vld [vmem:[%s3970 + $0xac] sm:$0xf]
      %v4015 = vld [vmem:[%s3970 + $0xb0] sm:$0xf]
      %v4016 = vld [vmem:[%s3970 + $0xb4] sm:$0xf]
      %v4017 = vld [vmem:[%s3970 + $0xb8] sm:$0xf]
      %v4018 = vld [vmem:[%s3970 + $0xbc] sm:$0xf]
      %v4019 = vld [vmem:[%s3970 + $0xc0] sm:$0xf]
      %v4020 = vld [vmem:[%s3970 + $0xc4] sm:$0xf]
      %v4021 = vld [vmem:[%s3970 + $0xc8] sm:$0xf]
      %v4022 = vld [vmem:[%s3970 + $0xcc] sm:$0xf]
      %v4023 = vld [vmem:[%s3970 + $0xd0] sm:$0xf]
      %v4024 = vld [vmem:[%s3970 + $0xd4] sm:$0xf]
      %v4025 = vld [vmem:[%s3970 + $0xd8] sm:$0xf]
      %v4026 = vld [vmem:[%s3970 + $0xdc] sm:$0xf]
      %v4027 = vld [vmem:[%s3970 + $0xe0] sm:$0xf]
      %v4028 = vld [vmem:[%s3970 + $0xe4] sm:$0xf]
      %v4029 = vld [vmem:[%s3970 + $0xe8] sm:$0xf]
      %v4030 = vld [vmem:[%s3970 + $0xec] sm:$0xf]
      %v4031 = vld [vmem:[%s3970 + $0xf0] sm:$0xf]
      %v4032 = vld [vmem:[%s3970 + $0xf4] sm:$0xf]
      %v4033 = vld [vmem:[%s3970 + $0xf8] sm:$0xf]
      %v4034 = vld [vmem:[%s3970 + $0xfc] sm:$0xf]
      %v4099 = vunpack.c.l.b16 %v3971
      %v4100 = vunpack.c.l.b16 %v3972
      %v4101 = vunpack.c.l.b16 %v3973
      %v4102 = vunpack.c.l.b16 %v3974
      %v4103 = vunpack.c.l.b16 %v3975
      %v4104 = vunpack.c.l.b16 %v3976
      %v4105 = vunpack.c.l.b16 %v3977
      %v4106 = vunpack.c.l.b16 %v3978
      %v4107 = vunpack.c.l.b16 %v3979
      %v4108 = vunpack.c.l.b16 %v3980
      %v4109 = vunpack.c.l.b16 %v3981
      %v4110 = vunpack.c.l.b16 %v3982
      %v4111 = vunpack.c.l.b16 %v3983
      %v4112 = vunpack.c.l.b16 %v3984
      %v4113 = vunpack.c.l.b16 %v3985
      %v4114 = vunpack.c.l.b16 %v3986
      %v4115 = vunpack.c.l.b16 %v3987
      %v4116 = vunpack.c.l.b16 %v3988
      %v4117 = vunpack.c.l.b16 %v3989
      %v4118 = vunpack.c.l.b16 %v3990
      %v4119 = vunpack.c.l.b16 %v3991
      %v4120 = vunpack.c.l.b16 %v3992
      %v4121 = vunpack.c.l.b16 %v3993
      %v4122 = vunpack.c.l.b16 %v3994
      %v4123 = vunpack.c.l.b16 %v3995
      %v4124 = vunpack.c.l.b16 %v3996
      %v4125 = vunpack.c.l.b16 %v3997
      %v4126 = vunpack.c.l.b16 %v3998
      %v4127 = vunpack.c.l.b16 %v3999
      %v4128 = vunpack.c.l.b16 %v4000
      %v4129 = vunpack.c.l.b16 %v4001
      %v4130 = vunpack.c.l.b16 %v4002
      %v4131 = vunpack.c.l.b16 %v4003
      %v4132 = vunpack.c.l.b16 %v4004
      %v4133 = vunpack.c.l.b16 %v4005
      %v4134 = vunpack.c.l.b16 %v4006
      %v4135 = vunpack.c.l.b16 %v4007
      %v4136 = vunpack.c.l.b16 %v4008
      %v4137 = vunpack.c.l.b16 %v4009
      %v4138 = vunpack.c.l.b16 %v4010
      %v4139 = vunpack.c.l.b16 %v4011
      %v4140 = vunpack.c.l.b16 %v4012
      %v4141 = vunpack.c.l.b16 %v4013
      %v4142 = vunpack.c.l.b16 %v4014
      %v4143 = vunpack.c.l.b16 %v4015
      %v4144 = vunpack.c.l.b16 %v4016
      %v4145 = vunpack.c.l.b16 %v4017
      %v4146 = vunpack.c.l.b16 %v4018
      %v4147 = vunpack.c.l.b16 %v4019
      %v4148 = vunpack.c.l.b16 %v4020
      %v4149 = vunpack.c.l.b16 %v4021
      %v4150 = vunpack.c.l.b16 %v4022
      %v4151 = vunpack.c.l.b16 %v4023
      %v4152 = vunpack.c.l.b16 %v4024
      %v4153 = vunpack.c.l.b16 %v4025
      %v4154 = vunpack.c.l.b16 %v4026
      %v4155 = vunpack.c.l.b16 %v4027
      %v4156 = vunpack.c.l.b16 %v4028
      %v4157 = vunpack.c.l.b16 %v4029
      %v4158 = vunpack.c.l.b16 %v4030
      %v4159 = vunpack.c.l.b16 %v4031
      %v4160 = vunpack.c.l.b16 %v4032
      %v4161 = vunpack.c.l.b16 %v4033
      %v4162 = vunpack.c.l.b16 %v4034
      %v4163 = vpack.c.b16 %v4100, %v4099
      %v4164 = vpack.c.b16 %v4102, %v4101
      %v4165 = vpack.c.b16 %v4104, %v4103
      %v4166 = vpack.c.b16 %v4106, %v4105
      %v4167 = vpack.c.b16 %v4108, %v4107
      %v4168 = vpack.c.b16 %v4110, %v4109
      %v4169 = vpack.c.b16 %v4112, %v4111
      %v4170 = vpack.c.b16 %v4114, %v4113
      %v4171 = vpack.c.b16 %v4116, %v4115
      %v4172 = vpack.c.b16 %v4118, %v4117
      %v4173 = vpack.c.b16 %v4120, %v4119
      %v4174 = vpack.c.b16 %v4122, %v4121
      %v4175 = vpack.c.b16 %v4124, %v4123
      %v4176 = vpack.c.b16 %v4126, %v4125
      %v4177 = vpack.c.b16 %v4128, %v4127
      %v4178 = vpack.c.b16 %v4130, %v4129
      %v4179 = vpack.c.b16 %v4132, %v4131
      %v4180 = vpack.c.b16 %v4134, %v4133
      %v4181 = vpack.c.b16 %v4136, %v4135
      %v4182 = vpack.c.b16 %v4138, %v4137
      %v4183 = vpack.c.b16 %v4140, %v4139
      %v4184 = vpack.c.b16 %v4142, %v4141
      %v4185 = vpack.c.b16 %v4144, %v4143
      %v4186 = vpack.c.b16 %v4146, %v4145
      %v4187 = vpack.c.b16 %v4148, %v4147
      %v4188 = vpack.c.b16 %v4150, %v4149
      %v4189 = vpack.c.b16 %v4152, %v4151
      %v4190 = vpack.c.b16 %v4154, %v4153
      %v4191 = vpack.c.b16 %v4156, %v4155
      %v4192 = vpack.c.b16 %v4158, %v4157
      %v4193 = vpack.c.b16 %v4160, %v4159
      %v4194 = vpack.c.b16 %v4162, %v4161
      %4227 = vmatprep.subr.bf16.mxu0 0
      %4228 = vmatpush1.bf16.msra.mxu0 %v4163
      %4229 = vmatprep.subr.bf16.mxu0 0
      %4230 = vmatpush1.bf16.msra.mxu0 %v4164
      %4231 = vmatprep.subr.bf16.mxu0 0
      %4232 = vmatpush1.bf16.msra.mxu0 %v4165
      %4233 = vmatprep.subr.bf16.mxu0 0
      %4234 = vmatpush1.bf16.msra.mxu0 %v4166
      %4235 = vmatprep.subr.bf16.mxu0 0
      %4236 = vmatpush1.bf16.msra.mxu0 %v4167
      %4237 = vmatprep.subr.bf16.mxu0 0
      %4238 = vmatpush1.bf16.msra.mxu0 %v4168
      %4239 = vmatprep.subr.bf16.mxu0 0
      %4240 = vmatpush1.bf16.msra.mxu0 %v4169
      %4241 = vmatprep.subr.bf16.mxu0 0
      %4242 = vmatpush1.bf16.msra.mxu0 %v4170
      %4243 = vmatprep.subr.bf16.mxu0 0
      %4244 = vmatpush1.bf16.msra.mxu0 %v4171
      %4245 = vmatprep.subr.bf16.mxu0 0
      %4246 = vmatpush1.bf16.msra.mxu0 %v4172
      %4247 = vmatprep.subr.bf16.mxu0 0
      %4248 = vmatpush1.bf16.msra.mxu0 %v4173
      %4249 = vmatprep.subr.bf16.mxu0 0
      %4250 = vmatpush1.bf16.msra.mxu0 %v4174
      %4251 = vmatprep.subr.bf16.mxu0 0
      %4252 = vmatpush1.bf16.msra.mxu0 %v4175
      %4253 = vmatprep.subr.bf16.mxu0 0
      %4254 = vmatpush1.bf16.msra.mxu0 %v4176
      %4255 = vmatprep.subr.bf16.mxu0 0
      %4256 = vmatpush1.bf16.msra.mxu0 %v4177
      %4257 = vmatprep.subr.bf16.mxu0 0
      %4258 = vmatpush1.bf16.msra.mxu0 %v4178
      %4259 = vmatprep.mubr.bf16.mxu0 %v3955
      %4260 = vmatmul.mubr.bf16.gmra.mrb[0].mxu0 %v3954
      %v4261 = vpop.f32.mrb[0].mxu0
      %v4262 = vadd.f32 0.0, %v4261
      %v4263 = vpop.f32.mrb[0].mxu0
      %v4264 = vpop.f32.mrb[0].mxu0
      %v4265 = vadd.f32 0.0, %v4264
      %v4266 = vpop.f32.mrb[0].mxu0
      %4267 = vmatprep.mubr.bf16.mxu0 %v3959
      %4268 = vmatmul.mubr.bf16.gmra.mrb[0].mxu0 %v3958
      %v4269 = vpop.f32.mrb[0].mxu0
      %v4270 = vadd.f32 0.0, %v4269
      %v4271 = vpop.f32.mrb[0].mxu0
      %v4272 = vpop.f32.mrb[0].mxu0
      %v4273 = vadd.f32 0.0, %v4272
      %v4274 = vpop.f32.mrb[0].mxu0
      %4275 = vmatprep.mubr.bf16.mxu0 %v3963
      %4276 = vmatmul.mubr.bf16.gmra.mrb[0].mxu0 %v3962
      %v4277 = vpop.f32.mrb[0].mxu0
      %v4278 = vadd.f32 0.0, %v4277
      %v4279 = vpop.f32.mrb[0].mxu0
      %v4280 = vpop.f32.mrb[0].mxu0
      %v4281 = vadd.f32 0.0, %v4280
      %v4282 = vpop.f32.mrb[0].mxu0
      %4283 = vmatprep.mubr.bf16.mxu0 %v3967
      %4284 = vmatmul.mubr.bf16.gmra.mrb[0].mxu0 %v3966
      %v4285 = vpop.f32.mrb[0].mxu0
      %v4286 = vadd.f32 0.0, %v4285
      %v4287 = vpop.f32.mrb[0].mxu0
      %v4288 = vpop.f32.mrb[0].mxu0
      %v4289 = vadd.f32 0.0, %v4288
      %v4290 = vpop.f32.mrb[0].mxu0
      %4291 = vdwg.mxu0
      %4292 = vmatprep.subr.bf16.mxu0 0
      %4293 = vmatpush1.bf16.msra.mxu0 %v4179
      %4294 = vmatprep.subr.bf16.mxu0 0
      %4295 = vmatpush1.bf16.msra.mxu0 %v4180
      %4296 = vmatprep.subr.bf16.mxu0 0
      %4297 = vmatpush1.bf16.msra.mxu0 %v4181
      %4298 = vmatprep.subr.bf16.mxu0 0
      %4299 = vmatpush1.bf16.msra.mxu0 %v4182
      %4300 = vmatprep.subr.bf16.mxu0 0
      %4301 = vmatpush1.bf16.msra.mxu0 %v4183
      %4302 = vmatprep.subr.bf16.mxu0 0
      %4303 = vmatpush1.bf16.msra.mxu0 %v4184
      %4304 = vmatprep.subr.bf16.mxu0 0
      %4305 = vmatpush1.bf16.msra.mxu0 %v4185
      %4306 = vmatprep.subr.bf16.mxu0 0
      %4307 = vmatpush1.bf16.msra.mxu0 %v4186
      %4308 = vmatprep.subr.bf16.mxu0 0
      %4309 = vmatpush1.bf16.msra.mxu0 %v4187
      %4310 = vmatprep.subr.bf16.mxu0 0
      %4311 = vmatpush1.bf16.msra.mxu0 %v4188
      %4312 = vmatprep.subr.bf16.mxu0 0
      %4313 = vmatpush1.bf16.msra.mxu0 %v4189
      %4314 = vmatprep.subr.bf16.mxu0 0
      %4315 = vmatpush1.bf16.msra.mxu0 %v4190
      %4316 = vmatprep.subr.bf16.mxu0 0
      %4317 = vmatpush1.bf16.msra.mxu0 %v4191
      %4318 = vmatprep.subr.bf16.mxu0 0
      %4319 = vmatpush1.bf16.msra.mxu0 %v4192
      %4320 = vmatprep.subr.bf16.mxu0 0
      %4321 = vmatpush1.bf16.msra.mxu0 %v4193
      %4322 = vmatprep.subr.bf16.mxu0 0
      %4323 = vmatpush1.bf16.msra.mxu0 %v4194
      %4324 = vmatprep.mubr.bf16.mxu0 %v3957
      %4325 = vmatmul.mubr.bf16.gmra.mrb[0].mxu0 %v3956
      %v4326 = vpop.f32.mrb[0].mxu0
      %v4327 = vadd.f32 %v4262, %v4326
      %v4328 = vpop.f32.mrb[0].mxu0
      %v4329 = vpop.f32.mrb[0].mxu0
      %v4330 = vadd.f32 %v4265, %v4329
      %v4331 = vpop.f32.mrb[0].mxu0
      %4332 = vmatprep.mubr.bf16.mxu0 %v3961
      %4333 = vmatmul.mubr.bf16.gmra.mrb[0].mxu0 %v3960
      %v4334 = vpop.f32.mrb[0].mxu0
      %v4335 = vadd.f32 %v4270, %v4334
      %v4336 = vpop.f32.mrb[0].mxu0
      %v4337 = vpop.f32.mrb[0].mxu0
      %v4338 = vadd.f32 %v4273, %v4337
      %v4339 = vpop.f32.mrb[0].mxu0
      %4340 = vmatprep.mubr.bf16.mxu0 %v3965
      %4341 = vmatmul.mubr.bf16.gmra.mrb[0].mxu0 %v3964
      %v4342 = vpop.f32.mrb[0].mxu0
      %v4343 = vadd.f32 %v4278, %v4342
      %v4344 = vpop.f32.mrb[0].mxu0
      %v4345 = vpop.f32.mrb[0].mxu0
      %v4346 = vadd.f32 %v4281, %v4345
      %v4347 = vpop.f32.mrb[0].mxu0
      %4348 = vmatprep.mubr.bf16.mxu0 %v3969
      %4349 = vmatmul.mubr.bf16.gmra.mrb[0].mxu0 %v3968
      %v4350 = vpop.f32.mrb[0].mxu0
      %v4351 = vadd.f32 %v4286, %v4350
      %v4352 = vpop.f32.mrb[0].mxu0
      %v4353 = vpop.f32.mrb[0].mxu0
      %v4354 = vadd.f32 %v4289, %v4353
      %v4355 = vpop.f32.mrb[0].mxu0
      %4356 = vdwg.mxu0
      %vm4357 = vcmp.ge.f32.partialorder %v4327, 0.0
      %vm4358 = vcmp.ge.f32.partialorder %v4330, 0.0
      %vm4359 = vcmp.ge.f32.partialorder %v4335, 0.0
      %vm4360 = vcmp.ge.f32.partialorder %v4338, 0.0
      %vm4361 = vcmp.ge.f32.partialorder %v4343, 0.0
      %vm4362 = vcmp.ge.f32.partialorder %v4346, 0.0
      %vm4363 = vcmp.ge.f32.partialorder %v4351, 0.0
      %vm4364 = vcmp.ge.f32.partialorder %v4354, 0.0
      %v4365 = vmul.f32 %v4327, 0.1
      %v4366 = vmul.f32 %v4330, 0.1
      %v4367 = vmul.f32 %v4335, 0.1
      %v4368 = vmul.f32 %v4338, 0.1
      %v4369 = vmul.f32 %v4343, 0.1
      %v4370 = vmul.f32 %v4346, 0.1
      %v4371 = vmul.f32 %v4351, 0.1
      %v4372 = vmul.f32 %v4354, 0.1
      %v4373 = vsel %vm4357, %v4327, %v4365
      %v4374 = vsel %vm4358, %v4330, %v4366
      %v4375 = vsel %vm4359, %v4335, %v4367
      %v4376 = vsel %vm4360, %v4338, %v4368
      %v4377 = vsel %vm4361, %v4343, %v4369
      %v4378 = vsel %vm4362, %v4346, %v4370
      %v4379 = vsel %vm4363, %v4351, %v4371
      %v4380 = vsel %vm4364, %v4354, %v4372
      %s4381 = scalar_lea.vmem [#allocation3], 496
      %4382 = vst.msk [vmem:[%s4381 + $0x1] sm:$0xff] %vm305, %v4373
      %4383 = vst.msk [vmem:[%s4381 + $0x11] sm:$0xff] %vm305, %v4374
      %4384 = vst.msk [vmem:[%s4381 + $0x21] sm:$0xff] %vm305, %v4375
      %4385 = vst.msk [vmem:[%s4381 + $0x31] sm:$0xff] %vm305, %v4376
      %4386 = vst.msk [vmem:[%s4381 + $0x41] sm:$0xff] %vm305, %v4377
      %4387 = vst.msk [vmem:[%s4381 + $0x51] sm:$0xff] %vm305, %v4378
      %4388 = vst.msk [vmem:[%s4381 + $0x61] sm:$0xff] %vm305, %v4379
      %4389 = vst.msk [vmem:[%s4381 + $0x71] sm:$0xff] %vm305, %v4380
      %s4390 = scalar_lea.vmem [#allocation3], 480
      %v4391 = vld [vmem:[%s4390] sm:$0xff]
      %v4392 = vld [vmem:[%s4390 + $0x10] sm:$0xff]
      %v4393 = vld [vmem:[%s4390 + $0x20] sm:$0xff]
      %v4394 = vld [vmem:[%s4390 + $0x30] sm:$0xff]
      %v4395 = vld [vmem:[%s4390 + $0x40] sm:$0xff]
      %v4396 = vld [vmem:[%s4390 + $0x50] sm:$0xff]
      %v4397 = vld [vmem:[%s4390 + $0x60] sm:$0xff]
      %v4398 = vld [vmem:[%s4390 + $0x70] sm:$0xff]
      %s4399 = scalar_lea.vmem [#allocation3], 320
      %v4400 = vld [vmem:[%s4399 + $0x1] sm:$0xff]
      %v4401 = vld [vmem:[%s4399 + $0x11] sm:$0xff]
      %v4402 = vld [vmem:[%s4399 + $0x21] sm:$0xff]
      %v4403 = vld [vmem:[%s4399 + $0x31] sm:$0xff]
      %v4404 = vld [vmem:[%s4399 + $0x41] sm:$0xff]
      %v4405 = vld [vmem:[%s4399 + $0x51] sm:$0xff]
      %v4406 = vld [vmem:[%s4399 + $0x61] sm:$0xff]
      %v4407 = vld [vmem:[%s4399 + $0x71] sm:$0xff]
      %v4408 = vld [vmem:[%s4390 + $0x1] sm:$0xff]
      %v4409 = vld [vmem:[%s4390 + $0x11] sm:$0xff]
      %v4410 = vld [vmem:[%s4390 + $0x21] sm:$0xff]
      %v4411 = vld [vmem:[%s4390 + $0x31] sm:$0xff]
      %v4412 = vld [vmem:[%s4390 + $0x41] sm:$0xff]
      %v4413 = vld [vmem:[%s4390 + $0x51] sm:$0xff]
      %v4414 = vld [vmem:[%s4390 + $0x61] sm:$0xff]
      %v4415 = vld [vmem:[%s4390 + $0x71] sm:$0xff]
      %v4416 = vld [vmem:[%s3445] sm:$0xff]
      %v4417 = vld [vmem:[%s3445 + $0x10] sm:$0xff]
      %v4418 = vld [vmem:[%s3445 + $0x20] sm:$0xff]
      %v4419 = vld [vmem:[%s3445 + $0x30] sm:$0xff]
      %v4420 = vld [vmem:[%s3445 + $0x40] sm:$0xff]
      %v4421 = vld [vmem:[%s3445 + $0x50] sm:$0xff]
      %v4422 = vld [vmem:[%s3445 + $0x60] sm:$0xff]
      %v4423 = vld [vmem:[%s3445 + $0x70] sm:$0xff]
      %v4424 = vld [vmem:[%s2977 + $0x1] sm:$0xff]
      %v4425 = vld [vmem:[%s2977 + $0x11] sm:$0xff]
      %v4426 = vld [vmem:[%s2977 + $0x21] sm:$0xff]
      %v4427 = vld [vmem:[%s2977 + $0x31] sm:$0xff]
      %v4428 = vld [vmem:[%s2977 + $0x41] sm:$0xff]
      %v4429 = vld [vmem:[%s2977 + $0x51] sm:$0xff]
      %v4430 = vld [vmem:[%s2977 + $0x61] sm:$0xff]
      %v4431 = vld [vmem:[%s2977 + $0x71] sm:$0xff]
      %v4432 = vld [vmem:[%s3445 + $0x1] sm:$0xff]
      %v4433 = vld [vmem:[%s3445 + $0x11] sm:$0xff]
      %v4434 = vld [vmem:[%s3445 + $0x21] sm:$0xff]
      %v4435 = vld [vmem:[%s3445 + $0x31] sm:$0xff]
      %v4436 = vld [vmem:[%s3445 + $0x41] sm:$0xff]
      %v4437 = vld [vmem:[%s3445 + $0x51] sm:$0xff]
      %v4438 = vld [vmem:[%s3445 + $0x61] sm:$0xff]
      %v4439 = vld [vmem:[%s3445 + $0x71] sm:$0xff]
      %v4440 = vld [vmem:[%s4381] sm:$0xff]
      %v4441 = vld [vmem:[%s4381 + $0x10] sm:$0xff]
      %v4442 = vld [vmem:[%s4381 + $0x20] sm:$0xff]
      %v4443 = vld [vmem:[%s4381 + $0x30] sm:$0xff]
      %v4444 = vld [vmem:[%s4381 + $0x40] sm:$0xff]
      %v4445 = vld [vmem:[%s4381 + $0x50] sm:$0xff]
      %v4446 = vld [vmem:[%s4381 + $0x60] sm:$0xff]
      %v4447 = vld [vmem:[%s4381 + $0x70] sm:$0xff]
      %v4448 = vld [vmem:[%s3913 + $0x1] sm:$0xff]
      %v4449 = vld [vmem:[%s3913 + $0x11] sm:$0xff]
      %v4450 = vld [vmem:[%s3913 + $0x21] sm:$0xff]
      %v4451 = vld [vmem:[%s3913 + $0x31] sm:$0xff]
      %v4452 = vld [vmem:[%s3913 + $0x41] sm:$0xff]
      %v4453 = vld [vmem:[%s3913 + $0x51] sm:$0xff]
      %v4454 = vld [vmem:[%s3913 + $0x61] sm:$0xff]
      %v4455 = vld [vmem:[%s3913 + $0x71] sm:$0xff]
      %v4456 = vld [vmem:[%s4381 + $0x1] sm:$0xff]
      %v4457 = vld [vmem:[%s4381 + $0x11] sm:$0xff]
      %v4458 = vld [vmem:[%s4381 + $0x21] sm:$0xff]
      %v4459 = vld [vmem:[%s4381 + $0x31] sm:$0xff]
      %v4460 = vld [vmem:[%s4381 + $0x41] sm:$0xff]
      %v4461 = vld [vmem:[%s4381 + $0x51] sm:$0xff]
      %v4462 = vld [vmem:[%s4381 + $0x61] sm:$0xff]
      %v4463 = vld [vmem:[%s4381 + $0x71] sm:$0xff]
      %4472 = vrot.lane.b32.xlu0 %v4400, 64
      %v4473 = vpop.permute.xlu0 %4472
      %4474 = vrot.lane.b32.xlu0 %v4401, 64
      %v4475 = vpop.permute.xlu0 %4474
      %4476 = vrot.lane.b32.xlu0 %v4402, 64
      %v4477 = vpop.permute.xlu0 %4476
      %4478 = vrot.lane.b32.xlu0 %v4403, 64
      %v4479 = vpop.permute.xlu0 %4478
      %4480 = vrot.lane.b32.xlu0 %v4404, 64
      %v4481 = vpop.permute.xlu0 %4480
      %4482 = vrot.lane.b32.xlu0 %v4405, 64
      %v4483 = vpop.permute.xlu0 %4482
      %4484 = vrot.lane.b32.xlu0 %v4406, 64
      %v4485 = vpop.permute.xlu0 %4484
      %4486 = vrot.lane.b32.xlu0 %v4407, 64
      %v4487 = vpop.permute.xlu0 %4486
      %4504 = vrot.lane.b32.xlu0 %v4416, 64
      %v4505 = vpop.permute.xlu0 %4504
      %4506 = vrot.lane.b32.xlu0 %v4417, 64
      %v4507 = vpop.permute.xlu0 %4506
      %4508 = vrot.lane.b32.xlu0 %v4418, 64
      %v4509 = vpop.permute.xlu0 %4508
      %4510 = vrot.lane.b32.xlu0 %v4419, 64
      %v4511 = vpop.permute.xlu0 %4510
      %4512 = vrot.lane.b32.xlu0 %v4420, 64
      %v4513 = vpop.permute.xlu0 %4512
      %4514 = vrot.lane.b32.xlu0 %v4421, 64
      %v4515 = vpop.permute.xlu0 %4514
      %4516 = vrot.lane.b32.xlu0 %v4422, 64
      %v4517 = vpop.permute.xlu0 %4516
      %4518 = vrot.lane.b32.xlu0 %v4423, 64
      %v4519 = vpop.permute.xlu0 %4518
      %4536 = vrot.lane.b32.xlu0 %v4432, 64
      %v4537 = vpop.permute.xlu0 %4536
      %4538 = vrot.lane.b32.xlu0 %v4433, 64
      %v4539 = vpop.permute.xlu0 %4538
      %4540 = vrot.lane.b32.xlu0 %v4434, 64
      %v4541 = vpop.permute.xlu0 %4540
      %4542 = vrot.lane.b32.xlu0 %v4435, 64
      %v4543 = vpop.permute.xlu0 %4542
      %4544 = vrot.lane.b32.xlu0 %v4436, 64
      %v4545 = vpop.permute.xlu0 %4544
      %4546 = vrot.lane.b32.xlu0 %v4437, 64
      %v4547 = vpop.permute.xlu0 %4546
      %4548 = vrot.lane.b32.xlu0 %v4438, 64
      %v4549 = vpop.permute.xlu0 %4548
      %4550 = vrot.lane.b32.xlu0 %v4439, 64
      %v4551 = vpop.permute.xlu0 %4550
      %4568 = vrot.lane.b32.xlu0 %v4448, 64
      %v4569 = vpop.permute.xlu0 %4568
      %4570 = vrot.lane.b32.xlu0 %v4449, 64
      %v4571 = vpop.permute.xlu0 %4570
      %4572 = vrot.lane.b32.xlu0 %v4450, 64
      %v4573 = vpop.permute.xlu0 %4572
      %4574 = vrot.lane.b32.xlu0 %v4451, 64
      %v4575 = vpop.permute.xlu0 %4574
      %4576 = vrot.lane.b32.xlu0 %v4452, 64
      %v4577 = vpop.permute.xlu0 %4576
      %4578 = vrot.lane.b32.xlu0 %v4453, 64
      %v4579 = vpop.permute.xlu0 %4578
      %4580 = vrot.lane.b32.xlu0 %v4454, 64
      %v4581 = vpop.permute.xlu0 %4580
      %4582 = vrot.lane.b32.xlu0 %v4455, 64
      %v4583 = vpop.permute.xlu0 %4582
      %v4592 = vsel %vm305, %v4391, %v4473
      %v4593 = vsel %vm305, %v4392, %v4475
      %v4594 = vsel %vm305, %v4393, %v4477
      %v4595 = vsel %vm305, %v4394, %v4479
      %v4596 = vsel %vm305, %v4395, %v4481
      %v4597 = vsel %vm305, %v4396, %v4483
      %v4598 = vsel %vm305, %v4397, %v4485
      %v4599 = vsel %vm305, %v4398, %v4487
      %v4600 = vsel %vm305, %v4408, %v4505
      %v4601 = vsel %vm305, %v4409, %v4507
      %v4602 = vsel %vm305, %v4410, %v4509
      %v4603 = vsel %vm305, %v4411, %v4511
      %v4604 = vsel %vm305, %v4412, %v4513
      %v4605 = vsel %vm305, %v4413, %v4515
      %v4606 = vsel %vm305, %v4414, %v4517
      %v4607 = vsel %vm305, %v4415, %v4519
      %v4608 = vsel %vm305, %v4424, %v4537
      %v4609 = vsel %vm305, %v4425, %v4539
      %v4610 = vsel %vm305, %v4426, %v4541
      %v4611 = vsel %vm305, %v4427, %v4543
      %v4612 = vsel %vm305, %v4428, %v4545
      %v4613 = vsel %vm305, %v4429, %v4547
      %v4614 = vsel %vm305, %v4430, %v4549
      %v4615 = vsel %vm305, %v4431, %v4551
      %v4616 = vsel %vm305, %v4440, %v4569
      %v4617 = vsel %vm305, %v4441, %v4571
      %v4618 = vsel %vm305, %v4442, %v4573
      %v4619 = vsel %vm305, %v4443, %v4575
      %v4620 = vsel %vm305, %v4444, %v4577
      %v4621 = vsel %vm305, %v4445, %v4579
      %v4622 = vsel %vm305, %v4446, %v4581
      %v4623 = vsel %vm305, %v4447, %v4583
      %v4624 = vld [vmem:[%s4399 + $0x2] sm:$0xff]
      %v4625 = vld [vmem:[%s4399 + $0x12] sm:$0xff]
      %v4626 = vld [vmem:[%s4399 + $0x22] sm:$0xff]
      %v4627 = vld [vmem:[%s4399 + $0x32] sm:$0xff]
      %v4628 = vld [vmem:[%s4399 + $0x42] sm:$0xff]
      %v4629 = vld [vmem:[%s4399 + $0x52] sm:$0xff]
      %v4630 = vld [vmem:[%s4399 + $0x62] sm:$0xff]
      %v4631 = vld [vmem:[%s4399 + $0x72] sm:$0xff]
      %v4632 = vld [vmem:[%s2977 + $0x2] sm:$0xff]
      %v4633 = vld [vmem:[%s2977 + $0x12] sm:$0xff]
      %v4634 = vld [vmem:[%s2977 + $0x22] sm:$0xff]
      %v4635 = vld [vmem:[%s2977 + $0x32] sm:$0xff]
      %v4636 = vld [vmem:[%s2977 + $0x42] sm:$0xff]
      %v4637 = vld [vmem:[%s2977 + $0x52] sm:$0xff]
      %v4638 = vld [vmem:[%s2977 + $0x62] sm:$0xff]
      %v4639 = vld [vmem:[%s2977 + $0x72] sm:$0xff]
      %v4640 = vld [vmem:[%s3913 + $0x2] sm:$0xff]
      %v4641 = vld [vmem:[%s3913 + $0x12] sm:$0xff]
      %v4642 = vld [vmem:[%s3913 + $0x22] sm:$0xff]
      %v4643 = vld [vmem:[%s3913 + $0x32] sm:$0xff]
      %v4644 = vld [vmem:[%s3913 + $0x42] sm:$0xff]
      %v4645 = vld [vmem:[%s3913 + $0x52] sm:$0xff]
      %v4646 = vld [vmem:[%s3913 + $0x62] sm:$0xff]
      %v4647 = vld [vmem:[%s3913 + $0x72] sm:$0xff]
      %4656 = vrot.lane.b32.xlu0 %v4408, 64
      %v4657 = vpop.permute.xlu0 %4656
      %4658 = vrot.lane.b32.xlu0 %v4409, 64
      %v4659 = vpop.permute.xlu0 %4658
      %4660 = vrot.lane.b32.xlu0 %v4410, 64
      %v4661 = vpop.permute.xlu0 %4660
      %4662 = vrot.lane.b32.xlu0 %v4411, 64
      %v4663 = vpop.permute.xlu0 %4662
      %4664 = vrot.lane.b32.xlu0 %v4412, 64
      %v4665 = vpop.permute.xlu0 %4664
      %4666 = vrot.lane.b32.xlu0 %v4413, 64
      %v4667 = vpop.permute.xlu0 %4666
      %4668 = vrot.lane.b32.xlu0 %v4414, 64
      %v4669 = vpop.permute.xlu0 %4668
      %4670 = vrot.lane.b32.xlu0 %v4415, 64
      %v4671 = vpop.permute.xlu0 %4670
      %4688 = vrot.lane.b32.xlu0 %v4424, 64
      %v4689 = vpop.permute.xlu0 %4688
      %4690 = vrot.lane.b32.xlu0 %v4425, 64
      %v4691 = vpop.permute.xlu0 %4690
      %4692 = vrot.lane.b32.xlu0 %v4426, 64
      %v4693 = vpop.permute.xlu0 %4692
      %4694 = vrot.lane.b32.xlu0 %v4427, 64
      %v4695 = vpop.permute.xlu0 %4694
      %4696 = vrot.lane.b32.xlu0 %v4428, 64
      %v4697 = vpop.permute.xlu0 %4696
      %4698 = vrot.lane.b32.xlu0 %v4429, 64
      %v4699 = vpop.permute.xlu0 %4698
      %4700 = vrot.lane.b32.xlu0 %v4430, 64
      %v4701 = vpop.permute.xlu0 %4700
      %4702 = vrot.lane.b32.xlu0 %v4431, 64
      %v4703 = vpop.permute.xlu0 %4702
      %4720 = vrot.lane.b32.xlu0 %v4632, 64
      %v4721 = vpop.permute.xlu0 %4720
      %4722 = vrot.lane.b32.xlu0 %v4633, 64
      %v4723 = vpop.permute.xlu0 %4722
      %4724 = vrot.lane.b32.xlu0 %v4634, 64
      %v4725 = vpop.permute.xlu0 %4724
      %4726 = vrot.lane.b32.xlu0 %v4635, 64
      %v4727 = vpop.permute.xlu0 %4726
      %4728 = vrot.lane.b32.xlu0 %v4636, 64
      %v4729 = vpop.permute.xlu0 %4728
      %4730 = vrot.lane.b32.xlu0 %v4637, 64
      %v4731 = vpop.permute.xlu0 %4730
      %4732 = vrot.lane.b32.xlu0 %v4638, 64
      %v4733 = vpop.permute.xlu0 %4732
      %4734 = vrot.lane.b32.xlu0 %v4639, 64
      %v4735 = vpop.permute.xlu0 %4734
      %4752 = vrot.lane.b32.xlu0 %v4456, 64
      %v4753 = vpop.permute.xlu0 %4752
      %4754 = vrot.lane.b32.xlu0 %v4457, 64
      %v4755 = vpop.permute.xlu0 %4754
      %4756 = vrot.lane.b32.xlu0 %v4458, 64
      %v4757 = vpop.permute.xlu0 %4756
      %4758 = vrot.lane.b32.xlu0 %v4459, 64
      %v4759 = vpop.permute.xlu0 %4758
      %4760 = vrot.lane.b32.xlu0 %v4460, 64
      %v4761 = vpop.permute.xlu0 %4760
      %4762 = vrot.lane.b32.xlu0 %v4461, 64
      %v4763 = vpop.permute.xlu0 %4762
      %4764 = vrot.lane.b32.xlu0 %v4462, 64
      %v4765 = vpop.permute.xlu0 %4764
      %4766 = vrot.lane.b32.xlu0 %v4463, 64
      %v4767 = vpop.permute.xlu0 %4766
      %v4776 = vsel %vm305, %v4400, %v4657
      %v4777 = vsel %vm305, %v4401, %v4659
      %v4778 = vsel %vm305, %v4402, %v4661
      %v4779 = vsel %vm305, %v4403, %v4663
      %v4780 = vsel %vm305, %v4404, %v4665
      %v4781 = vsel %vm305, %v4405, %v4667
      %v4782 = vsel %vm305, %v4406, %v4669
      %v4783 = vsel %vm305, %v4407, %v4671
      %v4784 = vsel %vm305, %v4624, %v4689
      %v4785 = vsel %vm305, %v4625, %v4691
      %v4786 = vsel %vm305, %v4626, %v4693
      %v4787 = vsel %vm305, %v4627, %v4695
      %v4788 = vsel %vm305, %v4628, %v4697
      %v4789 = vsel %vm305, %v4629, %v4699
      %v4790 = vsel %vm305, %v4630, %v4701
      %v4791 = vsel %vm305, %v4631, %v4703
      %v4792 = vsel %vm305, %v4432, %v4721
      %v4793 = vsel %vm305, %v4433, %v4723
      %v4794 = vsel %vm305, %v4434, %v4725
      %v4795 = vsel %vm305, %v4435, %v4727
      %v4796 = vsel %vm305, %v4436, %v4729
      %v4797 = vsel %vm305, %v4437, %v4731
      %v4798 = vsel %vm305, %v4438, %v4733
      %v4799 = vsel %vm305, %v4439, %v4735
      %v4800 = vsel %vm305, %v4448, %v4753
      %v4801 = vsel %vm305, %v4449, %v4755
      %v4802 = vsel %vm305, %v4450, %v4757
      %v4803 = vsel %vm305, %v4451, %v4759
      %v4804 = vsel %vm305, %v4452, %v4761
      %v4805 = vsel %vm305, %v4453, %v4763
      %v4806 = vsel %vm305, %v4454, %v4765
      %v4807 = vsel %vm305, %v4455, %v4767
      %s4808 = scalar_lea.vmem [#allocation3], 192
      %v4809 = vld [vmem:[%s4808] sm:$0xff]
      %v4810 = vld [vmem:[%s4808 + $0x10] sm:$0xff]
      %v4811 = vld [vmem:[%s4808 + $0x20] sm:$0xff]
      %v4812 = vld [vmem:[%s4808 + $0x30] sm:$0xff]
      %v4813 = vld [vmem:[%s4808 + $0x40] sm:$0xff]
      %v4814 = vld [vmem:[%s4808 + $0x50] sm:$0xff]
      %v4815 = vld [vmem:[%s4808 + $0x60] sm:$0xff]
      %v4816 = vld [vmem:[%s4808 + $0x70] sm:$0xff]
      %s4817 = scalar_lea.vmem [#allocation3], 32
      %v4818 = vld [vmem:[%s4817 + $0x1] sm:$0xff]
      %v4819 = vld [vmem:[%s4817 + $0x11] sm:$0xff]
      %v4820 = vld [vmem:[%s4817 + $0x21] sm:$0xff]
      %v4821 = vld [vmem:[%s4817 + $0x31] sm:$0xff]
      %v4822 = vld [vmem:[%s4817 + $0x41] sm:$0xff]
      %v4823 = vld [vmem:[%s4817 + $0x51] sm:$0xff]
      %v4824 = vld [vmem:[%s4817 + $0x61] sm:$0xff]
      %v4825 = vld [vmem:[%s4817 + $0x71] sm:$0xff]
      %v4826 = vld [vmem:[%s4808 + $0x1] sm:$0xff]
      %v4827 = vld [vmem:[%s4808 + $0x11] sm:$0xff]
      %v4828 = vld [vmem:[%s4808 + $0x21] sm:$0xff]
      %v4829 = vld [vmem:[%s4808 + $0x31] sm:$0xff]
      %v4830 = vld [vmem:[%s4808 + $0x41] sm:$0xff]
      %v4831 = vld [vmem:[%s4808 + $0x51] sm:$0xff]
      %v4832 = vld [vmem:[%s4808 + $0x61] sm:$0xff]
      %v4833 = vld [vmem:[%s4808 + $0x71] sm:$0xff]
      %4842 = vrot.lane.b32.xlu0 %v4440, 64
      %v4843 = vpop.permute.xlu0 %4842
      %4844 = vrot.lane.b32.xlu0 %v4441, 64
      %v4845 = vpop.permute.xlu0 %4844
      %4846 = vrot.lane.b32.xlu0 %v4442, 64
      %v4847 = vpop.permute.xlu0 %4846
      %4848 = vrot.lane.b32.xlu0 %v4443, 64
      %v4849 = vpop.permute.xlu0 %4848
      %4850 = vrot.lane.b32.xlu0 %v4444, 64
      %v4851 = vpop.permute.xlu0 %4850
      %4852 = vrot.lane.b32.xlu0 %v4445, 64
      %v4853 = vpop.permute.xlu0 %4852
      %4854 = vrot.lane.b32.xlu0 %v4446, 64
      %v4855 = vpop.permute.xlu0 %4854
      %4856 = vrot.lane.b32.xlu0 %v4447, 64
      %v4857 = vpop.permute.xlu0 %4856
      %4874 = vrot.lane.b32.xlu0 %v4818, 64
      %v4875 = vpop.permute.xlu0 %4874
      %4876 = vrot.lane.b32.xlu0 %v4819, 64
      %v4877 = vpop.permute.xlu0 %4876
      %4878 = vrot.lane.b32.xlu0 %v4820, 64
      %v4879 = vpop.permute.xlu0 %4878
      %4880 = vrot.lane.b32.xlu0 %v4821, 64
      %v4881 = vpop.permute.xlu0 %4880
      %4882 = vrot.lane.b32.xlu0 %v4822, 64
      %v4883 = vpop.permute.xlu0 %4882
      %4884 = vrot.lane.b32.xlu0 %v4823, 64
      %v4885 = vpop.permute.xlu0 %4884
      %4886 = vrot.lane.b32.xlu0 %v4824, 64
      %v4887 = vpop.permute.xlu0 %4886
      %4888 = vrot.lane.b32.xlu0 %v4825, 64
      %v4889 = vpop.permute.xlu0 %4888
      %v4898 = vsel %vm305, %v4416, %v4689
      %v4899 = vsel %vm305, %v4417, %v4691
      %v4900 = vsel %vm305, %v4418, %v4693
      %v4901 = vsel %vm305, %v4419, %v4695
      %v4902 = vsel %vm305, %v4420, %v4697
      %v4903 = vsel %vm305, %v4421, %v4699
      %v4904 = vsel %vm305, %v4422, %v4701
      %v4905 = vsel %vm305, %v4423, %v4703
      %v4906 = vsel %vm305, %v4432, %v4843
      %v4907 = vsel %vm305, %v4433, %v4845
      %v4908 = vsel %vm305, %v4434, %v4847
      %v4909 = vsel %vm305, %v4435, %v4849
      %v4910 = vsel %vm305, %v4436, %v4851
      %v4911 = vsel %vm305, %v4437, %v4853
      %v4912 = vsel %vm305, %v4438, %v4855
      %v4913 = vsel %vm305, %v4439, %v4857
      %v4914 = vsel %vm305, %v4809, %v4875
      %v4915 = vsel %vm305, %v4810, %v4877
      %v4916 = vsel %vm305, %v4811, %v4879
      %v4917 = vsel %vm305, %v4812, %v4881
      %v4918 = vsel %vm305, %v4813, %v4883
      %v4919 = vsel %vm305, %v4814, %v4885
      %v4920 = vsel %vm305, %v4815, %v4887
      %v4921 = vsel %vm305, %v4816, %v4889
      %v4922 = vld [vmem:[%s4817 + $0x2] sm:$0xff]
      %v4923 = vld [vmem:[%s4817 + $0x12] sm:$0xff]
      %v4924 = vld [vmem:[%s4817 + $0x22] sm:$0xff]
      %v4925 = vld [vmem:[%s4817 + $0x32] sm:$0xff]
      %v4926 = vld [vmem:[%s4817 + $0x42] sm:$0xff]
      %v4927 = vld [vmem:[%s4817 + $0x52] sm:$0xff]
      %v4928 = vld [vmem:[%s4817 + $0x62] sm:$0xff]
      %v4929 = vld [vmem:[%s4817 + $0x72] sm:$0xff]
      %4938 = vrot.lane.b32.xlu0 %v4640, 64
      %v4939 = vpop.permute.xlu0 %4938
      %4940 = vrot.lane.b32.xlu0 %v4641, 64
      %v4941 = vpop.permute.xlu0 %4940
      %4942 = vrot.lane.b32.xlu0 %v4642, 64
      %v4943 = vpop.permute.xlu0 %4942
      %4944 = vrot.lane.b32.xlu0 %v4643, 64
      %v4945 = vpop.permute.xlu0 %4944
      %4946 = vrot.lane.b32.xlu0 %v4644, 64
      %v4947 = vpop.permute.xlu0 %4946
      %4948 = vrot.lane.b32.xlu0 %v4645, 64
      %v4949 = vpop.permute.xlu0 %4948
      %4950 = vrot.lane.b32.xlu0 %v4646, 64
      %v4951 = vpop.permute.xlu0 %4950
      %4952 = vrot.lane.b32.xlu0 %v4647, 64
      %v4953 = vpop.permute.xlu0 %4952
      %4970 = vrot.lane.b32.xlu0 %v4826, 64
      %v4971 = vpop.permute.xlu0 %4970
      %4972 = vrot.lane.b32.xlu0 %v4827, 64
      %v4973 = vpop.permute.xlu0 %4972
      %4974 = vrot.lane.b32.xlu0 %v4828, 64
      %v4975 = vpop.permute.xlu0 %4974
      %4976 = vrot.lane.b32.xlu0 %v4829, 64
      %v4977 = vpop.permute.xlu0 %4976
      %4978 = vrot.lane.b32.xlu0 %v4830, 64
      %v4979 = vpop.permute.xlu0 %4978
      %4980 = vrot.lane.b32.xlu0 %v4831, 64
      %v4981 = vpop.permute.xlu0 %4980
      %4982 = vrot.lane.b32.xlu0 %v4832, 64
      %v4983 = vpop.permute.xlu0 %4982
      %4984 = vrot.lane.b32.xlu0 %v4833, 64
      %v4985 = vpop.permute.xlu0 %4984
      %v4994 = vsel %vm305, %v4632, %v4569
      %v4995 = vsel %vm305, %v4633, %v4571
      %v4996 = vsel %vm305, %v4634, %v4573
      %v4997 = vsel %vm305, %v4635, %v4575
      %v4998 = vsel %vm305, %v4636, %v4577
      %v4999 = vsel %vm305, %v4637, %v4579
      %v5000 = vsel %vm305, %v4638, %v4581
      %v5001 = vsel %vm305, %v4639, %v4583
      %v5002 = vsel %vm305, %v4456, %v4939
      %v5003 = vsel %vm305, %v4457, %v4941
      %v5004 = vsel %vm305, %v4458, %v4943
      %v5005 = vsel %vm305, %v4459, %v4945
      %v5006 = vsel %vm305, %v4460, %v4947
      %v5007 = vsel %vm305, %v4461, %v4949
      %v5008 = vsel %vm305, %v4462, %v4951
      %v5009 = vsel %vm305, %v4463, %v4953
      %v5010 = vsel %vm305, %v4818, %v4971
      %v5011 = vsel %vm305, %v4819, %v4973
      %v5012 = vsel %vm305, %v4820, %v4975
      %v5013 = vsel %vm305, %v4821, %v4977
      %v5014 = vsel %vm305, %v4822, %v4979
      %v5015 = vsel %vm305, %v4823, %v4981
      %v5016 = vsel %vm305, %v4824, %v4983
      %v5017 = vsel %vm305, %v4825, %v4985
      %v5018 = vpack.c.bf16 %v4593, %v4592
      %v5019 = vpack.c.bf16 %v4601, %v4600
      %v5020 = vpack.c.bf16 %v4609, %v4608
      %v5021 = vpack.c.bf16 %v4617, %v4616
      %v5022 = vpack.c.bf16 %v4457, %v4456
      %v5023 = vpack.c.bf16 %v4595, %v4594
      %v5024 = vpack.c.bf16 %v4603, %v4602
      %v5025 = vpack.c.bf16 %v4611, %v4610
      %v5026 = vpack.c.bf16 %v4619, %v4618
      %v5027 = vpack.c.bf16 %v4459, %v4458
      %v5028 = vpack.c.bf16 %v4597, %v4596
      %v5029 = vpack.c.bf16 %v4605, %v4604
      %v5030 = vpack.c.bf16 %v4613, %v4612
      %v5031 = vpack.c.bf16 %v4621, %v4620
      %v5032 = vpack.c.bf16 %v4461, %v4460
      %v5033 = vpack.c.bf16 %v4599, %v4598
      %v5034 = vpack.c.bf16 %v4607, %v4606
      %v5035 = vpack.c.bf16 %v4615, %v4614
      %v5036 = vpack.c.bf16 %v4623, %v4622
      %v5037 = vpack.c.bf16 %v4463, %v4462
      %v5038 = vpack.c.bf16 %v4777, %v4776
      %v5039 = vpack.c.bf16 %v4785, %v4784
      %v5040 = vpack.c.bf16 %v4793, %v4792
      %v5041 = vpack.c.bf16 %v4801, %v4800
      %v5042 = vpack.c.bf16 %v4641, %v4640
      %v5043 = vpack.c.bf16 %v4779, %v4778
      %v5044 = vpack.c.bf16 %v4787, %v4786
      %v5045 = vpack.c.bf16 %v4795, %v4794
      %v5046 = vpack.c.bf16 %v4803, %v4802
      %v5047 = vpack.c.bf16 %v4643, %v4642
      %v5048 = vpack.c.bf16 %v4781, %v4780
      %v5049 = vpack.c.bf16 %v4789, %v4788
      %v5050 = vpack.c.bf16 %v4797, %v4796
      %v5051 = vpack.c.bf16 %v4805, %v4804
      %v5052 = vpack.c.bf16 %v4645, %v4644
      %v5053 = vpack.c.bf16 %v4783, %v4782
      %v5054 = vpack.c.bf16 %v4791, %v4790
      %v5055 = vpack.c.bf16 %v4799, %v4798
      %v5056 = vpack.c.bf16 %v4807, %v4806
      %v5057 = vpack.c.bf16 %v4647, %v4646
      %v5058 = vpack.c.bf16 %v4899, %v4898
      %v5059 = vpack.c.bf16 %v4907, %v4906
      %v5060 = vpack.c.bf16 %v4915, %v4914
      %v5061 = vpack.c.bf16 %v4827, %v4826
      %v5062 = vpack.c.bf16 %v4901, %v4900
      %v5063 = vpack.c.bf16 %v4909, %v4908
      %v5064 = vpack.c.bf16 %v4917, %v4916
      %v5065 = vpack.c.bf16 %v4829, %v4828
      %v5066 = vpack.c.bf16 %v4903, %v4902
      %v5067 = vpack.c.bf16 %v4911, %v4910
      %v5068 = vpack.c.bf16 %v4919, %v4918
      %v5069 = vpack.c.bf16 %v4831, %v4830
      %v5070 = vpack.c.bf16 %v4905, %v4904
      %v5071 = vpack.c.bf16 %v4913, %v4912
      %v5072 = vpack.c.bf16 %v4921, %v4920
      %v5073 = vpack.c.bf16 %v4833, %v4832
      %v5074 = vpack.c.bf16 %v4995, %v4994
      %v5075 = vpack.c.bf16 %v5003, %v5002
      %v5076 = vpack.c.bf16 %v5011, %v5010
      %v5077 = vpack.c.bf16 %v4923, %v4922
      %v5078 = vpack.c.bf16 %v4997, %v4996
      %v5079 = vpack.c.bf16 %v5005, %v5004
      %v5080 = vpack.c.bf16 %v5013, %v5012
      %v5081 = vpack.c.bf16 %v4925, %v4924
      %v5082 = vpack.c.bf16 %v4999, %v4998
      %v5083 = vpack.c.bf16 %v5007, %v5006
      %v5084 = vpack.c.bf16 %v5015, %v5014
      %v5085 = vpack.c.bf16 %v4927, %v4926
      %v5086 = vpack.c.bf16 %v5001, %v5000
      %v5087 = vpack.c.bf16 %v5009, %v5008
      %v5088 = vpack.c.bf16 %v5017, %v5016
      %v5089 = vpack.c.bf16 %v4929, %v4928
      %v5090 = vld [vmem:[%s6] sm:$0xf]
      %v5091 = vld [vmem:[%s6 + $0x4] sm:$0xf]
      %v5092 = vld [vmem:[%s6 + $0x8] sm:$0xf]
      %v5093 = vld [vmem:[%s6 + $0xc] sm:$0xf]
      %v5094 = vld [vmem:[%s6 + $0x10] sm:$0xf]
      %v5095 = vld [vmem:[%s6 + $0x14] sm:$0xf]
      %v5096 = vld [vmem:[%s6 + $0x18] sm:$0xf]
      %v5097 = vld [vmem:[%s6 + $0x1c] sm:$0xf]
      %v5098 = vld [vmem:[%s6 + $0x20] sm:$0xf]
      %v5099 = vld [vmem:[%s6 + $0x24] sm:$0xf]
      %v5100 = vld [vmem:[%s6 + $0x28] sm:$0xf]
      %v5101 = vld [vmem:[%s6 + $0x2c] sm:$0xf]
      %v5102 = vld [vmem:[%s6 + $0x30] sm:$0xf]
      %v5103 = vld [vmem:[%s6 + $0x34] sm:$0xf]
      %v5104 = vld [vmem:[%s6 + $0x38] sm:$0xf]
      %v5105 = vld [vmem:[%s6 + $0x3c] sm:$0xf]
      %v5106 = vld [vmem:[%s6 + $0x40] sm:$0xf]
      %v5107 = vld [vmem:[%s6 + $0x44] sm:$0xf]
      %v5108 = vld [vmem:[%s6 + $0x48] sm:$0xf]
      %v5109 = vld [vmem:[%s6 + $0x4c] sm:$0xf]
      %v5110 = vld [vmem:[%s6 + $0x50] sm:$0xf]
      %v5111 = vld [vmem:[%s6 + $0x54] sm:$0xf]
      %v5112 = vld [vmem:[%s6 + $0x58] sm:$0xf]
      %v5113 = vld [vmem:[%s6 + $0x5c] sm:$0xf]
      %v5114 = vld [vmem:[%s6 + $0x60] sm:$0xf]
      %v5115 = vld [vmem:[%s6 + $0x64] sm:$0xf]
      %v5116 = vld [vmem:[%s6 + $0x68] sm:$0xf]
      %v5117 = vld [vmem:[%s6 + $0x6c] sm:$0xf]
      %v5118 = vld [vmem:[%s6 + $0x70] sm:$0xf]
      %v5119 = vld [vmem:[%s6 + $0x74] sm:$0xf]
      %v5120 = vld [vmem:[%s6 + $0x78] sm:$0xf]
      %v5121 = vld [vmem:[%s6 + $0x7c] sm:$0xf]
      %v5122 = vld [vmem:[%s6 + $0x80] sm:$0xf]
      %v5123 = vld [vmem:[%s6 + $0x84] sm:$0xf]
      %v5124 = vld [vmem:[%s6 + $0x88] sm:$0xf]
      %v5125 = vld [vmem:[%s6 + $0x8c] sm:$0xf]
      %v5126 = vld [vmem:[%s6 + $0x90] sm:$0xf]
      %v5127 = vld [vmem:[%s6 + $0x94] sm:$0xf]
      %v5128 = vld [vmem:[%s6 + $0x98] sm:$0xf]
      %v5129 = vld [vmem:[%s6 + $0x9c] sm:$0xf]
      %v5130 = vld [vmem:[%s6 + $0xa0] sm:$0xf]
      %v5131 = vld [vmem:[%s6 + $0xa4] sm:$0xf]
      %v5132 = vld [vmem:[%s6 + $0xa8] sm:$0xf]
      %v5133 = vld [vmem:[%s6 + $0xac] sm:$0xf]
      %v5134 = vld [vmem:[%s6 + $0xb0] sm:$0xf]
      %v5135 = vld [vmem:[%s6 + $0xb4] sm:$0xf]
      %v5136 = vld [vmem:[%s6 + $0xb8] sm:$0xf]
      %v5137 = vld [vmem:[%s6 + $0xbc] sm:$0xf]
      %v5138 = vld [vmem:[%s6 + $0xc0] sm:$0xf]
      %v5139 = vld [vmem:[%s6 + $0xc4] sm:$0xf]
      %v5140 = vld [vmem:[%s6 + $0xc8] sm:$0xf]
      %v5141 = vld [vmem:[%s6 + $0xcc] sm:$0xf]
      %v5142 = vld [vmem:[%s6 + $0xd0] sm:$0xf]
      %v5143 = vld [vmem:[%s6 + $0xd4] sm:$0xf]
      %v5144 = vld [vmem:[%s6 + $0xd8] sm:$0xf]
      %v5145 = vld [vmem:[%s6 + $0xdc] sm:$0xf]
      %v5146 = vld [vmem:[%s6 + $0xe0] sm:$0xf]
      %v5147 = vld [vmem:[%s6 + $0xe4] sm:$0xf]
      %v5148 = vld [vmem:[%s6 + $0xe8] sm:$0xf]
      %v5149 = vld [vmem:[%s6 + $0xec] sm:$0xf]
      %v5150 = vld [vmem:[%s6 + $0xf0] sm:$0xf]
      %v5151 = vld [vmem:[%s6 + $0xf4] sm:$0xf]
      %v5152 = vld [vmem:[%s6 + $0xf8] sm:$0xf]
      %v5153 = vld [vmem:[%s6 + $0xfc] sm:$0xf]
      %v5154 = vld [vmem:[%s6 + $0x100] sm:$0xf]
      %v5155 = vld [vmem:[%s6 + $0x104] sm:$0xf]
      %v5156 = vld [vmem:[%s6 + $0x108] sm:$0xf]
      %v5157 = vld [vmem:[%s6 + $0x10c] sm:$0xf]
      %v5158 = vld [vmem:[%s6 + $0x110] sm:$0xf]
      %v5159 = vld [vmem:[%s6 + $0x114] sm:$0xf]
      %v5160 = vld [vmem:[%s6 + $0x118] sm:$0xf]
      %v5161 = vld [vmem:[%s6 + $0x11c] sm:$0xf]
      %v5234 = vunpack.c.l.b16 %v5090
      %v5235 = vunpack.c.l.b16 %v5091
      %v5236 = vunpack.c.l.b16 %v5092
      %v5237 = vunpack.c.l.b16 %v5093
      %v5238 = vunpack.c.l.b16 %v5094
      %v5239 = vunpack.c.l.b16 %v5095
      %v5240 = vunpack.c.l.b16 %v5096
      %v5241 = vunpack.c.l.b16 %v5097
      %v5242 = vunpack.c.l.b16 %v5098
      %v5243 = vunpack.c.l.b16 %v5099
      %v5244 = vunpack.c.l.b16 %v5100
      %v5245 = vunpack.c.l.b16 %v5101
      %v5246 = vunpack.c.l.b16 %v5102
      %v5247 = vunpack.c.l.b16 %v5103
      %v5248 = vunpack.c.l.b16 %v5104
      %v5249 = vunpack.c.l.b16 %v5105
      %v5250 = vunpack.c.l.b16 %v5106
      %v5251 = vunpack.c.l.b16 %v5107
      %v5252 = vunpack.c.l.b16 %v5108
      %v5253 = vunpack.c.l.b16 %v5109
      %v5254 = vunpack.c.l.b16 %v5110
      %v5255 = vunpack.c.l.b16 %v5111
      %v5256 = vunpack.c.l.b16 %v5112
      %v5257 = vunpack.c.l.b16 %v5113
      %v5258 = vunpack.c.l.b16 %v5114
      %v5259 = vunpack.c.l.b16 %v5115
      %v5260 = vunpack.c.l.b16 %v5116
      %v5261 = vunpack.c.l.b16 %v5117
      %v5262 = vunpack.c.l.b16 %v5118
      %v5263 = vunpack.c.l.b16 %v5119
      %v5264 = vunpack.c.l.b16 %v5120
      %v5265 = vunpack.c.l.b16 %v5121
      %v5266 = vunpack.c.l.b16 %v5122
      %v5267 = vunpack.c.l.b16 %v5123
      %v5268 = vunpack.c.l.b16 %v5124
      %v5269 = vunpack.c.l.b16 %v5125
      %v5270 = vunpack.c.l.b16 %v5126
      %v5271 = vunpack.c.l.b16 %v5127
      %v5272 = vunpack.c.l.b16 %v5128
      %v5273 = vunpack.c.l.b16 %v5129
      %v5274 = vunpack.c.l.b16 %v5130
      %v5275 = vunpack.c.l.b16 %v5131
      %v5276 = vunpack.c.l.b16 %v5132
      %v5277 = vunpack.c.l.b16 %v5133
      %v5278 = vunpack.c.l.b16 %v5134
      %v5279 = vunpack.c.l.b16 %v5135
      %v5280 = vunpack.c.l.b16 %v5136
      %v5281 = vunpack.c.l.b16 %v5137
      %v5282 = vunpack.c.l.b16 %v5138
      %v5283 = vunpack.c.l.b16 %v5139
      %v5284 = vunpack.c.l.b16 %v5140
      %v5285 = vunpack.c.l.b16 %v5141
      %v5286 = vunpack.c.l.b16 %v5142
      %v5287 = vunpack.c.l.b16 %v5143
      %v5288 = vunpack.c.l.b16 %v5144
      %v5289 = vunpack.c.l.b16 %v5145
      %v5290 = vunpack.c.l.b16 %v5146
      %v5291 = vunpack.c.l.b16 %v5147
      %v5292 = vunpack.c.l.b16 %v5148
      %v5293 = vunpack.c.l.b16 %v5149
      %v5294 = vunpack.c.l.b16 %v5150
      %v5295 = vunpack.c.l.b16 %v5151
      %v5296 = vunpack.c.l.b16 %v5152
      %v5297 = vunpack.c.l.b16 %v5153
      %v5298 = vunpack.c.l.b16 %v5154
      %v5299 = vunpack.c.l.b16 %v5155
      %v5300 = vunpack.c.l.b16 %v5156
      %v5301 = vunpack.c.l.b16 %v5157
      %v5302 = vunpack.c.l.b16 %v5158
      %v5303 = vunpack.c.l.b16 %v5159
      %v5304 = vunpack.c.l.b16 %v5160
      %v5305 = vunpack.c.l.b16 %v5161
      %v5306 = vpack.c.b16 %v5235, %v5234
      %v5307 = vpack.c.b16 %v5237, %v5236
      %v5308 = vpack.c.b16 %v5239, %v5238
      %v5309 = vpack.c.b16 %v5241, %v5240
      %v5310 = vpack.c.b16 %v5243, %v5242
      %v5311 = vpack.c.b16 %v5245, %v5244
      %v5312 = vpack.c.b16 %v5247, %v5246
      %v5313 = vpack.c.b16 %v5249, %v5248
      %v5314 = vpack.c.b16 %v5251, %v5250
      %v5315 = vpack.c.b16 %v5253, %v5252
      %v5316 = vpack.c.b16 %v5255, %v5254
      %v5317 = vpack.c.b16 %v5257, %v5256
      %v5318 = vpack.c.b16 %v5259, %v5258
      %v5319 = vpack.c.b16 %v5261, %v5260
      %v5320 = vpack.c.b16 %v5263, %v5262
      %v5321 = vpack.c.b16 %v5265, %v5264
      %v5322 = vpack.c.b16 %v5267, %v5266
      %v5323 = vpack.c.b16 %v5269, %v5268
      %v5324 = vpack.c.b16 %v5271, %v5270
      %v5325 = vpack.c.b16 %v5273, %v5272
      %v5326 = vpack.c.b16 %v5275, %v5274
      %v5327 = vpack.c.b16 %v5277, %v5276
      %v5328 = vpack.c.b16 %v5279, %v5278
      %v5329 = vpack.c.b16 %v5281, %v5280
      %v5330 = vpack.c.b16 %v5283, %v5282
      %v5331 = vpack.c.b16 %v5285, %v5284
      %v5332 = vpack.c.b16 %v5287, %v5286
      %v5333 = vpack.c.b16 %v5289, %v5288
      %v5334 = vpack.c.b16 %v5291, %v5290
      %v5335 = vpack.c.b16 %v5293, %v5292
      %v5336 = vpack.c.b16 %v5295, %v5294
      %v5337 = vpack.c.b16 %v5297, %v5296
      %v5338 = vpack.c.b16 %v5299, %v5298
      %v5339 = vpack.c.b16 %v5301, %v5300
      %v5340 = vpack.c.b16 %v5303, %v5302
      %v5341 = vpack.c.b16 %v5305, %v5304
      %v5379 = vsel %vm305, %v5022, 0
      %v5382 = vsel %vm305, %v5027, 0
      %v5385 = vsel %vm305, %v5032, 0
      %v5388 = vsel %vm305, %v5037, 0
      %v5391 = vsel %vm305, %v5042, 0
      %v5394 = vsel %vm305, %v5047, 0
      %v5397 = vsel %vm305, %v5052, 0
      %v5400 = vsel %vm305, %v5057, 0
      %v5403 = vsel %vm305, %v5061, 0
      %v5406 = vsel %vm305, %v5065, 0
      %v5409 = vsel %vm305, %v5069, 0
      %v5412 = vsel %vm305, %v5073, 0
      %v5415 = vsel %vm305, %v5077, 0
      %v5418 = vsel %vm305, %v5081, 0
      %v5421 = vsel %vm305, %v5085, 0
      %v5424 = vsel %vm305, %v5089, 0
      %5426 = vmatprep.subr.bf16.mxu0 0
      %5427 = vmatpush1.bf16.msra.mxu0 %v5306
      %5428 = vmatprep.subr.bf16.mxu0 0
      %5429 = vmatpush1.bf16.msra.mxu0 %v5307
      %5430 = vmatprep.subr.bf16.mxu0 0
      %5431 = vmatpush1.bf16.msra.mxu0 %v5308
      %5432 = vmatprep.subr.bf16.mxu0 0
      %5433 = vmatpush1.bf16.msra.mxu0 %v5309
      %5434 = vmatprep.subr.bf16.mxu0 0
      %5435 = vmatpush1.bf16.msra.mxu0 %v5310
      %5436 = vmatprep.subr.bf16.mxu0 0
      %5437 = vmatpush1.bf16.msra.mxu0 %v5311
      %5438 = vmatprep.subr.bf16.mxu0 0
      %5439 = vmatpush1.bf16.msra.mxu0 %v5312
      %5440 = vmatprep.subr.bf16.mxu0 0
      %5441 = vmatpush1.bf16.msra.mxu0 %v5313
      %5442 = vmatprep.subr.bf16.mxu0 0
      %5443 = vmatpush1.bf16.msra.mxu0 %v5314
      %5444 = vmatprep.subr.bf16.mxu0 0
      %5445 = vmatpush1.bf16.msra.mxu0 %v5315
      %5446 = vmatprep.subr.bf16.mxu0 0
      %5447 = vmatpush1.bf16.msra.mxu0 %v5316
      %5448 = vmatprep.subr.bf16.mxu0 0
      %5449 = vmatpush1.bf16.msra.mxu0 %v5317
      %5450 = vmatprep.subr.bf16.mxu0 0
      %5451 = vmatpush1.bf16.msra.mxu0 %v5318
      %5452 = vmatprep.subr.bf16.mxu0 0
      %5453 = vmatpush1.bf16.msra.mxu0 %v5319
      %5454 = vmatprep.subr.bf16.mxu0 0
      %5455 = vmatpush1.bf16.msra.mxu0 %v5320
      %5456 = vmatprep.subr.bf16.mxu0 0
      %5457 = vmatpush1.bf16.msra.mxu0 %v5321
      %5458 = vmatprep.mubr.bf16.mxu0 %v5019
      %5459 = vmatmul.mubr.bf16.gmra.mrb[0].mxu0 %v5018
      %v5460 = vpop.f32.mrb[0].mxu0
      %v5461 = vadd.f32 0.0, %v5460
      %v5462 = vpop.f32.mrb[0].mxu0
      %v5463 = vpop.f32.mrb[0].mxu0
      %v5464 = vadd.f32 0.0, %v5463
      %v5465 = vpop.f32.mrb[0].mxu0
      %5466 = vmatprep.mubr.bf16.mxu0 %v5024
      %5467 = vmatmul.mubr.bf16.gmra.mrb[0].mxu0 %v5023
      %v5468 = vpop.f32.mrb[0].mxu0
      %v5469 = vadd.f32 0.0, %v5468
      %v5470 = vpop.f32.mrb[0].mxu0
      %v5471 = vpop.f32.mrb[0].mxu0
      %v5472 = vadd.f32 0.0, %v5471
      %v5473 = vpop.f32.mrb[0].mxu0
      %5474 = vmatprep.mubr.bf16.mxu0 %v5029
      %5475 = vmatmul.mubr.bf16.gmra.mrb[0].mxu0 %v5028
      %v5476 = vpop.f32.mrb[0].mxu0
      %v5477 = vadd.f32 0.0, %v5476
      %v5478 = vpop.f32.mrb[0].mxu0
      %v5479 = vpop.f32.mrb[0].mxu0
      %v5480 = vadd.f32 0.0, %v5479
      %v5481 = vpop.f32.mrb[0].mxu0
      %5482 = vmatprep.mubr.bf16.mxu0 %v5034
      %5483 = vmatmul.mubr.bf16.gmra.mrb[0].mxu0 %v5033
      %v5484 = vpop.f32.mrb[0].mxu0
      %v5485 = vadd.f32 0.0, %v5484
      %v5486 = vpop.f32.mrb[0].mxu0
      %v5487 = vpop.f32.mrb[0].mxu0
      %v5488 = vadd.f32 0.0, %v5487
      %v5489 = vpop.f32.mrb[0].mxu0
      %5490 = vmatprep.mubr.bf16.mxu0 %v5039
      %5491 = vmatmul.mubr.bf16.gmra.mrb[0].mxu0 %v5038
      %v5492 = vpop.f32.mrb[0].mxu0
      %v5493 = vadd.f32 0.0, %v5492
      %v5494 = vpop.f32.mrb[0].mxu0
      %v5495 = vpop.f32.mrb[0].mxu0
      %v5496 = vadd.f32 0.0, %v5495
      %v5497 = vpop.f32.mrb[0].mxu0
      %5498 = vmatprep.mubr.bf16.mxu0 %v5044
      %5499 = vmatmul.mubr.bf16.gmra.mrb[0].mxu0 %v5043
      %v5500 = vpop.f32.mrb[0].mxu0
      %v5501 = vadd.f32 0.0, %v5500
      %v5502 = vpop.f32.mrb[0].mxu0
      %v5503 = vpop.f32.mrb[0].mxu0
      %v5504 = vadd.f32 0.0, %v5503
      %v5505 = vpop.f32.mrb[0].mxu0
      %5506 = vmatprep.mubr.bf16.mxu0 %v5049
      %5507 = vmatmul.mubr.bf16.gmra.mrb[0].mxu0 %v5048
      %v5508 = vpop.f32.mrb[0].mxu0
      %v5509 = vadd.f32 0.0, %v5508
      %v5510 = vpop.f32.mrb[0].mxu0
      %v5511 = vpop.f32.mrb[0].mxu0
      %v5512 = vadd.f32 0.0, %v5511
      %v5513 = vpop.f32.mrb[0].mxu0
      %5514 = vmatprep.mubr.bf16.mxu0 %v5054
      %5515 = vmatmul.mubr.bf16.gmra.mrb[0].mxu0 %v5053
      %v5516 = vpop.f32.mrb[0].mxu0
      %v5517 = vadd.f32 0.0, %v5516
      %v5518 = vpop.f32.mrb[0].mxu0
      %v5519 = vpop.f32.mrb[0].mxu0
      %v5520 = vadd.f32 0.0, %v5519
      %v5521 = vpop.f32.mrb[0].mxu0
      %5522 = vmatprep.mubr.bf16.mxu0 %v5059
      %5523 = vmatmul.mubr.bf16.gmra.mrb[0].mxu0 %v5058
      %v5524 = vpop.f32.mrb[0].mxu0
      %v5525 = vadd.f32 0.0, %v5524
      %v5526 = vpop.f32.mrb[0].mxu0
      %v5527 = vpop.f32.mrb[0].mxu0
      %v5528 = vadd.f32 0.0, %v5527
      %v5529 = vpop.f32.mrb[0].mxu0
      %5530 = vmatprep.mubr.bf16.mxu0 %v5063
      %5531 = vmatmul.mubr.bf16.gmra.mrb[0].mxu0 %v5062
      %v5532 = vpop.f32.mrb[0].mxu0
      %v5533 = vadd.f32 0.0, %v5532
      %v5534 = vpop.f32.mrb[0].mxu0
      %v5535 = vpop.f32.mrb[0].mxu0
      %v5536 = vadd.f32 0.0, %v5535
      %v5537 = vpop.f32.mrb[0].mxu0
      %5538 = vmatprep.mubr.bf16.mxu0 %v5067
      %5539 = vmatmul.mubr.bf16.gmra.mrb[0].mxu0 %v5066
      %v5540 = vpop.f32.mrb[0].mxu0
      %v5541 = vadd.f32 0.0, %v5540
      %v5542 = vpop.f32.mrb[0].mxu0
      %v5543 = vpop.f32.mrb[0].mxu0
      %v5544 = vadd.f32 0.0, %v5543
      %v5545 = vpop.f32.mrb[0].mxu0
      %5546 = vmatprep.mubr.bf16.mxu0 %v5071
      %5547 = vmatmul.mubr.bf16.gmra.mrb[0].mxu0 %v5070
      %v5548 = vpop.f32.mrb[0].mxu0
      %v5549 = vadd.f32 0.0, %v5548
      %v5550 = vpop.f32.mrb[0].mxu0
      %v5551 = vpop.f32.mrb[0].mxu0
      %v5552 = vadd.f32 0.0, %v5551
      %v5553 = vpop.f32.mrb[0].mxu0
      %5554 = vmatprep.mubr.bf16.mxu0 %v5074
      %5555 = vmatmul.mubr.bf16.gmra.mrb[0].mxu0 %v5020
      %v5556 = vpop.f32.mrb[0].mxu0
      %v5557 = vadd.f32 0.0, %v5556
      %v5558 = vpop.f32.mrb[0].mxu0
      %v5559 = vpop.f32.mrb[0].mxu0
      %v5560 = vadd.f32 0.0, %v5559
      %v5561 = vpop.f32.mrb[0].mxu0
      %5562 = vmatprep.mubr.bf16.mxu0 %v5078
      %5563 = vmatmul.mubr.bf16.gmra.mrb[0].mxu0 %v5025
      %v5564 = vpop.f32.mrb[0].mxu0
      %v5565 = vadd.f32 0.0, %v5564
      %v5566 = vpop.f32.mrb[0].mxu0
      %v5567 = vpop.f32.mrb[0].mxu0
      %v5568 = vadd.f32 0.0, %v5567
      %v5569 = vpop.f32.mrb[0].mxu0
      %5570 = vmatprep.mubr.bf16.mxu0 %v5082
      %5571 = vmatmul.mubr.bf16.gmra.mrb[0].mxu0 %v5030
      %v5572 = vpop.f32.mrb[0].mxu0
      %v5573 = vadd.f32 0.0, %v5572
      %v5574 = vpop.f32.mrb[0].mxu0
      %v5575 = vpop.f32.mrb[0].mxu0
      %v5576 = vadd.f32 0.0, %v5575
      %v5577 = vpop.f32.mrb[0].mxu0
      %5578 = vmatprep.mubr.bf16.mxu0 %v5086
      %5579 = vmatmul.mubr.bf16.gmra.mrb[0].mxu0 %v5035
      %v5580 = vpop.f32.mrb[0].mxu0
      %v5581 = vadd.f32 0.0, %v5580
      %v5582 = vpop.f32.mrb[0].mxu0
      %v5583 = vpop.f32.mrb[0].mxu0
      %v5584 = vadd.f32 0.0, %v5583
      %v5585 = vpop.f32.mrb[0].mxu0
      %5586 = vdwg.mxu0
      %5587 = vmatprep.subr.bf16.mxu0 0
      %5588 = vmatpush1.bf16.msra.mxu0 %v5322
      %5589 = vmatprep.subr.bf16.mxu0 0
      %5590 = vmatpush1.bf16.msra.mxu0 %v5323
      %5591 = vmatprep.subr.bf16.mxu0 0
      %5592 = vmatpush1.bf16.msra.mxu0 %v5324
      %5593 = vmatprep.subr.bf16.mxu0 0
      %5594 = vmatpush1.bf16.msra.mxu0 %v5325
      %5595 = vmatprep.subr.bf16.mxu0 0
      %5596 = vmatpush1.bf16.msra.mxu0 %v5326
      %5597 = vmatprep.subr.bf16.mxu0 0
      %5598 = vmatpush1.bf16.msra.mxu0 %v5327
      %5599 = vmatprep.subr.bf16.mxu0 0
      %5600 = vmatpush1.bf16.msra.mxu0 %v5328
      %5601 = vmatprep.subr.bf16.mxu0 0
      %5602 = vmatpush1.bf16.msra.mxu0 %v5329
      %5603 = vmatprep.subr.bf16.mxu0 0
      %5604 = vmatpush1.bf16.msra.mxu0 %v5330
      %5605 = vmatprep.subr.bf16.mxu0 0
      %5606 = vmatpush1.bf16.msra.mxu0 %v5331
      %5607 = vmatprep.subr.bf16.mxu0 0
      %5608 = vmatpush1.bf16.msra.mxu0 %v5332
      %5609 = vmatprep.subr.bf16.mxu0 0
      %5610 = vmatpush1.bf16.msra.mxu0 %v5333
      %5611 = vmatprep.subr.bf16.mxu0 0
      %5612 = vmatpush1.bf16.msra.mxu0 %v5334
      %5613 = vmatprep.subr.bf16.mxu0 0
      %5614 = vmatpush1.bf16.msra.mxu0 %v5335
      %5615 = vmatprep.subr.bf16.mxu0 0
      %5616 = vmatpush1.bf16.msra.mxu0 %v5336
      %5617 = vmatprep.subr.bf16.mxu0 0
      %5618 = vmatpush1.bf16.msra.mxu0 %v5337
      %5619 = vmatprep.mubr.bf16.mxu0 %v5021
      %5620 = vmatmul.mubr.bf16.gmra.mrb[0].mxu0 %v5020
      %v5621 = vpop.f32.mrb[0].mxu0
      %v5622 = vadd.f32 %v5461, %v5621
      %v5623 = vpop.f32.mrb[0].mxu0
      %v5624 = vpop.f32.mrb[0].mxu0
      %v5625 = vadd.f32 %v5464, %v5624
      %v5626 = vpop.f32.mrb[0].mxu0
      %5627 = vmatprep.mubr.bf16.mxu0 %v5026
      %5628 = vmatmul.mubr.bf16.gmra.mrb[0].mxu0 %v5025
      %v5629 = vpop.f32.mrb[0].mxu0
      %v5630 = vadd.f32 %v5469, %v5629
      %v5631 = vpop.f32.mrb[0].mxu0
      %v5632 = vpop.f32.mrb[0].mxu0
      %v5633 = vadd.f32 %v5472, %v5632
      %v5634 = vpop.f32.mrb[0].mxu0
      %5635 = vmatprep.mubr.bf16.mxu0 %v5031
      %5636 = vmatmul.mubr.bf16.gmra.mrb[0].mxu0 %v5030
      %v5637 = vpop.f32.mrb[0].mxu0
      %v5638 = vadd.f32 %v5477, %v5637
      %v5639 = vpop.f32.mrb[0].mxu0
      %v5640 = vpop.f32.mrb[0].mxu0
      %v5641 = vadd.f32 %v5480, %v5640
      %v5642 = vpop.f32.mrb[0].mxu0
      %5643 = vmatprep.mubr.bf16.mxu0 %v5036
      %5644 = vmatmul.mubr.bf16.gmra.mrb[0].mxu0 %v5035
      %v5645 = vpop.f32.mrb[0].mxu0
      %v5646 = vadd.f32 %v5485, %v5645
      %v5647 = vpop.f32.mrb[0].mxu0
      %v5648 = vpop.f32.mrb[0].mxu0
      %v5649 = vadd.f32 %v5488, %v5648
      %v5650 = vpop.f32.mrb[0].mxu0
      %5651 = vmatprep.mubr.bf16.mxu0 %v5041
      %5652 = vmatmul.mubr.bf16.gmra.mrb[0].mxu0 %v5040
      %v5653 = vpop.f32.mrb[0].mxu0
      %v5654 = vadd.f32 %v5493, %v5653
      %v5655 = vpop.f32.mrb[0].mxu0
      %v5656 = vpop.f32.mrb[0].mxu0
      %v5657 = vadd.f32 %v5496, %v5656
      %v5658 = vpop.f32.mrb[0].mxu0
      %5659 = vmatprep.mubr.bf16.mxu0 %v5046
      %5660 = vmatmul.mubr.bf16.gmra.mrb[0].mxu0 %v5045
      %v5661 = vpop.f32.mrb[0].mxu0
      %v5662 = vadd.f32 %v5501, %v5661
      %v5663 = vpop.f32.mrb[0].mxu0
      %v5664 = vpop.f32.mrb[0].mxu0
      %v5665 = vadd.f32 %v5504, %v5664
      %v5666 = vpop.f32.mrb[0].mxu0
      %5667 = vmatprep.mubr.bf16.mxu0 %v5051
      %5668 = vmatmul.mubr.bf16.gmra.mrb[0].mxu0 %v5050
      %v5669 = vpop.f32.mrb[0].mxu0
      %v5670 = vadd.f32 %v5509, %v5669
      %v5671 = vpop.f32.mrb[0].mxu0
      %v5672 = vpop.f32.mrb[0].mxu0
      %v5673 = vadd.f32 %v5512, %v5672
      %v5674 = vpop.f32.mrb[0].mxu0
      %5675 = vmatprep.mubr.bf16.mxu0 %v5056
      %5676 = vmatmul.mubr.bf16.gmra.mrb[0].mxu0 %v5055
      %v5677 = vpop.f32.mrb[0].mxu0
      %v5678 = vadd.f32 %v5517, %v5677
      %v5679 = vpop.f32.mrb[0].mxu0
      %v5680 = vpop.f32.mrb[0].mxu0
      %v5681 = vadd.f32 %v5520, %v5680
      %v5682 = vpop.f32.mrb[0].mxu0
      %5683 = vmatprep.mubr.bf16.mxu0 %v5060
      %5684 = vmatmul.mubr.bf16.gmra.mrb[0].mxu0 %v5041
      %v5685 = vpop.f32.mrb[0].mxu0
      %v5686 = vadd.f32 %v5525, %v5685
      %v5687 = vpop.f32.mrb[0].mxu0
      %v5688 = vpop.f32.mrb[0].mxu0
      %v5689 = vadd.f32 %v5528, %v5688
      %v5690 = vpop.f32.mrb[0].mxu0
      %5691 = vmatprep.mubr.bf16.mxu0 %v5064
      %5692 = vmatmul.mubr.bf16.gmra.mrb[0].mxu0 %v5046
      %v5693 = vpop.f32.mrb[0].mxu0
      %v5694 = vadd.f32 %v5533, %v5693
      %v5695 = vpop.f32.mrb[0].mxu0
      %v5696 = vpop.f32.mrb[0].mxu0
      %v5697 = vadd.f32 %v5536, %v5696
      %v5698 = vpop.f32.mrb[0].mxu0
      %5699 = vmatprep.mubr.bf16.mxu0 %v5068
      %5700 = vmatmul.mubr.bf16.gmra.mrb[0].mxu0 %v5051
      %v5701 = vpop.f32.mrb[0].mxu0
      %v5702 = vadd.f32 %v5541, %v5701
      %v5703 = vpop.f32.mrb[0].mxu0
      %v5704 = vpop.f32.mrb[0].mxu0
      %v5705 = vadd.f32 %v5544, %v5704
      %v5706 = vpop.f32.mrb[0].mxu0
      %5707 = vmatprep.mubr.bf16.mxu0 %v5072
      %5708 = vmatmul.mubr.bf16.gmra.mrb[0].mxu0 %v5056
      %v5709 = vpop.f32.mrb[0].mxu0
      %v5710 = vadd.f32 %v5549, %v5709
      %v5711 = vpop.f32.mrb[0].mxu0
      %v5712 = vpop.f32.mrb[0].mxu0
      %v5713 = vadd.f32 %v5552, %v5712
      %v5714 = vpop.f32.mrb[0].mxu0
      %5715 = vmatprep.mubr.bf16.mxu0 %v5076
      %5716 = vmatmul.mubr.bf16.gmra.mrb[0].mxu0 %v5075
      %v5717 = vpop.f32.mrb[0].mxu0
      %v5718 = vadd.f32 %v5557, %v5717
      %v5719 = vpop.f32.mrb[0].mxu0
      %v5720 = vpop.f32.mrb[0].mxu0
      %v5721 = vadd.f32 %v5560, %v5720
      %v5722 = vpop.f32.mrb[0].mxu0
      %5723 = vmatprep.mubr.bf16.mxu0 %v5080
      %5724 = vmatmul.mubr.bf16.gmra.mrb[0].mxu0 %v5079
      %v5725 = vpop.f32.mrb[0].mxu0
      %v5726 = vadd.f32 %v5565, %v5725
      %v5727 = vpop.f32.mrb[0].mxu0
      %v5728 = vpop.f32.mrb[0].mxu0
      %v5729 = vadd.f32 %v5568, %v5728
      %v5730 = vpop.f32.mrb[0].mxu0
      %5731 = vmatprep.mubr.bf16.mxu0 %v5084
      %5732 = vmatmul.mubr.bf16.gmra.mrb[0].mxu0 %v5083
      %v5733 = vpop.f32.mrb[0].mxu0
      %v5734 = vadd.f32 %v5573, %v5733
      %v5735 = vpop.f32.mrb[0].mxu0
      %v5736 = vpop.f32.mrb[0].mxu0
      %v5737 = vadd.f32 %v5576, %v5736
      %v5738 = vpop.f32.mrb[0].mxu0
      %5739 = vmatprep.mubr.bf16.mxu0 %v5088
      %5740 = vmatmul.mubr.bf16.gmra.mrb[0].mxu0 %v5087
      %v5741 = vpop.f32.mrb[0].mxu0
      %v5742 = vadd.f32 %v5581, %v5741
      %v5743 = vpop.f32.mrb[0].mxu0
      %v5744 = vpop.f32.mrb[0].mxu0
      %v5745 = vadd.f32 %v5584, %v5744
      %v5746 = vpop.f32.mrb[0].mxu0
      %5747 = vdwg.mxu0
      %5748 = vmatprep.subr.bf16.mxu0 0
      %5749 = vmatpush1.bf16.msra.mxu0 %v5338
      %5750 = vmatprep.subr.bf16.mxu0 0
      %5751 = vmatpush1.bf16.msra.mxu0 %v5339
      %5752 = vmatprep.subr.bf16.mxu0 0
      %5753 = vmatpush1.bf16.msra.mxu0 %v5340
      %5754 = vmatprep.subr.bf16.mxu0 0
      %5755 = vmatpush1.bf16.msra.mxu0 %v5341
      %5756 = vmatprep.subr.bf16.mxu0 0
      %5757 = vmatpush1.bf16.msra.mxu0 0
      %5758 = vmatprep.subr.bf16.mxu0 0
      %5759 = vmatpush1.bf16.msra.mxu0 0
      %5760 = vmatprep.subr.bf16.mxu0 0
      %5761 = vmatpush1.bf16.msra.mxu0 0
      %5762 = vmatprep.subr.bf16.mxu0 0
      %5763 = vmatpush1.bf16.msra.mxu0 0
      %5764 = vmatprep.subr.bf16.mxu0 0
      %5765 = vmatpush1.bf16.msra.mxu0 0
      %5766 = vmatprep.subr.bf16.mxu0 0
      %5767 = vmatpush1.bf16.msra.mxu0 0
      %5768 = vmatprep.subr.bf16.mxu0 0
      %5769 = vmatpush1.bf16.msra.mxu0 0
      %5770 = vmatprep.subr.bf16.mxu0 0
      %5771 = vmatpush1.bf16.msra.mxu0 0
      %5772 = vmatprep.subr.bf16.mxu0 0
      %5773 = vmatpush1.bf16.msra.mxu0 0
      %5774 = vmatprep.subr.bf16.mxu0 0
      %5775 = vmatpush1.bf16.msra.mxu0 0
      %5776 = vmatprep.subr.bf16.mxu0 0
      %5777 = vmatpush1.bf16.msra.mxu0 0
      %5778 = vmatprep.subr.bf16.mxu0 0
      %5779 = vmatpush1.bf16.msra.mxu0 0
      %5780 = vmatprep.mubr.bf16.mxu0 0
      %5781 = vmatmul.mubr.bf16.gmra.mrb[0].mxu0 %v5379
      %v5782 = vpop.f32.mrb[0].mxu0
      %v5783 = vadd.f32 %v5622, %v5782
      %v5784 = vpop.f32.mrb[0].mxu0
      %v5785 = vpop.f32.mrb[0].mxu0
      %v5786 = vadd.f32 %v5625, %v5785
      %v5787 = vpop.f32.mrb[0].mxu0
      %5788 = vmatprep.mubr.bf16.mxu0 0
      %5789 = vmatmul.mubr.bf16.gmra.mrb[0].mxu0 %v5382
      %v5790 = vpop.f32.mrb[0].mxu0
      %v5791 = vadd.f32 %v5630, %v5790
      %v5792 = vpop.f32.mrb[0].mxu0
      %v5793 = vpop.f32.mrb[0].mxu0
      %v5794 = vadd.f32 %v5633, %v5793
      %v5795 = vpop.f32.mrb[0].mxu0
      %5796 = vmatprep.mubr.bf16.mxu0 0
      %5797 = vmatmul.mubr.bf16.gmra.mrb[0].mxu0 %v5385
      %v5798 = vpop.f32.mrb[0].mxu0
      %v5799 = vadd.f32 %v5638, %v5798
      %v5800 = vpop.f32.mrb[0].mxu0
      %v5801 = vpop.f32.mrb[0].mxu0
      %v5802 = vadd.f32 %v5641, %v5801
      %v5803 = vpop.f32.mrb[0].mxu0
      %5804 = vmatprep.mubr.bf16.mxu0 0
      %5805 = vmatmul.mubr.bf16.gmra.mrb[0].mxu0 %v5388
      %v5806 = vpop.f32.mrb[0].mxu0
      %v5807 = vadd.f32 %v5646, %v5806
      %v5808 = vpop.f32.mrb[0].mxu0
      %v5809 = vpop.f32.mrb[0].mxu0
      %v5810 = vadd.f32 %v5649, %v5809
      %v5811 = vpop.f32.mrb[0].mxu0
      %5812 = vmatprep.mubr.bf16.mxu0 0
      %5813 = vmatmul.mubr.bf16.gmra.mrb[0].mxu0 %v5391
      %v5814 = vpop.f32.mrb[0].mxu0
      %v5815 = vadd.f32 %v5654, %v5814
      %v5816 = vpop.f32.mrb[0].mxu0
      %v5817 = vpop.f32.mrb[0].mxu0
      %v5818 = vadd.f32 %v5657, %v5817
      %v5819 = vpop.f32.mrb[0].mxu0
      %5820 = vmatprep.mubr.bf16.mxu0 0
      %5821 = vmatmul.mubr.bf16.gmra.mrb[0].mxu0 %v5394
      %v5822 = vpop.f32.mrb[0].mxu0
      %v5823 = vadd.f32 %v5662, %v5822
      %v5824 = vpop.f32.mrb[0].mxu0
      %v5825 = vpop.f32.mrb[0].mxu0
      %v5826 = vadd.f32 %v5665, %v5825
      %v5827 = vpop.f32.mrb[0].mxu0
      %5828 = vmatprep.mubr.bf16.mxu0 0
      %5829 = vmatmul.mubr.bf16.gmra.mrb[0].mxu0 %v5397
      %v5830 = vpop.f32.mrb[0].mxu0
      %v5831 = vadd.f32 %v5670, %v5830
      %v5832 = vpop.f32.mrb[0].mxu0
      %v5833 = vpop.f32.mrb[0].mxu0
      %v5834 = vadd.f32 %v5673, %v5833
      %v5835 = vpop.f32.mrb[0].mxu0
      %5836 = vmatprep.mubr.bf16.mxu0 0
      %5837 = vmatmul.mubr.bf16.gmra.mrb[0].mxu0 %v5400
      %v5838 = vpop.f32.mrb[0].mxu0
      %v5839 = vadd.f32 %v5678, %v5838
      %v5840 = vpop.f32.mrb[0].mxu0
      %v5841 = vpop.f32.mrb[0].mxu0
      %v5842 = vadd.f32 %v5681, %v5841
      %v5843 = vpop.f32.mrb[0].mxu0
      %5844 = vmatprep.mubr.bf16.mxu0 0
      %5845 = vmatmul.mubr.bf16.gmra.mrb[0].mxu0 %v5403
      %v5846 = vpop.f32.mrb[0].mxu0
      %v5847 = vadd.f32 %v5686, %v5846
      %v5848 = vpop.f32.mrb[0].mxu0
      %v5849 = vpop.f32.mrb[0].mxu0
      %v5850 = vadd.f32 %v5689, %v5849
      %v5851 = vpop.f32.mrb[0].mxu0
      %5852 = vmatprep.mubr.bf16.mxu0 0
      %5853 = vmatmul.mubr.bf16.gmra.mrb[0].mxu0 %v5406
      %v5854 = vpop.f32.mrb[0].mxu0
      %v5855 = vadd.f32 %v5694, %v5854
      %v5856 = vpop.f32.mrb[0].mxu0
      %v5857 = vpop.f32.mrb[0].mxu0
      %v5858 = vadd.f32 %v5697, %v5857
      %v5859 = vpop.f32.mrb[0].mxu0
      %5860 = vmatprep.mubr.bf16.mxu0 0
      %5861 = vmatmul.mubr.bf16.gmra.mrb[0].mxu0 %v5409
      %v5862 = vpop.f32.mrb[0].mxu0
      %v5863 = vadd.f32 %v5702, %v5862
      %v5864 = vpop.f32.mrb[0].mxu0
      %v5865 = vpop.f32.mrb[0].mxu0
      %v5866 = vadd.f32 %v5705, %v5865
      %v5867 = vpop.f32.mrb[0].mxu0
      %5868 = vmatprep.mubr.bf16.mxu0 0
      %5869 = vmatmul.mubr.bf16.gmra.mrb[0].mxu0 %v5412
      %v5870 = vpop.f32.mrb[0].mxu0
      %v5871 = vadd.f32 %v5710, %v5870
      %v5872 = vpop.f32.mrb[0].mxu0
      %v5873 = vpop.f32.mrb[0].mxu0
      %v5874 = vadd.f32 %v5713, %v5873
      %v5875 = vpop.f32.mrb[0].mxu0
      %5876 = vmatprep.mubr.bf16.mxu0 0
      %5877 = vmatmul.mubr.bf16.gmra.mrb[0].mxu0 %v5415
      %v5878 = vpop.f32.mrb[0].mxu0
      %v5879 = vadd.f32 %v5718, %v5878
      %v5880 = vpop.f32.mrb[0].mxu0
      %v5881 = vpop.f32.mrb[0].mxu0
      %v5882 = vadd.f32 %v5721, %v5881
      %v5883 = vpop.f32.mrb[0].mxu0
      %5884 = vmatprep.mubr.bf16.mxu0 0
      %5885 = vmatmul.mubr.bf16.gmra.mrb[0].mxu0 %v5418
      %v5886 = vpop.f32.mrb[0].mxu0
      %v5887 = vadd.f32 %v5726, %v5886
      %v5888 = vpop.f32.mrb[0].mxu0
      %v5889 = vpop.f32.mrb[0].mxu0
      %v5890 = vadd.f32 %v5729, %v5889
      %v5891 = vpop.f32.mrb[0].mxu0
      %5892 = vmatprep.mubr.bf16.mxu0 0
      %5893 = vmatmul.mubr.bf16.gmra.mrb[0].mxu0 %v5421
      %v5894 = vpop.f32.mrb[0].mxu0
      %v5895 = vadd.f32 %v5734, %v5894
      %v5896 = vpop.f32.mrb[0].mxu0
      %v5897 = vpop.f32.mrb[0].mxu0
      %v5898 = vadd.f32 %v5737, %v5897
      %v5899 = vpop.f32.mrb[0].mxu0
      %5900 = vmatprep.mubr.bf16.mxu0 0
      %5901 = vmatmul.mubr.bf16.gmra.mrb[0].mxu0 %v5424
      %v5902 = vpop.f32.mrb[0].mxu0
      %v5903 = vadd.f32 %v5742, %v5902
      %v5904 = vpop.f32.mrb[0].mxu0
      %v5905 = vpop.f32.mrb[0].mxu0
      %v5906 = vadd.f32 %v5745, %v5905
      %v5907 = vpop.f32.mrb[0].mxu0
      %5908 = vdwg.mxu0
      %v5909 = vmul.f32 %v5783, %v5783
      %v5910 = vmul.f32 %v5786, %v5786
      %v5911 = vmul.f32 %v5791, %v5791
      %v5912 = vmul.f32 %v5794, %v5794
      %v5913 = vmul.f32 %v5799, %v5799
      %v5914 = vmul.f32 %v5802, %v5802
      %v5915 = vmul.f32 %v5807, %v5807
      %v5916 = vmul.f32 %v5810, %v5810
      %v5917 = vmul.f32 %v5815, %v5815
      %v5918 = vmul.f32 %v5818, %v5818
      %v5919 = vmul.f32 %v5823, %v5823
      %v5920 = vmul.f32 %v5826, %v5826
      %v5921 = vmul.f32 %v5831, %v5831
      %v5922 = vmul.f32 %v5834, %v5834
      %v5923 = vmul.f32 %v5839, %v5839
      %v5924 = vmul.f32 %v5842, %v5842
      %v5925 = vmul.f32 %v5847, %v5847
      %v5926 = vmul.f32 %v5850, %v5850
      %v5927 = vmul.f32 %v5855, %v5855
      %v5928 = vmul.f32 %v5858, %v5858
      %v5929 = vmul.f32 %v5863, %v5863
      %v5930 = vmul.f32 %v5866, %v5866
      %v5931 = vmul.f32 %v5871, %v5871
      %v5932 = vmul.f32 %v5874, %v5874
      %v5933 = vmul.f32 %v5879, %v5879
      %v5934 = vmul.f32 %v5882, %v5882
      %v5935 = vmul.f32 %v5887, %v5887
      %v5936 = vmul.f32 %v5890, %v5890
      %v5937 = vmul.f32 %v5895, %v5895
      %v5938 = vmul.f32 %v5898, %v5898
      %v5939 = vmul.f32 %v5903, %v5903
      %v5940 = vmul.f32 %v5906, %v5906
      %5941 = vadd.xlane.f32.xlu0 %v5909
      %v5942 = vpop.xlane.xlu0 %5941
      %5943 = vadd.xlane.f32.xlu0 %v5910
      %v5944 = vpop.xlane.xlu0 %5943
      %5945 = vadd.xlane.f32.xlu0 %v5911
      %v5946 = vpop.xlane.xlu0 %5945
      %5947 = vadd.xlane.f32.xlu0 %v5912
      %v5948 = vpop.xlane.xlu0 %5947
      %5949 = vadd.xlane.f32.xlu0 %v5913
      %v5950 = vpop.xlane.xlu0 %5949
      %5951 = vadd.xlane.f32.xlu0 %v5914
      %v5952 = vpop.xlane.xlu0 %5951
      %5953 = vadd.xlane.f32.xlu0 %v5915
      %v5954 = vpop.xlane.xlu0 %5953
      %5955 = vadd.xlane.f32.xlu0 %v5916
      %v5956 = vpop.xlane.xlu0 %5955
      %5957 = vadd.xlane.f32.xlu0 %v5917
      %v5958 = vpop.xlane.xlu0 %5957
      %5959 = vadd.xlane.f32.xlu0 %v5918
      %v5960 = vpop.xlane.xlu0 %5959
      %5961 = vadd.xlane.f32.xlu0 %v5919
      %v5962 = vpop.xlane.xlu0 %5961
      %5963 = vadd.xlane.f32.xlu0 %v5920
      %v5964 = vpop.xlane.xlu0 %5963
      %5965 = vadd.xlane.f32.xlu0 %v5921
      %v5966 = vpop.xlane.xlu0 %5965
      %5967 = vadd.xlane.f32.xlu0 %v5922
      %v5968 = vpop.xlane.xlu0 %5967
      %5969 = vadd.xlane.f32.xlu0 %v5923
      %v5970 = vpop.xlane.xlu0 %5969
      %5971 = vadd.xlane.f32.xlu0 %v5924
      %v5972 = vpop.xlane.xlu0 %5971
      %5973 = vadd.xlane.f32.xlu0 %v5925
      %v5974 = vpop.xlane.xlu0 %5973
      %5975 = vadd.xlane.f32.xlu0 %v5926
      %v5976 = vpop.xlane.xlu0 %5975
      %5977 = vadd.xlane.f32.xlu0 %v5927
      %v5978 = vpop.xlane.xlu0 %5977
      %5979 = vadd.xlane.f32.xlu0 %v5928
      %v5980 = vpop.xlane.xlu0 %5979
      %5981 = vadd.xlane.f32.xlu0 %v5929
      %v5982 = vpop.xlane.xlu0 %5981
      %5983 = vadd.xlane.f32.xlu0 %v5930
      %v5984 = vpop.xlane.xlu0 %5983
      %5985 = vadd.xlane.f32.xlu0 %v5931
      %v5986 = vpop.xlane.xlu0 %5985
      %5987 = vadd.xlane.f32.xlu0 %v5932
      %v5988 = vpop.xlane.xlu0 %5987
      %5989 = vadd.xlane.f32.xlu0 %v5933
      %v5990 = vpop.xlane.xlu0 %5989
      %5991 = vadd.xlane.f32.xlu0 %v5934
      %v5992 = vpop.xlane.xlu0 %5991
      %5993 = vadd.xlane.f32.xlu0 %v5935
      %v5994 = vpop.xlane.xlu0 %5993
      %5995 = vadd.xlane.f32.xlu0 %v5936
      %v5996 = vpop.xlane.xlu0 %5995
      %5997 = vadd.xlane.f32.xlu0 %v5937
      %v5998 = vpop.xlane.xlu0 %5997
      %5999 = vadd.xlane.f32.xlu0 %v5938
      %v6000 = vpop.xlane.xlu0 %5999
      %6001 = vadd.xlane.f32.xlu0 %v5939
      %v6002 = vpop.xlane.xlu0 %6001
      %6003 = vadd.xlane.f32.xlu0 %v5940
      %v6004 = vpop.xlane.xlu0 %6003
      %v6005 = vmax.f32 %v5942, 1e-24
      %v6006 = vmax.f32 %v5944, 1e-24
      %v6007 = vmax.f32 %v5946, 1e-24
      %v6008 = vmax.f32 %v5948, 1e-24
      %v6009 = vmax.f32 %v5950, 1e-24
      %v6010 = vmax.f32 %v5952, 1e-24
      %v6011 = vmax.f32 %v5954, 1e-24
      %v6012 = vmax.f32 %v5956, 1e-24
      %v6013 = vmax.f32 %v5958, 1e-24
      %v6014 = vmax.f32 %v5960, 1e-24
      %v6015 = vmax.f32 %v5962, 1e-24
      %v6016 = vmax.f32 %v5964, 1e-24
      %v6017 = vmax.f32 %v5966, 1e-24
      %v6018 = vmax.f32 %v5968, 1e-24
      %v6019 = vmax.f32 %v5970, 1e-24
      %v6020 = vmax.f32 %v5972, 1e-24
      %v6021 = vmax.f32 %v5974, 1e-24
      %v6022 = vmax.f32 %v5976, 1e-24
      %v6023 = vmax.f32 %v5978, 1e-24
      %v6024 = vmax.f32 %v5980, 1e-24
      %v6025 = vmax.f32 %v5982, 1e-24
      %v6026 = vmax.f32 %v5984, 1e-24
      %v6027 = vmax.f32 %v5986, 1e-24
      %v6028 = vmax.f32 %v5988, 1e-24
      %v6029 = vmax.f32 %v5990, 1e-24
      %v6030 = vmax.f32 %v5992, 1e-24
      %v6031 = vmax.f32 %v5994, 1e-24
      %v6032 = vmax.f32 %v5996, 1e-24
      %v6033 = vmax.f32 %v5998, 1e-24
      %v6034 = vmax.f32 %v6000, 1e-24
      %v6035 = vmax.f32 %v6002, 1e-24
      %v6036 = vmax.f32 %v6004, 1e-24
      %v6037 = vrsqrt.pop %v6005
      %v6038 = vrsqrt.pop %v6006
      %v6039 = vrsqrt.pop %v6007
      %v6040 = vrsqrt.pop %v6008
      %v6041 = vrsqrt.pop %v6009
      %v6042 = vrsqrt.pop %v6010
      %v6043 = vrsqrt.pop %v6011
      %v6044 = vrsqrt.pop %v6012
      %v6045 = vrsqrt.pop %v6013
      %v6046 = vrsqrt.pop %v6014
      %v6047 = vrsqrt.pop %v6015
      %v6048 = vrsqrt.pop %v6016
      %v6049 = vrsqrt.pop %v6017
      %v6050 = vrsqrt.pop %v6018
      %v6051 = vrsqrt.pop %v6019
      %v6052 = vrsqrt.pop %v6020
      %v6053 = vrsqrt.pop %v6021
      %v6054 = vrsqrt.pop %v6022
      %v6055 = vrsqrt.pop %v6023
      %v6056 = vrsqrt.pop %v6024
      %v6057 = vrsqrt.pop %v6025
      %v6058 = vrsqrt.pop %v6026
      %v6059 = vrsqrt.pop %v6027
      %v6060 = vrsqrt.pop %v6028
      %v6061 = vrsqrt.pop %v6029
      %v6062 = vrsqrt.pop %v6030
      %v6063 = vrsqrt.pop %v6031
      %v6064 = vrsqrt.pop %v6032
      %v6065 = vrsqrt.pop %v6033
      %v6066 = vrsqrt.pop %v6034
      %v6067 = vrsqrt.pop %v6035
      %v6068 = vrsqrt.pop %v6036
      %v6069 = vmul.f32 %v5783, %v6037
      %v6070 = vmul.f32 %v5786, %v6038
      %v6071 = vmul.f32 %v5791, %v6039
      %v6072 = vmul.f32 %v5794, %v6040
      %v6073 = vmul.f32 %v5799, %v6041
      %v6074 = vmul.f32 %v5802, %v6042
      %v6075 = vmul.f32 %v5807, %v6043
      %v6076 = vmul.f32 %v5810, %v6044
      %v6077 = vmul.f32 %v5815, %v6045
      %v6078 = vmul.f32 %v5818, %v6046
      %v6079 = vmul.f32 %v5823, %v6047
      %v6080 = vmul.f32 %v5826, %v6048
      %v6081 = vmul.f32 %v5831, %v6049
      %v6082 = vmul.f32 %v5834, %v6050
      %v6083 = vmul.f32 %v5839, %v6051
      %v6084 = vmul.f32 %v5842, %v6052
      %v6085 = vmul.f32 %v5847, %v6053
      %v6086 = vmul.f32 %v5850, %v6054
      %v6087 = vmul.f32 %v5855, %v6055
      %v6088 = vmul.f32 %v5858, %v6056
      %v6089 = vmul.f32 %v5863, %v6057
      %v6090 = vmul.f32 %v5866, %v6058
      %v6091 = vmul.f32 %v5871, %v6059
      %v6092 = vmul.f32 %v5874, %v6060
      %v6093 = vmul.f32 %v5879, %v6061
      %v6094 = vmul.f32 %v5882, %v6062
      %v6095 = vmul.f32 %v5887, %v6063
      %v6096 = vmul.f32 %v5890, %v6064
      %v6097 = vmul.f32 %v5895, %v6065
      %v6098 = vmul.f32 %v5898, %v6066
      %v6099 = vmul.f32 %v5903, %v6067
      %v6100 = vmul.f32 %v5906, %v6068
      %6101 = vst [vmem:[%s278] sm:$0xff] %v6069
      %6102 = vst [vmem:[%s278 + $0x8] sm:$0xff] %v6070
      %6103 = vst [vmem:[%s278 + $0x10] sm:$0xff] %v6071
      %6104 = vst [vmem:[%s278 + $0x18] sm:$0xff] %v6072
      %6105 = vst [vmem:[%s278 + $0x20] sm:$0xff] %v6073
      %6106 = vst [vmem:[%s278 + $0x28] sm:$0xff] %v6074
      %6107 = vst [vmem:[%s278 + $0x30] sm:$0xff] %v6075
      %6108 = vst [vmem:[%s278 + $0x38] sm:$0xff] %v6076
      %6109 = vst [vmem:[%s278 + $0x40] sm:$0xff] %v6077
      %6110 = vst [vmem:[%s278 + $0x48] sm:$0xff] %v6078
      %6111 = vst [vmem:[%s278 + $0x50] sm:$0xff] %v6079
      %6112 = vst [vmem:[%s278 + $0x58] sm:$0xff] %v6080
      %6113 = vst [vmem:[%s278 + $0x60] sm:$0xff] %v6081
      %6114 = vst [vmem:[%s278 + $0x68] sm:$0xff] %v6082
      %6115 = vst [vmem:[%s278 + $0x70] sm:$0xff] %v6083
      %6116 = vst [vmem:[%s278 + $0x78] sm:$0xff] %v6084
      %6117 = vst [vmem:[%s278 + $0x80] sm:$0xff] %v6085
      %6118 = vst [vmem:[%s278 + $0x88] sm:$0xff] %v6086
      %6119 = vst [vmem:[%s278 + $0x90] sm:$0xff] %v6087
      %6120 = vst [vmem:[%s278 + $0x98] sm:$0xff] %v6088
      %6121 = vst [vmem:[%s278 + $0xa0] sm:$0xff] %v6089
      %6122 = vst [vmem:[%s278 + $0xa8] sm:$0xff] %v6090
      %6123 = vst [vmem:[%s278 + $0xb0] sm:$0xff] %v6091
      %6124 = vst [vmem:[%s278 + $0xb8] sm:$0xff] %v6092
      %6125 = vst [vmem:[%s278 + $0xc0] sm:$0xff] %v6093
      %6126 = vst [vmem:[%s278 + $0xc8] sm:$0xff] %v6094
      %6127 = vst [vmem:[%s278 + $0xd0] sm:$0xff] %v6095
      %6128 = vst [vmem:[%s278 + $0xd8] sm:$0xff] %v6096
      %6129 = vst [vmem:[%s278 + $0xe0] sm:$0xff] %v6097
      %6130 = vst [vmem:[%s278 + $0xe8] sm:$0xff] %v6098
      %6131 = vst [vmem:[%s278 + $0xf0] sm:$0xff] %v6099
      %6132 = vst [vmem:[%s278 + $0xf8] sm:$0xff] %v6100
      %p6133 = scmp.lt.s32.totalorder %s18, 1
      %s6134 = scalar_select %p6133, %s18, 1
      %s6135 = smul.addr %s6134, 32
      %s6136 = smul.addr %s6135, 8
      %s6137 = scalar_lea.vmem %s7, %s6136
      // Predicated region
      $region49: #{regressor_forward.1} parent=47 // pred_check
        %p6138 = pneg %p188
      $region50: #{regressor_forward.1} parent=47 // pred_check_branch
        %6140 = sbr.rel (%p6138) target = $region52
      $region51: #{regressor_forward.1} parent=47 // pred_region
        _
      $region52: #{regressor_forward.1} parent=47 // pred_fallthru
        _
    $region48: #{regressor_forward.1} parent=5 // pred_fallthru
      _
    %p6141 = scmp.le.s32.totalorder 2, %s13
    // Predicated region
    $region53: #{regressor_forward.1} parent=5 // pred_check
      %p6142 = pneg %p6141
    $region54: #{regressor_forward.1} parent=5 // pred_check_branch
      %6144 = sbr.rel (%p6142) target = $region56
    $region55: #{regressor_forward.1} parent=5 // pred_region
      %s6145 = ssub.s32 %s13, 2
      // Predicated region
      $region57: #{regressor_forward.1} parent=55 // pred_check
        %p6146 = pneg %p194
      $region58: #{regressor_forward.1} parent=55 // pred_check_branch
        %6148 = sbr.rel (%p6146) target = $region60
      $region59: #{regressor_forward.1} parent=55 // pred_region
        %p6149 = scmp.lt.s32.totalorder %s19, 1
        %s6150 = scalar_select %p6149, %s19, 1
        %s6151 = smul.addr %s6150, 32
        %s6152 = smul.addr %s6151, 8
        %s6153 = scalar_lea.vmem %s7, %s6152
      $region60: #{regressor_forward.1} parent=55 // pred_fallthru
        _
    $region56: #{regressor_forward.1} parent=5 // pred_fallthru
      _
  $region6: #{regressor_forward.1} parent=0 // loop_footer
    %s17 = sadd.s32 1, %s13
  $region7: #{regressor_forward.1} parent=0 // loop_footer_branch
    %12 = sbr.rel target = $region3
  $region8: #{regressor_forward.1} parent=0 // loop_exit
    _

</llo_original>
